<compile_context>
chip_gen: v5e
topology: v5e:2x2
jax: 0.10.0
libtpu: 0.0.40
codegen_flags: <defaults>
</compile_context>

<pallas_src>
import functools

import jax
import jax.numpy as jnp
from jax.experimental import pallas as pl
from jax.experimental.pallas import tpu as pltpu


# ----------------------------------------------------------------------------
# Pallas kernel: fused matmul + bias (+ optional ReLU), M-tiled grid.
# x: (TM, K) bf16, w: (K, N) bf16, b: (1, N) f32 -> o: (TM, N).
# ----------------------------------------------------------------------------
def _matmul_bias_kernel(x_ref, w_ref, b_ref, o_ref, *, relu: bool):
    acc = jnp.dot(x_ref[...], w_ref[...], preferred_element_type=jnp.float32)
    acc = acc + b_ref[...]                 # (1, N) broadcasts over rows
    if relu:
        acc = jnp.maximum(acc, 0.0)
    o_ref[...] = acc.astype(o_ref.dtype)


# Rows per grid step. bf16 x-block at the largest K (2200) is ~2.2 MiB; with
# double-buffering this stays far under v7x's 32 MiB scoped VMEM default.
_TM = 512


def matmul_bias(x, w, b, *, relu: bool = False, out_dtype=jnp.float32):
    """x: (M, K), w: (K, N) bf16, b: (1, N) f32 -> (M, N)."""
    x = x.astype(jnp.bfloat16)
    w = w.astype(jnp.bfloat16)
    b = b.astype(jnp.float32)
    M, K = x.shape
    K2, N = w.shape
    assert K == K2 and b.shape == (1, N)

    tm = M if M <= _TM else _TM            # single block for small M, else tile
    grid = (pl.cdiv(M, tm),)
    kern = functools.partial(_matmul_bias_kernel, relu=relu)
    cost = pl.CostEstimate(
        flops=2 * M * K * N,
        transcendentals=0,
        bytes_accessed=(M * K + K * N) * 2 + N * 4 + M * N * 4,
    )
    return pl.pallas_call(
        kern,
        out_shape=jax.ShapeDtypeStruct((M, N), out_dtype),
        grid=grid,
        in_specs=[
            pl.BlockSpec((tm, K), lambda i: (i, 0)),   # x: tiled over M
            pl.BlockSpec((K, N), lambda i: (0, 0)),    # w: resident
            pl.BlockSpec((1, N), lambda i: (0, 0)),    # b: resident
        ],
        out_specs=pl.BlockSpec((tm, N), lambda i: (i, 0)),
        compiler_params=pltpu.CompilerParams(
            dimension_semantics=("parallel",),         # shard M across TCs (v7x)
        ),
        cost_estimate=cost,
    )(x, w, b)


# ----------------------------------------------------------------------------
# Conv wrappers (NHWC). im2col is cheap slicing/concat glue; the hot path is
# always the single fused Pallas matmul above.
# ----------------------------------------------------------------------------
def _im2col_nhwc(x, k, padding):
    """x: (N, H, W, C) -> ((N*Ho*Wo, k*k*C), Ho, Wo); col idx = (di*k+dj)*C + c."""
    if padding:
        x = jnp.pad(x, ((0, 0), (padding, padding), (padding, padding), (0, 0)))
    n, h, w, c = x.shape
    ho, wo = h - k + 1, w - k + 1
    cols = []
    for di in range(k):
        for dj in range(k):
            cols.append(x[:, di:di + ho, dj:dj + wo, :])
    p = jnp.concatenate(cols, axis=-1)                 # (N, Ho, Wo, k*k*C)
    return p.reshape(n * ho * wo, k * k * c), ho, wo


def conv2d_nhwc(x, w_mat, b, *, k, padding=0, relu=False, out_dtype=jnp.bfloat16):
    """x: (N,H,W,Cin) bf16, w_mat: (k*k*Cin, Cout) bf16 (rows ordered (di,dj,c))."""
    n = x.shape[0]
    patches, ho, wo = _im2col_nhwc(x, k, padding)
    out = matmul_bias(patches, w_mat, b, relu=relu, out_dtype=out_dtype)
    return out.reshape(n, ho, wo, w_mat.shape[1])


def conv1x1_nhwc(x, w_mat, b, *, relu=False, out_dtype=jnp.bfloat16):
    """1x1 conv in NHWC is just a matmul over the channel axis (no im2col)."""
    n, h, w, c = x.shape
    out = matmul_bias(x.reshape(n * h * w, c), w_mat, b, relu=relu,
                      out_dtype=out_dtype)
    return out.reshape(n, h, w, w_mat.shape[1])


def maxpool2x2_nhwc(x):
    n, h, w, c = x.shape
    return x.reshape(n, h // 2, 2, w // 2, 2, c).max(axis=(2, 4))


# ----------------------------------------------------------------------------
# Parameter construction: deterministic synthetic weights, generated in
# PyTorch layout and pre-converted ONCE to (K, N) bf16 matmul layout.
# ----------------------------------------------------------------------------
def _conv_param_torch(key, cout, cin, k):
    k1, k2 = jax.random.split(key)
    w = jax.random.normal(k1, (cout, cin, k, k), jnp.float32) * 0.05
    b = jax.random.normal(k2, (cout,), jnp.float32) * 0.05
    return w, b


def _to_matmul(w, b):
    """(Cout,Cin,k,k) torch conv weight -> ((k*k*Cin, Cout) bf16, (1,Cout) f32),
    row ordering (di, dj, cin) to match _im2col_nhwc."""
    cout, cin, k, _ = w.shape
    wm = jnp.transpose(w, (2, 3, 1, 0)).reshape(k * k * cin, cout)
    return wm.astype(jnp.bfloat16), b.reshape(1, cout).astype(jnp.float32)


def make_inception_params(key, in_ch):
    keys = jax.random.split(key, 7)
    w31, b31 = _conv_param_torch(keys[0], 16, in_ch, 1)
    w32, b32 = _conv_param_torch(keys[1], 24, 16, 3)
    w33, b33 = _conv_param_torch(keys[2], 24, 24, 3)
    w51, b51 = _conv_param_torch(keys[3], 16, in_ch, 1)
    w52, b52 = _conv_param_torch(keys[4], 24, 16, 5)
    w11, b11 = _conv_param_torch(keys[5], 16, in_ch, 1)
    wbp, bbp = _conv_param_torch(keys[6], 24, in_ch, 1)

    # Fused 1x1 convs sharing input x: columns [b3_1 | b5_1 | b1] -> N = 48.
    m31, v31 = _to_matmul(w31, b31)
    m51, v51 = _to_matmul(w51, b51)
    m11, v11 = _to_matmul(w11, b11)
    fused_w = jnp.concatenate([m31, m51, m11], axis=1)        # (in_ch, 48) bf16
    fused_b = jnp.concatenate([v31, v51, v11], axis=1)        # (1, 48) f32

    # branch_pool: avg_pool3x3(s=1,p=1) + 1x1 conv == 3x3 conv with w/9 taps.
    wbp_mat = jnp.transpose(wbp, (2, 3, 1, 0)).reshape(in_ch, 24) / 9.0
    bp_w = jnp.tile(wbp_mat, (9, 1)).astype(jnp.bfloat16)     # (9*in_ch, 24)
    bp_b = bbp.reshape(1, 24).astype(jnp.float32)

    b3_2_w, b3_2_b = _to_matmul(w32, b32)                     # (144, 24)
    b3_3_w, b3_3_b = _to_matmul(w33, b33)                     # (216, 24)
    b5_2_w, b5_2_b = _to_matmul(w52, b52)                     # (400, 24)

    return {
        "fused1x1_w": fused_w, "fused1x1_b": fused_b,
        "b3_2_w": b3_2_w, "b3_2_b": b3_2_b,
        "b3_3_w": b3_3_w, "b3_3_b": b3_3_b,
        "b5_2_w": b5_2_w, "b5_2_b": b5_2_b,
        "bp_w": bp_w, "bp_b": bp_b,
    }


def make_net_params(key):
    keys = jax.random.split(key, 6)
    w1, b1 = _conv_param_torch(keys[0], 10, 3, 5)
    w2, b2 = _conv_param_torch(keys[1], 20, 88, 5)
    conv1_w, conv1_b = _to_matmul(w1, b1)                     # (75, 10)
    conv2_w, conv2_b = _to_matmul(w2, b2)                     # (2200, 20)
    fc_w = (jax.random.normal(keys[4], (2200, 10), jnp.float32) * 0.02
            ).astype(jnp.bfloat16)
    fc_b = (jax.random.normal(keys[5], (10,), jnp.float32) * 0.02).reshape(1, 10)
    return {
        "conv1_w": conv1_w, "conv1_b": conv1_b,
        "conv2_w": conv2_w, "conv2_b": conv2_b,
        "incep1": make_inception_params(keys[2], 10),
        "incep2": make_inception_params(keys[3], 20),
        "fc_w": fc_w, "fc_b": fc_b,
    }


# ----------------------------------------------------------------------------
# Forward pass.
# ----------------------------------------------------------------------------
def inception_forward(x, p):
    # One matmul for the three 1x1 branch convs that share x (N = 48).
    f = conv1x1_nhwc(x, p["fused1x1_w"], p["fused1x1_b"])
    s3 = f[..., 0:16]          # branch3x3_1 output
    s5 = f[..., 16:32]         # branch5x5_1 output
    b1 = f[..., 32:48]         # branch1x1 output
    b3 = conv2d_nhwc(s3, p["b3_2_w"], p["b3_2_b"], k=3, padding=1)
    b3 = conv2d_nhwc(b3, p["b3_3_w"], p["b3_3_b"], k=3, padding=1)
    b5 = conv2d_nhwc(s5, p["b5_2_w"], p["b5_2_b"], k=5, padding=2)
    bp = conv2d_nhwc(x, p["bp_w"], p["bp_b"], k=3, padding=1)   # avgpool+1x1 folded
    # channel concat order matches torch.cat([b3, b5, b1, bp], dim=1)
    return jnp.concatenate([b3, b5, b1, bp], axis=-1)           # (..., 88)


def net_forward(x_nchw, params):
    # Single layout change at the entry: NCHW f32 -> NHWC bf16.
    x = jnp.transpose(x_nchw, (0, 2, 3, 1)).astype(jnp.bfloat16)
    # relu(maxpool(conv(x))) == maxpool(relu(conv(x))) (ReLU monotone) ->
    # the ReLU is fused into the conv's Pallas matmul kernel.
    x = maxpool2x2_nhwc(conv2d_nhwc(x, params["conv1_w"], params["conv1_b"],
                                    k=5, relu=True))            # (B,14,14,10)
    x = inception_forward(x, params["incep1"])                  # (B,14,14,88)
    x = maxpool2x2_nhwc(conv2d_nhwc(x, params["conv2_w"], params["conv2_b"],
                                    k=5, relu=True))            # (B,5,5,20)
    x = inception_forward(x, params["incep2"])                  # (B,5,5,88)
    b = x.shape[0]
    # Match torch.Flatten() of NCHW (channel-major feature ordering).
    x = jnp.transpose(x, (0, 3, 1, 2)).reshape(b, -1)           # (B,2200)
    return matmul_bias(x, params["fc_w"], params["fc_b"],
                       out_dtype=jnp.float32)                   # (B,10)


if __name__ == "__main__":
    key = jax.random.PRNGKey(0)
    pkey, xkey = jax.random.split(key)
    params = make_net_params(pkey)
    x = jax.random.normal(xkey, (2, 3, 32, 32), jnp.float32)    # NCHW
    out = jax.jit(net_forward)(x, params)
    out = jax.block_until_ready(out)
    assert out.shape == (2, 10) and out.dtype == jnp.float32
    assert bool(jnp.all(jnp.isfinite(out)))
    print("KERNEL_OK")
</pallas_src>

<mosaic_0001>
module attributes {stable_mosaic.version = 11 : i64} {
  func.func @_matmul_bias_kernel(%arg0: i32, %arg1: memref<512x75xbf16, #tpu.memory_space<vmem>>, %arg2: memref<75x10xbf16, #tpu.memory_space<vmem>>, %arg3: memref<1x10xf32, #tpu.memory_space<vmem>>, %arg4: memref<512x10xbf16, #tpu.memory_space<vmem>>) attributes {dimension_semantics = [#tpu.dimension_semantics<parallel>], iteration_bounds = array<i64: 4>, scalar_prefetch = 0 : i64, scratch_operands = 0 : i64, tpu.core_type = #tpu.core_type<tc>, window_params = [{transform_indices = @transform_0, window_bounds = array<i64: 512, 75>}, {pipeline_mode = #tpu.pipeline_mode<synchronous>, transform_indices = @transform_1, window_bounds = array<i64: 75, 10>}, {pipeline_mode = #tpu.pipeline_mode<synchronous>, transform_indices = @transform_2, window_bounds = array<i64: 1, 10>}, {transform_indices = @transform_3, window_bounds = array<i64: 512, 10>}]} {
    %c0 = arith.constant 0 : index
    %c0_0 = arith.constant 0 : index
    %0 = vector.load %arg1[%c0, %c0_0] : memref<512x75xbf16, #tpu.memory_space<vmem>>, vector<512x75xbf16>
    %c0_1 = arith.constant 0 : index
    %c0_2 = arith.constant 0 : index
    %1 = vector.load %arg2[%c0_1, %c0_2] : memref<75x10xbf16, #tpu.memory_space<vmem>>, vector<75x10xbf16>
    %cst = arith.constant dense<0.000000e+00> : vector<512x10xf32>
    %2 = tpu.matmul %0, %1, %cst {dimension_numbers = #tpu.dot_dimension_numbers<[1], [0], [0], [1], [0, 0, 1, 1], [], []>} : vector<512x75xbf16>, vector<75x10xbf16>, vector<512x10xf32> -> vector<512x10xf32>
    %c0_3 = arith.constant 0 : index
    %c0_4 = arith.constant 0 : index
    %3 = vector.load %arg3[%c0_3, %c0_4] : memref<1x10xf32, #tpu.memory_space<vmem>>, vector<1x10xf32>
    %4 = vector.broadcast %3 : vector<1x10xf32> to vector<512x10xf32>
    %5 = arith.addf %2, %4 : vector<512x10xf32>
    %cst_5 = arith.constant 0.000000e+00 : f32
    %6 = vector.broadcast %cst_5 : f32 to vector<512x10xf32>
    %7 = arith.maximumf %5, %6 : vector<512x10xf32>
    %8 = arith.truncf %7 : vector<512x10xf32> to vector<512x10xbf16>
    %c0_6 = arith.constant 0 : index
    %c0_7 = arith.constant 0 : index
    %9 = vector.load %arg4[%c0_6, %c0_7] : memref<512x10xbf16, #tpu.memory_space<vmem>>, vector<512x10xbf16>
    tpu.vector_store %arg4[%c0_6, %c0_7], %8 {strides = array<i32>} : memref<512x10xbf16, #tpu.memory_space<vmem>>, vector<512x10xbf16>,
    return
  }
  func.func @transform_0(%arg0: i32) -> (i32, i32) {
    %c0_i32 = arith.constant 0 : i32
    %c0_i32_0 = arith.constant 0 : i32
    return %arg0, %c0_i32 : i32, i32
  }
  func.func @transform_1(%arg0: i32) -> (i32, i32) {
    %c0_i32 = arith.constant 0 : i32
    %c0_i32_0 = arith.constant 0 : i32
    %c0_i32_1 = arith.constant 0 : i32
    return %c0_i32, %c0_i32_0 : i32, i32
  }
  func.func @transform_2(%arg0: i32) -> (i32, i32) {
    %c0_i32 = arith.constant 0 : i32
    %c0_i32_0 = arith.constant 0 : i32
    %c0_i32_1 = arith.constant 0 : i32
    return %c0_i32, %c0_i32_0 : i32, i32
  }
  func.func @transform_3(%arg0: i32) -> (i32, i32) {
    %c0_i32 = arith.constant 0 : i32
    %c0_i32_0 = arith.constant 0 : i32
    return %arg0, %c0_i32 : i32, i32
  }
}

module attributes {stable_mosaic.version = 11 : i64} {
  func.func @_matmul_bias_kernel(%arg0: i32, %arg1: memref<392x10xbf16, #tpu.memory_space<vmem>>, %arg2: memref<10x48xbf16, #tpu.memory_space<vmem>>, %arg3: memref<1x48xf32, #tpu.memory_space<vmem>>, %arg4: memref<392x48xbf16, #tpu.memory_space<vmem>>) attributes {dimension_semantics = [#tpu.dimension_semantics<parallel>], iteration_bounds = array<i64: 1>, scalar_prefetch = 0 : i64, scratch_operands = 0 : i64, tpu.core_type = #tpu.core_type<tc>, window_params = [{transform_indices = @transform_0, window_bounds = array<i64: 392, 10>}, {pipeline_mode = #tpu.pipeline_mode<synchronous>, transform_indices = @transform_1, window_bounds = array<i64: 10, 48>}, {pipeline_mode = #tpu.pipeline_mode<synchronous>, transform_indices = @transform_2, window_bounds = array<i64: 1, 48>}, {transform_indices = @transform_3, window_bounds = array<i64: 392, 48>}]} {
    %c0 = arith.constant 0 : index
    %c0_0 = arith.constant 0 : index
    %0 = vector.load %arg1[%c0, %c0_0] : memref<392x10xbf16, #tpu.memory_space<vmem>>, vector<392x10xbf16>
    %c0_1 = arith.constant 0 : index
    %c0_2 = arith.constant 0 : index
    %1 = vector.load %arg2[%c0_1, %c0_2] : memref<10x48xbf16, #tpu.memory_space<vmem>>, vector<10x48xbf16>
    %cst = arith.constant dense<0.000000e+00> : vector<392x48xf32>
    %2 = tpu.matmul %0, %1, %cst {dimension_numbers = #tpu.dot_dimension_numbers<[1], [0], [0], [1], [0, 0, 1, 1], [], []>} : vector<392x10xbf16>, vector<10x48xbf16>, vector<392x48xf32> -> vector<392x48xf32>
    %c0_3 = arith.constant 0 : index
    %c0_4 = arith.constant 0 : index
    %3 = vector.load %arg3[%c0_3, %c0_4] : memref<1x48xf32, #tpu.memory_space<vmem>>, vector<1x48xf32>
    %4 = vector.broadcast %3 : vector<1x48xf32> to vector<392x48xf32>
    %5 = arith.addf %2, %4 : vector<392x48xf32>
    %6 = arith.truncf %5 : vector<392x48xf32> to vector<392x48xbf16>
    %c0_5 = arith.constant 0 : index
    %c0_6 = arith.constant 0 : index
    %7 = vector.load %arg4[%c0_5, %c0_6] : memref<392x48xbf16, #tpu.memory_space<vmem>>, vector<392x48xbf16>
    tpu.vector_store %arg4[%c0_5, %c0_6], %6 {strides = array<i32>} : memref<392x48xbf16, #tpu.memory_space<vmem>>, vector<392x48xbf16>,
    return
  }
  func.func @transform_0(%arg0: i32) -> (i32, i32) {
    %c0_i32 = arith.constant 0 : i32
    %c0_i32_0 = arith.constant 0 : i32
    return %arg0, %c0_i32 : i32, i32
  }
  func.func @transform_1(%arg0: i32) -> (i32, i32) {
    %c0_i32 = arith.constant 0 : i32
    %c0_i32_0 = arith.constant 0 : i32
    %c0_i32_1 = arith.constant 0 : i32
    return %c0_i32, %c0_i32_0 : i32, i32
  }
  func.func @transform_2(%arg0: i32) -> (i32, i32) {
    %c0_i32 = arith.constant 0 : i32
    %c0_i32_0 = arith.constant 0 : i32
    %c0_i32_1 = arith.constant 0 : i32
    return %c0_i32, %c0_i32_0 : i32, i32
  }
  func.func @transform_3(%arg0: i32) -> (i32, i32) {
    %c0_i32 = arith.constant 0 : i32
    %c0_i32_0 = arith.constant 0 : i32
    return %arg0, %c0_i32 : i32, i32
  }
}

module attributes {stable_mosaic.version = 11 : i64} {
  func.func @_matmul_bias_kernel(%arg0: i32, %arg1: memref<392x144xbf16, #tpu.memory_space<vmem>>, %arg2: memref<144x24xbf16, #tpu.memory_space<vmem>>, %arg3: memref<1x24xf32, #tpu.memory_space<vmem>>, %arg4: memref<392x24xbf16, #tpu.memory_space<vmem>>) attributes {dimension_semantics = [#tpu.dimension_semantics<parallel>], iteration_bounds = array<i64: 1>, scalar_prefetch = 0 : i64, scratch_operands = 0 : i64, tpu.core_type = #tpu.core_type<tc>, window_params = [{transform_indices = @transform_0, window_bounds = array<i64: 392, 144>}, {pipeline_mode = #tpu.pipeline_mode<synchronous>, transform_indices = @transform_1, window_bounds = array<i64: 144, 24>}, {pipeline_mode = #tpu.pipeline_mode<synchronous>, transform_indices = @transform_2, window_bounds = array<i64: 1, 24>}, {transform_indices = @transform_3, window_bounds = array<i64: 392, 24>}]} {
    %c0 = arith.constant 0 : index
    %c0_0 = arith.constant 0 : index
    %0 = vector.load %arg1[%c0, %c0_0] : memref<392x144xbf16, #tpu.memory_space<vmem>>, vector<392x144xbf16>
    %c0_1 = arith.constant 0 : index
    %c0_2 = arith.constant 0 : index
    %1 = vector.load %arg2[%c0_1, %c0_2] : memref<144x24xbf16, #tpu.memory_space<vmem>>, vector<144x24xbf16>
    %cst = arith.constant dense<0.000000e+00> : vector<392x24xf32>
    %2 = tpu.matmul %0, %1, %cst {dimension_numbers = #tpu.dot_dimension_numbers<[1], [0], [0], [1], [0, 0, 1, 1], [], []>} : vector<392x144xbf16>, vector<144x24xbf16>, vector<392x24xf32> -> vector<392x24xf32>
    %c0_3 = arith.constant 0 : index
    %c0_4 = arith.constant 0 : index
    %3 = vector.load %arg3[%c0_3, %c0_4] : memref<1x24xf32, #tpu.memory_space<vmem>>, vector<1x24xf32>
    %4 = vector.broadcast %3 : vector<1x24xf32> to vector<392x24xf32>
    %5 = arith.addf %2, %4 : vector<392x24xf32>
    %6 = arith.truncf %5 : vector<392x24xf32> to vector<392x24xbf16>
    %c0_5 = arith.constant 0 : index
    %c0_6 = arith.constant 0 : index
    %7 = vector.load %arg4[%c0_5, %c0_6] : memref<392x24xbf16, #tpu.memory_space<vmem>>, vector<392x24xbf16>
    tpu.vector_store %arg4[%c0_5, %c0_6], %6 {strides = array<i32>} : memref<392x24xbf16, #tpu.memory_space<vmem>>, vector<392x24xbf16>,
    return
  }
  func.func @transform_0(%arg0: i32) -> (i32, i32) {
    %c0_i32 = arith.constant 0 : i32
    %c0_i32_0 = arith.constant 0 : i32
    return %arg0, %c0_i32 : i32, i32
  }
  func.func @transform_1(%arg0: i32) -> (i32, i32) {
    %c0_i32 = arith.constant 0 : i32
    %c0_i32_0 = arith.constant 0 : i32
    %c0_i32_1 = arith.constant 0 : i32
    return %c0_i32, %c0_i32_0 : i32, i32
  }
  func.func @transform_2(%arg0: i32) -> (i32, i32) {
    %c0_i32 = arith.constant 0 : i32
    %c0_i32_0 = arith.constant 0 : i32
    %c0_i32_1 = arith.constant 0 : i32
    return %c0_i32, %c0_i32_0 : i32, i32
  }
  func.func @transform_3(%arg0: i32) -> (i32, i32) {
    %c0_i32 = arith.constant 0 : i32
    %c0_i32_0 = arith.constant 0 : i32
    return %arg0, %c0_i32 : i32, i32
  }
}

module attributes {stable_mosaic.version = 11 : i64} {
  func.func @_matmul_bias_kernel(%arg0: i32, %arg1: memref<392x216xbf16, #tpu.memory_space<vmem>>, %arg2: memref<216x24xbf16, #tpu.memory_space<vmem>>, %arg3: memref<1x24xf32, #tpu.memory_space<vmem>>, %arg4: memref<392x24xbf16, #tpu.memory_space<vmem>>) attributes {dimension_semantics = [#tpu.dimension_semantics<parallel>], iteration_bounds = array<i64: 1>, scalar_prefetch = 0 : i64, scratch_operands = 0 : i64, tpu.core_type = #tpu.core_type<tc>, window_params = [{transform_indices = @transform_0, window_bounds = array<i64: 392, 216>}, {pipeline_mode = #tpu.pipeline_mode<synchronous>, transform_indices = @transform_1, window_bounds = array<i64: 216, 24>}, {pipeline_mode = #tpu.pipeline_mode<synchronous>, transform_indices = @transform_2, window_bounds = array<i64: 1, 24>}, {transform_indices = @transform_3, window_bounds = array<i64: 392, 24>}]} {
    %c0 = arith.constant 0 : index
    %c0_0 = arith.constant 0 : index
    %0 = vector.load %arg1[%c0, %c0_0] : memref<392x216xbf16, #tpu.memory_space<vmem>>, vector<392x216xbf16>
    %c0_1 = arith.constant 0 : index
    %c0_2 = arith.constant 0 : index
    %1 = vector.load %arg2[%c0_1, %c0_2] : memref<216x24xbf16, #tpu.memory_space<vmem>>, vector<216x24xbf16>
    %cst = arith.constant dense<0.000000e+00> : vector<392x24xf32>
    %2 = tpu.matmul %0, %1, %cst {dimension_numbers = #tpu.dot_dimension_numbers<[1], [0], [0], [1], [0, 0, 1, 1], [], []>} : vector<392x216xbf16>, vector<216x24xbf16>, vector<392x24xf32> -> vector<392x24xf32>
    %c0_3 = arith.constant 0 : index
    %c0_4 = arith.constant 0 : index
    %3 = vector.load %arg3[%c0_3, %c0_4] : memref<1x24xf32, #tpu.memory_space<vmem>>, vector<1x24xf32>
    %4 = vector.broadcast %3 : vector<1x24xf32> to vector<392x24xf32>
    %5 = arith.addf %2, %4 : vector<392x24xf32>
    %6 = arith.truncf %5 : vector<392x24xf32> to vector<392x24xbf16>
    %c0_5 = arith.constant 0 : index
    %c0_6 = arith.constant 0 : index
    %7 = vector.load %arg4[%c0_5, %c0_6] : memref<392x24xbf16, #tpu.memory_space<vmem>>, vector<392x24xbf16>
    tpu.vector_store %arg4[%c0_5, %c0_6], %6 {strides = array<i32>} : memref<392x24xbf16, #tpu.memory_space<vmem>>, vector<392x24xbf16>,
    return
  }
  func.func @transform_0(%arg0: i32) -> (i32, i32) {
    %c0_i32 = arith.constant 0 : i32
    %c0_i32_0 = arith.constant 0 : i32
    return %arg0, %c0_i32 : i32, i32
  }
  func.func @transform_1(%arg0: i32) -> (i32, i32) {
    %c0_i32 = arith.constant 0 : i32
    %c0_i32_0 = arith.constant 0 : i32
    %c0_i32_1 = arith.constant 0 : i32
    return %c0_i32, %c0_i32_0 : i32, i32
  }
  func.func @transform_2(%arg0: i32) -> (i32, i32) {
    %c0_i32 = arith.constant 0 : i32
    %c0_i32_0 = arith.constant 0 : i32
    %c0_i32_1 = arith.constant 0 : i32
    return %c0_i32, %c0_i32_0 : i32, i32
  }
  func.func @transform_3(%arg0: i32) -> (i32, i32) {
    %c0_i32 = arith.constant 0 : i32
    %c0_i32_0 = arith.constant 0 : i32
    return %arg0, %c0_i32 : i32, i32
  }
}

module attributes {stable_mosaic.version = 11 : i64} {
  func.func @_matmul_bias_kernel(%arg0: i32, %arg1: memref<392x400xbf16, #tpu.memory_space<vmem>>, %arg2: memref<400x24xbf16, #tpu.memory_space<vmem>>, %arg3: memref<1x24xf32, #tpu.memory_space<vmem>>, %arg4: memref<392x24xbf16, #tpu.memory_space<vmem>>) attributes {dimension_semantics = [#tpu.dimension_semantics<parallel>], iteration_bounds = array<i64: 1>, scalar_prefetch = 0 : i64, scratch_operands = 0 : i64, tpu.core_type = #tpu.core_type<tc>, window_params = [{transform_indices = @transform_0, window_bounds = array<i64: 392, 400>}, {pipeline_mode = #tpu.pipeline_mode<synchronous>, transform_indices = @transform_1, window_bounds = array<i64: 400, 24>}, {pipeline_mode = #tpu.pipeline_mode<synchronous>, transform_indices = @transform_2, window_bounds = array<i64: 1, 24>}, {transform_indices = @transform_3, window_bounds = array<i64: 392, 24>}]} {
    %c0 = arith.constant 0 : index
    %c0_0 = arith.constant 0 : index
    %0 = vector.load %arg1[%c0, %c0_0] : memref<392x400xbf16, #tpu.memory_space<vmem>>, vector<392x400xbf16>
    %c0_1 = arith.constant 0 : index
    %c0_2 = arith.constant 0 : index
    %1 = vector.load %arg2[%c0_1, %c0_2] : memref<400x24xbf16, #tpu.memory_space<vmem>>, vector<400x24xbf16>
    %cst = arith.constant dense<0.000000e+00> : vector<392x24xf32>
    %2 = tpu.matmul %0, %1, %cst {dimension_numbers = #tpu.dot_dimension_numbers<[1], [0], [0], [1], [0, 0, 1, 1], [], []>} : vector<392x400xbf16>, vector<400x24xbf16>, vector<392x24xf32> -> vector<392x24xf32>
    %c0_3 = arith.constant 0 : index
    %c0_4 = arith.constant 0 : index
    %3 = vector.load %arg3[%c0_3, %c0_4] : memref<1x24xf32, #tpu.memory_space<vmem>>, vector<1x24xf32>
    %4 = vector.broadcast %3 : vector<1x24xf32> to vector<392x24xf32>
    %5 = arith.addf %2, %4 : vector<392x24xf32>
    %6 = arith.truncf %5 : vector<392x24xf32> to vector<392x24xbf16>
    %c0_5 = arith.constant 0 : index
    %c0_6 = arith.constant 0 : index
    %7 = vector.load %arg4[%c0_5, %c0_6] : memref<392x24xbf16, #tpu.memory_space<vmem>>, vector<392x24xbf16>
    tpu.vector_store %arg4[%c0_5, %c0_6], %6 {strides = array<i32>} : memref<392x24xbf16, #tpu.memory_space<vmem>>, vector<392x24xbf16>,
    return
  }
  func.func @transform_0(%arg0: i32) -> (i32, i32) {
    %c0_i32 = arith.constant 0 : i32
    %c0_i32_0 = arith.constant 0 : i32
    return %arg0, %c0_i32 : i32, i32
  }
  func.func @transform_1(%arg0: i32) -> (i32, i32) {
    %c0_i32 = arith.constant 0 : i32
    %c0_i32_0 = arith.constant 0 : i32
    %c0_i32_1 = arith.constant 0 : i32
    return %c0_i32, %c0_i32_0 : i32, i32
  }
  func.func @transform_2(%arg0: i32) -> (i32, i32) {
    %c0_i32 = arith.constant 0 : i32
    %c0_i32_0 = arith.constant 0 : i32
    %c0_i32_1 = arith.constant 0 : i32
    return %c0_i32, %c0_i32_0 : i32, i32
  }
  func.func @transform_3(%arg0: i32) -> (i32, i32) {
    %c0_i32 = arith.constant 0 : i32
    %c0_i32_0 = arith.constant 0 : i32
    return %arg0, %c0_i32 : i32, i32
  }
}

module attributes {stable_mosaic.version = 11 : i64} {
  func.func @_matmul_bias_kernel(%arg0: i32, %arg1: memref<392x90xbf16, #tpu.memory_space<vmem>>, %arg2: memref<90x24xbf16, #tpu.memory_space<vmem>>, %arg3: memref<1x24xf32, #tpu.memory_space<vmem>>, %arg4: memref<392x24xbf16, #tpu.memory_space<vmem>>) attributes {dimension_semantics = [#tpu.dimension_semantics<parallel>], iteration_bounds = array<i64: 1>, scalar_prefetch = 0 : i64, scratch_operands = 0 : i64, tpu.core_type = #tpu.core_type<tc>, window_params = [{transform_indices = @transform_0, window_bounds = array<i64: 392, 90>}, {pipeline_mode = #tpu.pipeline_mode<synchronous>, transform_indices = @transform_1, window_bounds = array<i64: 90, 24>}, {pipeline_mode = #tpu.pipeline_mode<synchronous>, transform_indices = @transform_2, window_bounds = array<i64: 1, 24>}, {transform_indices = @transform_3, window_bounds = array<i64: 392, 24>}]} {
    %c0 = arith.constant 0 : index
    %c0_0 = arith.constant 0 : index
    %0 = vector.load %arg1[%c0, %c0_0] : memref<392x90xbf16, #tpu.memory_space<vmem>>, vector<392x90xbf16>
    %c0_1 = arith.constant 0 : index
    %c0_2 = arith.constant 0 : index
    %1 = vector.load %arg2[%c0_1, %c0_2] : memref<90x24xbf16, #tpu.memory_space<vmem>>, vector<90x24xbf16>
    %cst = arith.constant dense<0.000000e+00> : vector<392x24xf32>
    %2 = tpu.matmul %0, %1, %cst {dimension_numbers = #tpu.dot_dimension_numbers<[1], [0], [0], [1], [0, 0, 1, 1], [], []>} : vector<392x90xbf16>, vector<90x24xbf16>, vector<392x24xf32> -> vector<392x24xf32>
    %c0_3 = arith.constant 0 : index
    %c0_4 = arith.constant 0 : index
    %3 = vector.load %arg3[%c0_3, %c0_4] : memref<1x24xf32, #tpu.memory_space<vmem>>, vector<1x24xf32>
    %4 = vector.broadcast %3 : vector<1x24xf32> to vector<392x24xf32>
    %5 = arith.addf %2, %4 : vector<392x24xf32>
    %6 = arith.truncf %5 : vector<392x24xf32> to vector<392x24xbf16>
    %c0_5 = arith.constant 0 : index
    %c0_6 = arith.constant 0 : index
    %7 = vector.load %arg4[%c0_5, %c0_6] : memref<392x24xbf16, #tpu.memory_space<vmem>>, vector<392x24xbf16>
    tpu.vector_store %arg4[%c0_5, %c0_6], %6 {strides = array<i32>} : memref<392x24xbf16, #tpu.memory_space<vmem>>, vector<392x24xbf16>,
    return
  }
  func.func @transform_0(%arg0: i32) -> (i32, i32) {
    %c0_i32 = arith.constant 0 : i32
    %c0_i32_0 = arith.constant 0 : i32
    return %arg0, %c0_i32 : i32, i32
  }
  func.func @transform_1(%arg0: i32) -> (i32, i32) {
    %c0_i32 = arith.constant 0 : i32
    %c0_i32_0 = arith.constant 0 : i32
    %c0_i32_1 = arith.constant 0 : i32
    return %c0_i32, %c0_i32_0 : i32, i32
  }
  func.func @transform_2(%arg0: i32) -> (i32, i32) {
    %c0_i32 = arith.constant 0 : i32
    %c0_i32_0 = arith.constant 0 : i32
    %c0_i32_1 = arith.constant 0 : i32
    return %c0_i32, %c0_i32_0 : i32, i32
  }
  func.func @transform_3(%arg0: i32) -> (i32, i32) {
    %c0_i32 = arith.constant 0 : i32
    %c0_i32_0 = arith.constant 0 : i32
    return %arg0, %c0_i32 : i32, i32
  }
}

module attributes {stable_mosaic.version = 11 : i64} {
  func.func @_matmul_bias_kernel(%arg0: i32, %arg1: memref<200x2200xbf16, #tpu.memory_space<vmem>>, %arg2: memref<2200x20xbf16, #tpu.memory_space<vmem>>, %arg3: memref<1x20xf32, #tpu.memory_space<vmem>>, %arg4: memref<200x20xbf16, #tpu.memory_space<vmem>>) attributes {dimension_semantics = [#tpu.dimension_semantics<parallel>], iteration_bounds = array<i64: 1>, scalar_prefetch = 0 : i64, scratch_operands = 0 : i64, tpu.core_type = #tpu.core_type<tc>, window_params = [{transform_indices = @transform_0, window_bounds = array<i64: 200, 2200>}, {pipeline_mode = #tpu.pipeline_mode<synchronous>, transform_indices = @transform_1, window_bounds = array<i64: 2200, 20>}, {pipeline_mode = #tpu.pipeline_mode<synchronous>, transform_indices = @transform_2, window_bounds = array<i64: 1, 20>}, {transform_indices = @transform_3, window_bounds = array<i64: 200, 20>}]} {
    %c0 = arith.constant 0 : index
    %c0_0 = arith.constant 0 : index
    %0 = vector.load %arg1[%c0, %c0_0] : memref<200x2200xbf16, #tpu.memory_space<vmem>>, vector<200x2200xbf16>
    %c0_1 = arith.constant 0 : index
    %c0_2 = arith.constant 0 : index
    %1 = vector.load %arg2[%c0_1, %c0_2] : memref<2200x20xbf16, #tpu.memory_space<vmem>>, vector<2200x20xbf16>
    %cst = arith.constant dense<0.000000e+00> : vector<200x20xf32>
    %2 = tpu.matmul %0, %1, %cst {dimension_numbers = #tpu.dot_dimension_numbers<[1], [0], [0], [1], [0, 0, 1, 1], [], []>} : vector<200x2200xbf16>, vector<2200x20xbf16>, vector<200x20xf32> -> vector<200x20xf32>
    %c0_3 = arith.constant 0 : index
    %c0_4 = arith.constant 0 : index
    %3 = vector.load %arg3[%c0_3, %c0_4] : memref<1x20xf32, #tpu.memory_space<vmem>>, vector<1x20xf32>
    %4 = vector.broadcast %3 : vector<1x20xf32> to vector<200x20xf32>
    %5 = arith.addf %2, %4 : vector<200x20xf32>
    %cst_5 = arith.constant 0.000000e+00 : f32
    %6 = vector.broadcast %cst_5 : f32 to vector<200x20xf32>
    %7 = arith.maximumf %5, %6 : vector<200x20xf32>
    %8 = arith.truncf %7 : vector<200x20xf32> to vector<200x20xbf16>
    %c0_6 = arith.constant 0 : index
    %c0_7 = arith.constant 0 : index
    %9 = vector.load %arg4[%c0_6, %c0_7] : memref<200x20xbf16, #tpu.memory_space<vmem>>, vector<200x20xbf16>
    tpu.vector_store %arg4[%c0_6, %c0_7], %8 {strides = array<i32>} : memref<200x20xbf16, #tpu.memory_space<vmem>>, vector<200x20xbf16>,
    return
  }
  func.func @transform_0(%arg0: i32) -> (i32, i32) {
    %c0_i32 = arith.constant 0 : i32
    %c0_i32_0 = arith.constant 0 : i32
    return %arg0, %c0_i32 : i32, i32
  }
  func.func @transform_1(%arg0: i32) -> (i32, i32) {
    %c0_i32 = arith.constant 0 : i32
    %c0_i32_0 = arith.constant 0 : i32
    %c0_i32_1 = arith.constant 0 : i32
    return %c0_i32, %c0_i32_0 : i32, i32
  }
  func.func @transform_2(%arg0: i32) -> (i32, i32) {
    %c0_i32 = arith.constant 0 : i32
    %c0_i32_0 = arith.constant 0 : i32
    %c0_i32_1 = arith.constant 0 : i32
    return %c0_i32, %c0_i32_0 : i32, i32
  }
  func.func @transform_3(%arg0: i32) -> (i32, i32) {
    %c0_i32 = arith.constant 0 : i32
    %c0_i32_0 = arith.constant 0 : i32
    return %arg0, %c0_i32 : i32, i32
  }
}

module attributes {stable_mosaic.version = 11 : i64} {
  func.func @_matmul_bias_kernel(%arg0: i32, %arg1: memref<50x20xbf16, #tpu.memory_space<vmem>>, %arg2: memref<20x48xbf16, #tpu.memory_space<vmem>>, %arg3: memref<1x48xf32, #tpu.memory_space<vmem>>, %arg4: memref<50x48xbf16, #tpu.memory_space<vmem>>) attributes {dimension_semantics = [#tpu.dimension_semantics<parallel>], iteration_bounds = array<i64: 1>, scalar_prefetch = 0 : i64, scratch_operands = 0 : i64, tpu.core_type = #tpu.core_type<tc>, window_params = [{transform_indices = @transform_0, window_bounds = array<i64: 50, 20>}, {pipeline_mode = #tpu.pipeline_mode<synchronous>, transform_indices = @transform_1, window_bounds = array<i64: 20, 48>}, {pipeline_mode = #tpu.pipeline_mode<synchronous>, transform_indices = @transform_2, window_bounds = array<i64: 1, 48>}, {transform_indices = @transform_3, window_bounds = array<i64: 50, 48>}]} {
    %c0 = arith.constant 0 : index
    %c0_0 = arith.constant 0 : index
    %0 = vector.load %arg1[%c0, %c0_0] : memref<50x20xbf16, #tpu.memory_space<vmem>>, vector<50x20xbf16>
    %c0_1 = arith.constant 0 : index
    %c0_2 = arith.constant 0 : index
    %1 = vector.load %arg2[%c0_1, %c0_2] : memref<20x48xbf16, #tpu.memory_space<vmem>>, vector<20x48xbf16>
    %cst = arith.constant dense<0.000000e+00> : vector<50x48xf32>
    %2 = tpu.matmul %0, %1, %cst {dimension_numbers = #tpu.dot_dimension_numbers<[1], [0], [0], [1], [0, 0, 1, 1], [], []>} : vector<50x20xbf16>, vector<20x48xbf16>, vector<50x48xf32> -> vector<50x48xf32>
    %c0_3 = arith.constant 0 : index
    %c0_4 = arith.constant 0 : index
    %3 = vector.load %arg3[%c0_3, %c0_4] : memref<1x48xf32, #tpu.memory_space<vmem>>, vector<1x48xf32>
    %4 = vector.broadcast %3 : vector<1x48xf32> to vector<50x48xf32>
    %5 = arith.addf %2, %4 : vector<50x48xf32>
    %6 = arith.truncf %5 : vector<50x48xf32> to vector<50x48xbf16>
    %c0_5 = arith.constant 0 : index
    %c0_6 = arith.constant 0 : index
    %7 = vector.load %arg4[%c0_5, %c0_6] : memref<50x48xbf16, #tpu.memory_space<vmem>>, vector<50x48xbf16>
    tpu.vector_store %arg4[%c0_5, %c0_6], %6 {strides = array<i32>} : memref<50x48xbf16, #tpu.memory_space<vmem>>, vector<50x48xbf16>,
    return
  }
  func.func @transform_0(%arg0: i32) -> (i32, i32) {
    %c0_i32 = arith.constant 0 : i32
    %c0_i32_0 = arith.constant 0 : i32
    return %arg0, %c0_i32 : i32, i32
  }
  func.func @transform_1(%arg0: i32) -> (i32, i32) {
    %c0_i32 = arith.constant 0 : i32
    %c0_i32_0 = arith.constant 0 : i32
    %c0_i32_1 = arith.constant 0 : i32
    return %c0_i32, %c0_i32_0 : i32, i32
  }
  func.func @transform_2(%arg0: i32) -> (i32, i32) {
    %c0_i32 = arith.constant 0 : i32
    %c0_i32_0 = arith.constant 0 : i32
    %c0_i32_1 = arith.constant 0 : i32
    return %c0_i32, %c0_i32_0 : i32, i32
  }
  func.func @transform_3(%arg0: i32) -> (i32, i32) {
    %c0_i32 = arith.constant 0 : i32
    %c0_i32_0 = arith.constant 0 : i32
    return %arg0, %c0_i32 : i32, i32
  }
}

module attributes {stable_mosaic.version = 11 : i64} {
  func.func @_matmul_bias_kernel(%arg0: i32, %arg1: memref<50x144xbf16, #tpu.memory_space<vmem>>, %arg2: memref<144x24xbf16, #tpu.memory_space<vmem>>, %arg3: memref<1x24xf32, #tpu.memory_space<vmem>>, %arg4: memref<50x24xbf16, #tpu.memory_space<vmem>>) attributes {dimension_semantics = [#tpu.dimension_semantics<parallel>], iteration_bounds = array<i64: 1>, scalar_prefetch = 0 : i64, scratch_operands = 0 : i64, tpu.core_type = #tpu.core_type<tc>, window_params = [{transform_indices = @transform_0, window_bounds = array<i64: 50, 144>}, {pipeline_mode = #tpu.pipeline_mode<synchronous>, transform_indices = @transform_1, window_bounds = array<i64: 144, 24>}, {pipeline_mode = #tpu.pipeline_mode<synchronous>, transform_indices = @transform_2, window_bounds = array<i64: 1, 24>}, {transform_indices = @transform_3, window_bounds = array<i64: 50, 24>}]} {
    %c0 = arith.constant 0 : index
    %c0_0 = arith.constant 0 : index
    %0 = vector.load %arg1[%c0, %c0_0] : memref<50x144xbf16, #tpu.memory_space<vmem>>, vector<50x144xbf16>
    %c0_1 = arith.constant 0 : index
    %c0_2 = arith.constant 0 : index
    %1 = vector.load %arg2[%c0_1, %c0_2] : memref<144x24xbf16, #tpu.memory_space<vmem>>, vector<144x24xbf16>
    %cst = arith.constant dense<0.000000e+00> : vector<50x24xf32>
    %2 = tpu.matmul %0, %1, %cst {dimension_numbers = #tpu.dot_dimension_numbers<[1], [0], [0], [1], [0, 0, 1, 1], [], []>} : vector<50x144xbf16>, vector<144x24xbf16>, vector<50x24xf32> -> vector<50x24xf32>
    %c0_3 = arith.constant 0 : index
    %c0_4 = arith.constant 0 : index
    %3 = vector.load %arg3[%c0_3, %c0_4] : memref<1x24xf32, #tpu.memory_space<vmem>>, vector<1x24xf32>
    %4 = vector.broadcast %3 : vector<1x24xf32> to vector<50x24xf32>
    %5 = arith.addf %2, %4 : vector<50x24xf32>
    %6 = arith.truncf %5 : vector<50x24xf32> to vector<50x24xbf16>
    %c0_5 = arith.constant 0 : index
    %c0_6 = arith.constant 0 : index
    %7 = vector.load %arg4[%c0_5, %c0_6] : memref<50x24xbf16, #tpu.memory_space<vmem>>, vector<50x24xbf16>
    tpu.vector_store %arg4[%c0_5, %c0_6], %6 {strides = array<i32>} : memref<50x24xbf16, #tpu.memory_space<vmem>>, vector<50x24xbf16>,
    return
  }
  func.func @transform_0(%arg0: i32) -> (i32, i32) {
    %c0_i32 = arith.constant 0 : i32
    %c0_i32_0 = arith.constant 0 : i32
    return %arg0, %c0_i32 : i32, i32
  }
  func.func @transform_1(%arg0: i32) -> (i32, i32) {
    %c0_i32 = arith.constant 0 : i32
    %c0_i32_0 = arith.constant 0 : i32
    %c0_i32_1 = arith.constant 0 : i32
    return %c0_i32, %c0_i32_0 : i32, i32
  }
  func.func @transform_2(%arg0: i32) -> (i32, i32) {
    %c0_i32 = arith.constant 0 : i32
    %c0_i32_0 = arith.constant 0 : i32
    %c0_i32_1 = arith.constant 0 : i32
    return %c0_i32, %c0_i32_0 : i32, i32
  }
  func.func @transform_3(%arg0: i32) -> (i32, i32) {
    %c0_i32 = arith.constant 0 : i32
    %c0_i32_0 = arith.constant 0 : i32
    return %arg0, %c0_i32 : i32, i32
  }
}

module attributes {stable_mosaic.version = 11 : i64} {
  func.func @_matmul_bias_kernel(%arg0: i32, %arg1: memref<50x216xbf16, #tpu.memory_space<vmem>>, %arg2: memref<216x24xbf16, #tpu.memory_space<vmem>>, %arg3: memref<1x24xf32, #tpu.memory_space<vmem>>, %arg4: memref<50x24xbf16, #tpu.memory_space<vmem>>) attributes {dimension_semantics = [#tpu.dimension_semantics<parallel>], iteration_bounds = array<i64: 1>, scalar_prefetch = 0 : i64, scratch_operands = 0 : i64, tpu.core_type = #tpu.core_type<tc>, window_params = [{transform_indices = @transform_0, window_bounds = array<i64: 50, 216>}, {pipeline_mode = #tpu.pipeline_mode<synchronous>, transform_indices = @transform_1, window_bounds = array<i64: 216, 24>}, {pipeline_mode = #tpu.pipeline_mode<synchronous>, transform_indices = @transform_2, window_bounds = array<i64: 1, 24>}, {transform_indices = @transform_3, window_bounds = array<i64: 50, 24>}]} {
    %c0 = arith.constant 0 : index
    %c0_0 = arith.constant 0 : index
    %0 = vector.load %arg1[%c0, %c0_0] : memref<50x216xbf16, #tpu.memory_space<vmem>>, vector<50x216xbf16>
    %c0_1 = arith.constant 0 : index
    %c0_2 = arith.constant 0 : index
    %1 = vector.load %arg2[%c0_1, %c0_2] : memref<216x24xbf16, #tpu.memory_space<vmem>>, vector<216x24xbf16>
    %cst = arith.constant dense<0.000000e+00> : vector<50x24xf32>
    %2 = tpu.matmul %0, %1, %cst {dimension_numbers = #tpu.dot_dimension_numbers<[1], [0], [0], [1], [0, 0, 1, 1], [], []>} : vector<50x216xbf16>, vector<216x24xbf16>, vector<50x24xf32> -> vector<50x24xf32>
    %c0_3 = arith.constant 0 : index
    %c0_4 = arith.constant 0 : index
    %3 = vector.load %arg3[%c0_3, %c0_4] : memref<1x24xf32, #tpu.memory_space<vmem>>, vector<1x24xf32>
    %4 = vector.broadcast %3 : vector<1x24xf32> to vector<50x24xf32>
    %5 = arith.addf %2, %4 : vector<50x24xf32>
    %6 = arith.truncf %5 : vector<50x24xf32> to vector<50x24xbf16>
    %c0_5 = arith.constant 0 : index
    %c0_6 = arith.constant 0 : index
    %7 = vector.load %arg4[%c0_5, %c0_6] : memref<50x24xbf16, #tpu.memory_space<vmem>>, vector<50x24xbf16>
    tpu.vector_store %arg4[%c0_5, %c0_6], %6 {strides = array<i32>} : memref<50x24xbf16, #tpu.memory_space<vmem>>, vector<50x24xbf16>,
    return
  }
  func.func @transform_0(%arg0: i32) -> (i32, i32) {
    %c0_i32 = arith.constant 0 : i32
    %c0_i32_0 = arith.constant 0 : i32
    return %arg0, %c0_i32 : i32, i32
  }
  func.func @transform_1(%arg0: i32) -> (i32, i32) {
    %c0_i32 = arith.constant 0 : i32
    %c0_i32_0 = arith.constant 0 : i32
    %c0_i32_1 = arith.constant 0 : i32
    return %c0_i32, %c0_i32_0 : i32, i32
  }
  func.func @transform_2(%arg0: i32) -> (i32, i32) {
    %c0_i32 = arith.constant 0 : i32
    %c0_i32_0 = arith.constant 0 : i32
    %c0_i32_1 = arith.constant 0 : i32
    return %c0_i32, %c0_i32_0 : i32, i32
  }
  func.func @transform_3(%arg0: i32) -> (i32, i32) {
    %c0_i32 = arith.constant 0 : i32
    %c0_i32_0 = arith.constant 0 : i32
    return %arg0, %c0_i32 : i32, i32
  }
}

module attributes {stable_mosaic.version = 11 : i64} {
  func.func @_matmul_bias_kernel(%arg0: i32, %arg1: memref<50x400xbf16, #tpu.memory_space<vmem>>, %arg2: memref<400x24xbf16, #tpu.memory_space<vmem>>, %arg3: memref<1x24xf32, #tpu.memory_space<vmem>>, %arg4: memref<50x24xbf16, #tpu.memory_space<vmem>>) attributes {dimension_semantics = [#tpu.dimension_semantics<parallel>], iteration_bounds = array<i64: 1>, scalar_prefetch = 0 : i64, scratch_operands = 0 : i64, tpu.core_type = #tpu.core_type<tc>, window_params = [{transform_indices = @transform_0, window_bounds = array<i64: 50, 400>}, {pipeline_mode = #tpu.pipeline_mode<synchronous>, transform_indices = @transform_1, window_bounds = array<i64: 400, 24>}, {pipeline_mode = #tpu.pipeline_mode<synchronous>, transform_indices = @transform_2, window_bounds = array<i64: 1, 24>}, {transform_indices = @transform_3, window_bounds = array<i64: 50, 24>}]} {
    %c0 = arith.constant 0 : index
    %c0_0 = arith.constant 0 : index
    %0 = vector.load %arg1[%c0, %c0_0] : memref<50x400xbf16, #tpu.memory_space<vmem>>, vector<50x400xbf16>
    %c0_1 = arith.constant 0 : index
    %c0_2 = arith.constant 0 : index
    %1 = vector.load %arg2[%c0_1, %c0_2] : memref<400x24xbf16, #tpu.memory_space<vmem>>, vector<400x24xbf16>
    %cst = arith.constant dense<0.000000e+00> : vector<50x24xf32>
    %2 = tpu.matmul %0, %1, %cst {dimension_numbers = #tpu.dot_dimension_numbers<[1], [0], [0], [1], [0, 0, 1, 1], [], []>} : vector<50x400xbf16>, vector<400x24xbf16>, vector<50x24xf32> -> vector<50x24xf32>
    %c0_3 = arith.constant 0 : index
    %c0_4 = arith.constant 0 : index
    %3 = vector.load %arg3[%c0_3, %c0_4] : memref<1x24xf32, #tpu.memory_space<vmem>>, vector<1x24xf32>
    %4 = vector.broadcast %3 : vector<1x24xf32> to vector<50x24xf32>
    %5 = arith.addf %2, %4 : vector<50x24xf32>
    %6 = arith.truncf %5 : vector<50x24xf32> to vector<50x24xbf16>
    %c0_5 = arith.constant 0 : index
    %c0_6 = arith.constant 0 : index
    %7 = vector.load %arg4[%c0_5, %c0_6] : memref<50x24xbf16, #tpu.memory_space<vmem>>, vector<50x24xbf16>
    tpu.vector_store %arg4[%c0_5, %c0_6], %6 {strides = array<i32>} : memref<50x24xbf16, #tpu.memory_space<vmem>>, vector<50x24xbf16>,
    return
  }
  func.func @transform_0(%arg0: i32) -> (i32, i32) {
    %c0_i32 = arith.constant 0 : i32
    %c0_i32_0 = arith.constant 0 : i32
    return %arg0, %c0_i32 : i32, i32
  }
  func.func @transform_1(%arg0: i32) -> (i32, i32) {
    %c0_i32 = arith.constant 0 : i32
    %c0_i32_0 = arith.constant 0 : i32
    %c0_i32_1 = arith.constant 0 : i32
    return %c0_i32, %c0_i32_0 : i32, i32
  }
  func.func @transform_2(%arg0: i32) -> (i32, i32) {
    %c0_i32 = arith.constant 0 : i32
    %c0_i32_0 = arith.constant 0 : i32
    %c0_i32_1 = arith.constant 0 : i32
    return %c0_i32, %c0_i32_0 : i32, i32
  }
  func.func @transform_3(%arg0: i32) -> (i32, i32) {
    %c0_i32 = arith.constant 0 : i32
    %c0_i32_0 = arith.constant 0 : i32
    return %arg0, %c0_i32 : i32, i32
  }
}

module attributes {stable_mosaic.version = 11 : i64} {
  func.func @_matmul_bias_kernel(%arg0: i32, %arg1: memref<50x180xbf16, #tpu.memory_space<vmem>>, %arg2: memref<180x24xbf16, #tpu.memory_space<vmem>>, %arg3: memref<1x24xf32, #tpu.memory_space<vmem>>, %arg4: memref<50x24xbf16, #tpu.memory_space<vmem>>) attributes {dimension_semantics = [#tpu.dimension_semantics<parallel>], iteration_bounds = array<i64: 1>, scalar_prefetch = 0 : i64, scratch_operands = 0 : i64, tpu.core_type = #tpu.core_type<tc>, window_params = [{transform_indices = @transform_0, window_bounds = array<i64: 50, 180>}, {pipeline_mode = #tpu.pipeline_mode<synchronous>, transform_indices = @transform_1, window_bounds = array<i64: 180, 24>}, {pipeline_mode = #tpu.pipeline_mode<synchronous>, transform_indices = @transform_2, window_bounds = array<i64: 1, 24>}, {transform_indices = @transform_3, window_bounds = array<i64: 50, 24>}]} {
    %c0 = arith.constant 0 : index
    %c0_0 = arith.constant 0 : index
    %0 = vector.load %arg1[%c0, %c0_0] : memref<50x180xbf16, #tpu.memory_space<vmem>>, vector<50x180xbf16>
    %c0_1 = arith.constant 0 : index
    %c0_2 = arith.constant 0 : index
    %1 = vector.load %arg2[%c0_1, %c0_2] : memref<180x24xbf16, #tpu.memory_space<vmem>>, vector<180x24xbf16>
    %cst = arith.constant dense<0.000000e+00> : vector<50x24xf32>
    %2 = tpu.matmul %0, %1, %cst {dimension_numbers = #tpu.dot_dimension_numbers<[1], [0], [0], [1], [0, 0, 1, 1], [], []>} : vector<50x180xbf16>, vector<180x24xbf16>, vector<50x24xf32> -> vector<50x24xf32>
    %c0_3 = arith.constant 0 : index
    %c0_4 = arith.constant 0 : index
    %3 = vector.load %arg3[%c0_3, %c0_4] : memref<1x24xf32, #tpu.memory_space<vmem>>, vector<1x24xf32>
    %4 = vector.broadcast %3 : vector<1x24xf32> to vector<50x24xf32>
    %5 = arith.addf %2, %4 : vector<50x24xf32>
    %6 = arith.truncf %5 : vector<50x24xf32> to vector<50x24xbf16>
    %c0_5 = arith.constant 0 : index
    %c0_6 = arith.constant 0 : index
    %7 = vector.load %arg4[%c0_5, %c0_6] : memref<50x24xbf16, #tpu.memory_space<vmem>>, vector<50x24xbf16>
    tpu.vector_store %arg4[%c0_5, %c0_6], %6 {strides = array<i32>} : memref<50x24xbf16, #tpu.memory_space<vmem>>, vector<50x24xbf16>,
    return
  }
  func.func @transform_0(%arg0: i32) -> (i32, i32) {
    %c0_i32 = arith.constant 0 : i32
    %c0_i32_0 = arith.constant 0 : i32
    return %arg0, %c0_i32 : i32, i32
  }
  func.func @transform_1(%arg0: i32) -> (i32, i32) {
    %c0_i32 = arith.constant 0 : i32
    %c0_i32_0 = arith.constant 0 : i32
    %c0_i32_1 = arith.constant 0 : i32
    return %c0_i32, %c0_i32_0 : i32, i32
  }
  func.func @transform_2(%arg0: i32) -> (i32, i32) {
    %c0_i32 = arith.constant 0 : i32
    %c0_i32_0 = arith.constant 0 : i32
    %c0_i32_1 = arith.constant 0 : i32
    return %c0_i32, %c0_i32_0 : i32, i32
  }
  func.func @transform_3(%arg0: i32) -> (i32, i32) {
    %c0_i32 = arith.constant 0 : i32
    %c0_i32_0 = arith.constant 0 : i32
    return %arg0, %c0_i32 : i32, i32
  }
}

module attributes {stable_mosaic.version = 11 : i64} {
  func.func @_matmul_bias_kernel(%arg0: i32, %arg1: memref<2x2200xbf16, #tpu.memory_space<vmem>>, %arg2: memref<2200x10xbf16, #tpu.memory_space<vmem>>, %arg3: memref<1x10xf32, #tpu.memory_space<vmem>>, %arg4: memref<2x10xf32, #tpu.memory_space<vmem>>) attributes {dimension_semantics = [#tpu.dimension_semantics<parallel>], iteration_bounds = array<i64: 1>, scalar_prefetch = 0 : i64, scratch_operands = 0 : i64, tpu.core_type = #tpu.core_type<tc>, window_params = [{transform_indices = @transform_0, window_bounds = array<i64: 2, 2200>}, {pipeline_mode = #tpu.pipeline_mode<synchronous>, transform_indices = @transform_1, window_bounds = array<i64: 2200, 10>}, {pipeline_mode = #tpu.pipeline_mode<synchronous>, transform_indices = @transform_2, window_bounds = array<i64: 1, 10>}, {transform_indices = @transform_3, window_bounds = array<i64: 2, 10>}]} {
    %c0 = arith.constant 0 : index
    %c0_0 = arith.constant 0 : index
    %0 = vector.load %arg1[%c0, %c0_0] : memref<2x2200xbf16, #tpu.memory_space<vmem>>, vector<2x2200xbf16>
    %c0_1 = arith.constant 0 : index
    %c0_2 = arith.constant 0 : index
    %1 = vector.load %arg2[%c0_1, %c0_2] : memref<2200x10xbf16, #tpu.memory_space<vmem>>, vector<2200x10xbf16>
    %cst = arith.constant dense<0.000000e+00> : vector<2x10xf32>
    %2 = tpu.matmul %0, %1, %cst {dimension_numbers = #tpu.dot_dimension_numbers<[1], [0], [0], [1], [0, 0, 1, 1], [], []>} : vector<2x2200xbf16>, vector<2200x10xbf16>, vector<2x10xf32> -> vector<2x10xf32>
    %c0_3 = arith.constant 0 : index
    %c0_4 = arith.constant 0 : index
    %3 = vector.load %arg3[%c0_3, %c0_4] : memref<1x10xf32, #tpu.memory_space<vmem>>, vector<1x10xf32>
    %4 = vector.broadcast %3 : vector<1x10xf32> to vector<2x10xf32>
    %5 = arith.addf %2, %4 : vector<2x10xf32>
    %c0_5 = arith.constant 0 : index
    %c0_6 = arith.constant 0 : index
    %6 = vector.load %arg4[%c0_5, %c0_6] : memref<2x10xf32, #tpu.memory_space<vmem>>, vector<2x10xf32>
    tpu.vector_store %arg4[%c0_5, %c0_6], %5 {strides = array<i32>} : memref<2x10xf32, #tpu.memory_space<vmem>>, vector<2x10xf32>,
    return
  }
  func.func @transform_0(%arg0: i32) -> (i32, i32) {
    %c0_i32 = arith.constant 0 : i32
    %c0_i32_0 = arith.constant 0 : i32
    return %arg0, %c0_i32 : i32, i32
  }
  func.func @transform_1(%arg0: i32) -> (i32, i32) {
    %c0_i32 = arith.constant 0 : i32
    %c0_i32_0 = arith.constant 0 : i32
    %c0_i32_1 = arith.constant 0 : i32
    return %c0_i32, %c0_i32_0 : i32, i32
  }
  func.func @transform_2(%arg0: i32) -> (i32, i32) {
    %c0_i32 = arith.constant 0 : i32
    %c0_i32_0 = arith.constant 0 : i32
    %c0_i32_1 = arith.constant 0 : i32
    return %c0_i32, %c0_i32_0 : i32, i32
  }
  func.func @transform_3(%arg0: i32) -> (i32, i32) {
    %c0_i32 = arith.constant 0 : i32
    %c0_i32_0 = arith.constant 0 : i32
    return %arg0, %c0_i32 : i32, i32
  }
}

</mosaic_0001>

<llo_original>
// kernel: net_forward.13
$region0: #{net_forward.13}
  #allocation0 [shape = 'u32[]', space=smem, size = 0x4, offset = 0x4, fixed_abs, tag = 'smem constant byte address 0x4 - core index']
  #allocation1 [shape = 'u32[72,128]{1,0:T(1,128)}', space=vmem, size = 0x9000, scoped, tag = 'internal scratch']
  %s0 = inlined_call_operand.vmem [shape: bf16[1568,75], index: 0, kind: input, shape index: {}]
  %s1 = inlined_call_operand.vmem [shape: bf16[75,10], index: 1, kind: input, shape index: {}]
  %s2 = inlined_call_operand.vmem [shape: f32[1,10], index: 2, kind: input, shape index: {}]
  %s3 = inlined_call_operand.vmem [shape: bf16[1568,10], index: 3, kind: output, shape index: {}]
  %s4 = sld [smem:[#allocation0]]
  $region89: #{net_forward.13} parent=0
    _
  %s6 = ssub.s32 1, %s4
  %s7 = scalar_select 0, %s6, %s4
  $region1: #{net_forward.13} parent=0
    #allocation2 [shape = 'u8[262144]{0}', space=vmem, size = 0x40000, scoped, tag = 'output window, operand 0']
    loop: start=0, step=1, limit=6
    $region2: #{net_forward.13} parent=1 // loop_pre_header
      _
    $region3: #{net_forward.13} parent=1 // loop_header
      %s9 = sphi 0, %s13
      %p10 = scmp.ge.s32.totalorder %s9, 6
      %s19 = sphi 0, %s21
      %s22 = sphi 0, %s19
      %s23 = sphi 0, %s22
      %s39 = sphi 0, %s23
      %s43 = sphi 0, %s43
      %s45 = sphi 0, %s43
      %s46 = sphi 0, %s45
      %s60 = sphi 0, %s46
      %s64 = sphi 0, %s64
      %s66 = sphi 0, %s64
      %s67 = sphi 0, %s66
      %s81 = sphi 0, %s67
      %s87 = sphi 0, %s89
      %s90 = sphi 0, %s87
      %s91 = sphi 0, %s90
      %s107 = sphi 0, %s91
    $region4: #{net_forward.13} parent=1 // loop_header_branch
      %12 = sbr.rel (%p10) target = $region8
    $region5: #{net_forward.13} parent=1 // loop_body
      %s14 = ssub.s32 %s9, 1
      %s15 = ssub.s32 %s9, 2
      %s16 = sadd.s32 %s9, 1
      %s17 = ssub.s32 %s9, %s16
      %p18 = scmp.eq.s32.totalorder %s17, 0
      %s20 = sadd.s32 %s19, 1
      %s21 = scalar_select %p18, %s19, %s20
      %p24 = pneg %p18
      %p25 = scmp.eq.s32.totalorder %s9, 3
      %p26 = por %p24, %p25
      %p27 = scmp.ne.s32.totalorder %s19, %s22
      %p28 = scmp.eq.s32.totalorder %s9, 0
      %p29 = por %p27, %p28
      %p30 = scmp.ne.s32.totalorder %s19, %s22
      %p31 = scmp.eq.s32.totalorder %s14, 3
      %p32 = por %p30, %p31
      %p33 = scmp.ne.s32.totalorder %s22, %s23
      %p34 = scmp.eq.s32.totalorder %s14, 0
      %p35 = por %p33, %p34
      %p36 = scmp.ne.s32.totalorder %s22, %s23
      %p37 = scmp.eq.s32.totalorder %s15, 3
      %p38 = por %p36, %p37
      %p40 = scmp.ne.s32.totalorder %s23, %s39
      %p41 = scmp.eq.s32.totalorder %s15, 0
      %p42 = por %p40, %p41
      %s44 = sadd.s32 %s43, 1
      %p47 = scmp.eq.s32.totalorder %s9, 3
      %p48 = scmp.ne.s32.totalorder %s43, %s45
      %p49 = scmp.eq.s32.totalorder %s9, 0
      %p50 = por %p48, %p49
      %p51 = scmp.ne.s32.totalorder %s43, %s45
      %p52 = scmp.eq.s32.totalorder %s14, 3
      %p53 = por %p51, %p52
      %p54 = scmp.ne.s32.totalorder %s45, %s46
      %p55 = scmp.eq.s32.totalorder %s14, 0
      %p56 = por %p54, %p55
      %p57 = scmp.ne.s32.totalorder %s45, %s46
      %p58 = scmp.eq.s32.totalorder %s15, 3
      %p59 = por %p57, %p58
      %p61 = scmp.ne.s32.totalorder %s46, %s60
      %p62 = scmp.eq.s32.totalorder %s15, 0
      %p63 = por %p61, %p62
      %s65 = sadd.s32 %s64, 1
      %p68 = scmp.eq.s32.totalorder %s9, 3
      %p69 = scmp.ne.s32.totalorder %s64, %s66
      %p70 = scmp.eq.s32.totalorder %s9, 0
      %p71 = por %p69, %p70
      %p72 = scmp.ne.s32.totalorder %s64, %s66
      %p73 = scmp.eq.s32.totalorder %s14, 3
      %p74 = por %p72, %p73
      %p75 = scmp.ne.s32.totalorder %s66, %s67
      %p76 = scmp.eq.s32.totalorder %s14, 0
      %p77 = por %p75, %p76
      %p78 = scmp.ne.s32.totalorder %s66, %s67
      %p79 = scmp.eq.s32.totalorder %s15, 3
      %p80 = por %p78, %p79
      %p82 = scmp.ne.s32.totalorder %s67, %s81
      %p83 = scmp.eq.s32.totalorder %s15, 0
      %p84 = por %p82, %p83
      %s85 = ssub.s32 %s9, %s16
      %p86 = scmp.eq.s32.totalorder %s85, 0
      %s88 = sadd.s32 %s87, 1
      %s89 = scalar_select %p86, %s87, %s88
      %p92 = pneg %p86
      %p93 = scmp.eq.s32.totalorder %s9, 3
      %p94 = por %p92, %p93
      %p95 = scmp.ne.s32.totalorder %s87, %s90
      %p96 = scmp.eq.s32.totalorder %s9, 0
      %p97 = por %p95, %p96
      %p98 = scmp.ne.s32.totalorder %s87, %s90
      %p99 = scmp.eq.s32.totalorder %s14, 3
      %p100 = por %p98, %p99
      %p101 = scmp.ne.s32.totalorder %s90, %s91
      %p102 = scmp.eq.s32.totalorder %s14, 0
      %p103 = por %p101, %p102
      %p104 = scmp.ne.s32.totalorder %s90, %s91
      %p105 = scmp.eq.s32.totalorder %s15, 3
      %p106 = por %p104, %p105
      %p108 = scmp.ne.s32.totalorder %s91, %s107
      %p109 = scmp.eq.s32.totalorder %s15, 0
      %p110 = por %p108, %p109
      %p111 = scmp.le.s32.totalorder 1, %s9
      %p112 = scmp.lt.s32.totalorder %s9, 5
      %p113 = pnand %p111, %p112
      %p114 = pneg %p113
      // Predicated region
      $region9: #{net_forward.13} parent=5 // pred_check
        _
      $region10: #{net_forward.13} parent=5 // pred_check_branch
        %116 = sbr.rel (%p113) target = $region12
      $region11: #{net_forward.13} parent=5 // pred_region
        %s117 = ssub.s32 %s9, 1
        // Predicated region
        $region13: #{net_forward.13} parent=11 // pred_check
          %p118 = pneg %p56
        $region14: #{net_forward.13} parent=11 // pred_check_branch
          %120 = sbr.rel (%p118) target = $region16
        $region15: #{net_forward.13} parent=11 // pred_region
          _
        $region16: #{net_forward.13} parent=11 // pred_fallthru
          _
        // Predicated region
        $region17: #{net_forward.13} parent=11 // pred_check
          %p121 = pneg %p77
        $region18: #{net_forward.13} parent=11 // pred_check_branch
          %123 = sbr.rel (%p121) target = $region20
        $region19: #{net_forward.13} parent=11 // pred_region
          _
        $region20: #{net_forward.13} parent=11 // pred_fallthru
          _
      $region12: #{net_forward.13} parent=5 // pred_fallthru
        _
      %p124 = scmp.lt.s32.totalorder %s9, 4
      // Predicated region
      $region21: #{net_forward.13} parent=5 // pred_check
        %p125 = pneg %p124
      $region22: #{net_forward.13} parent=5 // pred_check_branch
        %127 = sbr.rel (%p125) target = $region24
      $region23: #{net_forward.13} parent=5 // pred_region
        // Predicated region
        $region25: #{net_forward.13} parent=23 // pred_check
          %p128 = pneg %p29
        $region26: #{net_forward.13} parent=23 // pred_check_branch
          %130 = sbr.rel (%p128) target = $region28
        $region27: #{net_forward.13} parent=23 // pred_region
          %s131 = smul.u32 64, %s9
          %s132 = ssub.s32 196, %s131
          %p133 = scmp.lt.s32.totalorder %s132, 64
          %s134 = scalar_select %p133, %s132, 64
          %s135 = smul.u32 4, %s134
          %p136 = scmp.lt.s32.totalorder %s131, 195
          %s137 = scalar_select %p136, %s131, 195
          %s138 = smul.addr %s137, 4
          %s139 = scalar_lea.vmem %s0, %s138
          %s140 = smul.u32 64, %s9
          %s141 = ssub.s32 196, %s140
          %p142 = scmp.lt.s32.totalorder %s141, 64
          %s143 = scalar_select %p142, %s141, 64
          %s144 = smul.u32 4, %s143
        $region28: #{net_forward.13} parent=23 // pred_fallthru
          _
      $region24: #{net_forward.13} parent=5 // pred_fallthru
        _
      %p145 = scmp.le.s32.totalorder 1, %s9
      %p146 = scmp.lt.s32.totalorder %s9, 5
      %p147 = pnand %p145, %p146
      %p148 = pneg %p147
      // Predicated region
      $region29: #{net_forward.13} parent=5 // pred_check
        _
      $region30: #{net_forward.13} parent=5 // pred_check_branch
        %150 = sbr.rel (%p147) target = $region32
      $region31: #{net_forward.13} parent=5 // pred_region
        %s151 = ssub.s32 %s9, 1
        %s152 = smul.u32 64, %s14
        %s153 = ssub.s32 196, %s152
        %p154 = scmp.lt.s32.totalorder %s153, 64
        %s155 = scalar_select %p154, %s153, 64
        %s156 = smul.u32 4, %s155
        %p157 = scmp.lt.s32.totalorder %s152, 195
        %s158 = scalar_select %p157, %s152, 195
        %s159 = smul.addr %s158, 4
        %s160 = scalar_lea.vmem %s0, %s159
        %p161 = pneg %p35
        %p162 = pneg %p32
        %p163 = pneg %p56
        %p164 = pneg %p53
        %p165 = pneg %p77
        %p166 = pneg %p74
        %p167 = pneg %p103
        %p168 = pneg %p100
        %s169 = sand.u32 %s90, 1
        %s170 = sand.u32 %s90, 1
        %s171 = smul.addr %s170, 256
        %s172 = scalar_lea.vmem [#allocation2], %s171
        %s173 = smul.u32 64, %s14
        %s174 = ssub.s32 196, %s173
        %p175 = scmp.lt.s32.totalorder %s174, 64
        %s176 = scalar_select %p175, %s174, 64
        %s177 = smul.u32 4, %s176
        %p178 = scmp.lt.s32.totalorder %s173, 195
        %s179 = scalar_select %p178, %s173, 195
        %s180 = smul.addr %s179, 4
        %s181 = scalar_lea.vmem %s0, %s180
        %s182 = smul.u32 64, %s14
        %s183 = ssub.s32 196, %s182
        %p184 = scmp.lt.s32.totalorder %s183, 64
        %s185 = scalar_select %p184, %s183, 64
        %s186 = smul.u32 4, %s185
        %s187 = smul.u32 64, %s14
        %s188 = ssub.s32 196, %s187
        %p189 = scmp.lt.s32.totalorder %s188, 64
        %s190 = scalar_select %p189, %s188, 64
        %s191 = smul.u32 4, %s190
        %v193 = vld [vmem:[%s181] sm:$0xf]
        %v194 = vld [vmem:[%s181 + $0x4] sm:$0xf]
        %v195 = vld [vmem:[%s181 + $0x8] sm:$0xf]
        %v196 = vld [vmem:[%s181 + $0xc] sm:$0xf]
        %v197 = vld [vmem:[%s181 + $0x10] sm:$0xf]
        %v198 = vld [vmem:[%s181 + $0x14] sm:$0xf]
        %v199 = vld [vmem:[%s181 + $0x18] sm:$0xf]
        %v200 = vld [vmem:[%s181 + $0x1c] sm:$0xf]
        %v201 = vld [vmem:[%s181 + $0x20] sm:$0xf]
        %v202 = vld [vmem:[%s181 + $0x24] sm:$0xf]
        %v203 = vld [vmem:[%s181 + $0x28] sm:$0xf]
        %v204 = vld [vmem:[%s181 + $0x2c] sm:$0xf]
        %v205 = vld [vmem:[%s181 + $0x30] sm:$0xf]
        %v206 = vld [vmem:[%s181 + $0x34] sm:$0xf]
        %v207 = vld [vmem:[%s181 + $0x38] sm:$0xf]
        %v208 = vld [vmem:[%s181 + $0x3c] sm:$0xf]
        %v209 = vld [vmem:[%s181 + $0x40] sm:$0xf]
        %v210 = vld [vmem:[%s181 + $0x44] sm:$0xf]
        %v211 = vld [vmem:[%s181 + $0x48] sm:$0xf]
        %v212 = vld [vmem:[%s181 + $0x4c] sm:$0xf]
        %v213 = vld [vmem:[%s181 + $0x50] sm:$0xf]
        %v214 = vld [vmem:[%s181 + $0x54] sm:$0xf]
        %v215 = vld [vmem:[%s181 + $0x58] sm:$0xf]
        %v216 = vld [vmem:[%s181 + $0x5c] sm:$0xf]
        %v217 = vld [vmem:[%s181 + $0x60] sm:$0xf]
        %v218 = vld [vmem:[%s181 + $0x64] sm:$0xf]
        %v219 = vld [vmem:[%s181 + $0x68] sm:$0xf]
        %v220 = vld [vmem:[%s181 + $0x6c] sm:$0xf]
        %v221 = vld [vmem:[%s181 + $0x70] sm:$0xf]
        %v222 = vld [vmem:[%s181 + $0x74] sm:$0xf]
        %v223 = vld [vmem:[%s181 + $0x78] sm:$0xf]
        %v224 = vld [vmem:[%s181 + $0x7c] sm:$0xf]
        %v225 = vld [vmem:[%s181 + $0x80] sm:$0xf]
        %v226 = vld [vmem:[%s181 + $0x84] sm:$0xf]
        %v227 = vld [vmem:[%s181 + $0x88] sm:$0xf]
        %v228 = vld [vmem:[%s181 + $0x8c] sm:$0xf]
        %v229 = vld [vmem:[%s181 + $0x90] sm:$0xf]
        %v230 = vld [vmem:[%s181 + $0x94] sm:$0xf]
        %v231 = vld [vmem:[%s181 + $0x98] sm:$0xf]
        %v232 = vld [vmem:[%s181 + $0x9c] sm:$0xf]
        %v233 = vld [vmem:[%s181 + $0xa0] sm:$0xf]
        %v234 = vld [vmem:[%s181 + $0xa4] sm:$0xf]
        %v235 = vld [vmem:[%s181 + $0xa8] sm:$0xf]
        %v236 = vld [vmem:[%s181 + $0xac] sm:$0xf]
        %v237 = vld [vmem:[%s181 + $0xb0] sm:$0xf]
        %v238 = vld [vmem:[%s181 + $0xb4] sm:$0xf]
        %v239 = vld [vmem:[%s181 + $0xb8] sm:$0xf]
        %v240 = vld [vmem:[%s181 + $0xbc] sm:$0xf]
        %v241 = vld [vmem:[%s181 + $0xc0] sm:$0xf]
        %v242 = vld [vmem:[%s181 + $0xc4] sm:$0xf]
        %v243 = vld [vmem:[%s181 + $0xc8] sm:$0xf]
        %v244 = vld [vmem:[%s181 + $0xcc] sm:$0xf]
        %v245 = vld [vmem:[%s181 + $0xd0] sm:$0xf]
        %v246 = vld [vmem:[%s181 + $0xd4] sm:$0xf]
        %v247 = vld [vmem:[%s181 + $0xd8] sm:$0xf]
        %v248 = vld [vmem:[%s181 + $0xdc] sm:$0xf]
        %v249 = vld [vmem:[%s181 + $0xe0] sm:$0xf]
        %v250 = vld [vmem:[%s181 + $0xe4] sm:$0xf]
        %v251 = vld [vmem:[%s181 + $0xe8] sm:$0xf]
        %v252 = vld [vmem:[%s181 + $0xec] sm:$0xf]
        %v253 = vld [vmem:[%s181 + $0xf0] sm:$0xf]
        %v254 = vld [vmem:[%s181 + $0xf4] sm:$0xf]
        %v255 = vld [vmem:[%s181 + $0xf8] sm:$0xf]
        %v256 = vld [vmem:[%s181 + $0xfc] sm:$0xf]
        %v257 = vld [vmem:[%s1] sm:$0xf]
        %v258 = vld [vmem:[%s1 + $0x4] sm:$0xf]
        %v259 = vld [vmem:[%s1 + $0x8] sm:$0xf]
        %v260 = vld [vmem:[%s1 + $0xc] sm:$0xf]
        %v261 = vld [vmem:[%s1 + $0x10] sm:$0xf]
        %v262 = vld [vmem:[%s1 + $0x14] sm:$0xf]
        %v263 = vld [vmem:[%s1 + $0x18] sm:$0xf]
        %v264 = vld [vmem:[%s1 + $0x1c] sm:$0xf]
        %v265 = vld [vmem:[%s1 + $0x20] sm:$0xf]
        %v266 = vld [vmem:[%s1 + $0x24] sm:$0x3]
        %v267 = vld [vmem:[%s2] sm:$0x1]
        %v269 = vperm.slane %v267, 0
        %v335 = vunpack.c.l.b16 %v193
        %v336 = vunpack.c.l.b16 %v194
        %v337 = vunpack.c.l.b16 %v195
        %v338 = vunpack.c.l.b16 %v196
        %v339 = vunpack.c.l.b16 %v197
        %v340 = vunpack.c.l.b16 %v198
        %v341 = vunpack.c.l.b16 %v199
        %v342 = vunpack.c.l.b16 %v200
        %v343 = vunpack.c.l.b16 %v201
        %v344 = vunpack.c.l.b16 %v202
        %v345 = vunpack.c.l.b16 %v203
        %v346 = vunpack.c.l.b16 %v204
        %v347 = vunpack.c.l.b16 %v205
        %v348 = vunpack.c.l.b16 %v206
        %v349 = vunpack.c.l.b16 %v207
        %v350 = vunpack.c.l.b16 %v208
        %v351 = vunpack.c.l.b16 %v209
        %v352 = vunpack.c.l.b16 %v210
        %v353 = vunpack.c.l.b16 %v211
        %v354 = vunpack.c.l.b16 %v212
        %v355 = vunpack.c.l.b16 %v213
        %v356 = vunpack.c.l.b16 %v214
        %v357 = vunpack.c.l.b16 %v215
        %v358 = vunpack.c.l.b16 %v216
        %v359 = vunpack.c.l.b16 %v217
        %v360 = vunpack.c.l.b16 %v218
        %v361 = vunpack.c.l.b16 %v219
        %v362 = vunpack.c.l.b16 %v220
        %v363 = vunpack.c.l.b16 %v221
        %v364 = vunpack.c.l.b16 %v222
        %v365 = vunpack.c.l.b16 %v223
        %v366 = vunpack.c.l.b16 %v224
        %v367 = vunpack.c.l.b16 %v225
        %v368 = vunpack.c.l.b16 %v226
        %v369 = vunpack.c.l.b16 %v227
        %v370 = vunpack.c.l.b16 %v228
        %v371 = vunpack.c.l.b16 %v229
        %v372 = vunpack.c.l.b16 %v230
        %v373 = vunpack.c.l.b16 %v231
        %v374 = vunpack.c.l.b16 %v232
        %v375 = vunpack.c.l.b16 %v233
        %v376 = vunpack.c.l.b16 %v234
        %v377 = vunpack.c.l.b16 %v235
        %v378 = vunpack.c.l.b16 %v236
        %v379 = vunpack.c.l.b16 %v237
        %v380 = vunpack.c.l.b16 %v238
        %v381 = vunpack.c.l.b16 %v239
        %v382 = vunpack.c.l.b16 %v240
        %v383 = vunpack.c.l.b16 %v241
        %v384 = vunpack.c.l.b16 %v242
        %v385 = vunpack.c.l.b16 %v243
        %v386 = vunpack.c.l.b16 %v244
        %v387 = vunpack.c.l.b16 %v245
        %v388 = vunpack.c.l.b16 %v246
        %v389 = vunpack.c.l.b16 %v247
        %v390 = vunpack.c.l.b16 %v248
        %v391 = vunpack.c.l.b16 %v249
        %v392 = vunpack.c.l.b16 %v250
        %v393 = vunpack.c.l.b16 %v251
        %v394 = vunpack.c.l.b16 %v252
        %v395 = vunpack.c.l.b16 %v253
        %v396 = vunpack.c.l.b16 %v254
        %v397 = vunpack.c.l.b16 %v255
        %v398 = vunpack.c.l.b16 %v256
        %v399 = vpack.c.b16 %v336, %v335
        %v400 = vpack.c.b16 %v338, %v337
        %v401 = vpack.c.b16 %v340, %v339
        %v402 = vpack.c.b16 %v342, %v341
        %v403 = vpack.c.b16 %v344, %v343
        %v404 = vpack.c.b16 %v346, %v345
        %v405 = vpack.c.b16 %v348, %v347
        %v406 = vpack.c.b16 %v350, %v349
        %v407 = vpack.c.b16 %v352, %v351
        %v408 = vpack.c.b16 %v354, %v353
        %v409 = vpack.c.b16 %v356, %v355
        %v410 = vpack.c.b16 %v358, %v357
        %v411 = vpack.c.b16 %v360, %v359
        %v412 = vpack.c.b16 %v362, %v361
        %v413 = vpack.c.b16 %v364, %v363
        %v414 = vpack.c.b16 %v366, %v365
        %v415 = vpack.c.b16 %v368, %v367
        %v416 = vpack.c.b16 %v370, %v369
        %v417 = vpack.c.b16 %v372, %v371
        %v418 = vpack.c.b16 %v374, %v373
        %v419 = vpack.c.b16 %v376, %v375
        %v420 = vpack.c.b16 %v378, %v377
        %v421 = vpack.c.b16 %v380, %v379
        %v422 = vpack.c.b16 %v382, %v381
        %v423 = vpack.c.b16 %v384, %v383
        %v424 = vpack.c.b16 %v386, %v385
        %v425 = vpack.c.b16 %v388, %v387
        %v426 = vpack.c.b16 %v390, %v389
        %v427 = vpack.c.b16 %v392, %v391
        %v428 = vpack.c.b16 %v394, %v393
        %v429 = vpack.c.b16 %v396, %v395
        %v430 = vpack.c.b16 %v398, %v397
        %v441 = vunpack.c.l.b16 %v257
        %v442 = vunpack.c.l.b16 %v258
        %v443 = vunpack.c.l.b16 %v259
        %v444 = vunpack.c.l.b16 %v260
        %v445 = vunpack.c.l.b16 %v261
        %v446 = vunpack.c.l.b16 %v262
        %v447 = vunpack.c.l.b16 %v263
        %v448 = vunpack.c.l.b16 %v264
        %v449 = vunpack.c.l.b16 %v265
        %v450 = vunpack.c.l.b16 %v266
        %v451 = vpack.c.b16 %v442, %v441
        %v452 = vpack.c.b16 %v444, %v443
        %v453 = vpack.c.b16 %v446, %v445
        %v454 = vpack.c.b16 %v448, %v447
        %v455 = vpack.c.b16 %v450, %v449
        %vm460 = vcmask 613376
        %v462 = vsel %vm460, %v399, 0
        %v465 = vsel %vm460, %v400, 0
        %v468 = vsel %vm460, %v401, 0
        %v471 = vsel %vm460, %v402, 0
        %v474 = vsel %vm460, %v403, 0
        %v477 = vsel %vm460, %v404, 0
        %v480 = vsel %vm460, %v405, 0
        %v483 = vsel %vm460, %v406, 0
        %v486 = vsel %vm460, %v407, 0
        %v489 = vsel %vm460, %v408, 0
        %v492 = vsel %vm460, %v409, 0
        %v495 = vsel %vm460, %v410, 0
        %v498 = vsel %vm460, %v411, 0
        %v501 = vsel %vm460, %v412, 0
        %v504 = vsel %vm460, %v413, 0
        %v507 = vsel %vm460, %v414, 0
        %v510 = vsel %vm460, %v415, 0
        %v513 = vsel %vm460, %v416, 0
        %v516 = vsel %vm460, %v417, 0
        %v519 = vsel %vm460, %v418, 0
        %v522 = vsel %vm460, %v419, 0
        %v525 = vsel %vm460, %v420, 0
        %v528 = vsel %vm460, %v421, 0
        %v531 = vsel %vm460, %v422, 0
        %v534 = vsel %vm460, %v423, 0
        %v537 = vsel %vm460, %v424, 0
        %v540 = vsel %vm460, %v425, 0
        %v543 = vsel %vm460, %v426, 0
        %v546 = vsel %vm460, %v427, 0
        %v549 = vsel %vm460, %v428, 0
        %v552 = vsel %vm460, %v429, 0
        %v555 = vsel %vm460, %v430, 0
        %vm557 = vcmask 1044480
        %vm558 = vcmask 1045504
        %v559 = vsel %vm557, 4294967295, 65535
        %v560 = vsel %vm558, %v559, 0
        %v562 = vand.u32 %v455, %v560
        %564 = vmatpush.bf16.msra.mxu0 0
        %565 = vmatpush.bf16.msra.mxu0 0
        %566 = vmatpush.bf16.msra.mxu0 0
        %567 = vmatpush.bf16.msra.mxu0 %v562
        %568 = vmatpush.bf16.msra.mxu0 %v454
        %569 = vmatpush.bf16.msra.mxu0 %v453
        %570 = vmatpush.bf16.msra.mxu0 %v452
        %571 = vmatpush.bf16.msra.mxu0 %v451
        %572 = vmatmul.bf16.gmra.mxu0 %v462
        %v573 = vpop.f32.mrf.mxu0
        %v574 = vadd.f32 %v269, %v573
        %v575 = vpop.f32.mrf.mxu0
        %v576 = vadd.f32 %v269, %v575
        %577 = vmatmul.bf16.gmra.mxu0 %v465
        %v578 = vpop.f32.mrf.mxu0
        %v579 = vadd.f32 %v269, %v578
        %v580 = vpop.f32.mrf.mxu0
        %v581 = vadd.f32 %v269, %v580
        %582 = vmatmul.bf16.gmra.mxu0 %v468
        %v583 = vpop.f32.mrf.mxu0
        %v584 = vadd.f32 %v269, %v583
        %v585 = vpop.f32.mrf.mxu0
        %v586 = vadd.f32 %v269, %v585
        %587 = vmatmul.bf16.gmra.mxu0 %v471
        %v588 = vpop.f32.mrf.mxu0
        %v589 = vadd.f32 %v269, %v588
        %v590 = vpop.f32.mrf.mxu0
        %v591 = vadd.f32 %v269, %v590
        %592 = vmatmul.bf16.gmra.mxu0 %v474
        %v593 = vpop.f32.mrf.mxu0
        %v594 = vadd.f32 %v269, %v593
        %v595 = vpop.f32.mrf.mxu0
        %v596 = vadd.f32 %v269, %v595
        %597 = vmatmul.bf16.gmra.mxu0 %v477
        %v598 = vpop.f32.mrf.mxu0
        %v599 = vadd.f32 %v269, %v598
        %v600 = vpop.f32.mrf.mxu0
        %v601 = vadd.f32 %v269, %v600
        %602 = vmatmul.bf16.gmra.mxu0 %v480
        %v603 = vpop.f32.mrf.mxu0
        %v604 = vadd.f32 %v269, %v603
        %v605 = vpop.f32.mrf.mxu0
        %v606 = vadd.f32 %v269, %v605
        %607 = vmatmul.bf16.gmra.mxu0 %v483
        %v608 = vpop.f32.mrf.mxu0
        %v609 = vadd.f32 %v269, %v608
        %v610 = vpop.f32.mrf.mxu0
        %v611 = vadd.f32 %v269, %v610
        %612 = vmatmul.bf16.gmra.mxu0 %v486
        %v613 = vpop.f32.mrf.mxu0
        %v614 = vadd.f32 %v269, %v613
        %v615 = vpop.f32.mrf.mxu0
        %v616 = vadd.f32 %v269, %v615
        %617 = vmatmul.bf16.gmra.mxu0 %v489
        %v618 = vpop.f32.mrf.mxu0
        %v619 = vadd.f32 %v269, %v618
        %v620 = vpop.f32.mrf.mxu0
        %v621 = vadd.f32 %v269, %v620
        %622 = vmatmul.bf16.gmra.mxu0 %v492
        %v623 = vpop.f32.mrf.mxu0
        %v624 = vadd.f32 %v269, %v623
        %v625 = vpop.f32.mrf.mxu0
        %v626 = vadd.f32 %v269, %v625
        %627 = vmatmul.bf16.gmra.mxu0 %v495
        %v628 = vpop.f32.mrf.mxu0
        %v629 = vadd.f32 %v269, %v628
        %v630 = vpop.f32.mrf.mxu0
        %v631 = vadd.f32 %v269, %v630
        %632 = vmatmul.bf16.gmra.mxu0 %v498
        %v633 = vpop.f32.mrf.mxu0
        %v634 = vadd.f32 %v269, %v633
        %v635 = vpop.f32.mrf.mxu0
        %v636 = vadd.f32 %v269, %v635
        %637 = vmatmul.bf16.gmra.mxu0 %v501
        %v638 = vpop.f32.mrf.mxu0
        %v639 = vadd.f32 %v269, %v638
        %v640 = vpop.f32.mrf.mxu0
        %v641 = vadd.f32 %v269, %v640
        %642 = vmatmul.bf16.gmra.mxu0 %v504
        %v643 = vpop.f32.mrf.mxu0
        %v644 = vadd.f32 %v269, %v643
        %v645 = vpop.f32.mrf.mxu0
        %v646 = vadd.f32 %v269, %v645
        %647 = vmatmul.bf16.gmra.mxu0 %v507
        %v648 = vpop.f32.mrf.mxu0
        %v649 = vadd.f32 %v269, %v648
        %v650 = vpop.f32.mrf.mxu0
        %v651 = vadd.f32 %v269, %v650
        %652 = vmatmul.bf16.gmra.mxu0 %v510
        %v653 = vpop.f32.mrf.mxu0
        %v654 = vadd.f32 %v269, %v653
        %v655 = vpop.f32.mrf.mxu0
        %v656 = vadd.f32 %v269, %v655
        %657 = vmatmul.bf16.gmra.mxu0 %v513
        %v658 = vpop.f32.mrf.mxu0
        %v659 = vadd.f32 %v269, %v658
        %v660 = vpop.f32.mrf.mxu0
        %v661 = vadd.f32 %v269, %v660
        %662 = vmatmul.bf16.gmra.mxu0 %v516
        %v663 = vpop.f32.mrf.mxu0
        %v664 = vadd.f32 %v269, %v663
        %v665 = vpop.f32.mrf.mxu0
        %v666 = vadd.f32 %v269, %v665
        %667 = vmatmul.bf16.gmra.mxu0 %v519
        %v668 = vpop.f32.mrf.mxu0
        %v669 = vadd.f32 %v269, %v668
        %v670 = vpop.f32.mrf.mxu0
        %v671 = vadd.f32 %v269, %v670
        %672 = vmatmul.bf16.gmra.mxu0 %v522
        %v673 = vpop.f32.mrf.mxu0
        %v674 = vadd.f32 %v269, %v673
        %v675 = vpop.f32.mrf.mxu0
        %v676 = vadd.f32 %v269, %v675
        %677 = vmatmul.bf16.gmra.mxu0 %v525
        %v678 = vpop.f32.mrf.mxu0
        %v679 = vadd.f32 %v269, %v678
        %v680 = vpop.f32.mrf.mxu0
        %v681 = vadd.f32 %v269, %v680
        %682 = vmatmul.bf16.gmra.mxu0 %v528
        %v683 = vpop.f32.mrf.mxu0
        %v684 = vadd.f32 %v269, %v683
        %v685 = vpop.f32.mrf.mxu0
        %v686 = vadd.f32 %v269, %v685
        %687 = vmatmul.bf16.gmra.mxu0 %v531
        %v688 = vpop.f32.mrf.mxu0
        %v689 = vadd.f32 %v269, %v688
        %v690 = vpop.f32.mrf.mxu0
        %v691 = vadd.f32 %v269, %v690
        %692 = vmatmul.bf16.gmra.mxu0 %v534
        %v693 = vpop.f32.mrf.mxu0
        %v694 = vadd.f32 %v269, %v693
        %v695 = vpop.f32.mrf.mxu0
        %v696 = vadd.f32 %v269, %v695
        %697 = vmatmul.bf16.gmra.mxu0 %v537
        %v698 = vpop.f32.mrf.mxu0
        %v699 = vadd.f32 %v269, %v698
        %v700 = vpop.f32.mrf.mxu0
        %v701 = vadd.f32 %v269, %v700
        %702 = vmatmul.bf16.gmra.mxu0 %v540
        %v703 = vpop.f32.mrf.mxu0
        %v704 = vadd.f32 %v269, %v703
        %v705 = vpop.f32.mrf.mxu0
        %v706 = vadd.f32 %v269, %v705
        %707 = vmatmul.bf16.gmra.mxu0 %v543
        %v708 = vpop.f32.mrf.mxu0
        %v709 = vadd.f32 %v269, %v708
        %v710 = vpop.f32.mrf.mxu0
        %v711 = vadd.f32 %v269, %v710
        %712 = vmatmul.bf16.gmra.mxu0 %v546
        %v713 = vpop.f32.mrf.mxu0
        %v714 = vadd.f32 %v269, %v713
        %v715 = vpop.f32.mrf.mxu0
        %v716 = vadd.f32 %v269, %v715
        %717 = vmatmul.bf16.gmra.mxu0 %v549
        %v718 = vpop.f32.mrf.mxu0
        %v719 = vadd.f32 %v269, %v718
        %v720 = vpop.f32.mrf.mxu0
        %v721 = vadd.f32 %v269, %v720
        %722 = vmatmul.bf16.gmra.mxu0 %v552
        %v723 = vpop.f32.mrf.mxu0
        %v724 = vadd.f32 %v269, %v723
        %v725 = vpop.f32.mrf.mxu0
        %v726 = vadd.f32 %v269, %v725
        %727 = vmatmul.bf16.gmra.mxu0 %v555
        %v728 = vpop.f32.mrf.mxu0
        %v729 = vadd.f32 %v269, %v728
        %v730 = vpop.f32.mrf.mxu0
        %v731 = vadd.f32 %v269, %v730
        %732 = vdwg.mxu0
        %v733 = vmax.f32 %v574, 0.0
        %v734 = vmax.f32 %v576, 0.0
        %v735 = vmax.f32 %v579, 0.0
        %v736 = vmax.f32 %v581, 0.0
        %v737 = vmax.f32 %v584, 0.0
        %v738 = vmax.f32 %v586, 0.0
        %v739 = vmax.f32 %v589, 0.0
        %v740 = vmax.f32 %v591, 0.0
        %v741 = vmax.f32 %v594, 0.0
        %v742 = vmax.f32 %v596, 0.0
        %v743 = vmax.f32 %v599, 0.0
        %v744 = vmax.f32 %v601, 0.0
        %v745 = vmax.f32 %v604, 0.0
        %v746 = vmax.f32 %v606, 0.0
        %v747 = vmax.f32 %v609, 0.0
        %v748 = vmax.f32 %v611, 0.0
        %v749 = vmax.f32 %v614, 0.0
        %v750 = vmax.f32 %v616, 0.0
        %v751 = vmax.f32 %v619, 0.0
        %v752 = vmax.f32 %v621, 0.0
        %v753 = vmax.f32 %v624, 0.0
        %v754 = vmax.f32 %v626, 0.0
        %v755 = vmax.f32 %v629, 0.0
        %v756 = vmax.f32 %v631, 0.0
        %v757 = vmax.f32 %v634, 0.0
        %v758 = vmax.f32 %v636, 0.0
        %v759 = vmax.f32 %v639, 0.0
        %v760 = vmax.f32 %v641, 0.0
        %v761 = vmax.f32 %v644, 0.0
        %v762 = vmax.f32 %v646, 0.0
        %v763 = vmax.f32 %v649, 0.0
        %v764 = vmax.f32 %v651, 0.0
        %v765 = vmax.f32 %v654, 0.0
        %v766 = vmax.f32 %v656, 0.0
        %v767 = vmax.f32 %v659, 0.0
        %v768 = vmax.f32 %v661, 0.0
        %v769 = vmax.f32 %v664, 0.0
        %v770 = vmax.f32 %v666, 0.0
        %v771 = vmax.f32 %v669, 0.0
        %v772 = vmax.f32 %v671, 0.0
        %v773 = vmax.f32 %v674, 0.0
        %v774 = vmax.f32 %v676, 0.0
        %v775 = vmax.f32 %v679, 0.0
        %v776 = vmax.f32 %v681, 0.0
        %v777 = vmax.f32 %v684, 0.0
        %v778 = vmax.f32 %v686, 0.0
        %v779 = vmax.f32 %v689, 0.0
        %v780 = vmax.f32 %v691, 0.0
        %v781 = vmax.f32 %v694, 0.0
        %v782 = vmax.f32 %v696, 0.0
        %v783 = vmax.f32 %v699, 0.0
        %v784 = vmax.f32 %v701, 0.0
        %v785 = vmax.f32 %v704, 0.0
        %v786 = vmax.f32 %v706, 0.0
        %v787 = vmax.f32 %v709, 0.0
        %v788 = vmax.f32 %v711, 0.0
        %v789 = vmax.f32 %v714, 0.0
        %v790 = vmax.f32 %v716, 0.0
        %v791 = vmax.f32 %v719, 0.0
        %v792 = vmax.f32 %v721, 0.0
        %v793 = vmax.f32 %v724, 0.0
        %v794 = vmax.f32 %v726, 0.0
        %v795 = vmax.f32 %v729, 0.0
        %v796 = vmax.f32 %v731, 0.0
        %v797 = vpack.c.bf16 %v733, %v733
        %v798 = vpack.c.bf16 %v734, %v734
        %v799 = vpack.c.bf16 %v735, %v735
        %v800 = vpack.c.bf16 %v736, %v736
        %v801 = vpack.c.bf16 %v737, %v737
        %v802 = vpack.c.bf16 %v738, %v738
        %v803 = vpack.c.bf16 %v739, %v739
        %v804 = vpack.c.bf16 %v740, %v740
        %v805 = vpack.c.bf16 %v741, %v741
        %v806 = vpack.c.bf16 %v742, %v742
        %v807 = vpack.c.bf16 %v743, %v743
        %v808 = vpack.c.bf16 %v744, %v744
        %v809 = vpack.c.bf16 %v745, %v745
        %v810 = vpack.c.bf16 %v746, %v746
        %v811 = vpack.c.bf16 %v747, %v747
        %v812 = vpack.c.bf16 %v748, %v748
        %v813 = vpack.c.bf16 %v749, %v749
        %v814 = vpack.c.bf16 %v750, %v750
        %v815 = vpack.c.bf16 %v751, %v751
        %v816 = vpack.c.bf16 %v752, %v752
        %v817 = vpack.c.bf16 %v753, %v753
        %v818 = vpack.c.bf16 %v754, %v754
        %v819 = vpack.c.bf16 %v755, %v755
        %v820 = vpack.c.bf16 %v756, %v756
        %v821 = vpack.c.bf16 %v757, %v757
        %v822 = vpack.c.bf16 %v758, %v758
        %v823 = vpack.c.bf16 %v759, %v759
        %v824 = vpack.c.bf16 %v760, %v760
        %v825 = vpack.c.bf16 %v761, %v761
        %v826 = vpack.c.bf16 %v762, %v762
        %v827 = vpack.c.bf16 %v763, %v763
        %v828 = vpack.c.bf16 %v764, %v764
        %v829 = vpack.c.bf16 %v765, %v765
        %v830 = vpack.c.bf16 %v766, %v766
        %v831 = vpack.c.bf16 %v767, %v767
        %v832 = vpack.c.bf16 %v768, %v768
        %v833 = vpack.c.bf16 %v769, %v769
        %v834 = vpack.c.bf16 %v770, %v770
        %v835 = vpack.c.bf16 %v771, %v771
        %v836 = vpack.c.bf16 %v772, %v772
        %v837 = vpack.c.bf16 %v773, %v773
        %v838 = vpack.c.bf16 %v774, %v774
        %v839 = vpack.c.bf16 %v775, %v775
        %v840 = vpack.c.bf16 %v776, %v776
        %v841 = vpack.c.bf16 %v777, %v777
        %v842 = vpack.c.bf16 %v778, %v778
        %v843 = vpack.c.bf16 %v779, %v779
        %v844 = vpack.c.bf16 %v780, %v780
        %v845 = vpack.c.bf16 %v781, %v781
        %v846 = vpack.c.bf16 %v782, %v782
        %v847 = vpack.c.bf16 %v783, %v783
        %v848 = vpack.c.bf16 %v784, %v784
        %v849 = vpack.c.bf16 %v785, %v785
        %v850 = vpack.c.bf16 %v786, %v786
        %v851 = vpack.c.bf16 %v787, %v787
        %v852 = vpack.c.bf16 %v788, %v788
        %v853 = vpack.c.bf16 %v789, %v789
        %v854 = vpack.c.bf16 %v790, %v790
        %v855 = vpack.c.bf16 %v791, %v791
        %v856 = vpack.c.bf16 %v792, %v792
        %v857 = vpack.c.bf16 %v793, %v793
        %v858 = vpack.c.bf16 %v794, %v794
        %v859 = vpack.c.bf16 %v795, %v795
        %v860 = vpack.c.bf16 %v796, %v796
        %vm861 = vcmask 76800
        %862 = vst.msk [vmem:[%s172] sm:$0xf] %vm861, %v797
        %863 = vst.msk [vmem:[%s172 + $0x4] sm:$0xf] %vm861, %v798
        %864 = vst.msk [vmem:[%s172 + $0x8] sm:$0xf] %vm861, %v799
        %865 = vst.msk [vmem:[%s172 + $0xc] sm:$0xf] %vm861, %v800
        %866 = vst.msk [vmem:[%s172 + $0x10] sm:$0xf] %vm861, %v801
        %867 = vst.msk [vmem:[%s172 + $0x14] sm:$0xf] %vm861, %v802
        %868 = vst.msk [vmem:[%s172 + $0x18] sm:$0xf] %vm861, %v803
        %869 = vst.msk [vmem:[%s172 + $0x1c] sm:$0xf] %vm861, %v804
        %870 = vst.msk [vmem:[%s172 + $0x20] sm:$0xf] %vm861, %v805
        %871 = vst.msk [vmem:[%s172 + $0x24] sm:$0xf] %vm861, %v806
        %872 = vst.msk [vmem:[%s172 + $0x28] sm:$0xf] %vm861, %v807
        %873 = vst.msk [vmem:[%s172 + $0x2c] sm:$0xf] %vm861, %v808
        %874 = vst.msk [vmem:[%s172 + $0x30] sm:$0xf] %vm861, %v809
        %875 = vst.msk [vmem:[%s172 + $0x34] sm:$0xf] %vm861, %v810
        %876 = vst.msk [vmem:[%s172 + $0x38] sm:$0xf] %vm861, %v811
        %877 = vst.msk [vmem:[%s172 + $0x3c] sm:$0xf] %vm861, %v812
        %878 = vst.msk [vmem:[%s172 + $0x40] sm:$0xf] %vm861, %v813
        %879 = vst.msk [vmem:[%s172 + $0x44] sm:$0xf] %vm861, %v814
        %880 = vst.msk [vmem:[%s172 + $0x48] sm:$0xf] %vm861, %v815
        %881 = vst.msk [vmem:[%s172 + $0x4c] sm:$0xf] %vm861, %v816
        %882 = vst.msk [vmem:[%s172 + $0x50] sm:$0xf] %vm861, %v817
        %883 = vst.msk [vmem:[%s172 + $0x54] sm:$0xf] %vm861, %v818
        %884 = vst.msk [vmem:[%s172 + $0x58] sm:$0xf] %vm861, %v819
        %885 = vst.msk [vmem:[%s172 + $0x5c] sm:$0xf] %vm861, %v820
        %886 = vst.msk [vmem:[%s172 + $0x60] sm:$0xf] %vm861, %v821
        %887 = vst.msk [vmem:[%s172 + $0x64] sm:$0xf] %vm861, %v822
        %888 = vst.msk [vmem:[%s172 + $0x68] sm:$0xf] %vm861, %v823
        %889 = vst.msk [vmem:[%s172 + $0x6c] sm:$0xf] %vm861, %v824
        %890 = vst.msk [vmem:[%s172 + $0x70] sm:$0xf] %vm861, %v825
        %891 = vst.msk [vmem:[%s172 + $0x74] sm:$0xf] %vm861, %v826
        %892 = vst.msk [vmem:[%s172 + $0x78] sm:$0xf] %vm861, %v827
        %893 = vst.msk [vmem:[%s172 + $0x7c] sm:$0xf] %vm861, %v828
        %894 = vst.msk [vmem:[%s172 + $0x80] sm:$0xf] %vm861, %v829
        %895 = vst.msk [vmem:[%s172 + $0x84] sm:$0xf] %vm861, %v830
        %896 = vst.msk [vmem:[%s172 + $0x88] sm:$0xf] %vm861, %v831
        %897 = vst.msk [vmem:[%s172 + $0x8c] sm:$0xf] %vm861, %v832
        %898 = vst.msk [vmem:[%s172 + $0x90] sm:$0xf] %vm861, %v833
        %899 = vst.msk [vmem:[%s172 + $0x94] sm:$0xf] %vm861, %v834
        %900 = vst.msk [vmem:[%s172 + $0x98] sm:$0xf] %vm861, %v835
        %901 = vst.msk [vmem:[%s172 + $0x9c] sm:$0xf] %vm861, %v836
        %902 = vst.msk [vmem:[%s172 + $0xa0] sm:$0xf] %vm861, %v837
        %903 = vst.msk [vmem:[%s172 + $0xa4] sm:$0xf] %vm861, %v838
        %904 = vst.msk [vmem:[%s172 + $0xa8] sm:$0xf] %vm861, %v839
        %905 = vst.msk [vmem:[%s172 + $0xac] sm:$0xf] %vm861, %v840
        %906 = vst.msk [vmem:[%s172 + $0xb0] sm:$0xf] %vm861, %v841
        %907 = vst.msk [vmem:[%s172 + $0xb4] sm:$0xf] %vm861, %v842
        %908 = vst.msk [vmem:[%s172 + $0xb8] sm:$0xf] %vm861, %v843
        %909 = vst.msk [vmem:[%s172 + $0xbc] sm:$0xf] %vm861, %v844
        %910 = vst.msk [vmem:[%s172 + $0xc0] sm:$0xf] %vm861, %v845
        %911 = vst.msk [vmem:[%s172 + $0xc4] sm:$0xf] %vm861, %v846
        %912 = vst.msk [vmem:[%s172 + $0xc8] sm:$0xf] %vm861, %v847
        %913 = vst.msk [vmem:[%s172 + $0xcc] sm:$0xf] %vm861, %v848
        %914 = vst.msk [vmem:[%s172 + $0xd0] sm:$0xf] %vm861, %v849
        %915 = vst.msk [vmem:[%s172 + $0xd4] sm:$0xf] %vm861, %v850
        %916 = vst.msk [vmem:[%s172 + $0xd8] sm:$0xf] %vm861, %v851
        %917 = vst.msk [vmem:[%s172 + $0xdc] sm:$0xf] %vm861, %v852
        %918 = vst.msk [vmem:[%s172 + $0xe0] sm:$0xf] %vm861, %v853
        %919 = vst.msk [vmem:[%s172 + $0xe4] sm:$0xf] %vm861, %v854
        %920 = vst.msk [vmem:[%s172 + $0xe8] sm:$0xf] %vm861, %v855
        %921 = vst.msk [vmem:[%s172 + $0xec] sm:$0xf] %vm861, %v856
        %922 = vst.msk [vmem:[%s172 + $0xf0] sm:$0xf] %vm861, %v857
        %923 = vst.msk [vmem:[%s172 + $0xf4] sm:$0xf] %vm861, %v858
        %924 = vst.msk [vmem:[%s172 + $0xf8] sm:$0xf] %vm861, %v859
        %925 = vst.msk [vmem:[%s172 + $0xfc] sm:$0xf] %vm861, %v860
        %s926 = sand.u32 %s90, 1
        %s927 = sand.u32 %s90, 1
        %s928 = smul.addr %s927, 256
        %s929 = scalar_lea.vmem [#allocation2], %s928
        // Predicated region
        $region33: #{net_forward.13} parent=31 // pred_check
          %p930 = pneg %p100
        $region34: #{net_forward.13} parent=31 // pred_check_branch
          %932 = sbr.rel (%p930) target = $region36
        $region35: #{net_forward.13} parent=31 // pred_region
          %s933 = smul.u32 64, %s14
          %s934 = ssub.s32 196, %s933
          %p935 = scmp.lt.s32.totalorder %s934, 64
          %s936 = scalar_select %p935, %s934, 64
          %s937 = smul.u32 4, %s936
          %p938 = scmp.ne.s32.totalorder 0, %s937
          %s939 = smul.addr %s933, 4
          %s940 = scalar_lea.vmem %s3, %s939
          // Predicated region
          $region37: #{net_forward.13} parent=35 // pred_check
            %p941 = pneg %p938
          $region38: #{net_forward.13} parent=35 // pred_check_branch
            %943 = sbr.rel (%p941) target = $region40
          $region39: #{net_forward.13} parent=35 // pred_region
            // Predicated region
            $region41: #{net_forward.13} parent=39 // pred_check
              _
            $region42: #{net_forward.13} parent=39 // pred_check_branch
              %945 = sbr.rel target = $region44
            $region43: #{net_forward.13} parent=39 // pred_region
              // Predicated region
              $region63: #{net_forward.13} parent=43 // pred_check
                _
              $region64: #{net_forward.13} parent=43 // pred_check_branch
                %1057 = sbr.rel (0) target = $region66
              $region65: #{net_forward.13} parent=43 // pred_region
                %s1059 = ssub.s32 16, 1
                %s1060 = sshrl.u32 %s936, 5
                // While loop
                $region67: #{net_forward.13} parent=65 // loop_pre_header
                  _
                $region68: #{net_forward.13} parent=65 // loop_header
                  %s1062 = sphi 0, %s1064
                  %p1063 = scmp.ge.s32.totalorder %s1062, %s1060
                  %s1067 = sphi 0, %s1136
                  %s1068 = sphi %s929, %s1139
                  %s1069 = sphi %s940, %s1140
                $region69: #{net_forward.13} parent=65 // loop_header_branch
                  %1066 = sbr.rel (%p1063) target = $region73
                $region70: #{net_forward.13} parent=65 // loop_body
                  %v1070 = vld [vmem:[%s1068] sm:%s1059]
                  %1071 = vst [vmem:[%s1069] sm:%s1059] %v1070
                  %v1072 = vld [vmem:[%s1068 + $0x4] sm:%s1059]
                  %1073 = vst [vmem:[%s1069 + $0x4] sm:%s1059] %v1072
                  %v1074 = vld [vmem:[%s1068 + $0x8] sm:%s1059]
                  %1075 = vst [vmem:[%s1069 + $0x8] sm:%s1059] %v1074
                  %v1076 = vld [vmem:[%s1068 + $0xc] sm:%s1059]
                  %1077 = vst [vmem:[%s1069 + $0xc] sm:%s1059] %v1076
                  %v1078 = vld [vmem:[%s1068 + $0x10] sm:%s1059]
                  %1079 = vst [vmem:[%s1069 + $0x10] sm:%s1059] %v1078
                  %v1080 = vld [vmem:[%s1068 + $0x14] sm:%s1059]
                  %1081 = vst [vmem:[%s1069 + $0x14] sm:%s1059] %v1080
                  %v1082 = vld [vmem:[%s1068 + $0x18] sm:%s1059]
                  %1083 = vst [vmem:[%s1069 + $0x18] sm:%s1059] %v1082
                  %v1084 = vld [vmem:[%s1068 + $0x1c] sm:%s1059]
                  %1085 = vst [vmem:[%s1069 + $0x1c] sm:%s1059] %v1084
                  %v1086 = vld [vmem:[%s1068 + $0x20] sm:%s1059]
                  %1087 = vst [vmem:[%s1069 + $0x20] sm:%s1059] %v1086
                  %v1088 = vld [vmem:[%s1068 + $0x24] sm:%s1059]
                  %1089 = vst [vmem:[%s1069 + $0x24] sm:%s1059] %v1088
                  %v1090 = vld [vmem:[%s1068 + $0x28] sm:%s1059]
                  %1091 = vst [vmem:[%s1069 + $0x28] sm:%s1059] %v1090
                  %v1092 = vld [vmem:[%s1068 + $0x2c] sm:%s1059]
                  %1093 = vst [vmem:[%s1069 + $0x2c] sm:%s1059] %v1092
                  %v1094 = vld [vmem:[%s1068 + $0x30] sm:%s1059]
                  %1095 = vst [vmem:[%s1069 + $0x30] sm:%s1059] %v1094
                  %v1096 = vld [vmem:[%s1068 + $0x34] sm:%s1059]
                  %1097 = vst [vmem:[%s1069 + $0x34] sm:%s1059] %v1096
                  %v1098 = vld [vmem:[%s1068 + $0x38] sm:%s1059]
                  %1099 = vst [vmem:[%s1069 + $0x38] sm:%s1059] %v1098
                  %v1100 = vld [vmem:[%s1068 + $0x3c] sm:%s1059]
                  %1101 = vst [vmem:[%s1069 + $0x3c] sm:%s1059] %v1100
                  %v1102 = vld [vmem:[%s1068 + $0x40] sm:%s1059]
                  %1103 = vst [vmem:[%s1069 + $0x40] sm:%s1059] %v1102
                  %v1104 = vld [vmem:[%s1068 + $0x44] sm:%s1059]
                  %1105 = vst [vmem:[%s1069 + $0x44] sm:%s1059] %v1104
                  %v1106 = vld [vmem:[%s1068 + $0x48] sm:%s1059]
                  %1107 = vst [vmem:[%s1069 + $0x48] sm:%s1059] %v1106
                  %v1108 = vld [vmem:[%s1068 + $0x4c] sm:%s1059]
                  %1109 = vst [vmem:[%s1069 + $0x4c] sm:%s1059] %v1108
                  %v1110 = vld [vmem:[%s1068 + $0x50] sm:%s1059]
                  %1111 = vst [vmem:[%s1069 + $0x50] sm:%s1059] %v1110
                  %v1112 = vld [vmem:[%s1068 + $0x54] sm:%s1059]
                  %1113 = vst [vmem:[%s1069 + $0x54] sm:%s1059] %v1112
                  %v1114 = vld [vmem:[%s1068 + $0x58] sm:%s1059]
                  %1115 = vst [vmem:[%s1069 + $0x58] sm:%s1059] %v1114
                  %v1116 = vld [vmem:[%s1068 + $0x5c] sm:%s1059]
                  %1117 = vst [vmem:[%s1069 + $0x5c] sm:%s1059] %v1116
                  %v1118 = vld [vmem:[%s1068 + $0x60] sm:%s1059]
                  %1119 = vst [vmem:[%s1069 + $0x60] sm:%s1059] %v1118
                  %v1120 = vld [vmem:[%s1068 + $0x64] sm:%s1059]
                  %1121 = vst [vmem:[%s1069 + $0x64] sm:%s1059] %v1120
                  %v1122 = vld [vmem:[%s1068 + $0x68] sm:%s1059]
                  %1123 = vst [vmem:[%s1069 + $0x68] sm:%s1059] %v1122
                  %v1124 = vld [vmem:[%s1068 + $0x6c] sm:%s1059]
                  %1125 = vst [vmem:[%s1069 + $0x6c] sm:%s1059] %v1124
                  %v1126 = vld [vmem:[%s1068 + $0x70] sm:%s1059]
                  %1127 = vst [vmem:[%s1069 + $0x70] sm:%s1059] %v1126
                  %v1128 = vld [vmem:[%s1068 + $0x74] sm:%s1059]
                  %1129 = vst [vmem:[%s1069 + $0x74] sm:%s1059] %v1128
                  %v1130 = vld [vmem:[%s1068 + $0x78] sm:%s1059]
                  %1131 = vst [vmem:[%s1069 + $0x78] sm:%s1059] %v1130
                  %v1132 = vld [vmem:[%s1068 + $0x7c] sm:%s1059]
                  %1133 = vst [vmem:[%s1069 + $0x7c] sm:%s1059] %v1132
                  %s1134 = sadd.s32 1, %s1067
                  %p1135 = scmp.ge.s32.totalorder %s1134, %s1060
                  %s1136 = scalar_select %p1135, 0, %s1134
                  %s1137 = smul.u32 %s1136, 128
                  %s1138 = smul.u32 %s1136, 128
                  %s1139 = scalar_lea.vmem %s929, %s1137 [#allocation2]
                  %s1140 = scalar_lea.vmem %s940, %s1138
                $region71: #{net_forward.13} parent=65 // loop_footer
                  %s1064 = sadd.s32 %s1062, 1
                $region72: #{net_forward.13} parent=65 // loop_footer_branch
                  %1061 = sbr.rel target = $region68
                $region73: #{net_forward.13} parent=65 // loop_exit
                  _
                %s1141 = sshrl.u32 %s936, 5
                %s1142 = sand.u32 %s936, 31
                %s1143 = smul.u32 %s1141, 32
                %s1144 = smul.u32 4, %s1143
                %s1145 = scalar_lea.vmem %s929, %s1144 [#allocation2]
                %s1146 = smul.u32 4, %s1143
                %s1147 = scalar_lea.vmem %s940, %s1146
                // While loop
                $region74: #{net_forward.13} parent=65 // loop_pre_header
                  _
                $region75: #{net_forward.13} parent=65 // loop_header
                  %s1149 = sphi 0, %s1151
                  %p1150 = scmp.ge.s32.totalorder %s1149, %s1142
                  %s1154 = sphi 0, %s1161
                  %s1155 = sphi %s1145, %s1164
                  %s1156 = sphi %s1147, %s1165
                $region76: #{net_forward.13} parent=65 // loop_header_branch
                  %1153 = sbr.rel (%p1150) target = $region80
                $region77: #{net_forward.13} parent=65 // loop_body
                  %v1157 = vld [vmem:[%s1155] sm:%s1059]
                  %1158 = vst [vmem:[%s1156] sm:%s1059] %v1157
                  %s1159 = sadd.s32 1, %s1154
                  %p1160 = scmp.ge.s32.totalorder %s1159, %s1142
                  %s1161 = scalar_select %p1160, 0, %s1159
                  %s1162 = smul.u32 %s1161, 4
                  %s1163 = smul.u32 %s1161, 4
                  %s1164 = scalar_lea.vmem %s1145, %s1162 [#allocation2]
                  %s1165 = scalar_lea.vmem %s1147, %s1163
                $region78: #{net_forward.13} parent=65 // loop_footer
                  %s1151 = sadd.s32 %s1149, 1
                $region79: #{net_forward.13} parent=65 // loop_footer_branch
                  %1148 = sbr.rel target = $region75
                $region80: #{net_forward.13} parent=65 // loop_exit
                  _
              $region66: #{net_forward.13} parent=43 // pred_fallthru
                _
            $region44: #{net_forward.13} parent=39 // pred_fallthru
              _
            // Predicated region
            $region45: #{net_forward.13} parent=39 // pred_check
              _
            $region46: #{net_forward.13} parent=39 // pred_check_branch
              %947 = sbr.rel (0) target = $region48
            $region47: #{net_forward.13} parent=39 // pred_region
              %s949 = ssub.s32 16, 1
              %s950 = sshrl.u32 %s936, 5
              // While loop
              $region49: #{net_forward.13} parent=47 // loop_pre_header
                _
              $region50: #{net_forward.13} parent=47 // loop_header
                %s952 = sphi 0, %s954
                %p953 = scmp.ge.s32.totalorder %s952, %s950
                %s957 = sphi 0, %s1026
                %s958 = sphi %s929, %s1029
                %s959 = sphi %s940, %s1030
              $region51: #{net_forward.13} parent=47 // loop_header_branch
                %956 = sbr.rel (%p953) target = $region55
              $region52: #{net_forward.13} parent=47 // loop_body
                %v960 = vld [vmem:[%s958] sm:%s949]
                %961 = vst [vmem:[%s959] sm:%s949] %v960
                %v962 = vld [vmem:[%s958 + $0x4] sm:%s949]
                %963 = vst [vmem:[%s959 + $0x4] sm:%s949] %v962
                %v964 = vld [vmem:[%s958 + $0x8] sm:%s949]
                %965 = vst [vmem:[%s959 + $0x8] sm:%s949] %v964
                %v966 = vld [vmem:[%s958 + $0xc] sm:%s949]
                %967 = vst [vmem:[%s959 + $0xc] sm:%s949] %v966
                %v968 = vld [vmem:[%s958 + $0x10] sm:%s949]
                %969 = vst [vmem:[%s959 + $0x10] sm:%s949] %v968
                %v970 = vld [vmem:[%s958 + $0x14] sm:%s949]
                %971 = vst [vmem:[%s959 + $0x14] sm:%s949] %v970
                %v972 = vld [vmem:[%s958 + $0x18] sm:%s949]
                %973 = vst [vmem:[%s959 + $0x18] sm:%s949] %v972
                %v974 = vld [vmem:[%s958 + $0x1c] sm:%s949]
                %975 = vst [vmem:[%s959 + $0x1c] sm:%s949] %v974
                %v976 = vld [vmem:[%s958 + $0x20] sm:%s949]
                %977 = vst [vmem:[%s959 + $0x20] sm:%s949] %v976
                %v978 = vld [vmem:[%s958 + $0x24] sm:%s949]
                %979 = vst [vmem:[%s959 + $0x24] sm:%s949] %v978
                %v980 = vld [vmem:[%s958 + $0x28] sm:%s949]
                %981 = vst [vmem:[%s959 + $0x28] sm:%s949] %v980
                %v982 = vld [vmem:[%s958 + $0x2c] sm:%s949]
                %983 = vst [vmem:[%s959 + $0x2c] sm:%s949] %v982
                %v984 = vld [vmem:[%s958 + $0x30] sm:%s949]
                %985 = vst [vmem:[%s959 + $0x30] sm:%s949] %v984
                %v986 = vld [vmem:[%s958 + $0x34] sm:%s949]
                %987 = vst [vmem:[%s959 + $0x34] sm:%s949] %v986
                %v988 = vld [vmem:[%s958 + $0x38] sm:%s949]
                %989 = vst [vmem:[%s959 + $0x38] sm:%s949] %v988
                %v990 = vld [vmem:[%s958 + $0x3c] sm:%s949]
                %991 = vst [vmem:[%s959 + $0x3c] sm:%s949] %v990
                %v992 = vld [vmem:[%s958 + $0x40] sm:%s949]
                %993 = vst [vmem:[%s959 + $0x40] sm:%s949] %v992
                %v994 = vld [vmem:[%s958 + $0x44] sm:%s949]
                %995 = vst [vmem:[%s959 + $0x44] sm:%s949] %v994
                %v996 = vld [vmem:[%s958 + $0x48] sm:%s949]
                %997 = vst [vmem:[%s959 + $0x48] sm:%s949] %v996
                %v998 = vld [vmem:[%s958 + $0x4c] sm:%s949]
                %999 = vst [vmem:[%s959 + $0x4c] sm:%s949] %v998
                %v1000 = vld [vmem:[%s958 + $0x50] sm:%s949]
                %1001 = vst [vmem:[%s959 + $0x50] sm:%s949] %v1000
                %v1002 = vld [vmem:[%s958 + $0x54] sm:%s949]
                %1003 = vst [vmem:[%s959 + $0x54] sm:%s949] %v1002
                %v1004 = vld [vmem:[%s958 + $0x58] sm:%s949]
                %1005 = vst [vmem:[%s959 + $0x58] sm:%s949] %v1004
                %v1006 = vld [vmem:[%s958 + $0x5c] sm:%s949]
                %1007 = vst [vmem:[%s959 + $0x5c] sm:%s949] %v1006
                %v1008 = vld [vmem:[%s958 + $0x60] sm:%s949]
                %1009 = vst [vmem:[%s959 + $0x60] sm:%s949] %v1008
                %v1010 = vld [vmem:[%s958 + $0x64] sm:%s949]
                %1011 = vst [vmem:[%s959 + $0x64] sm:%s949] %v1010
                %v1012 = vld [vmem:[%s958 + $0x68] sm:%s949]
                %1013 = vst [vmem:[%s959 + $0x68] sm:%s949] %v1012
                %v1014 = vld [vmem:[%s958 + $0x6c] sm:%s949]
                %1015 = vst [vmem:[%s959 + $0x6c] sm:%s949] %v1014
                %v1016 = vld [vmem:[%s958 + $0x70] sm:%s949]
                %1017 = vst [vmem:[%s959 + $0x70] sm:%s949] %v1016
                %v1018 = vld [vmem:[%s958 + $0x74] sm:%s949]
                %1019 = vst [vmem:[%s959 + $0x74] sm:%s949] %v1018
                %v1020 = vld [vmem:[%s958 + $0x78] sm:%s949]
                %1021 = vst [vmem:[%s959 + $0x78] sm:%s949] %v1020
                %v1022 = vld [vmem:[%s958 + $0x7c] sm:%s949]
                %1023 = vst [vmem:[%s959 + $0x7c] sm:%s949] %v1022
                %s1024 = sadd.s32 1, %s957
                %p1025 = scmp.ge.s32.totalorder %s1024, %s950
                %s1026 = scalar_select %p1025, 0, %s1024
                %s1027 = smul.u32 %s1026, 128
                %s1028 = smul.u32 %s1026, 128
                %s1029 = scalar_lea.vmem %s929, %s1027 [#allocation2]
                %s1030 = scalar_lea.vmem %s940, %s1028
              $region53: #{net_forward.13} parent=47 // loop_footer
                %s954 = sadd.s32 %s952, 1
              $region54: #{net_forward.13} parent=47 // loop_footer_branch
                %951 = sbr.rel target = $region50
              $region55: #{net_forward.13} parent=47 // loop_exit
                _
              %s1031 = sshrl.u32 %s936, 5
              %s1032 = sand.u32 %s936, 31
              %s1033 = smul.u32 %s1031, 32
              %s1034 = smul.u32 4, %s1033
              %s1035 = scalar_lea.vmem %s929, %s1034 [#allocation2]
              %s1036 = smul.u32 4, %s1033
              %s1037 = scalar_lea.vmem %s940, %s1036
              // While loop
              $region56: #{net_forward.13} parent=47 // loop_pre_header
                _
              $region57: #{net_forward.13} parent=47 // loop_header
                %s1039 = sphi 0, %s1041
                %p1040 = scmp.ge.s32.totalorder %s1039, %s1032
                %s1044 = sphi 0, %s1051
                %s1045 = sphi %s1035, %s1054
                %s1046 = sphi %s1037, %s1055
              $region58: #{net_forward.13} parent=47 // loop_header_branch
                %1043 = sbr.rel (%p1040) target = $region62
              $region59: #{net_forward.13} parent=47 // loop_body
                %v1047 = vld [vmem:[%s1045] sm:%s949]
                %1048 = vst [vmem:[%s1046] sm:%s949] %v1047
                %s1049 = sadd.s32 1, %s1044
                %p1050 = scmp.ge.s32.totalorder %s1049, %s1032
                %s1051 = scalar_select %p1050, 0, %s1049
                %s1052 = smul.u32 %s1051, 4
                %s1053 = smul.u32 %s1051, 4
                %s1054 = scalar_lea.vmem %s1035, %s1052 [#allocation2]
                %s1055 = scalar_lea.vmem %s1037, %s1053
              $region60: #{net_forward.13} parent=47 // loop_footer
                %s1041 = sadd.s32 %s1039, 1
              $region61: #{net_forward.13} parent=47 // loop_footer_branch
                %1038 = sbr.rel target = $region57
              $region62: #{net_forward.13} parent=47 // loop_exit
                _
            $region48: #{net_forward.13} parent=39 // pred_fallthru
              _
          $region40: #{net_forward.13} parent=35 // pred_fallthru
            _
          %1166 = vnop
        $region36: #{net_forward.13} parent=31 // pred_fallthru
          _
      $region32: #{net_forward.13} parent=5 // pred_fallthru
        _
      %p1167 = scmp.le.s32.totalorder 2, %s9
      // Predicated region
      $region81: #{net_forward.13} parent=5 // pred_check
        %p1168 = pneg %p1167
      $region82: #{net_forward.13} parent=5 // pred_check_branch
        %1170 = sbr.rel (%p1168) target = $region84
      $region83: #{net_forward.13} parent=5 // pred_region
        %s1171 = ssub.s32 %s9, 2
        // Predicated region
        $region85: #{net_forward.13} parent=83 // pred_check
          %p1172 = pneg %p106
        $region86: #{net_forward.13} parent=83 // pred_check_branch
          %1174 = sbr.rel (%p1172) target = $region88
        $region87: #{net_forward.13} parent=83 // pred_region
          %s1175 = sand.u32 %s91, 1
          %s1176 = sand.u32 %s91, 1
          %s1177 = smul.addr %s1176, 256
          %s1178 = scalar_lea.vmem [#allocation2], %s1177
        $region88: #{net_forward.13} parent=83 // pred_fallthru
          _
      $region84: #{net_forward.13} parent=5 // pred_fallthru
        _
    $region6: #{net_forward.13} parent=1 // loop_footer
      %s13 = sadd.s32 1, %s9
    $region7: #{net_forward.13} parent=1 // loop_footer_branch
      %8 = sbr.rel target = $region3
    $region8: #{net_forward.13} parent=1 // loop_exit
      _

// kernel: net_forward.14
$region0: #{net_forward.14}
  #allocation0 [shape = 'u32[]', space=smem, size = 0x4, offset = 0x4, fixed_abs, tag = 'smem constant byte address 0x4 - core index']
  #allocation1 [shape = 'u32[72,128]{1,0:T(1,128)}', space=vmem, size = 0x9000, scoped, tag = 'internal scratch']
  %s0 = inlined_call_operand.vmem [shape: bf16[392,10], index: 0, kind: input, shape index: {}]
  %s1 = inlined_call_operand.vmem [shape: bf16[10,48], index: 1, kind: input, shape index: {}]
  %s2 = inlined_call_operand.vmem [shape: f32[1,48], index: 2, kind: input, shape index: {}]
  %s3 = inlined_call_operand.vmem [shape: bf16[392,48], index: 3, kind: output, shape index: {}]
  %s4 = sld [smem:[#allocation0]]
  $region22: #{net_forward.14} parent=0
    _
  %s6 = ssub.s32 1, %s4
  %s7 = scalar_select 0, %s6, %s4
  // Predicated region
  $region2: #{net_forward.14} parent=0 // pred_check
    _
  $region3: #{net_forward.14} parent=0 // pred_check_branch
    %9 = sbr.rel (0) target = $region5
  $region4: #{net_forward.14} parent=0 // pred_region
    _
  $region5: #{net_forward.14} parent=0 // pred_fallthru
    _
  // Predicated region
  $region6: #{net_forward.14} parent=0 // pred_check
    _
  $region7: #{net_forward.14} parent=0 // pred_check_branch
    %11 = sbr.rel (0) target = $region9
  $region8: #{net_forward.14} parent=0 // pred_region
    _
  $region9: #{net_forward.14} parent=0 // pred_fallthru
    _
  // Predicated region
  $region10: #{net_forward.14} parent=0 // pred_check
    _
  $region11: #{net_forward.14} parent=0 // pred_check_branch
    %13 = sbr.rel (0) target = $region13
  $region12: #{net_forward.14} parent=0 // pred_region
    _
  $region13: #{net_forward.14} parent=0 // pred_fallthru
    _
  %v15 = vld [vmem:[%s0] sm:$0xf]
  %v16 = vld [vmem:[%s0 + $0x4] sm:$0xf]
  %v17 = vld [vmem:[%s0 + $0x8] sm:$0xf]
  %v18 = vld [vmem:[%s0 + $0xc] sm:$0xf]
  %v19 = vld [vmem:[%s0 + $0x10] sm:$0xf]
  %v20 = vld [vmem:[%s0 + $0x14] sm:$0xf]
  %v21 = vld [vmem:[%s0 + $0x18] sm:$0xf]
  %v22 = vld [vmem:[%s0 + $0x1c] sm:$0xf]
  %v23 = vld [vmem:[%s0 + $0x20] sm:$0xf]
  %v24 = vld [vmem:[%s0 + $0x24] sm:$0xf]
  %v25 = vld [vmem:[%s0 + $0x28] sm:$0xf]
  %v26 = vld [vmem:[%s0 + $0x2c] sm:$0xf]
  %v27 = vld [vmem:[%s0 + $0x30] sm:$0xf]
  %v28 = vld [vmem:[%s0 + $0x34] sm:$0xf]
  %v29 = vld [vmem:[%s0 + $0x38] sm:$0xf]
  %v30 = vld [vmem:[%s0 + $0x3c] sm:$0xf]
  %v31 = vld [vmem:[%s0 + $0x40] sm:$0xf]
  %v32 = vld [vmem:[%s0 + $0x44] sm:$0xf]
  %v33 = vld [vmem:[%s0 + $0x48] sm:$0xf]
  %v34 = vld [vmem:[%s0 + $0x4c] sm:$0xf]
  %v35 = vld [vmem:[%s0 + $0x50] sm:$0xf]
  %v36 = vld [vmem:[%s0 + $0x54] sm:$0xf]
  %v37 = vld [vmem:[%s0 + $0x58] sm:$0xf]
  %v38 = vld [vmem:[%s0 + $0x5c] sm:$0xf]
  %v39 = vld [vmem:[%s0 + $0x60] sm:$0xf]
  %v40 = vld [vmem:[%s0 + $0x64] sm:$0xf]
  %v41 = vld [vmem:[%s0 + $0x68] sm:$0xf]
  %v42 = vld [vmem:[%s0 + $0x6c] sm:$0xf]
  %v43 = vld [vmem:[%s0 + $0x70] sm:$0xf]
  %v44 = vld [vmem:[%s0 + $0x74] sm:$0xf]
  %v45 = vld [vmem:[%s0 + $0x78] sm:$0xf]
  %v46 = vld [vmem:[%s0 + $0x7c] sm:$0xf]
  %v47 = vld [vmem:[%s0 + $0x80] sm:$0xf]
  %v48 = vld [vmem:[%s0 + $0x84] sm:$0xf]
  %v49 = vld [vmem:[%s0 + $0x88] sm:$0xf]
  %v50 = vld [vmem:[%s0 + $0x8c] sm:$0xf]
  %v51 = vld [vmem:[%s0 + $0x90] sm:$0xf]
  %v52 = vld [vmem:[%s0 + $0x94] sm:$0xf]
  %v53 = vld [vmem:[%s0 + $0x98] sm:$0xf]
  %v54 = vld [vmem:[%s0 + $0x9c] sm:$0xf]
  %v55 = vld [vmem:[%s0 + $0xa0] sm:$0xf]
  %v56 = vld [vmem:[%s0 + $0xa4] sm:$0xf]
  %v57 = vld [vmem:[%s0 + $0xa8] sm:$0xf]
  %v58 = vld [vmem:[%s0 + $0xac] sm:$0xf]
  %v59 = vld [vmem:[%s0 + $0xb0] sm:$0xf]
  %v60 = vld [vmem:[%s0 + $0xb4] sm:$0xf]
  %v61 = vld [vmem:[%s0 + $0xb8] sm:$0xf]
  %v62 = vld [vmem:[%s0 + $0xbc] sm:$0xf]
  %v63 = vld [vmem:[%s0 + $0xc0] sm:$0xf]
  %v64 = vld [vmem:[%s1] sm:$0xf]
  %v65 = vld [vmem:[%s1 + $0x4] sm:$0x1]
  %v66 = vld [vmem:[%s2] sm:$0x1]
  %v68 = vperm.slane %v66, 0
  %v119 = vunpack.c.l.b16 %v15
  %v120 = vunpack.c.l.b16 %v16
  %v121 = vunpack.c.l.b16 %v17
  %v122 = vunpack.c.l.b16 %v18
  %v123 = vunpack.c.l.b16 %v19
  %v124 = vunpack.c.l.b16 %v20
  %v125 = vunpack.c.l.b16 %v21
  %v126 = vunpack.c.l.b16 %v22
  %v127 = vunpack.c.l.b16 %v23
  %v128 = vunpack.c.l.b16 %v24
  %v129 = vunpack.c.l.b16 %v25
  %v130 = vunpack.c.l.b16 %v26
  %v131 = vunpack.c.l.b16 %v27
  %v132 = vunpack.c.l.b16 %v28
  %v133 = vunpack.c.l.b16 %v29
  %v134 = vunpack.c.l.b16 %v30
  %v135 = vunpack.c.l.b16 %v31
  %v136 = vunpack.c.l.b16 %v32
  %v137 = vunpack.c.l.b16 %v33
  %v138 = vunpack.c.l.b16 %v34
  %v139 = vunpack.c.l.b16 %v35
  %v140 = vunpack.c.l.b16 %v36
  %v141 = vunpack.c.l.b16 %v37
  %v142 = vunpack.c.l.b16 %v38
  %v143 = vunpack.c.l.b16 %v39
  %v144 = vunpack.c.l.b16 %v40
  %v145 = vunpack.c.l.b16 %v41
  %v146 = vunpack.c.l.b16 %v42
  %v147 = vunpack.c.l.b16 %v43
  %v148 = vunpack.c.l.b16 %v44
  %v149 = vunpack.c.l.b16 %v45
  %v150 = vunpack.c.l.b16 %v46
  %v151 = vunpack.c.l.b16 %v47
  %v152 = vunpack.c.l.b16 %v48
  %v153 = vunpack.c.l.b16 %v49
  %v154 = vunpack.c.l.b16 %v50
  %v155 = vunpack.c.l.b16 %v51
  %v156 = vunpack.c.l.b16 %v52
  %v157 = vunpack.c.l.b16 %v53
  %v158 = vunpack.c.l.b16 %v54
  %v159 = vunpack.c.l.b16 %v55
  %v160 = vunpack.c.l.b16 %v56
  %v161 = vunpack.c.l.b16 %v57
  %v162 = vunpack.c.l.b16 %v58
  %v163 = vunpack.c.l.b16 %v59
  %v164 = vunpack.c.l.b16 %v60
  %v165 = vunpack.c.l.b16 %v61
  %v166 = vunpack.c.l.b16 %v62
  %v167 = vunpack.c.l.b16 %v63
  %v168 = vpack.c.b16 %v120, %v119
  %v169 = vpack.c.b16 %v122, %v121
  %v170 = vpack.c.b16 %v124, %v123
  %v171 = vpack.c.b16 %v126, %v125
  %v172 = vpack.c.b16 %v128, %v127
  %v173 = vpack.c.b16 %v130, %v129
  %v174 = vpack.c.b16 %v132, %v131
  %v175 = vpack.c.b16 %v134, %v133
  %v176 = vpack.c.b16 %v136, %v135
  %v177 = vpack.c.b16 %v138, %v137
  %v178 = vpack.c.b16 %v140, %v139
  %v179 = vpack.c.b16 %v142, %v141
  %v180 = vpack.c.b16 %v144, %v143
  %v181 = vpack.c.b16 %v146, %v145
  %v182 = vpack.c.b16 %v148, %v147
  %v183 = vpack.c.b16 %v150, %v149
  %v184 = vpack.c.b16 %v152, %v151
  %v185 = vpack.c.b16 %v154, %v153
  %v186 = vpack.c.b16 %v156, %v155
  %v187 = vpack.c.b16 %v158, %v157
  %v188 = vpack.c.b16 %v160, %v159
  %v189 = vpack.c.b16 %v162, %v161
  %v190 = vpack.c.b16 %v164, %v163
  %v191 = vpack.c.b16 %v166, %v165
  %v192 = vpack.c.b16 %v167, %v167
  %v195 = vunpack.c.l.b16 %v64
  %v196 = vunpack.c.l.b16 %v65
  %v197 = vpack.c.b16 %v196, %v195
  %vm198 = vcmask 80896
  %v200 = vsel %vm198, %v168, 0
  %v203 = vsel %vm198, %v169, 0
  %v206 = vsel %vm198, %v170, 0
  %v209 = vsel %vm198, %v171, 0
  %v212 = vsel %vm198, %v172, 0
  %v215 = vsel %vm198, %v173, 0
  %v218 = vsel %vm198, %v174, 0
  %v221 = vsel %vm198, %v175, 0
  %v224 = vsel %vm198, %v176, 0
  %v227 = vsel %vm198, %v177, 0
  %v230 = vsel %vm198, %v178, 0
  %v233 = vsel %vm198, %v179, 0
  %v236 = vsel %vm198, %v180, 0
  %v239 = vsel %vm198, %v181, 0
  %v242 = vsel %vm198, %v182, 0
  %v245 = vsel %vm198, %v183, 0
  %v248 = vsel %vm198, %v184, 0
  %v251 = vsel %vm198, %v185, 0
  %v254 = vsel %vm198, %v186, 0
  %v257 = vsel %vm198, %v187, 0
  %v260 = vsel %vm198, %v188, 0
  %v263 = vsel %vm198, %v189, 0
  %v266 = vsel %vm198, %v190, 0
  %v269 = vsel %vm198, %v191, 0
  %v272 = vsel %vm198, %v192, 0
  %vm274 = vcmask 1044480
  %v276 = vsel %vm274, %v197, 0
  %278 = vmatpush.bf16.msra.mxu0 0
  %279 = vmatpush.bf16.msra.mxu0 0
  %280 = vmatpush.bf16.msra.mxu0 0
  %281 = vmatpush.bf16.msra.mxu0 0
  %282 = vmatpush.bf16.msra.mxu0 0
  %283 = vmatpush.bf16.msra.mxu0 0
  %284 = vmatpush.bf16.msra.mxu0 0
  %285 = vmatpush.bf16.msra.mxu0 %v276
  %286 = vmatmul.bf16.gmra.mxu0 %v200
  %v287 = vpop.f32.mrf.mxu0
  %v288 = vadd.f32 %v68, %v287
  %v289 = vpop.f32.mrf.mxu0
  %v290 = vadd.f32 %v68, %v289
  %291 = vmatmul.bf16.gmra.mxu0 %v203
  %v292 = vpop.f32.mrf.mxu0
  %v293 = vadd.f32 %v68, %v292
  %v294 = vpop.f32.mrf.mxu0
  %v295 = vadd.f32 %v68, %v294
  %296 = vmatmul.bf16.gmra.mxu0 %v206
  %v297 = vpop.f32.mrf.mxu0
  %v298 = vadd.f32 %v68, %v297
  %v299 = vpop.f32.mrf.mxu0
  %v300 = vadd.f32 %v68, %v299
  %301 = vmatmul.bf16.gmra.mxu0 %v209
  %v302 = vpop.f32.mrf.mxu0
  %v303 = vadd.f32 %v68, %v302
  %v304 = vpop.f32.mrf.mxu0
  %v305 = vadd.f32 %v68, %v304
  %306 = vmatmul.bf16.gmra.mxu0 %v212
  %v307 = vpop.f32.mrf.mxu0
  %v308 = vadd.f32 %v68, %v307
  %v309 = vpop.f32.mrf.mxu0
  %v310 = vadd.f32 %v68, %v309
  %311 = vmatmul.bf16.gmra.mxu0 %v215
  %v312 = vpop.f32.mrf.mxu0
  %v313 = vadd.f32 %v68, %v312
  %v314 = vpop.f32.mrf.mxu0
  %v315 = vadd.f32 %v68, %v314
  %316 = vmatmul.bf16.gmra.mxu0 %v218
  %v317 = vpop.f32.mrf.mxu0
  %v318 = vadd.f32 %v68, %v317
  %v319 = vpop.f32.mrf.mxu0
  %v320 = vadd.f32 %v68, %v319
  %321 = vmatmul.bf16.gmra.mxu0 %v221
  %v322 = vpop.f32.mrf.mxu0
  %v323 = vadd.f32 %v68, %v322
  %v324 = vpop.f32.mrf.mxu0
  %v325 = vadd.f32 %v68, %v324
  %326 = vmatmul.bf16.gmra.mxu0 %v224
  %v327 = vpop.f32.mrf.mxu0
  %v328 = vadd.f32 %v68, %v327
  %v329 = vpop.f32.mrf.mxu0
  %v330 = vadd.f32 %v68, %v329
  %331 = vmatmul.bf16.gmra.mxu0 %v227
  %v332 = vpop.f32.mrf.mxu0
  %v333 = vadd.f32 %v68, %v332
  %v334 = vpop.f32.mrf.mxu0
  %v335 = vadd.f32 %v68, %v334
  %336 = vmatmul.bf16.gmra.mxu0 %v230
  %v337 = vpop.f32.mrf.mxu0
  %v338 = vadd.f32 %v68, %v337
  %v339 = vpop.f32.mrf.mxu0
  %v340 = vadd.f32 %v68, %v339
  %341 = vmatmul.bf16.gmra.mxu0 %v233
  %v342 = vpop.f32.mrf.mxu0
  %v343 = vadd.f32 %v68, %v342
  %v344 = vpop.f32.mrf.mxu0
  %v345 = vadd.f32 %v68, %v344
  %346 = vmatmul.bf16.gmra.mxu0 %v236
  %v347 = vpop.f32.mrf.mxu0
  %v348 = vadd.f32 %v68, %v347
  %v349 = vpop.f32.mrf.mxu0
  %v350 = vadd.f32 %v68, %v349
  %351 = vmatmul.bf16.gmra.mxu0 %v239
  %v352 = vpop.f32.mrf.mxu0
  %v353 = vadd.f32 %v68, %v352
  %v354 = vpop.f32.mrf.mxu0
  %v355 = vadd.f32 %v68, %v354
  %356 = vmatmul.bf16.gmra.mxu0 %v242
  %v357 = vpop.f32.mrf.mxu0
  %v358 = vadd.f32 %v68, %v357
  %v359 = vpop.f32.mrf.mxu0
  %v360 = vadd.f32 %v68, %v359
  %361 = vmatmul.bf16.gmra.mxu0 %v245
  %v362 = vpop.f32.mrf.mxu0
  %v363 = vadd.f32 %v68, %v362
  %v364 = vpop.f32.mrf.mxu0
  %v365 = vadd.f32 %v68, %v364
  %366 = vmatmul.bf16.gmra.mxu0 %v248
  %v367 = vpop.f32.mrf.mxu0
  %v368 = vadd.f32 %v68, %v367
  %v369 = vpop.f32.mrf.mxu0
  %v370 = vadd.f32 %v68, %v369
  %371 = vmatmul.bf16.gmra.mxu0 %v251
  %v372 = vpop.f32.mrf.mxu0
  %v373 = vadd.f32 %v68, %v372
  %v374 = vpop.f32.mrf.mxu0
  %v375 = vadd.f32 %v68, %v374
  %376 = vmatmul.bf16.gmra.mxu0 %v254
  %v377 = vpop.f32.mrf.mxu0
  %v378 = vadd.f32 %v68, %v377
  %v379 = vpop.f32.mrf.mxu0
  %v380 = vadd.f32 %v68, %v379
  %381 = vmatmul.bf16.gmra.mxu0 %v257
  %v382 = vpop.f32.mrf.mxu0
  %v383 = vadd.f32 %v68, %v382
  %v384 = vpop.f32.mrf.mxu0
  %v385 = vadd.f32 %v68, %v384
  %386 = vmatmul.bf16.gmra.mxu0 %v260
  %v387 = vpop.f32.mrf.mxu0
  %v388 = vadd.f32 %v68, %v387
  %v389 = vpop.f32.mrf.mxu0
  %v390 = vadd.f32 %v68, %v389
  %391 = vmatmul.bf16.gmra.mxu0 %v263
  %v392 = vpop.f32.mrf.mxu0
  %v393 = vadd.f32 %v68, %v392
  %v394 = vpop.f32.mrf.mxu0
  %v395 = vadd.f32 %v68, %v394
  %396 = vmatmul.bf16.gmra.mxu0 %v266
  %v397 = vpop.f32.mrf.mxu0
  %v398 = vadd.f32 %v68, %v397
  %v399 = vpop.f32.mrf.mxu0
  %v400 = vadd.f32 %v68, %v399
  %401 = vmatmul.bf16.gmra.mxu0 %v269
  %v402 = vpop.f32.mrf.mxu0
  %v403 = vadd.f32 %v68, %v402
  %v404 = vpop.f32.mrf.mxu0
  %v405 = vadd.f32 %v68, %v404
  %406 = vmatmul.bf16.gmra.mxu0 %v272
  %v407 = vpop.f32.mrf.mxu0
  %v408 = vadd.f32 %v68, %v407
  %v409 = vpop.f32.mrf.mxu0
  %410 = vdwg.mxu0
  %v411 = vpack.c.bf16 %v288, %v288
  %v412 = vpack.c.bf16 %v290, %v290
  %v413 = vpack.c.bf16 %v293, %v293
  %v414 = vpack.c.bf16 %v295, %v295
  %v415 = vpack.c.bf16 %v298, %v298
  %v416 = vpack.c.bf16 %v300, %v300
  %v417 = vpack.c.bf16 %v303, %v303
  %v418 = vpack.c.bf16 %v305, %v305
  %v419 = vpack.c.bf16 %v308, %v308
  %v420 = vpack.c.bf16 %v310, %v310
  %v421 = vpack.c.bf16 %v313, %v313
  %v422 = vpack.c.bf16 %v315, %v315
  %v423 = vpack.c.bf16 %v318, %v318
  %v424 = vpack.c.bf16 %v320, %v320
  %v425 = vpack.c.bf16 %v323, %v323
  %v426 = vpack.c.bf16 %v325, %v325
  %v427 = vpack.c.bf16 %v328, %v328
  %v428 = vpack.c.bf16 %v330, %v330
  %v429 = vpack.c.bf16 %v333, %v333
  %v430 = vpack.c.bf16 %v335, %v335
  %v431 = vpack.c.bf16 %v338, %v338
  %v432 = vpack.c.bf16 %v340, %v340
  %v433 = vpack.c.bf16 %v343, %v343
  %v434 = vpack.c.bf16 %v345, %v345
  %v435 = vpack.c.bf16 %v348, %v348
  %v436 = vpack.c.bf16 %v350, %v350
  %v437 = vpack.c.bf16 %v353, %v353
  %v438 = vpack.c.bf16 %v355, %v355
  %v439 = vpack.c.bf16 %v358, %v358
  %v440 = vpack.c.bf16 %v360, %v360
  %v441 = vpack.c.bf16 %v363, %v363
  %v442 = vpack.c.bf16 %v365, %v365
  %v443 = vpack.c.bf16 %v368, %v368
  %v444 = vpack.c.bf16 %v370, %v370
  %v445 = vpack.c.bf16 %v373, %v373
  %v446 = vpack.c.bf16 %v375, %v375
  %v447 = vpack.c.bf16 %v378, %v378
  %v448 = vpack.c.bf16 %v380, %v380
  %v449 = vpack.c.bf16 %v383, %v383
  %v450 = vpack.c.bf16 %v385, %v385
  %v451 = vpack.c.bf16 %v388, %v388
  %v452 = vpack.c.bf16 %v390, %v390
  %v453 = vpack.c.bf16 %v393, %v393
  %v454 = vpack.c.bf16 %v395, %v395
  %v455 = vpack.c.bf16 %v398, %v398
  %v456 = vpack.c.bf16 %v400, %v400
  %v457 = vpack.c.bf16 %v403, %v403
  %v458 = vpack.c.bf16 %v405, %v405
  %v459 = vpack.c.bf16 %v408, %v408
  %vm460 = vcmask 388096
  %461 = vst.msk [vmem:[%s3] sm:$0xf] %vm460, %v411
  %462 = vst.msk [vmem:[%s3 + $0x4] sm:$0xf] %vm460, %v412
  %463 = vst.msk [vmem:[%s3 + $0x8] sm:$0xf] %vm460, %v413
  %464 = vst.msk [vmem:[%s3 + $0xc] sm:$0xf] %vm460, %v414
  %465 = vst.msk [vmem:[%s3 + $0x10] sm:$0xf] %vm460, %v415
  %466 = vst.msk [vmem:[%s3 + $0x14] sm:$0xf] %vm460, %v416
  %467 = vst.msk [vmem:[%s3 + $0x18] sm:$0xf] %vm460, %v417
  %468 = vst.msk [vmem:[%s3 + $0x1c] sm:$0xf] %vm460, %v418
  %469 = vst.msk [vmem:[%s3 + $0x20] sm:$0xf] %vm460, %v419
  %470 = vst.msk [vmem:[%s3 + $0x24] sm:$0xf] %vm460, %v420
  %471 = vst.msk [vmem:[%s3 + $0x28] sm:$0xf] %vm460, %v421
  %472 = vst.msk [vmem:[%s3 + $0x2c] sm:$0xf] %vm460, %v422
  %473 = vst.msk [vmem:[%s3 + $0x30] sm:$0xf] %vm460, %v423
  %474 = vst.msk [vmem:[%s3 + $0x34] sm:$0xf] %vm460, %v424
  %475 = vst.msk [vmem:[%s3 + $0x38] sm:$0xf] %vm460, %v425
  %476 = vst.msk [vmem:[%s3 + $0x3c] sm:$0xf] %vm460, %v426
  %477 = vst.msk [vmem:[%s3 + $0x40] sm:$0xf] %vm460, %v427
  %478 = vst.msk [vmem:[%s3 + $0x44] sm:$0xf] %vm460, %v428
  %479 = vst.msk [vmem:[%s3 + $0x48] sm:$0xf] %vm460, %v429
  %480 = vst.msk [vmem:[%s3 + $0x4c] sm:$0xf] %vm460, %v430
  %481 = vst.msk [vmem:[%s3 + $0x50] sm:$0xf] %vm460, %v431
  %482 = vst.msk [vmem:[%s3 + $0x54] sm:$0xf] %vm460, %v432
  %483 = vst.msk [vmem:[%s3 + $0x58] sm:$0xf] %vm460, %v433
  %484 = vst.msk [vmem:[%s3 + $0x5c] sm:$0xf] %vm460, %v434
  %485 = vst.msk [vmem:[%s3 + $0x60] sm:$0xf] %vm460, %v435
  %486 = vst.msk [vmem:[%s3 + $0x64] sm:$0xf] %vm460, %v436
  %487 = vst.msk [vmem:[%s3 + $0x68] sm:$0xf] %vm460, %v437
  %488 = vst.msk [vmem:[%s3 + $0x6c] sm:$0xf] %vm460, %v438
  %489 = vst.msk [vmem:[%s3 + $0x70] sm:$0xf] %vm460, %v439
  %490 = vst.msk [vmem:[%s3 + $0x74] sm:$0xf] %vm460, %v440
  %491 = vst.msk [vmem:[%s3 + $0x78] sm:$0xf] %vm460, %v441
  %492 = vst.msk [vmem:[%s3 + $0x7c] sm:$0xf] %vm460, %v442
  %493 = vst.msk [vmem:[%s3 + $0x80] sm:$0xf] %vm460, %v443
  %494 = vst.msk [vmem:[%s3 + $0x84] sm:$0xf] %vm460, %v444
  %495 = vst.msk [vmem:[%s3 + $0x88] sm:$0xf] %vm460, %v445
  %496 = vst.msk [vmem:[%s3 + $0x8c] sm:$0xf] %vm460, %v446
  %497 = vst.msk [vmem:[%s3 + $0x90] sm:$0xf] %vm460, %v447
  %498 = vst.msk [vmem:[%s3 + $0x94] sm:$0xf] %vm460, %v448
  %499 = vst.msk [vmem:[%s3 + $0x98] sm:$0xf] %vm460, %v449
  %500 = vst.msk [vmem:[%s3 + $0x9c] sm:$0xf] %vm460, %v450
  %501 = vst.msk [vmem:[%s3 + $0xa0] sm:$0xf] %vm460, %v451
  %502 = vst.msk [vmem:[%s3 + $0xa4] sm:$0xf] %vm460, %v452
  %503 = vst.msk [vmem:[%s3 + $0xa8] sm:$0xf] %vm460, %v453
  %504 = vst.msk [vmem:[%s3 + $0xac] sm:$0xf] %vm460, %v454
  %505 = vst.msk [vmem:[%s3 + $0xb0] sm:$0xf] %vm460, %v455
  %506 = vst.msk [vmem:[%s3 + $0xb4] sm:$0xf] %vm460, %v456
  %507 = vst.msk [vmem:[%s3 + $0xb8] sm:$0xf] %vm460, %v457
  %508 = vst.msk [vmem:[%s3 + $0xbc] sm:$0xf] %vm460, %v458
  %509 = vst.msk [vmem:[%s3 + $0xc0] sm:$0xf] %vm460, %v459
  // Predicated region
  $region14: #{net_forward.14} parent=0 // pred_check
    _
  $region15: #{net_forward.14} parent=0 // pred_check_branch
    %511 = sbr.rel (0) target = $region17
  $region16: #{net_forward.14} parent=0 // pred_region
    _
  $region17: #{net_forward.14} parent=0 // pred_fallthru
    _
  // Predicated region
  $region18: #{net_forward.14} parent=0 // pred_check
    _
  $region19: #{net_forward.14} parent=0 // pred_check_branch
    %513 = sbr.rel (0) target = $region21
  $region20: #{net_forward.14} parent=0 // pred_region
    _
  $region21: #{net_forward.14} parent=0 // pred_fallthru
    _

// kernel: net_forward.15
$region0: #{net_forward.15}
  #allocation0 [shape = 'u32[]', space=smem, size = 0x4, offset = 0x4, fixed_abs, tag = 'smem constant byte address 0x4 - core index']
  #allocation1 [shape = 'u32[72,128]{1,0:T(1,128)}', space=vmem, size = 0x9000, scoped, tag = 'internal scratch']
  %s0 = inlined_call_operand.vmem [shape: bf16[392,144], index: 0, kind: input, shape index: {}]
  %s1 = inlined_call_operand.vmem [shape: bf16[144,24], index: 1, kind: input, shape index: {}]
  %s2 = inlined_call_operand.vmem [shape: f32[1,24], index: 2, kind: input, shape index: {}]
  %s3 = inlined_call_operand.vmem [shape: bf16[392,24], index: 3, kind: output, shape index: {}]
  %s4 = sld [smem:[#allocation0]]
  $region22: #{net_forward.15} parent=0
    _
  %s6 = ssub.s32 1, %s4
  %s7 = scalar_select 0, %s6, %s4
  // Predicated region
  $region2: #{net_forward.15} parent=0 // pred_check
    _
  $region3: #{net_forward.15} parent=0 // pred_check_branch
    %9 = sbr.rel (0) target = $region5
  $region4: #{net_forward.15} parent=0 // pred_region
    _
  $region5: #{net_forward.15} parent=0 // pred_fallthru
    _
  // Predicated region
  $region6: #{net_forward.15} parent=0 // pred_check
    _
  $region7: #{net_forward.15} parent=0 // pred_check_branch
    %11 = sbr.rel (0) target = $region9
  $region8: #{net_forward.15} parent=0 // pred_region
    _
  $region9: #{net_forward.15} parent=0 // pred_fallthru
    _
  // Predicated region
  $region10: #{net_forward.15} parent=0 // pred_check
    _
  $region11: #{net_forward.15} parent=0 // pred_check_branch
    %13 = sbr.rel (0) target = $region13
  $region12: #{net_forward.15} parent=0 // pred_region
    _
  $region13: #{net_forward.15} parent=0 // pred_fallthru
    _
  %v15 = vld [vmem:[%s0] sm:$0xff]
  %v16 = vld [vmem:[%s0 + $0x8] sm:$0xff]
  %v17 = vld [vmem:[%s0 + $0x10] sm:$0xff]
  %v18 = vld [vmem:[%s0 + $0x18] sm:$0xff]
  %v19 = vld [vmem:[%s0 + $0x20] sm:$0xff]
  %v20 = vld [vmem:[%s0 + $0x28] sm:$0xff]
  %v21 = vld [vmem:[%s0 + $0x30] sm:$0xff]
  %v22 = vld [vmem:[%s0 + $0x38] sm:$0xff]
  %v23 = vld [vmem:[%s0 + $0x40] sm:$0xff]
  %v24 = vld [vmem:[%s0 + $0x48] sm:$0xff]
  %v25 = vld [vmem:[%s0 + $0x50] sm:$0xff]
  %v26 = vld [vmem:[%s0 + $0x58] sm:$0xff]
  %v27 = vld [vmem:[%s0 + $0x60] sm:$0xff]
  %v28 = vld [vmem:[%s0 + $0x68] sm:$0xff]
  %v29 = vld [vmem:[%s0 + $0x70] sm:$0xff]
  %v30 = vld [vmem:[%s0 + $0x78] sm:$0xff]
  %v31 = vld [vmem:[%s0 + $0x80] sm:$0xff]
  %v32 = vld [vmem:[%s0 + $0x88] sm:$0xff]
  %v33 = vld [vmem:[%s0 + $0x90] sm:$0xff]
  %v34 = vld [vmem:[%s0 + $0x98] sm:$0xff]
  %v35 = vld [vmem:[%s0 + $0xa0] sm:$0xff]
  %v36 = vld [vmem:[%s0 + $0xa8] sm:$0xff]
  %v37 = vld [vmem:[%s0 + $0xb0] sm:$0xff]
  %v38 = vld [vmem:[%s0 + $0xb8] sm:$0xff]
  %v39 = vld [vmem:[%s0 + $0xc0] sm:$0xff]
  %v40 = vld [vmem:[%s0 + $0xc8] sm:$0xff]
  %v41 = vld [vmem:[%s0 + $0xd0] sm:$0xff]
  %v42 = vld [vmem:[%s0 + $0xd8] sm:$0xff]
  %v43 = vld [vmem:[%s0 + $0xe0] sm:$0xff]
  %v44 = vld [vmem:[%s0 + $0xe8] sm:$0xff]
  %v45 = vld [vmem:[%s0 + $0xf0] sm:$0xff]
  %v46 = vld [vmem:[%s0 + $0xf8] sm:$0xff]
  %v47 = vld [vmem:[%s0 + $0x100] sm:$0xff]
  %v48 = vld [vmem:[%s0 + $0x108] sm:$0xff]
  %v49 = vld [vmem:[%s0 + $0x110] sm:$0xff]
  %v50 = vld [vmem:[%s0 + $0x118] sm:$0xff]
  %v51 = vld [vmem:[%s0 + $0x120] sm:$0xff]
  %v52 = vld [vmem:[%s0 + $0x128] sm:$0xff]
  %v53 = vld [vmem:[%s0 + $0x130] sm:$0xff]
  %v54 = vld [vmem:[%s0 + $0x138] sm:$0xff]
  %v55 = vld [vmem:[%s0 + $0x140] sm:$0xff]
  %v56 = vld [vmem:[%s0 + $0x148] sm:$0xff]
  %v57 = vld [vmem:[%s0 + $0x150] sm:$0xff]
  %v58 = vld [vmem:[%s0 + $0x158] sm:$0xff]
  %v59 = vld [vmem:[%s0 + $0x160] sm:$0xff]
  %v60 = vld [vmem:[%s0 + $0x168] sm:$0xff]
  %v61 = vld [vmem:[%s0 + $0x170] sm:$0xff]
  %v62 = vld [vmem:[%s0 + $0x178] sm:$0xff]
  %v63 = vld [vmem:[%s0 + $0x180] sm:$0xff]
  %v64 = vld [vmem:[%s1] sm:$0xf]
  %v65 = vld [vmem:[%s1 + $0x4] sm:$0xf]
  %v66 = vld [vmem:[%s1 + $0x8] sm:$0xf]
  %v67 = vld [vmem:[%s1 + $0xc] sm:$0xf]
  %v68 = vld [vmem:[%s1 + $0x10] sm:$0xf]
  %v69 = vld [vmem:[%s1 + $0x14] sm:$0xf]
  %v70 = vld [vmem:[%s1 + $0x18] sm:$0xf]
  %v71 = vld [vmem:[%s1 + $0x1c] sm:$0xf]
  %v72 = vld [vmem:[%s1 + $0x20] sm:$0xf]
  %v73 = vld [vmem:[%s1 + $0x24] sm:$0xf]
  %v74 = vld [vmem:[%s1 + $0x28] sm:$0xf]
  %v75 = vld [vmem:[%s1 + $0x2c] sm:$0xf]
  %v76 = vld [vmem:[%s1 + $0x30] sm:$0xf]
  %v77 = vld [vmem:[%s1 + $0x34] sm:$0xf]
  %v78 = vld [vmem:[%s1 + $0x38] sm:$0xf]
  %v79 = vld [vmem:[%s1 + $0x3c] sm:$0xf]
  %v80 = vld [vmem:[%s1 + $0x40] sm:$0xf]
  %v81 = vld [vmem:[%s1 + $0x44] sm:$0xf]
  %v82 = vld [vmem:[%s2] sm:$0x1]
  %v84 = vperm.slane %v82, 0
  %v135 = vunpack.c.l.b16 %v15
  %v136 = vunpack.c.h.b16 %v15
  %v137 = vunpack.c.l.b16 %v16
  %v138 = vunpack.c.h.b16 %v16
  %v139 = vunpack.c.l.b16 %v17
  %v140 = vunpack.c.h.b16 %v17
  %v141 = vunpack.c.l.b16 %v18
  %v142 = vunpack.c.h.b16 %v18
  %v143 = vunpack.c.l.b16 %v19
  %v144 = vunpack.c.h.b16 %v19
  %v145 = vunpack.c.l.b16 %v20
  %v146 = vunpack.c.h.b16 %v20
  %v147 = vunpack.c.l.b16 %v21
  %v148 = vunpack.c.h.b16 %v21
  %v149 = vunpack.c.l.b16 %v22
  %v150 = vunpack.c.h.b16 %v22
  %v151 = vunpack.c.l.b16 %v23
  %v152 = vunpack.c.h.b16 %v23
  %v153 = vunpack.c.l.b16 %v24
  %v154 = vunpack.c.h.b16 %v24
  %v155 = vunpack.c.l.b16 %v25
  %v156 = vunpack.c.h.b16 %v25
  %v157 = vunpack.c.l.b16 %v26
  %v158 = vunpack.c.h.b16 %v26
  %v159 = vunpack.c.l.b16 %v27
  %v160 = vunpack.c.h.b16 %v27
  %v161 = vunpack.c.l.b16 %v28
  %v162 = vunpack.c.h.b16 %v28
  %v163 = vunpack.c.l.b16 %v29
  %v164 = vunpack.c.h.b16 %v29
  %v165 = vunpack.c.l.b16 %v30
  %v166 = vunpack.c.h.b16 %v30
  %v167 = vunpack.c.l.b16 %v31
  %v168 = vunpack.c.h.b16 %v31
  %v169 = vunpack.c.l.b16 %v32
  %v170 = vunpack.c.h.b16 %v32
  %v171 = vunpack.c.l.b16 %v33
  %v172 = vunpack.c.h.b16 %v33
  %v173 = vunpack.c.l.b16 %v34
  %v174 = vunpack.c.h.b16 %v34
  %v175 = vunpack.c.l.b16 %v35
  %v176 = vunpack.c.h.b16 %v35
  %v177 = vunpack.c.l.b16 %v36
  %v178 = vunpack.c.h.b16 %v36
  %v179 = vunpack.c.l.b16 %v37
  %v180 = vunpack.c.h.b16 %v37
  %v181 = vunpack.c.l.b16 %v38
  %v182 = vunpack.c.h.b16 %v38
  %v183 = vunpack.c.l.b16 %v39
  %v184 = vunpack.c.h.b16 %v39
  %v185 = vunpack.c.l.b16 %v40
  %v186 = vunpack.c.h.b16 %v40
  %v187 = vunpack.c.l.b16 %v41
  %v188 = vunpack.c.h.b16 %v41
  %v189 = vunpack.c.l.b16 %v42
  %v190 = vunpack.c.h.b16 %v42
  %v191 = vunpack.c.l.b16 %v43
  %v192 = vunpack.c.h.b16 %v43
  %v193 = vunpack.c.l.b16 %v44
  %v194 = vunpack.c.h.b16 %v44
  %v195 = vunpack.c.l.b16 %v45
  %v196 = vunpack.c.h.b16 %v45
  %v197 = vunpack.c.l.b16 %v46
  %v198 = vunpack.c.h.b16 %v46
  %v199 = vunpack.c.l.b16 %v47
  %v200 = vunpack.c.h.b16 %v47
  %v201 = vunpack.c.l.b16 %v48
  %v202 = vunpack.c.h.b16 %v48
  %v203 = vunpack.c.l.b16 %v49
  %v204 = vunpack.c.h.b16 %v49
  %v205 = vunpack.c.l.b16 %v50
  %v206 = vunpack.c.h.b16 %v50
  %v207 = vunpack.c.l.b16 %v51
  %v208 = vunpack.c.h.b16 %v51
  %v209 = vunpack.c.l.b16 %v52
  %v210 = vunpack.c.h.b16 %v52
  %v211 = vunpack.c.l.b16 %v53
  %v212 = vunpack.c.h.b16 %v53
  %v213 = vunpack.c.l.b16 %v54
  %v214 = vunpack.c.h.b16 %v54
  %v215 = vunpack.c.l.b16 %v55
  %v216 = vunpack.c.h.b16 %v55
  %v217 = vunpack.c.l.b16 %v56
  %v218 = vunpack.c.h.b16 %v56
  %v219 = vunpack.c.l.b16 %v57
  %v220 = vunpack.c.h.b16 %v57
  %v221 = vunpack.c.l.b16 %v58
  %v222 = vunpack.c.h.b16 %v58
  %v223 = vunpack.c.l.b16 %v59
  %v224 = vunpack.c.h.b16 %v59
  %v225 = vunpack.c.l.b16 %v60
  %v226 = vunpack.c.h.b16 %v60
  %v227 = vunpack.c.l.b16 %v61
  %v228 = vunpack.c.h.b16 %v61
  %v229 = vunpack.c.l.b16 %v62
  %v230 = vunpack.c.h.b16 %v62
  %v231 = vunpack.c.l.b16 %v63
  %v232 = vunpack.c.h.b16 %v63
  %v233 = vpack.c.b16 %v137, %v135
  %v234 = vpack.c.b16 %v138, %v136
  %v235 = vpack.c.b16 %v141, %v139
  %v236 = vpack.c.b16 %v142, %v140
  %v237 = vpack.c.b16 %v145, %v143
  %v238 = vpack.c.b16 %v146, %v144
  %v239 = vpack.c.b16 %v149, %v147
  %v240 = vpack.c.b16 %v150, %v148
  %v241 = vpack.c.b16 %v153, %v151
  %v242 = vpack.c.b16 %v154, %v152
  %v243 = vpack.c.b16 %v157, %v155
  %v244 = vpack.c.b16 %v158, %v156
  %v245 = vpack.c.b16 %v161, %v159
  %v246 = vpack.c.b16 %v162, %v160
  %v247 = vpack.c.b16 %v165, %v163
  %v248 = vpack.c.b16 %v166, %v164
  %v249 = vpack.c.b16 %v169, %v167
  %v250 = vpack.c.b16 %v170, %v168
  %v251 = vpack.c.b16 %v173, %v171
  %v252 = vpack.c.b16 %v174, %v172
  %v253 = vpack.c.b16 %v177, %v175
  %v254 = vpack.c.b16 %v178, %v176
  %v255 = vpack.c.b16 %v181, %v179
  %v256 = vpack.c.b16 %v182, %v180
  %v257 = vpack.c.b16 %v185, %v183
  %v258 = vpack.c.b16 %v186, %v184
  %v259 = vpack.c.b16 %v189, %v187
  %v260 = vpack.c.b16 %v190, %v188
  %v261 = vpack.c.b16 %v193, %v191
  %v262 = vpack.c.b16 %v194, %v192
  %v263 = vpack.c.b16 %v197, %v195
  %v264 = vpack.c.b16 %v198, %v196
  %v265 = vpack.c.b16 %v201, %v199
  %v266 = vpack.c.b16 %v202, %v200
  %v267 = vpack.c.b16 %v205, %v203
  %v268 = vpack.c.b16 %v206, %v204
  %v269 = vpack.c.b16 %v209, %v207
  %v270 = vpack.c.b16 %v210, %v208
  %v271 = vpack.c.b16 %v213, %v211
  %v272 = vpack.c.b16 %v214, %v212
  %v273 = vpack.c.b16 %v217, %v215
  %v274 = vpack.c.b16 %v218, %v216
  %v275 = vpack.c.b16 %v221, %v219
  %v276 = vpack.c.b16 %v222, %v220
  %v277 = vpack.c.b16 %v225, %v223
  %v278 = vpack.c.b16 %v226, %v224
  %v279 = vpack.c.b16 %v229, %v227
  %v280 = vpack.c.b16 %v230, %v228
  %v281 = vpack.c.b16 %v231, %v231
  %v282 = vpack.c.b16 %v232, %v232
  %v326 = vunpack.c.l.b16 %v64
  %v327 = vunpack.c.l.b16 %v65
  %v328 = vunpack.c.l.b16 %v66
  %v329 = vunpack.c.l.b16 %v67
  %v330 = vunpack.c.l.b16 %v68
  %v331 = vunpack.c.l.b16 %v69
  %v332 = vunpack.c.l.b16 %v70
  %v333 = vunpack.c.l.b16 %v71
  %v334 = vunpack.c.l.b16 %v72
  %v335 = vunpack.c.l.b16 %v73
  %v336 = vunpack.c.l.b16 %v74
  %v337 = vunpack.c.l.b16 %v75
  %v338 = vunpack.c.l.b16 %v76
  %v339 = vunpack.c.l.b16 %v77
  %v340 = vunpack.c.l.b16 %v78
  %v341 = vunpack.c.l.b16 %v79
  %v342 = vunpack.c.l.b16 %v80
  %v343 = vunpack.c.l.b16 %v81
  %v344 = vpack.c.b16 %v327, %v326
  %v345 = vpack.c.b16 %v329, %v328
  %v346 = vpack.c.b16 %v331, %v330
  %v347 = vpack.c.b16 %v333, %v332
  %v348 = vpack.c.b16 %v335, %v334
  %v349 = vpack.c.b16 %v337, %v336
  %v350 = vpack.c.b16 %v339, %v338
  %v351 = vpack.c.b16 %v341, %v340
  %v352 = vpack.c.b16 %v343, %v342
  %vm362 = vcmask 130048
  %v364 = vsel %vm362, %v234, 0
  %v367 = vsel %vm362, %v236, 0
  %v370 = vsel %vm362, %v238, 0
  %v373 = vsel %vm362, %v240, 0
  %v376 = vsel %vm362, %v242, 0
  %v379 = vsel %vm362, %v244, 0
  %v382 = vsel %vm362, %v246, 0
  %v385 = vsel %vm362, %v248, 0
  %v388 = vsel %vm362, %v250, 0
  %v391 = vsel %vm362, %v252, 0
  %v394 = vsel %vm362, %v254, 0
  %v397 = vsel %vm362, %v256, 0
  %v400 = vsel %vm362, %v258, 0
  %v403 = vsel %vm362, %v260, 0
  %v406 = vsel %vm362, %v262, 0
  %v409 = vsel %vm362, %v264, 0
  %v412 = vsel %vm362, %v266, 0
  %v415 = vsel %vm362, %v268, 0
  %v418 = vsel %vm362, %v270, 0
  %v421 = vsel %vm362, %v272, 0
  %v424 = vsel %vm362, %v274, 0
  %v427 = vsel %vm362, %v276, 0
  %v430 = vsel %vm362, %v278, 0
  %v433 = vsel %vm362, %v280, 0
  %v436 = vsel %vm362, %v282, 0
  %438 = vmatpush.bf16.msra.mxu0 %v351
  %439 = vmatpush.bf16.msra.mxu0 %v350
  %440 = vmatpush.bf16.msra.mxu0 %v349
  %441 = vmatpush.bf16.msra.mxu0 %v348
  %442 = vmatpush.bf16.msra.mxu0 %v347
  %443 = vmatpush.bf16.msra.mxu0 %v346
  %444 = vmatpush.bf16.msra.mxu0 %v345
  %445 = vmatpush.bf16.msra.mxu0 %v344
  %446 = vmatmul.bf16.gmra.mxu0 %v233
  %v447 = vpop.f32.mrf.mxu0
  %v448 = vadd.f32 %v84, %v447
  %v449 = vpop.f32.mrf.mxu0
  %v450 = vadd.f32 %v84, %v449
  %451 = vmatmul.bf16.gmra.mxu0 %v235
  %v452 = vpop.f32.mrf.mxu0
  %v453 = vadd.f32 %v84, %v452
  %v454 = vpop.f32.mrf.mxu0
  %v455 = vadd.f32 %v84, %v454
  %456 = vmatmul.bf16.gmra.mxu0 %v237
  %v457 = vpop.f32.mrf.mxu0
  %v458 = vadd.f32 %v84, %v457
  %v459 = vpop.f32.mrf.mxu0
  %v460 = vadd.f32 %v84, %v459
  %461 = vmatmul.bf16.gmra.mxu0 %v239
  %v462 = vpop.f32.mrf.mxu0
  %v463 = vadd.f32 %v84, %v462
  %v464 = vpop.f32.mrf.mxu0
  %v465 = vadd.f32 %v84, %v464
  %466 = vmatmul.bf16.gmra.mxu0 %v241
  %v467 = vpop.f32.mrf.mxu0
  %v468 = vadd.f32 %v84, %v467
  %v469 = vpop.f32.mrf.mxu0
  %v470 = vadd.f32 %v84, %v469
  %471 = vmatmul.bf16.gmra.mxu0 %v243
  %v472 = vpop.f32.mrf.mxu0
  %v473 = vadd.f32 %v84, %v472
  %v474 = vpop.f32.mrf.mxu0
  %v475 = vadd.f32 %v84, %v474
  %476 = vmatmul.bf16.gmra.mxu0 %v245
  %v477 = vpop.f32.mrf.mxu0
  %v478 = vadd.f32 %v84, %v477
  %v479 = vpop.f32.mrf.mxu0
  %v480 = vadd.f32 %v84, %v479
  %481 = vmatmul.bf16.gmra.mxu0 %v247
  %v482 = vpop.f32.mrf.mxu0
  %v483 = vadd.f32 %v84, %v482
  %v484 = vpop.f32.mrf.mxu0
  %v485 = vadd.f32 %v84, %v484
  %486 = vmatmul.bf16.gmra.mxu0 %v249
  %v487 = vpop.f32.mrf.mxu0
  %v488 = vadd.f32 %v84, %v487
  %v489 = vpop.f32.mrf.mxu0
  %v490 = vadd.f32 %v84, %v489
  %491 = vmatmul.bf16.gmra.mxu0 %v251
  %v492 = vpop.f32.mrf.mxu0
  %v493 = vadd.f32 %v84, %v492
  %v494 = vpop.f32.mrf.mxu0
  %v495 = vadd.f32 %v84, %v494
  %496 = vmatmul.bf16.gmra.mxu0 %v253
  %v497 = vpop.f32.mrf.mxu0
  %v498 = vadd.f32 %v84, %v497
  %v499 = vpop.f32.mrf.mxu0
  %v500 = vadd.f32 %v84, %v499
  %501 = vmatmul.bf16.gmra.mxu0 %v255
  %v502 = vpop.f32.mrf.mxu0
  %v503 = vadd.f32 %v84, %v502
  %v504 = vpop.f32.mrf.mxu0
  %v505 = vadd.f32 %v84, %v504
  %506 = vmatmul.bf16.gmra.mxu0 %v257
  %v507 = vpop.f32.mrf.mxu0
  %v508 = vadd.f32 %v84, %v507
  %v509 = vpop.f32.mrf.mxu0
  %v510 = vadd.f32 %v84, %v509
  %511 = vmatmul.bf16.gmra.mxu0 %v259
  %v512 = vpop.f32.mrf.mxu0
  %v513 = vadd.f32 %v84, %v512
  %v514 = vpop.f32.mrf.mxu0
  %v515 = vadd.f32 %v84, %v514
  %516 = vmatmul.bf16.gmra.mxu0 %v261
  %v517 = vpop.f32.mrf.mxu0
  %v518 = vadd.f32 %v84, %v517
  %v519 = vpop.f32.mrf.mxu0
  %v520 = vadd.f32 %v84, %v519
  %521 = vmatmul.bf16.gmra.mxu0 %v263
  %v522 = vpop.f32.mrf.mxu0
  %v523 = vadd.f32 %v84, %v522
  %v524 = vpop.f32.mrf.mxu0
  %v525 = vadd.f32 %v84, %v524
  %526 = vmatmul.bf16.gmra.mxu0 %v265
  %v527 = vpop.f32.mrf.mxu0
  %v528 = vadd.f32 %v84, %v527
  %v529 = vpop.f32.mrf.mxu0
  %v530 = vadd.f32 %v84, %v529
  %531 = vmatmul.bf16.gmra.mxu0 %v267
  %v532 = vpop.f32.mrf.mxu0
  %v533 = vadd.f32 %v84, %v532
  %v534 = vpop.f32.mrf.mxu0
  %v535 = vadd.f32 %v84, %v534
  %536 = vmatmul.bf16.gmra.mxu0 %v269
  %v537 = vpop.f32.mrf.mxu0
  %v538 = vadd.f32 %v84, %v537
  %v539 = vpop.f32.mrf.mxu0
  %v540 = vadd.f32 %v84, %v539
  %541 = vmatmul.bf16.gmra.mxu0 %v271
  %v542 = vpop.f32.mrf.mxu0
  %v543 = vadd.f32 %v84, %v542
  %v544 = vpop.f32.mrf.mxu0
  %v545 = vadd.f32 %v84, %v544
  %546 = vmatmul.bf16.gmra.mxu0 %v273
  %v547 = vpop.f32.mrf.mxu0
  %v548 = vadd.f32 %v84, %v547
  %v549 = vpop.f32.mrf.mxu0
  %v550 = vadd.f32 %v84, %v549
  %551 = vmatmul.bf16.gmra.mxu0 %v275
  %v552 = vpop.f32.mrf.mxu0
  %v553 = vadd.f32 %v84, %v552
  %v554 = vpop.f32.mrf.mxu0
  %v555 = vadd.f32 %v84, %v554
  %556 = vmatmul.bf16.gmra.mxu0 %v277
  %v557 = vpop.f32.mrf.mxu0
  %v558 = vadd.f32 %v84, %v557
  %v559 = vpop.f32.mrf.mxu0
  %v560 = vadd.f32 %v84, %v559
  %561 = vmatmul.bf16.gmra.mxu0 %v279
  %v562 = vpop.f32.mrf.mxu0
  %v563 = vadd.f32 %v84, %v562
  %v564 = vpop.f32.mrf.mxu0
  %v565 = vadd.f32 %v84, %v564
  %566 = vmatmul.bf16.gmra.mxu0 %v281
  %v567 = vpop.f32.mrf.mxu0
  %v568 = vadd.f32 %v84, %v567
  %v569 = vpop.f32.mrf.mxu0
  %570 = vdwg.mxu0
  %571 = vmatpush.bf16.msra.mxu0 0
  %572 = vmatpush.bf16.msra.mxu0 0
  %573 = vmatpush.bf16.msra.mxu0 0
  %574 = vmatpush.bf16.msra.mxu0 0
  %575 = vmatpush.bf16.msra.mxu0 0
  %576 = vmatpush.bf16.msra.mxu0 0
  %577 = vmatpush.bf16.msra.mxu0 0
  %578 = vmatpush.bf16.msra.mxu0 %v352
  %579 = vmatmul.bf16.gmra.mxu0 %v364
  %v580 = vpop.f32.mrf.mxu0
  %v581 = vadd.f32 %v448, %v580
  %v582 = vpop.f32.mrf.mxu0
  %v583 = vadd.f32 %v450, %v582
  %584 = vmatmul.bf16.gmra.mxu0 %v367
  %v585 = vpop.f32.mrf.mxu0
  %v586 = vadd.f32 %v453, %v585
  %v587 = vpop.f32.mrf.mxu0
  %v588 = vadd.f32 %v455, %v587
  %589 = vmatmul.bf16.gmra.mxu0 %v370
  %v590 = vpop.f32.mrf.mxu0
  %v591 = vadd.f32 %v458, %v590
  %v592 = vpop.f32.mrf.mxu0
  %v593 = vadd.f32 %v460, %v592
  %594 = vmatmul.bf16.gmra.mxu0 %v373
  %v595 = vpop.f32.mrf.mxu0
  %v596 = vadd.f32 %v463, %v595
  %v597 = vpop.f32.mrf.mxu0
  %v598 = vadd.f32 %v465, %v597
  %599 = vmatmul.bf16.gmra.mxu0 %v376
  %v600 = vpop.f32.mrf.mxu0
  %v601 = vadd.f32 %v468, %v600
  %v602 = vpop.f32.mrf.mxu0
  %v603 = vadd.f32 %v470, %v602
  %604 = vmatmul.bf16.gmra.mxu0 %v379
  %v605 = vpop.f32.mrf.mxu0
  %v606 = vadd.f32 %v473, %v605
  %v607 = vpop.f32.mrf.mxu0
  %v608 = vadd.f32 %v475, %v607
  %609 = vmatmul.bf16.gmra.mxu0 %v382
  %v610 = vpop.f32.mrf.mxu0
  %v611 = vadd.f32 %v478, %v610
  %v612 = vpop.f32.mrf.mxu0
  %v613 = vadd.f32 %v480, %v612
  %614 = vmatmul.bf16.gmra.mxu0 %v385
  %v615 = vpop.f32.mrf.mxu0
  %v616 = vadd.f32 %v483, %v615
  %v617 = vpop.f32.mrf.mxu0
  %v618 = vadd.f32 %v485, %v617
  %619 = vmatmul.bf16.gmra.mxu0 %v388
  %v620 = vpop.f32.mrf.mxu0
  %v621 = vadd.f32 %v488, %v620
  %v622 = vpop.f32.mrf.mxu0
  %v623 = vadd.f32 %v490, %v622
  %624 = vmatmul.bf16.gmra.mxu0 %v391
  %v625 = vpop.f32.mrf.mxu0
  %v626 = vadd.f32 %v493, %v625
  %v627 = vpop.f32.mrf.mxu0
  %v628 = vadd.f32 %v495, %v627
  %629 = vmatmul.bf16.gmra.mxu0 %v394
  %v630 = vpop.f32.mrf.mxu0
  %v631 = vadd.f32 %v498, %v630
  %v632 = vpop.f32.mrf.mxu0
  %v633 = vadd.f32 %v500, %v632
  %634 = vmatmul.bf16.gmra.mxu0 %v397
  %v635 = vpop.f32.mrf.mxu0
  %v636 = vadd.f32 %v503, %v635
  %v637 = vpop.f32.mrf.mxu0
  %v638 = vadd.f32 %v505, %v637
  %639 = vmatmul.bf16.gmra.mxu0 %v400
  %v640 = vpop.f32.mrf.mxu0
  %v641 = vadd.f32 %v508, %v640
  %v642 = vpop.f32.mrf.mxu0
  %v643 = vadd.f32 %v510, %v642
  %644 = vmatmul.bf16.gmra.mxu0 %v403
  %v645 = vpop.f32.mrf.mxu0
  %v646 = vadd.f32 %v513, %v645
  %v647 = vpop.f32.mrf.mxu0
  %v648 = vadd.f32 %v515, %v647
  %649 = vmatmul.bf16.gmra.mxu0 %v406
  %v650 = vpop.f32.mrf.mxu0
  %v651 = vadd.f32 %v518, %v650
  %v652 = vpop.f32.mrf.mxu0
  %v653 = vadd.f32 %v520, %v652
  %654 = vmatmul.bf16.gmra.mxu0 %v409
  %v655 = vpop.f32.mrf.mxu0
  %v656 = vadd.f32 %v523, %v655
  %v657 = vpop.f32.mrf.mxu0
  %v658 = vadd.f32 %v525, %v657
  %659 = vmatmul.bf16.gmra.mxu0 %v412
  %v660 = vpop.f32.mrf.mxu0
  %v661 = vadd.f32 %v528, %v660
  %v662 = vpop.f32.mrf.mxu0
  %v663 = vadd.f32 %v530, %v662
  %664 = vmatmul.bf16.gmra.mxu0 %v415
  %v665 = vpop.f32.mrf.mxu0
  %v666 = vadd.f32 %v533, %v665
  %v667 = vpop.f32.mrf.mxu0
  %v668 = vadd.f32 %v535, %v667
  %669 = vmatmul.bf16.gmra.mxu0 %v418
  %v670 = vpop.f32.mrf.mxu0
  %v671 = vadd.f32 %v538, %v670
  %v672 = vpop.f32.mrf.mxu0
  %v673 = vadd.f32 %v540, %v672
  %674 = vmatmul.bf16.gmra.mxu0 %v421
  %v675 = vpop.f32.mrf.mxu0
  %v676 = vadd.f32 %v543, %v675
  %v677 = vpop.f32.mrf.mxu0
  %v678 = vadd.f32 %v545, %v677
  %679 = vmatmul.bf16.gmra.mxu0 %v424
  %v680 = vpop.f32.mrf.mxu0
  %v681 = vadd.f32 %v548, %v680
  %v682 = vpop.f32.mrf.mxu0
  %v683 = vadd.f32 %v550, %v682
  %684 = vmatmul.bf16.gmra.mxu0 %v427
  %v685 = vpop.f32.mrf.mxu0
  %v686 = vadd.f32 %v553, %v685
  %v687 = vpop.f32.mrf.mxu0
  %v688 = vadd.f32 %v555, %v687
  %689 = vmatmul.bf16.gmra.mxu0 %v430
  %v690 = vpop.f32.mrf.mxu0
  %v691 = vadd.f32 %v558, %v690
  %v692 = vpop.f32.mrf.mxu0
  %v693 = vadd.f32 %v560, %v692
  %694 = vmatmul.bf16.gmra.mxu0 %v433
  %v695 = vpop.f32.mrf.mxu0
  %v696 = vadd.f32 %v563, %v695
  %v697 = vpop.f32.mrf.mxu0
  %v698 = vadd.f32 %v565, %v697
  %699 = vmatmul.bf16.gmra.mxu0 %v436
  %v700 = vpop.f32.mrf.mxu0
  %v701 = vadd.f32 %v568, %v700
  %v702 = vpop.f32.mrf.mxu0
  %703 = vdwg.mxu0
  %v704 = vpack.c.bf16 %v581, %v581
  %v705 = vpack.c.bf16 %v583, %v583
  %v706 = vpack.c.bf16 %v586, %v586
  %v707 = vpack.c.bf16 %v588, %v588
  %v708 = vpack.c.bf16 %v591, %v591
  %v709 = vpack.c.bf16 %v593, %v593
  %v710 = vpack.c.bf16 %v596, %v596
  %v711 = vpack.c.bf16 %v598, %v598
  %v712 = vpack.c.bf16 %v601, %v601
  %v713 = vpack.c.bf16 %v603, %v603
  %v714 = vpack.c.bf16 %v606, %v606
  %v715 = vpack.c.bf16 %v608, %v608
  %v716 = vpack.c.bf16 %v611, %v611
  %v717 = vpack.c.bf16 %v613, %v613
  %v718 = vpack.c.bf16 %v616, %v616
  %v719 = vpack.c.bf16 %v618, %v618
  %v720 = vpack.c.bf16 %v621, %v621
  %v721 = vpack.c.bf16 %v623, %v623
  %v722 = vpack.c.bf16 %v626, %v626
  %v723 = vpack.c.bf16 %v628, %v628
  %v724 = vpack.c.bf16 %v631, %v631
  %v725 = vpack.c.bf16 %v633, %v633
  %v726 = vpack.c.bf16 %v636, %v636
  %v727 = vpack.c.bf16 %v638, %v638
  %v728 = vpack.c.bf16 %v641, %v641
  %v729 = vpack.c.bf16 %v643, %v643
  %v730 = vpack.c.bf16 %v646, %v646
  %v731 = vpack.c.bf16 %v648, %v648
  %v732 = vpack.c.bf16 %v651, %v651
  %v733 = vpack.c.bf16 %v653, %v653
  %v734 = vpack.c.bf16 %v656, %v656
  %v735 = vpack.c.bf16 %v658, %v658
  %v736 = vpack.c.bf16 %v661, %v661
  %v737 = vpack.c.bf16 %v663, %v663
  %v738 = vpack.c.bf16 %v666, %v666
  %v739 = vpack.c.bf16 %v668, %v668
  %v740 = vpack.c.bf16 %v671, %v671
  %v741 = vpack.c.bf16 %v673, %v673
  %v742 = vpack.c.bf16 %v676, %v676
  %v743 = vpack.c.bf16 %v678, %v678
  %v744 = vpack.c.bf16 %v681, %v681
  %v745 = vpack.c.bf16 %v683, %v683
  %v746 = vpack.c.bf16 %v686, %v686
  %v747 = vpack.c.bf16 %v688, %v688
  %v748 = vpack.c.bf16 %v691, %v691
  %v749 = vpack.c.bf16 %v693, %v693
  %v750 = vpack.c.bf16 %v696, %v696
  %v751 = vpack.c.bf16 %v698, %v698
  %v752 = vpack.c.bf16 %v701, %v701
  %vm753 = vcmask 191488
  %754 = vst.msk [vmem:[%s3] sm:$0xf] %vm753, %v704
  %755 = vst.msk [vmem:[%s3 + $0x4] sm:$0xf] %vm753, %v705
  %756 = vst.msk [vmem:[%s3 + $0x8] sm:$0xf] %vm753, %v706
  %757 = vst.msk [vmem:[%s3 + $0xc] sm:$0xf] %vm753, %v707
  %758 = vst.msk [vmem:[%s3 + $0x10] sm:$0xf] %vm753, %v708
  %759 = vst.msk [vmem:[%s3 + $0x14] sm:$0xf] %vm753, %v709
  %760 = vst.msk [vmem:[%s3 + $0x18] sm:$0xf] %vm753, %v710
  %761 = vst.msk [vmem:[%s3 + $0x1c] sm:$0xf] %vm753, %v711
  %762 = vst.msk [vmem:[%s3 + $0x20] sm:$0xf] %vm753, %v712
  %763 = vst.msk [vmem:[%s3 + $0x24] sm:$0xf] %vm753, %v713
  %764 = vst.msk [vmem:[%s3 + $0x28] sm:$0xf] %vm753, %v714
  %765 = vst.msk [vmem:[%s3 + $0x2c] sm:$0xf] %vm753, %v715
  %766 = vst.msk [vmem:[%s3 + $0x30] sm:$0xf] %vm753, %v716
  %767 = vst.msk [vmem:[%s3 + $0x34] sm:$0xf] %vm753, %v717
  %768 = vst.msk [vmem:[%s3 + $0x38] sm:$0xf] %vm753, %v718
  %769 = vst.msk [vmem:[%s3 + $0x3c] sm:$0xf] %vm753, %v719
  %770 = vst.msk [vmem:[%s3 + $0x40] sm:$0xf] %vm753, %v720
  %771 = vst.msk [vmem:[%s3 + $0x44] sm:$0xf] %vm753, %v721
  %772 = vst.msk [vmem:[%s3 + $0x48] sm:$0xf] %vm753, %v722
  %773 = vst.msk [vmem:[%s3 + $0x4c] sm:$0xf] %vm753, %v723
  %774 = vst.msk [vmem:[%s3 + $0x50] sm:$0xf] %vm753, %v724
  %775 = vst.msk [vmem:[%s3 + $0x54] sm:$0xf] %vm753, %v725
  %776 = vst.msk [vmem:[%s3 + $0x58] sm:$0xf] %vm753, %v726
  %777 = vst.msk [vmem:[%s3 + $0x5c] sm:$0xf] %vm753, %v727
  %778 = vst.msk [vmem:[%s3 + $0x60] sm:$0xf] %vm753, %v728
  %779 = vst.msk [vmem:[%s3 + $0x64] sm:$0xf] %vm753, %v729
  %780 = vst.msk [vmem:[%s3 + $0x68] sm:$0xf] %vm753, %v730
  %781 = vst.msk [vmem:[%s3 + $0x6c] sm:$0xf] %vm753, %v731
  %782 = vst.msk [vmem:[%s3 + $0x70] sm:$0xf] %vm753, %v732
  %783 = vst.msk [vmem:[%s3 + $0x74] sm:$0xf] %vm753, %v733
  %784 = vst.msk [vmem:[%s3 + $0x78] sm:$0xf] %vm753, %v734
  %785 = vst.msk [vmem:[%s3 + $0x7c] sm:$0xf] %vm753, %v735
  %786 = vst.msk [vmem:[%s3 + $0x80] sm:$0xf] %vm753, %v736
  %787 = vst.msk [vmem:[%s3 + $0x84] sm:$0xf] %vm753, %v737
  %788 = vst.msk [vmem:[%s3 + $0x88] sm:$0xf] %vm753, %v738
  %789 = vst.msk [vmem:[%s3 + $0x8c] sm:$0xf] %vm753, %v739
  %790 = vst.msk [vmem:[%s3 + $0x90] sm:$0xf] %vm753, %v740
  %791 = vst.msk [vmem:[%s3 + $0x94] sm:$0xf] %vm753, %v741
  %792 = vst.msk [vmem:[%s3 + $0x98] sm:$0xf] %vm753, %v742
  %793 = vst.msk [vmem:[%s3 + $0x9c] sm:$0xf] %vm753, %v743
  %794 = vst.msk [vmem:[%s3 + $0xa0] sm:$0xf] %vm753, %v744
  %795 = vst.msk [vmem:[%s3 + $0xa4] sm:$0xf] %vm753, %v745
  %796 = vst.msk [vmem:[%s3 + $0xa8] sm:$0xf] %vm753, %v746
  %797 = vst.msk [vmem:[%s3 + $0xac] sm:$0xf] %vm753, %v747
  %798 = vst.msk [vmem:[%s3 + $0xb0] sm:$0xf] %vm753, %v748
  %799 = vst.msk [vmem:[%s3 + $0xb4] sm:$0xf] %vm753, %v749
  %800 = vst.msk [vmem:[%s3 + $0xb8] sm:$0xf] %vm753, %v750
  %801 = vst.msk [vmem:[%s3 + $0xbc] sm:$0xf] %vm753, %v751
  %802 = vst.msk [vmem:[%s3 + $0xc0] sm:$0xf] %vm753, %v752
  // Predicated region
  $region14: #{net_forward.15} parent=0 // pred_check
    _
  $region15: #{net_forward.15} parent=0 // pred_check_branch
    %804 = sbr.rel (0) target = $region17
  $region16: #{net_forward.15} parent=0 // pred_region
    _
  $region17: #{net_forward.15} parent=0 // pred_fallthru
    _
  // Predicated region
  $region18: #{net_forward.15} parent=0 // pred_check
    _
  $region19: #{net_forward.15} parent=0 // pred_check_branch
    %806 = sbr.rel (0) target = $region21
  $region20: #{net_forward.15} parent=0 // pred_region
    _
  $region21: #{net_forward.15} parent=0 // pred_fallthru
    _

// kernel: net_forward.16
$region0: #{net_forward.16}
  #allocation0 [shape = 'u32[]', space=smem, size = 0x4, offset = 0x4, fixed_abs, tag = 'smem constant byte address 0x4 - core index']
  #allocation1 [shape = 'u32[72,128]{1,0:T(1,128)}', space=vmem, size = 0x9000, scoped, tag = 'internal scratch']
  %s0 = inlined_call_operand.vmem [shape: bf16[392,216], index: 0, kind: input, shape index: {}]
  %s1 = inlined_call_operand.vmem [shape: bf16[216,24], index: 1, kind: input, shape index: {}]
  %s2 = inlined_call_operand.vmem [shape: f32[1,24], index: 2, kind: input, shape index: {}]
  %s3 = inlined_call_operand.vmem [shape: bf16[392,24], index: 3, kind: output, shape index: {}]
  %s4 = sld [smem:[#allocation0]]
  $region22: #{net_forward.16} parent=0
    _
  %s6 = ssub.s32 1, %s4
  %s7 = scalar_select 0, %s6, %s4
  // Predicated region
  $region2: #{net_forward.16} parent=0 // pred_check
    _
  $region3: #{net_forward.16} parent=0 // pred_check_branch
    %9 = sbr.rel (0) target = $region5
  $region4: #{net_forward.16} parent=0 // pred_region
    _
  $region5: #{net_forward.16} parent=0 // pred_fallthru
    _
  // Predicated region
  $region6: #{net_forward.16} parent=0 // pred_check
    _
  $region7: #{net_forward.16} parent=0 // pred_check_branch
    %11 = sbr.rel (0) target = $region9
  $region8: #{net_forward.16} parent=0 // pred_region
    _
  $region9: #{net_forward.16} parent=0 // pred_fallthru
    _
  // Predicated region
  $region10: #{net_forward.16} parent=0 // pred_check
    _
  $region11: #{net_forward.16} parent=0 // pred_check_branch
    %13 = sbr.rel (0) target = $region13
  $region12: #{net_forward.16} parent=0 // pred_region
    _
  $region13: #{net_forward.16} parent=0 // pred_fallthru
    _
  %v15 = vld [vmem:[%s0] sm:$0xff]
  %v16 = vld [vmem:[%s0 + $0x8] sm:$0xff]
  %v17 = vld [vmem:[%s0 + $0x10] sm:$0xff]
  %v18 = vld [vmem:[%s0 + $0x18] sm:$0xff]
  %v19 = vld [vmem:[%s0 + $0x20] sm:$0xff]
  %v20 = vld [vmem:[%s0 + $0x28] sm:$0xff]
  %v21 = vld [vmem:[%s0 + $0x30] sm:$0xff]
  %v22 = vld [vmem:[%s0 + $0x38] sm:$0xff]
  %v23 = vld [vmem:[%s0 + $0x40] sm:$0xff]
  %v24 = vld [vmem:[%s0 + $0x48] sm:$0xff]
  %v25 = vld [vmem:[%s0 + $0x50] sm:$0xff]
  %v26 = vld [vmem:[%s0 + $0x58] sm:$0xff]
  %v27 = vld [vmem:[%s0 + $0x60] sm:$0xff]
  %v28 = vld [vmem:[%s0 + $0x68] sm:$0xff]
  %v29 = vld [vmem:[%s0 + $0x70] sm:$0xff]
  %v30 = vld [vmem:[%s0 + $0x78] sm:$0xff]
  %v31 = vld [vmem:[%s0 + $0x80] sm:$0xff]
  %v32 = vld [vmem:[%s0 + $0x88] sm:$0xff]
  %v33 = vld [vmem:[%s0 + $0x90] sm:$0xff]
  %v34 = vld [vmem:[%s0 + $0x98] sm:$0xff]
  %v35 = vld [vmem:[%s0 + $0xa0] sm:$0xff]
  %v36 = vld [vmem:[%s0 + $0xa8] sm:$0xff]
  %v37 = vld [vmem:[%s0 + $0xb0] sm:$0xff]
  %v38 = vld [vmem:[%s0 + $0xb8] sm:$0xff]
  %v39 = vld [vmem:[%s0 + $0xc0] sm:$0xff]
  %v40 = vld [vmem:[%s0 + $0xc8] sm:$0xff]
  %v41 = vld [vmem:[%s0 + $0xd0] sm:$0xff]
  %v42 = vld [vmem:[%s0 + $0xd8] sm:$0xff]
  %v43 = vld [vmem:[%s0 + $0xe0] sm:$0xff]
  %v44 = vld [vmem:[%s0 + $0xe8] sm:$0xff]
  %v45 = vld [vmem:[%s0 + $0xf0] sm:$0xff]
  %v46 = vld [vmem:[%s0 + $0xf8] sm:$0xff]
  %v47 = vld [vmem:[%s0 + $0x100] sm:$0xff]
  %v48 = vld [vmem:[%s0 + $0x108] sm:$0xff]
  %v49 = vld [vmem:[%s0 + $0x110] sm:$0xff]
  %v50 = vld [vmem:[%s0 + $0x118] sm:$0xff]
  %v51 = vld [vmem:[%s0 + $0x120] sm:$0xff]
  %v52 = vld [vmem:[%s0 + $0x128] sm:$0xff]
  %v53 = vld [vmem:[%s0 + $0x130] sm:$0xff]
  %v54 = vld [vmem:[%s0 + $0x138] sm:$0xff]
  %v55 = vld [vmem:[%s0 + $0x140] sm:$0xff]
  %v56 = vld [vmem:[%s0 + $0x148] sm:$0xff]
  %v57 = vld [vmem:[%s0 + $0x150] sm:$0xff]
  %v58 = vld [vmem:[%s0 + $0x158] sm:$0xff]
  %v59 = vld [vmem:[%s0 + $0x160] sm:$0xff]
  %v60 = vld [vmem:[%s0 + $0x168] sm:$0xff]
  %v61 = vld [vmem:[%s0 + $0x170] sm:$0xff]
  %v62 = vld [vmem:[%s0 + $0x178] sm:$0xff]
  %v63 = vld [vmem:[%s0 + $0x180] sm:$0xff]
  %v64 = vld [vmem:[%s1] sm:$0xf]
  %v65 = vld [vmem:[%s1 + $0x4] sm:$0xf]
  %v66 = vld [vmem:[%s1 + $0x8] sm:$0xf]
  %v67 = vld [vmem:[%s1 + $0xc] sm:$0xf]
  %v68 = vld [vmem:[%s1 + $0x10] sm:$0xf]
  %v69 = vld [vmem:[%s1 + $0x14] sm:$0xf]
  %v70 = vld [vmem:[%s1 + $0x18] sm:$0xf]
  %v71 = vld [vmem:[%s1 + $0x1c] sm:$0xf]
  %v72 = vld [vmem:[%s1 + $0x20] sm:$0xf]
  %v73 = vld [vmem:[%s1 + $0x24] sm:$0xf]
  %v74 = vld [vmem:[%s1 + $0x28] sm:$0xf]
  %v75 = vld [vmem:[%s1 + $0x2c] sm:$0xf]
  %v76 = vld [vmem:[%s1 + $0x30] sm:$0xf]
  %v77 = vld [vmem:[%s1 + $0x34] sm:$0xf]
  %v78 = vld [vmem:[%s1 + $0x38] sm:$0xf]
  %v79 = vld [vmem:[%s1 + $0x3c] sm:$0xf]
  %v80 = vld [vmem:[%s1 + $0x40] sm:$0xf]
  %v81 = vld [vmem:[%s1 + $0x44] sm:$0xf]
  %v82 = vld [vmem:[%s1 + $0x48] sm:$0xf]
  %v83 = vld [vmem:[%s1 + $0x4c] sm:$0xf]
  %v84 = vld [vmem:[%s1 + $0x50] sm:$0xf]
  %v85 = vld [vmem:[%s1 + $0x54] sm:$0xf]
  %v86 = vld [vmem:[%s1 + $0x58] sm:$0xf]
  %v87 = vld [vmem:[%s1 + $0x5c] sm:$0xf]
  %v88 = vld [vmem:[%s1 + $0x60] sm:$0xf]
  %v89 = vld [vmem:[%s1 + $0x64] sm:$0xf]
  %v90 = vld [vmem:[%s1 + $0x68] sm:$0xf]
  %v91 = vld [vmem:[%s2] sm:$0x1]
  %v93 = vperm.slane %v91, 0
  %v144 = vunpack.c.l.b16 %v15
  %v145 = vunpack.c.h.b16 %v15
  %v146 = vunpack.c.l.b16 %v16
  %v147 = vunpack.c.h.b16 %v16
  %v148 = vunpack.c.l.b16 %v17
  %v149 = vunpack.c.h.b16 %v17
  %v150 = vunpack.c.l.b16 %v18
  %v151 = vunpack.c.h.b16 %v18
  %v152 = vunpack.c.l.b16 %v19
  %v153 = vunpack.c.h.b16 %v19
  %v154 = vunpack.c.l.b16 %v20
  %v155 = vunpack.c.h.b16 %v20
  %v156 = vunpack.c.l.b16 %v21
  %v157 = vunpack.c.h.b16 %v21
  %v158 = vunpack.c.l.b16 %v22
  %v159 = vunpack.c.h.b16 %v22
  %v160 = vunpack.c.l.b16 %v23
  %v161 = vunpack.c.h.b16 %v23
  %v162 = vunpack.c.l.b16 %v24
  %v163 = vunpack.c.h.b16 %v24
  %v164 = vunpack.c.l.b16 %v25
  %v165 = vunpack.c.h.b16 %v25
  %v166 = vunpack.c.l.b16 %v26
  %v167 = vunpack.c.h.b16 %v26
  %v168 = vunpack.c.l.b16 %v27
  %v169 = vunpack.c.h.b16 %v27
  %v170 = vunpack.c.l.b16 %v28
  %v171 = vunpack.c.h.b16 %v28
  %v172 = vunpack.c.l.b16 %v29
  %v173 = vunpack.c.h.b16 %v29
  %v174 = vunpack.c.l.b16 %v30
  %v175 = vunpack.c.h.b16 %v30
  %v176 = vunpack.c.l.b16 %v31
  %v177 = vunpack.c.h.b16 %v31
  %v178 = vunpack.c.l.b16 %v32
  %v179 = vunpack.c.h.b16 %v32
  %v180 = vunpack.c.l.b16 %v33
  %v181 = vunpack.c.h.b16 %v33
  %v182 = vunpack.c.l.b16 %v34
  %v183 = vunpack.c.h.b16 %v34
  %v184 = vunpack.c.l.b16 %v35
  %v185 = vunpack.c.h.b16 %v35
  %v186 = vunpack.c.l.b16 %v36
  %v187 = vunpack.c.h.b16 %v36
  %v188 = vunpack.c.l.b16 %v37
  %v189 = vunpack.c.h.b16 %v37
  %v190 = vunpack.c.l.b16 %v38
  %v191 = vunpack.c.h.b16 %v38
  %v192 = vunpack.c.l.b16 %v39
  %v193 = vunpack.c.h.b16 %v39
  %v194 = vunpack.c.l.b16 %v40
  %v195 = vunpack.c.h.b16 %v40
  %v196 = vunpack.c.l.b16 %v41
  %v197 = vunpack.c.h.b16 %v41
  %v198 = vunpack.c.l.b16 %v42
  %v199 = vunpack.c.h.b16 %v42
  %v200 = vunpack.c.l.b16 %v43
  %v201 = vunpack.c.h.b16 %v43
  %v202 = vunpack.c.l.b16 %v44
  %v203 = vunpack.c.h.b16 %v44
  %v204 = vunpack.c.l.b16 %v45
  %v205 = vunpack.c.h.b16 %v45
  %v206 = vunpack.c.l.b16 %v46
  %v207 = vunpack.c.h.b16 %v46
  %v208 = vunpack.c.l.b16 %v47
  %v209 = vunpack.c.h.b16 %v47
  %v210 = vunpack.c.l.b16 %v48
  %v211 = vunpack.c.h.b16 %v48
  %v212 = vunpack.c.l.b16 %v49
  %v213 = vunpack.c.h.b16 %v49
  %v214 = vunpack.c.l.b16 %v50
  %v215 = vunpack.c.h.b16 %v50
  %v216 = vunpack.c.l.b16 %v51
  %v217 = vunpack.c.h.b16 %v51
  %v218 = vunpack.c.l.b16 %v52
  %v219 = vunpack.c.h.b16 %v52
  %v220 = vunpack.c.l.b16 %v53
  %v221 = vunpack.c.h.b16 %v53
  %v222 = vunpack.c.l.b16 %v54
  %v223 = vunpack.c.h.b16 %v54
  %v224 = vunpack.c.l.b16 %v55
  %v225 = vunpack.c.h.b16 %v55
  %v226 = vunpack.c.l.b16 %v56
  %v227 = vunpack.c.h.b16 %v56
  %v228 = vunpack.c.l.b16 %v57
  %v229 = vunpack.c.h.b16 %v57
  %v230 = vunpack.c.l.b16 %v58
  %v231 = vunpack.c.h.b16 %v58
  %v232 = vunpack.c.l.b16 %v59
  %v233 = vunpack.c.h.b16 %v59
  %v234 = vunpack.c.l.b16 %v60
  %v235 = vunpack.c.h.b16 %v60
  %v236 = vunpack.c.l.b16 %v61
  %v237 = vunpack.c.h.b16 %v61
  %v238 = vunpack.c.l.b16 %v62
  %v239 = vunpack.c.h.b16 %v62
  %v240 = vunpack.c.l.b16 %v63
  %v241 = vunpack.c.h.b16 %v63
  %v242 = vpack.c.b16 %v146, %v144
  %v243 = vpack.c.b16 %v147, %v145
  %v244 = vpack.c.b16 %v150, %v148
  %v245 = vpack.c.b16 %v151, %v149
  %v246 = vpack.c.b16 %v154, %v152
  %v247 = vpack.c.b16 %v155, %v153
  %v248 = vpack.c.b16 %v158, %v156
  %v249 = vpack.c.b16 %v159, %v157
  %v250 = vpack.c.b16 %v162, %v160
  %v251 = vpack.c.b16 %v163, %v161
  %v252 = vpack.c.b16 %v166, %v164
  %v253 = vpack.c.b16 %v167, %v165
  %v254 = vpack.c.b16 %v170, %v168
  %v255 = vpack.c.b16 %v171, %v169
  %v256 = vpack.c.b16 %v174, %v172
  %v257 = vpack.c.b16 %v175, %v173
  %v258 = vpack.c.b16 %v178, %v176
  %v259 = vpack.c.b16 %v179, %v177
  %v260 = vpack.c.b16 %v182, %v180
  %v261 = vpack.c.b16 %v183, %v181
  %v262 = vpack.c.b16 %v186, %v184
  %v263 = vpack.c.b16 %v187, %v185
  %v264 = vpack.c.b16 %v190, %v188
  %v265 = vpack.c.b16 %v191, %v189
  %v266 = vpack.c.b16 %v194, %v192
  %v267 = vpack.c.b16 %v195, %v193
  %v268 = vpack.c.b16 %v198, %v196
  %v269 = vpack.c.b16 %v199, %v197
  %v270 = vpack.c.b16 %v202, %v200
  %v271 = vpack.c.b16 %v203, %v201
  %v272 = vpack.c.b16 %v206, %v204
  %v273 = vpack.c.b16 %v207, %v205
  %v274 = vpack.c.b16 %v210, %v208
  %v275 = vpack.c.b16 %v211, %v209
  %v276 = vpack.c.b16 %v214, %v212
  %v277 = vpack.c.b16 %v215, %v213
  %v278 = vpack.c.b16 %v218, %v216
  %v279 = vpack.c.b16 %v219, %v217
  %v280 = vpack.c.b16 %v222, %v220
  %v281 = vpack.c.b16 %v223, %v221
  %v282 = vpack.c.b16 %v226, %v224
  %v283 = vpack.c.b16 %v227, %v225
  %v284 = vpack.c.b16 %v230, %v228
  %v285 = vpack.c.b16 %v231, %v229
  %v286 = vpack.c.b16 %v234, %v232
  %v287 = vpack.c.b16 %v235, %v233
  %v288 = vpack.c.b16 %v238, %v236
  %v289 = vpack.c.b16 %v239, %v237
  %v290 = vpack.c.b16 %v240, %v240
  %v291 = vpack.c.b16 %v241, %v241
  %v344 = vunpack.c.l.b16 %v64
  %v345 = vunpack.c.l.b16 %v65
  %v346 = vunpack.c.l.b16 %v66
  %v347 = vunpack.c.l.b16 %v67
  %v348 = vunpack.c.l.b16 %v68
  %v349 = vunpack.c.l.b16 %v69
  %v350 = vunpack.c.l.b16 %v70
  %v351 = vunpack.c.l.b16 %v71
  %v352 = vunpack.c.l.b16 %v72
  %v353 = vunpack.c.l.b16 %v73
  %v354 = vunpack.c.l.b16 %v74
  %v355 = vunpack.c.l.b16 %v75
  %v356 = vunpack.c.l.b16 %v76
  %v357 = vunpack.c.l.b16 %v77
  %v358 = vunpack.c.l.b16 %v78
  %v359 = vunpack.c.l.b16 %v79
  %v360 = vunpack.c.l.b16 %v80
  %v361 = vunpack.c.l.b16 %v81
  %v362 = vunpack.c.l.b16 %v82
  %v363 = vunpack.c.l.b16 %v83
  %v364 = vunpack.c.l.b16 %v84
  %v365 = vunpack.c.l.b16 %v85
  %v366 = vunpack.c.l.b16 %v86
  %v367 = vunpack.c.l.b16 %v87
  %v368 = vunpack.c.l.b16 %v88
  %v369 = vunpack.c.l.b16 %v89
  %v370 = vunpack.c.l.b16 %v90
  %v371 = vpack.c.b16 %v345, %v344
  %v372 = vpack.c.b16 %v347, %v346
  %v373 = vpack.c.b16 %v349, %v348
  %v374 = vpack.c.b16 %v351, %v350
  %v375 = vpack.c.b16 %v353, %v352
  %v376 = vpack.c.b16 %v355, %v354
  %v377 = vpack.c.b16 %v357, %v356
  %v378 = vpack.c.b16 %v359, %v358
  %v379 = vpack.c.b16 %v361, %v360
  %v380 = vpack.c.b16 %v363, %v362
  %v381 = vpack.c.b16 %v365, %v364
  %v382 = vpack.c.b16 %v367, %v366
  %v383 = vpack.c.b16 %v369, %v368
  %v384 = vpack.c.b16 %v370, %v370
  %vm398 = vcmask 719872
  %v400 = vsel %vm398, %v243, 0
  %v403 = vsel %vm398, %v245, 0
  %v406 = vsel %vm398, %v247, 0
  %v409 = vsel %vm398, %v249, 0
  %v412 = vsel %vm398, %v251, 0
  %v415 = vsel %vm398, %v253, 0
  %v418 = vsel %vm398, %v255, 0
  %v421 = vsel %vm398, %v257, 0
  %v424 = vsel %vm398, %v259, 0
  %v427 = vsel %vm398, %v261, 0
  %v430 = vsel %vm398, %v263, 0
  %v433 = vsel %vm398, %v265, 0
  %v436 = vsel %vm398, %v267, 0
  %v439 = vsel %vm398, %v269, 0
  %v442 = vsel %vm398, %v271, 0
  %v445 = vsel %vm398, %v273, 0
  %v448 = vsel %vm398, %v275, 0
  %v451 = vsel %vm398, %v277, 0
  %v454 = vsel %vm398, %v279, 0
  %v457 = vsel %vm398, %v281, 0
  %v460 = vsel %vm398, %v283, 0
  %v463 = vsel %vm398, %v285, 0
  %v466 = vsel %vm398, %v287, 0
  %v469 = vsel %vm398, %v289, 0
  %v472 = vsel %vm398, %v291, 0
  %vm474 = vcmask 1043456
  %v476 = vsel %vm474, %v384, 0
  %478 = vmatpush.bf16.msra.mxu0 %v378
  %479 = vmatpush.bf16.msra.mxu0 %v377
  %480 = vmatpush.bf16.msra.mxu0 %v376
  %481 = vmatpush.bf16.msra.mxu0 %v375
  %482 = vmatpush.bf16.msra.mxu0 %v374
  %483 = vmatpush.bf16.msra.mxu0 %v373
  %484 = vmatpush.bf16.msra.mxu0 %v372
  %485 = vmatpush.bf16.msra.mxu0 %v371
  %486 = vmatmul.bf16.gmra.mxu0 %v242
  %v487 = vpop.f32.mrf.mxu0
  %v488 = vadd.f32 %v93, %v487
  %v489 = vpop.f32.mrf.mxu0
  %v490 = vadd.f32 %v93, %v489
  %491 = vmatmul.bf16.gmra.mxu0 %v244
  %v492 = vpop.f32.mrf.mxu0
  %v493 = vadd.f32 %v93, %v492
  %v494 = vpop.f32.mrf.mxu0
  %v495 = vadd.f32 %v93, %v494
  %496 = vmatmul.bf16.gmra.mxu0 %v246
  %v497 = vpop.f32.mrf.mxu0
  %v498 = vadd.f32 %v93, %v497
  %v499 = vpop.f32.mrf.mxu0
  %v500 = vadd.f32 %v93, %v499
  %501 = vmatmul.bf16.gmra.mxu0 %v248
  %v502 = vpop.f32.mrf.mxu0
  %v503 = vadd.f32 %v93, %v502
  %v504 = vpop.f32.mrf.mxu0
  %v505 = vadd.f32 %v93, %v504
  %506 = vmatmul.bf16.gmra.mxu0 %v250
  %v507 = vpop.f32.mrf.mxu0
  %v508 = vadd.f32 %v93, %v507
  %v509 = vpop.f32.mrf.mxu0
  %v510 = vadd.f32 %v93, %v509
  %511 = vmatmul.bf16.gmra.mxu0 %v252
  %v512 = vpop.f32.mrf.mxu0
  %v513 = vadd.f32 %v93, %v512
  %v514 = vpop.f32.mrf.mxu0
  %v515 = vadd.f32 %v93, %v514
  %516 = vmatmul.bf16.gmra.mxu0 %v254
  %v517 = vpop.f32.mrf.mxu0
  %v518 = vadd.f32 %v93, %v517
  %v519 = vpop.f32.mrf.mxu0
  %v520 = vadd.f32 %v93, %v519
  %521 = vmatmul.bf16.gmra.mxu0 %v256
  %v522 = vpop.f32.mrf.mxu0
  %v523 = vadd.f32 %v93, %v522
  %v524 = vpop.f32.mrf.mxu0
  %v525 = vadd.f32 %v93, %v524
  %526 = vmatmul.bf16.gmra.mxu0 %v258
  %v527 = vpop.f32.mrf.mxu0
  %v528 = vadd.f32 %v93, %v527
  %v529 = vpop.f32.mrf.mxu0
  %v530 = vadd.f32 %v93, %v529
  %531 = vmatmul.bf16.gmra.mxu0 %v260
  %v532 = vpop.f32.mrf.mxu0
  %v533 = vadd.f32 %v93, %v532
  %v534 = vpop.f32.mrf.mxu0
  %v535 = vadd.f32 %v93, %v534
  %536 = vmatmul.bf16.gmra.mxu0 %v262
  %v537 = vpop.f32.mrf.mxu0
  %v538 = vadd.f32 %v93, %v537
  %v539 = vpop.f32.mrf.mxu0
  %v540 = vadd.f32 %v93, %v539
  %541 = vmatmul.bf16.gmra.mxu0 %v264
  %v542 = vpop.f32.mrf.mxu0
  %v543 = vadd.f32 %v93, %v542
  %v544 = vpop.f32.mrf.mxu0
  %v545 = vadd.f32 %v93, %v544
  %546 = vmatmul.bf16.gmra.mxu0 %v266
  %v547 = vpop.f32.mrf.mxu0
  %v548 = vadd.f32 %v93, %v547
  %v549 = vpop.f32.mrf.mxu0
  %v550 = vadd.f32 %v93, %v549
  %551 = vmatmul.bf16.gmra.mxu0 %v268
  %v552 = vpop.f32.mrf.mxu0
  %v553 = vadd.f32 %v93, %v552
  %v554 = vpop.f32.mrf.mxu0
  %v555 = vadd.f32 %v93, %v554
  %556 = vmatmul.bf16.gmra.mxu0 %v270
  %v557 = vpop.f32.mrf.mxu0
  %v558 = vadd.f32 %v93, %v557
  %v559 = vpop.f32.mrf.mxu0
  %v560 = vadd.f32 %v93, %v559
  %561 = vmatmul.bf16.gmra.mxu0 %v272
  %v562 = vpop.f32.mrf.mxu0
  %v563 = vadd.f32 %v93, %v562
  %v564 = vpop.f32.mrf.mxu0
  %v565 = vadd.f32 %v93, %v564
  %566 = vmatmul.bf16.gmra.mxu0 %v274
  %v567 = vpop.f32.mrf.mxu0
  %v568 = vadd.f32 %v93, %v567
  %v569 = vpop.f32.mrf.mxu0
  %v570 = vadd.f32 %v93, %v569
  %571 = vmatmul.bf16.gmra.mxu0 %v276
  %v572 = vpop.f32.mrf.mxu0
  %v573 = vadd.f32 %v93, %v572
  %v574 = vpop.f32.mrf.mxu0
  %v575 = vadd.f32 %v93, %v574
  %576 = vmatmul.bf16.gmra.mxu0 %v278
  %v577 = vpop.f32.mrf.mxu0
  %v578 = vadd.f32 %v93, %v577
  %v579 = vpop.f32.mrf.mxu0
  %v580 = vadd.f32 %v93, %v579
  %581 = vmatmul.bf16.gmra.mxu0 %v280
  %v582 = vpop.f32.mrf.mxu0
  %v583 = vadd.f32 %v93, %v582
  %v584 = vpop.f32.mrf.mxu0
  %v585 = vadd.f32 %v93, %v584
  %586 = vmatmul.bf16.gmra.mxu0 %v282
  %v587 = vpop.f32.mrf.mxu0
  %v588 = vadd.f32 %v93, %v587
  %v589 = vpop.f32.mrf.mxu0
  %v590 = vadd.f32 %v93, %v589
  %591 = vmatmul.bf16.gmra.mxu0 %v284
  %v592 = vpop.f32.mrf.mxu0
  %v593 = vadd.f32 %v93, %v592
  %v594 = vpop.f32.mrf.mxu0
  %v595 = vadd.f32 %v93, %v594
  %596 = vmatmul.bf16.gmra.mxu0 %v286
  %v597 = vpop.f32.mrf.mxu0
  %v598 = vadd.f32 %v93, %v597
  %v599 = vpop.f32.mrf.mxu0
  %v600 = vadd.f32 %v93, %v599
  %601 = vmatmul.bf16.gmra.mxu0 %v288
  %v602 = vpop.f32.mrf.mxu0
  %v603 = vadd.f32 %v93, %v602
  %v604 = vpop.f32.mrf.mxu0
  %v605 = vadd.f32 %v93, %v604
  %606 = vmatmul.bf16.gmra.mxu0 %v290
  %v607 = vpop.f32.mrf.mxu0
  %v608 = vadd.f32 %v93, %v607
  %v609 = vpop.f32.mrf.mxu0
  %610 = vdwg.mxu0
  %611 = vmatpush.bf16.msra.mxu0 0
  %612 = vmatpush.bf16.msra.mxu0 0
  %613 = vmatpush.bf16.msra.mxu0 %v476
  %614 = vmatpush.bf16.msra.mxu0 %v383
  %615 = vmatpush.bf16.msra.mxu0 %v382
  %616 = vmatpush.bf16.msra.mxu0 %v381
  %617 = vmatpush.bf16.msra.mxu0 %v380
  %618 = vmatpush.bf16.msra.mxu0 %v379
  %619 = vmatmul.bf16.gmra.mxu0 %v400
  %v620 = vpop.f32.mrf.mxu0
  %v621 = vadd.f32 %v488, %v620
  %v622 = vpop.f32.mrf.mxu0
  %v623 = vadd.f32 %v490, %v622
  %624 = vmatmul.bf16.gmra.mxu0 %v403
  %v625 = vpop.f32.mrf.mxu0
  %v626 = vadd.f32 %v493, %v625
  %v627 = vpop.f32.mrf.mxu0
  %v628 = vadd.f32 %v495, %v627
  %629 = vmatmul.bf16.gmra.mxu0 %v406
  %v630 = vpop.f32.mrf.mxu0
  %v631 = vadd.f32 %v498, %v630
  %v632 = vpop.f32.mrf.mxu0
  %v633 = vadd.f32 %v500, %v632
  %634 = vmatmul.bf16.gmra.mxu0 %v409
  %v635 = vpop.f32.mrf.mxu0
  %v636 = vadd.f32 %v503, %v635
  %v637 = vpop.f32.mrf.mxu0
  %v638 = vadd.f32 %v505, %v637
  %639 = vmatmul.bf16.gmra.mxu0 %v412
  %v640 = vpop.f32.mrf.mxu0
  %v641 = vadd.f32 %v508, %v640
  %v642 = vpop.f32.mrf.mxu0
  %v643 = vadd.f32 %v510, %v642
  %644 = vmatmul.bf16.gmra.mxu0 %v415
  %v645 = vpop.f32.mrf.mxu0
  %v646 = vadd.f32 %v513, %v645
  %v647 = vpop.f32.mrf.mxu0
  %v648 = vadd.f32 %v515, %v647
  %649 = vmatmul.bf16.gmra.mxu0 %v418
  %v650 = vpop.f32.mrf.mxu0
  %v651 = vadd.f32 %v518, %v650
  %v652 = vpop.f32.mrf.mxu0
  %v653 = vadd.f32 %v520, %v652
  %654 = vmatmul.bf16.gmra.mxu0 %v421
  %v655 = vpop.f32.mrf.mxu0
  %v656 = vadd.f32 %v523, %v655
  %v657 = vpop.f32.mrf.mxu0
  %v658 = vadd.f32 %v525, %v657
  %659 = vmatmul.bf16.gmra.mxu0 %v424
  %v660 = vpop.f32.mrf.mxu0
  %v661 = vadd.f32 %v528, %v660
  %v662 = vpop.f32.mrf.mxu0
  %v663 = vadd.f32 %v530, %v662
  %664 = vmatmul.bf16.gmra.mxu0 %v427
  %v665 = vpop.f32.mrf.mxu0
  %v666 = vadd.f32 %v533, %v665
  %v667 = vpop.f32.mrf.mxu0
  %v668 = vadd.f32 %v535, %v667
  %669 = vmatmul.bf16.gmra.mxu0 %v430
  %v670 = vpop.f32.mrf.mxu0
  %v671 = vadd.f32 %v538, %v670
  %v672 = vpop.f32.mrf.mxu0
  %v673 = vadd.f32 %v540, %v672
  %674 = vmatmul.bf16.gmra.mxu0 %v433
  %v675 = vpop.f32.mrf.mxu0
  %v676 = vadd.f32 %v543, %v675
  %v677 = vpop.f32.mrf.mxu0
  %v678 = vadd.f32 %v545, %v677
  %679 = vmatmul.bf16.gmra.mxu0 %v436
  %v680 = vpop.f32.mrf.mxu0
  %v681 = vadd.f32 %v548, %v680
  %v682 = vpop.f32.mrf.mxu0
  %v683 = vadd.f32 %v550, %v682
  %684 = vmatmul.bf16.gmra.mxu0 %v439
  %v685 = vpop.f32.mrf.mxu0
  %v686 = vadd.f32 %v553, %v685
  %v687 = vpop.f32.mrf.mxu0
  %v688 = vadd.f32 %v555, %v687
  %689 = vmatmul.bf16.gmra.mxu0 %v442
  %v690 = vpop.f32.mrf.mxu0
  %v691 = vadd.f32 %v558, %v690
  %v692 = vpop.f32.mrf.mxu0
  %v693 = vadd.f32 %v560, %v692
  %694 = vmatmul.bf16.gmra.mxu0 %v445
  %v695 = vpop.f32.mrf.mxu0
  %v696 = vadd.f32 %v563, %v695
  %v697 = vpop.f32.mrf.mxu0
  %v698 = vadd.f32 %v565, %v697
  %699 = vmatmul.bf16.gmra.mxu0 %v448
  %v700 = vpop.f32.mrf.mxu0
  %v701 = vadd.f32 %v568, %v700
  %v702 = vpop.f32.mrf.mxu0
  %v703 = vadd.f32 %v570, %v702
  %704 = vmatmul.bf16.gmra.mxu0 %v451
  %v705 = vpop.f32.mrf.mxu0
  %v706 = vadd.f32 %v573, %v705
  %v707 = vpop.f32.mrf.mxu0
  %v708 = vadd.f32 %v575, %v707
  %709 = vmatmul.bf16.gmra.mxu0 %v454
  %v710 = vpop.f32.mrf.mxu0
  %v711 = vadd.f32 %v578, %v710
  %v712 = vpop.f32.mrf.mxu0
  %v713 = vadd.f32 %v580, %v712
  %714 = vmatmul.bf16.gmra.mxu0 %v457
  %v715 = vpop.f32.mrf.mxu0
  %v716 = vadd.f32 %v583, %v715
  %v717 = vpop.f32.mrf.mxu0
  %v718 = vadd.f32 %v585, %v717
  %719 = vmatmul.bf16.gmra.mxu0 %v460
  %v720 = vpop.f32.mrf.mxu0
  %v721 = vadd.f32 %v588, %v720
  %v722 = vpop.f32.mrf.mxu0
  %v723 = vadd.f32 %v590, %v722
  %724 = vmatmul.bf16.gmra.mxu0 %v463
  %v725 = vpop.f32.mrf.mxu0
  %v726 = vadd.f32 %v593, %v725
  %v727 = vpop.f32.mrf.mxu0
  %v728 = vadd.f32 %v595, %v727
  %729 = vmatmul.bf16.gmra.mxu0 %v466
  %v730 = vpop.f32.mrf.mxu0
  %v731 = vadd.f32 %v598, %v730
  %v732 = vpop.f32.mrf.mxu0
  %v733 = vadd.f32 %v600, %v732
  %734 = vmatmul.bf16.gmra.mxu0 %v469
  %v735 = vpop.f32.mrf.mxu0
  %v736 = vadd.f32 %v603, %v735
  %v737 = vpop.f32.mrf.mxu0
  %v738 = vadd.f32 %v605, %v737
  %739 = vmatmul.bf16.gmra.mxu0 %v472
  %v740 = vpop.f32.mrf.mxu0
  %v741 = vadd.f32 %v608, %v740
  %v742 = vpop.f32.mrf.mxu0
  %743 = vdwg.mxu0
  %v744 = vpack.c.bf16 %v621, %v621
  %v745 = vpack.c.bf16 %v623, %v623
  %v746 = vpack.c.bf16 %v626, %v626
  %v747 = vpack.c.bf16 %v628, %v628
  %v748 = vpack.c.bf16 %v631, %v631
  %v749 = vpack.c.bf16 %v633, %v633
  %v750 = vpack.c.bf16 %v636, %v636
  %v751 = vpack.c.bf16 %v638, %v638
  %v752 = vpack.c.bf16 %v641, %v641
  %v753 = vpack.c.bf16 %v643, %v643
  %v754 = vpack.c.bf16 %v646, %v646
  %v755 = vpack.c.bf16 %v648, %v648
  %v756 = vpack.c.bf16 %v651, %v651
  %v757 = vpack.c.bf16 %v653, %v653
  %v758 = vpack.c.bf16 %v656, %v656
  %v759 = vpack.c.bf16 %v658, %v658
  %v760 = vpack.c.bf16 %v661, %v661
  %v761 = vpack.c.bf16 %v663, %v663
  %v762 = vpack.c.bf16 %v666, %v666
  %v763 = vpack.c.bf16 %v668, %v668
  %v764 = vpack.c.bf16 %v671, %v671
  %v765 = vpack.c.bf16 %v673, %v673
  %v766 = vpack.c.bf16 %v676, %v676
  %v767 = vpack.c.bf16 %v678, %v678
  %v768 = vpack.c.bf16 %v681, %v681
  %v769 = vpack.c.bf16 %v683, %v683
  %v770 = vpack.c.bf16 %v686, %v686
  %v771 = vpack.c.bf16 %v688, %v688
  %v772 = vpack.c.bf16 %v691, %v691
  %v773 = vpack.c.bf16 %v693, %v693
  %v774 = vpack.c.bf16 %v696, %v696
  %v775 = vpack.c.bf16 %v698, %v698
  %v776 = vpack.c.bf16 %v701, %v701
  %v777 = vpack.c.bf16 %v703, %v703
  %v778 = vpack.c.bf16 %v706, %v706
  %v779 = vpack.c.bf16 %v708, %v708
  %v780 = vpack.c.bf16 %v711, %v711
  %v781 = vpack.c.bf16 %v713, %v713
  %v782 = vpack.c.bf16 %v716, %v716
  %v783 = vpack.c.bf16 %v718, %v718
  %v784 = vpack.c.bf16 %v721, %v721
  %v785 = vpack.c.bf16 %v723, %v723
  %v786 = vpack.c.bf16 %v726, %v726
  %v787 = vpack.c.bf16 %v728, %v728
  %v788 = vpack.c.bf16 %v731, %v731
  %v789 = vpack.c.bf16 %v733, %v733
  %v790 = vpack.c.bf16 %v736, %v736
  %v791 = vpack.c.bf16 %v738, %v738
  %v792 = vpack.c.bf16 %v741, %v741
  %vm793 = vcmask 191488
  %794 = vst.msk [vmem:[%s3] sm:$0xf] %vm793, %v744
  %795 = vst.msk [vmem:[%s3 + $0x4] sm:$0xf] %vm793, %v745
  %796 = vst.msk [vmem:[%s3 + $0x8] sm:$0xf] %vm793, %v746
  %797 = vst.msk [vmem:[%s3 + $0xc] sm:$0xf] %vm793, %v747
  %798 = vst.msk [vmem:[%s3 + $0x10] sm:$0xf] %vm793, %v748
  %799 = vst.msk [vmem:[%s3 + $0x14] sm:$0xf] %vm793, %v749
  %800 = vst.msk [vmem:[%s3 + $0x18] sm:$0xf] %vm793, %v750
  %801 = vst.msk [vmem:[%s3 + $0x1c] sm:$0xf] %vm793, %v751
  %802 = vst.msk [vmem:[%s3 + $0x20] sm:$0xf] %vm793, %v752
  %803 = vst.msk [vmem:[%s3 + $0x24] sm:$0xf] %vm793, %v753
  %804 = vst.msk [vmem:[%s3 + $0x28] sm:$0xf] %vm793, %v754
  %805 = vst.msk [vmem:[%s3 + $0x2c] sm:$0xf] %vm793, %v755
  %806 = vst.msk [vmem:[%s3 + $0x30] sm:$0xf] %vm793, %v756
  %807 = vst.msk [vmem:[%s3 + $0x34] sm:$0xf] %vm793, %v757
  %808 = vst.msk [vmem:[%s3 + $0x38] sm:$0xf] %vm793, %v758
  %809 = vst.msk [vmem:[%s3 + $0x3c] sm:$0xf] %vm793, %v759
  %810 = vst.msk [vmem:[%s3 + $0x40] sm:$0xf] %vm793, %v760
  %811 = vst.msk [vmem:[%s3 + $0x44] sm:$0xf] %vm793, %v761
  %812 = vst.msk [vmem:[%s3 + $0x48] sm:$0xf] %vm793, %v762
  %813 = vst.msk [vmem:[%s3 + $0x4c] sm:$0xf] %vm793, %v763
  %814 = vst.msk [vmem:[%s3 + $0x50] sm:$0xf] %vm793, %v764
  %815 = vst.msk [vmem:[%s3 + $0x54] sm:$0xf] %vm793, %v765
  %816 = vst.msk [vmem:[%s3 + $0x58] sm:$0xf] %vm793, %v766
  %817 = vst.msk [vmem:[%s3 + $0x5c] sm:$0xf] %vm793, %v767
  %818 = vst.msk [vmem:[%s3 + $0x60] sm:$0xf] %vm793, %v768
  %819 = vst.msk [vmem:[%s3 + $0x64] sm:$0xf] %vm793, %v769
  %820 = vst.msk [vmem:[%s3 + $0x68] sm:$0xf] %vm793, %v770
  %821 = vst.msk [vmem:[%s3 + $0x6c] sm:$0xf] %vm793, %v771
  %822 = vst.msk [vmem:[%s3 + $0x70] sm:$0xf] %vm793, %v772
  %823 = vst.msk [vmem:[%s3 + $0x74] sm:$0xf] %vm793, %v773
  %824 = vst.msk [vmem:[%s3 + $0x78] sm:$0xf] %vm793, %v774
  %825 = vst.msk [vmem:[%s3 + $0x7c] sm:$0xf] %vm793, %v775
  %826 = vst.msk [vmem:[%s3 + $0x80] sm:$0xf] %vm793, %v776
  %827 = vst.msk [vmem:[%s3 + $0x84] sm:$0xf] %vm793, %v777
  %828 = vst.msk [vmem:[%s3 + $0x88] sm:$0xf] %vm793, %v778
  %829 = vst.msk [vmem:[%s3 + $0x8c] sm:$0xf] %vm793, %v779
  %830 = vst.msk [vmem:[%s3 + $0x90] sm:$0xf] %vm793, %v780
  %831 = vst.msk [vmem:[%s3 + $0x94] sm:$0xf] %vm793, %v781
  %832 = vst.msk [vmem:[%s3 + $0x98] sm:$0xf] %vm793, %v782
  %833 = vst.msk [vmem:[%s3 + $0x9c] sm:$0xf] %vm793, %v783
  %834 = vst.msk [vmem:[%s3 + $0xa0] sm:$0xf] %vm793, %v784
  %835 = vst.msk [vmem:[%s3 + $0xa4] sm:$0xf] %vm793, %v785
  %836 = vst.msk [vmem:[%s3 + $0xa8] sm:$0xf] %vm793, %v786
  %837 = vst.msk [vmem:[%s3 + $0xac] sm:$0xf] %vm793, %v787
  %838 = vst.msk [vmem:[%s3 + $0xb0] sm:$0xf] %vm793, %v788
  %839 = vst.msk [vmem:[%s3 + $0xb4] sm:$0xf] %vm793, %v789
  %840 = vst.msk [vmem:[%s3 + $0xb8] sm:$0xf] %vm793, %v790
  %841 = vst.msk [vmem:[%s3 + $0xbc] sm:$0xf] %vm793, %v791
  %842 = vst.msk [vmem:[%s3 + $0xc0] sm:$0xf] %vm793, %v792
  // Predicated region
  $region14: #{net_forward.16} parent=0 // pred_check
    _
  $region15: #{net_forward.16} parent=0 // pred_check_branch
    %844 = sbr.rel (0) target = $region17
  $region16: #{net_forward.16} parent=0 // pred_region
    _
  $region17: #{net_forward.16} parent=0 // pred_fallthru
    _
  // Predicated region
  $region18: #{net_forward.16} parent=0 // pred_check
    _
  $region19: #{net_forward.16} parent=0 // pred_check_branch
    %846 = sbr.rel (0) target = $region21
  $region20: #{net_forward.16} parent=0 // pred_region
    _
  $region21: #{net_forward.16} parent=0 // pred_fallthru
    _

// kernel: net_forward.17
$region0: #{net_forward.17}
  #allocation0 [shape = 'u32[]', space=smem, size = 0x4, offset = 0x4, fixed_abs, tag = 'smem constant byte address 0x4 - core index']
  #allocation1 [shape = 'u32[72,128]{1,0:T(1,128)}', space=vmem, size = 0x9000, scoped, tag = 'internal scratch']
  %s0 = inlined_call_operand.vmem [shape: bf16[392,400], index: 0, kind: input, shape index: {}]
  %s1 = inlined_call_operand.vmem [shape: bf16[400,24], index: 1, kind: input, shape index: {}]
  %s2 = inlined_call_operand.vmem [shape: f32[1,24], index: 2, kind: input, shape index: {}]
  %s3 = inlined_call_operand.vmem [shape: bf16[392,24], index: 3, kind: output, shape index: {}]
  %s4 = sld [smem:[#allocation0]]
  $region22: #{net_forward.17} parent=0
    _
  %s6 = ssub.s32 1, %s4
  %s7 = scalar_select 0, %s6, %s4
  // Predicated region
  $region2: #{net_forward.17} parent=0 // pred_check
    _
  $region3: #{net_forward.17} parent=0 // pred_check_branch
    %9 = sbr.rel (0) target = $region5
  $region4: #{net_forward.17} parent=0 // pred_region
    _
  $region5: #{net_forward.17} parent=0 // pred_fallthru
    _
  // Predicated region
  $region6: #{net_forward.17} parent=0 // pred_check
    _
  $region7: #{net_forward.17} parent=0 // pred_check_branch
    %11 = sbr.rel (0) target = $region9
  $region8: #{net_forward.17} parent=0 // pred_region
    _
  $region9: #{net_forward.17} parent=0 // pred_fallthru
    _
  // Predicated region
  $region10: #{net_forward.17} parent=0 // pred_check
    _
  $region11: #{net_forward.17} parent=0 // pred_check_branch
    %13 = sbr.rel (0) target = $region13
  $region12: #{net_forward.17} parent=0 // pred_region
    _
  $region13: #{net_forward.17} parent=0 // pred_fallthru
    _
  %v15 = vld [vmem:[%s0] sm:$0xff]
  %v16 = vld [vmem:[%s0 + $0x8] sm:$0xff]
  %v17 = vld [vmem:[%s0 + $0x10] sm:$0xff]
  %v18 = vld [vmem:[%s0 + $0x18] sm:$0xff]
  %v19 = vld [vmem:[%s0 + $0x20] sm:$0xff]
  %v20 = vld [vmem:[%s0 + $0x28] sm:$0xff]
  %v21 = vld [vmem:[%s0 + $0x30] sm:$0xff]
  %v22 = vld [vmem:[%s0 + $0x38] sm:$0xff]
  %v23 = vld [vmem:[%s0 + $0x40] sm:$0xff]
  %v24 = vld [vmem:[%s0 + $0x48] sm:$0xff]
  %v25 = vld [vmem:[%s0 + $0x50] sm:$0xff]
  %v26 = vld [vmem:[%s0 + $0x58] sm:$0xff]
  %v27 = vld [vmem:[%s0 + $0x60] sm:$0xff]
  %v28 = vld [vmem:[%s0 + $0x68] sm:$0xff]
  %v29 = vld [vmem:[%s0 + $0x70] sm:$0xff]
  %v30 = vld [vmem:[%s0 + $0x78] sm:$0xff]
  %v31 = vld [vmem:[%s0 + $0x80] sm:$0xff]
  %v32 = vld [vmem:[%s0 + $0x88] sm:$0xff]
  %v33 = vld [vmem:[%s0 + $0x90] sm:$0xff]
  %v34 = vld [vmem:[%s0 + $0x98] sm:$0xff]
  %v35 = vld [vmem:[%s0 + $0xa0] sm:$0xff]
  %v36 = vld [vmem:[%s0 + $0xa8] sm:$0xff]
  %v37 = vld [vmem:[%s0 + $0xb0] sm:$0xff]
  %v38 = vld [vmem:[%s0 + $0xb8] sm:$0xff]
  %v39 = vld [vmem:[%s0 + $0xc0] sm:$0xff]
  %v40 = vld [vmem:[%s0 + $0xc8] sm:$0xff]
  %v41 = vld [vmem:[%s0 + $0xd0] sm:$0xff]
  %v42 = vld [vmem:[%s0 + $0xd8] sm:$0xff]
  %v43 = vld [vmem:[%s0 + $0xe0] sm:$0xff]
  %v44 = vld [vmem:[%s0 + $0xe8] sm:$0xff]
  %v45 = vld [vmem:[%s0 + $0xf0] sm:$0xff]
  %v46 = vld [vmem:[%s0 + $0xf8] sm:$0xff]
  %v47 = vld [vmem:[%s0 + $0x100] sm:$0xff]
  %v48 = vld [vmem:[%s0 + $0x108] sm:$0xff]
  %v49 = vld [vmem:[%s0 + $0x110] sm:$0xff]
  %v50 = vld [vmem:[%s0 + $0x118] sm:$0xff]
  %v51 = vld [vmem:[%s0 + $0x120] sm:$0xff]
  %v52 = vld [vmem:[%s0 + $0x128] sm:$0xff]
  %v53 = vld [vmem:[%s0 + $0x130] sm:$0xff]
  %v54 = vld [vmem:[%s0 + $0x138] sm:$0xff]
  %v55 = vld [vmem:[%s0 + $0x140] sm:$0xff]
  %v56 = vld [vmem:[%s0 + $0x148] sm:$0xff]
  %v57 = vld [vmem:[%s0 + $0x150] sm:$0xff]
  %v58 = vld [vmem:[%s0 + $0x158] sm:$0xff]
  %v59 = vld [vmem:[%s0 + $0x160] sm:$0xff]
  %v60 = vld [vmem:[%s0 + $0x168] sm:$0xff]
  %v61 = vld [vmem:[%s0 + $0x170] sm:$0xff]
  %v62 = vld [vmem:[%s0 + $0x178] sm:$0xff]
  %v63 = vld [vmem:[%s0 + $0x180] sm:$0xff]
  %v64 = vld [vmem:[%s0 + $0x188] sm:$0xff]
  %v65 = vld [vmem:[%s0 + $0x190] sm:$0xff]
  %v66 = vld [vmem:[%s0 + $0x198] sm:$0xff]
  %v67 = vld [vmem:[%s0 + $0x1a0] sm:$0xff]
  %v68 = vld [vmem:[%s0 + $0x1a8] sm:$0xff]
  %v69 = vld [vmem:[%s0 + $0x1b0] sm:$0xff]
  %v70 = vld [vmem:[%s0 + $0x1b8] sm:$0xff]
  %v71 = vld [vmem:[%s0 + $0x1c0] sm:$0xff]
  %v72 = vld [vmem:[%s0 + $0x1c8] sm:$0xff]
  %v73 = vld [vmem:[%s0 + $0x1d0] sm:$0xff]
  %v74 = vld [vmem:[%s0 + $0x1d8] sm:$0xff]
  %v75 = vld [vmem:[%s0 + $0x1e0] sm:$0xff]
  %v76 = vld [vmem:[%s0 + $0x1e8] sm:$0xff]
  %v77 = vld [vmem:[%s0 + $0x1f0] sm:$0xff]
  %v78 = vld [vmem:[%s0 + $0x1f8] sm:$0xff]
  %v79 = vld [vmem:[%s0 + $0x200] sm:$0xff]
  %v80 = vld [vmem:[%s0 + $0x208] sm:$0xff]
  %v81 = vld [vmem:[%s0 + $0x210] sm:$0xff]
  %v82 = vld [vmem:[%s0 + $0x218] sm:$0xff]
  %v83 = vld [vmem:[%s0 + $0x220] sm:$0xff]
  %v84 = vld [vmem:[%s0 + $0x228] sm:$0xff]
  %v85 = vld [vmem:[%s0 + $0x230] sm:$0xff]
  %v86 = vld [vmem:[%s0 + $0x238] sm:$0xff]
  %v87 = vld [vmem:[%s0 + $0x240] sm:$0xff]
  %v88 = vld [vmem:[%s0 + $0x248] sm:$0xff]
  %v89 = vld [vmem:[%s0 + $0x250] sm:$0xff]
  %v90 = vld [vmem:[%s0 + $0x258] sm:$0xff]
  %v91 = vld [vmem:[%s0 + $0x260] sm:$0xff]
  %v92 = vld [vmem:[%s0 + $0x268] sm:$0xff]
  %v93 = vld [vmem:[%s0 + $0x270] sm:$0xff]
  %v94 = vld [vmem:[%s0 + $0x278] sm:$0xff]
  %v95 = vld [vmem:[%s0 + $0x280] sm:$0xff]
  %v96 = vld [vmem:[%s0 + $0x288] sm:$0xff]
  %v97 = vld [vmem:[%s0 + $0x290] sm:$0xff]
  %v98 = vld [vmem:[%s0 + $0x298] sm:$0xff]
  %v99 = vld [vmem:[%s0 + $0x2a0] sm:$0xff]
  %v100 = vld [vmem:[%s0 + $0x2a8] sm:$0xff]
  %v101 = vld [vmem:[%s0 + $0x2b0] sm:$0xff]
  %v102 = vld [vmem:[%s0 + $0x2b8] sm:$0xff]
  %v103 = vld [vmem:[%s0 + $0x2c0] sm:$0xff]
  %v104 = vld [vmem:[%s0 + $0x2c8] sm:$0xff]
  %v105 = vld [vmem:[%s0 + $0x2d0] sm:$0xff]
  %v106 = vld [vmem:[%s0 + $0x2d8] sm:$0xff]
  %v107 = vld [vmem:[%s0 + $0x2e0] sm:$0xff]
  %v108 = vld [vmem:[%s0 + $0x2e8] sm:$0xff]
  %v109 = vld [vmem:[%s0 + $0x2f0] sm:$0xff]
  %v110 = vld [vmem:[%s0 + $0x2f8] sm:$0xff]
  %v111 = vld [vmem:[%s0 + $0x300] sm:$0xff]
  %v112 = vld [vmem:[%s0 + $0x308] sm:$0xff]
  %v113 = vld [vmem:[%s1] sm:$0xf]
  %v114 = vld [vmem:[%s1 + $0x4] sm:$0xf]
  %v115 = vld [vmem:[%s1 + $0x8] sm:$0xf]
  %v116 = vld [vmem:[%s1 + $0xc] sm:$0xf]
  %v117 = vld [vmem:[%s1 + $0x10] sm:$0xf]
  %v118 = vld [vmem:[%s1 + $0x14] sm:$0xf]
  %v119 = vld [vmem:[%s1 + $0x18] sm:$0xf]
  %v120 = vld [vmem:[%s1 + $0x1c] sm:$0xf]
  %v121 = vld [vmem:[%s1 + $0x20] sm:$0xf]
  %v122 = vld [vmem:[%s1 + $0x24] sm:$0xf]
  %v123 = vld [vmem:[%s1 + $0x28] sm:$0xf]
  %v124 = vld [vmem:[%s1 + $0x2c] sm:$0xf]
  %v125 = vld [vmem:[%s1 + $0x30] sm:$0xf]
  %v126 = vld [vmem:[%s1 + $0x34] sm:$0xf]
  %v127 = vld [vmem:[%s1 + $0x38] sm:$0xf]
  %v128 = vld [vmem:[%s1 + $0x3c] sm:$0xf]
  %v129 = vld [vmem:[%s1 + $0x40] sm:$0xf]
  %v130 = vld [vmem:[%s1 + $0x44] sm:$0xf]
  %v131 = vld [vmem:[%s1 + $0x48] sm:$0xf]
  %v132 = vld [vmem:[%s1 + $0x4c] sm:$0xf]
  %v133 = vld [vmem:[%s1 + $0x50] sm:$0xf]
  %v134 = vld [vmem:[%s1 + $0x54] sm:$0xf]
  %v135 = vld [vmem:[%s1 + $0x58] sm:$0xf]
  %v136 = vld [vmem:[%s1 + $0x5c] sm:$0xf]
  %v137 = vld [vmem:[%s1 + $0x60] sm:$0xf]
  %v138 = vld [vmem:[%s1 + $0x64] sm:$0xf]
  %v139 = vld [vmem:[%s1 + $0x68] sm:$0xf]
  %v140 = vld [vmem:[%s1 + $0x6c] sm:$0xf]
  %v141 = vld [vmem:[%s1 + $0x70] sm:$0xf]
  %v142 = vld [vmem:[%s1 + $0x74] sm:$0xf]
  %v143 = vld [vmem:[%s1 + $0x78] sm:$0xf]
  %v144 = vld [vmem:[%s1 + $0x7c] sm:$0xf]
  %v145 = vld [vmem:[%s1 + $0x80] sm:$0xf]
  %v146 = vld [vmem:[%s1 + $0x84] sm:$0xf]
  %v147 = vld [vmem:[%s1 + $0x88] sm:$0xf]
  %v148 = vld [vmem:[%s1 + $0x8c] sm:$0xf]
  %v149 = vld [vmem:[%s1 + $0x90] sm:$0xf]
  %v150 = vld [vmem:[%s1 + $0x94] sm:$0xf]
  %v151 = vld [vmem:[%s1 + $0x98] sm:$0xf]
  %v152 = vld [vmem:[%s1 + $0x9c] sm:$0xf]
  %v153 = vld [vmem:[%s1 + $0xa0] sm:$0xf]
  %v154 = vld [vmem:[%s1 + $0xa4] sm:$0xf]
  %v155 = vld [vmem:[%s1 + $0xa8] sm:$0xf]
  %v156 = vld [vmem:[%s1 + $0xac] sm:$0xf]
  %v157 = vld [vmem:[%s1 + $0xb0] sm:$0xf]
  %v158 = vld [vmem:[%s1 + $0xb4] sm:$0xf]
  %v159 = vld [vmem:[%s1 + $0xb8] sm:$0xf]
  %v160 = vld [vmem:[%s1 + $0xbc] sm:$0xf]
  %v161 = vld [vmem:[%s1 + $0xc0] sm:$0xf]
  %v162 = vld [vmem:[%s1 + $0xc4] sm:$0xf]
  %v163 = vld [vmem:[%s2] sm:$0x1]
  %v165 = vperm.slane %v163, 0
  %v265 = vunpack.c.l.b16 %v15
  %v266 = vunpack.c.h.b16 %v15
  %v267 = vunpack.c.l.b16 %v16
  %v268 = vunpack.c.h.b16 %v16
  %v269 = vunpack.c.l.b16 %v17
  %v270 = vunpack.c.h.b16 %v17
  %v271 = vunpack.c.l.b16 %v18
  %v272 = vunpack.c.h.b16 %v18
  %v273 = vunpack.c.l.b16 %v19
  %v274 = vunpack.c.h.b16 %v19
  %v275 = vunpack.c.l.b16 %v20
  %v276 = vunpack.c.h.b16 %v20
  %v277 = vunpack.c.l.b16 %v21
  %v278 = vunpack.c.h.b16 %v21
  %v279 = vunpack.c.l.b16 %v22
  %v280 = vunpack.c.h.b16 %v22
  %v281 = vunpack.c.l.b16 %v23
  %v282 = vunpack.c.h.b16 %v23
  %v283 = vunpack.c.l.b16 %v24
  %v284 = vunpack.c.h.b16 %v24
  %v285 = vunpack.c.l.b16 %v25
  %v286 = vunpack.c.h.b16 %v25
  %v287 = vunpack.c.l.b16 %v26
  %v288 = vunpack.c.h.b16 %v26
  %v289 = vunpack.c.l.b16 %v27
  %v290 = vunpack.c.h.b16 %v27
  %v291 = vunpack.c.l.b16 %v28
  %v292 = vunpack.c.h.b16 %v28
  %v293 = vunpack.c.l.b16 %v29
  %v294 = vunpack.c.h.b16 %v29
  %v295 = vunpack.c.l.b16 %v30
  %v296 = vunpack.c.h.b16 %v30
  %v297 = vunpack.c.l.b16 %v31
  %v298 = vunpack.c.h.b16 %v31
  %v299 = vunpack.c.l.b16 %v32
  %v300 = vunpack.c.h.b16 %v32
  %v301 = vunpack.c.l.b16 %v33
  %v302 = vunpack.c.h.b16 %v33
  %v303 = vunpack.c.l.b16 %v34
  %v304 = vunpack.c.h.b16 %v34
  %v305 = vunpack.c.l.b16 %v35
  %v306 = vunpack.c.h.b16 %v35
  %v307 = vunpack.c.l.b16 %v36
  %v308 = vunpack.c.h.b16 %v36
  %v309 = vunpack.c.l.b16 %v37
  %v310 = vunpack.c.h.b16 %v37
  %v311 = vunpack.c.l.b16 %v38
  %v312 = vunpack.c.h.b16 %v38
  %v313 = vunpack.c.l.b16 %v39
  %v314 = vunpack.c.h.b16 %v39
  %v315 = vunpack.c.l.b16 %v40
  %v316 = vunpack.c.h.b16 %v40
  %v317 = vunpack.c.l.b16 %v41
  %v318 = vunpack.c.h.b16 %v41
  %v319 = vunpack.c.l.b16 %v42
  %v320 = vunpack.c.h.b16 %v42
  %v321 = vunpack.c.l.b16 %v43
  %v322 = vunpack.c.h.b16 %v43
  %v323 = vunpack.c.l.b16 %v44
  %v324 = vunpack.c.h.b16 %v44
  %v325 = vunpack.c.l.b16 %v45
  %v326 = vunpack.c.h.b16 %v45
  %v327 = vunpack.c.l.b16 %v46
  %v328 = vunpack.c.h.b16 %v46
  %v329 = vunpack.c.l.b16 %v47
  %v330 = vunpack.c.h.b16 %v47
  %v331 = vunpack.c.l.b16 %v48
  %v332 = vunpack.c.h.b16 %v48
  %v333 = vunpack.c.l.b16 %v49
  %v334 = vunpack.c.h.b16 %v49
  %v335 = vunpack.c.l.b16 %v50
  %v336 = vunpack.c.h.b16 %v50
  %v337 = vunpack.c.l.b16 %v51
  %v338 = vunpack.c.h.b16 %v51
  %v339 = vunpack.c.l.b16 %v52
  %v340 = vunpack.c.h.b16 %v52
  %v341 = vunpack.c.l.b16 %v53
  %v342 = vunpack.c.h.b16 %v53
  %v343 = vunpack.c.l.b16 %v54
  %v344 = vunpack.c.h.b16 %v54
  %v345 = vunpack.c.l.b16 %v55
  %v346 = vunpack.c.h.b16 %v55
  %v347 = vunpack.c.l.b16 %v56
  %v348 = vunpack.c.h.b16 %v56
  %v349 = vunpack.c.l.b16 %v57
  %v350 = vunpack.c.h.b16 %v57
  %v351 = vunpack.c.l.b16 %v58
  %v352 = vunpack.c.h.b16 %v58
  %v353 = vunpack.c.l.b16 %v59
  %v354 = vunpack.c.h.b16 %v59
  %v355 = vunpack.c.l.b16 %v60
  %v356 = vunpack.c.h.b16 %v60
  %v357 = vunpack.c.l.b16 %v61
  %v358 = vunpack.c.h.b16 %v61
  %v359 = vunpack.c.l.b16 %v62
  %v360 = vunpack.c.h.b16 %v62
  %v361 = vunpack.c.l.b16 %v63
  %v362 = vunpack.c.h.b16 %v63
  %v363 = vunpack.c.l.b16 %v64
  %v364 = vunpack.c.h.b16 %v64
  %v365 = vunpack.c.l.b16 %v65
  %v366 = vunpack.c.h.b16 %v65
  %v367 = vunpack.c.l.b16 %v66
  %v368 = vunpack.c.h.b16 %v66
  %v369 = vunpack.c.l.b16 %v67
  %v370 = vunpack.c.h.b16 %v67
  %v371 = vunpack.c.l.b16 %v68
  %v372 = vunpack.c.h.b16 %v68
  %v373 = vunpack.c.l.b16 %v69
  %v374 = vunpack.c.h.b16 %v69
  %v375 = vunpack.c.l.b16 %v70
  %v376 = vunpack.c.h.b16 %v70
  %v377 = vunpack.c.l.b16 %v71
  %v378 = vunpack.c.h.b16 %v71
  %v379 = vunpack.c.l.b16 %v72
  %v380 = vunpack.c.h.b16 %v72
  %v381 = vunpack.c.l.b16 %v73
  %v382 = vunpack.c.h.b16 %v73
  %v383 = vunpack.c.l.b16 %v74
  %v384 = vunpack.c.h.b16 %v74
  %v385 = vunpack.c.l.b16 %v75
  %v386 = vunpack.c.h.b16 %v75
  %v387 = vunpack.c.l.b16 %v76
  %v388 = vunpack.c.h.b16 %v76
  %v389 = vunpack.c.l.b16 %v77
  %v390 = vunpack.c.h.b16 %v77
  %v391 = vunpack.c.l.b16 %v78
  %v392 = vunpack.c.h.b16 %v78
  %v393 = vunpack.c.l.b16 %v79
  %v394 = vunpack.c.h.b16 %v79
  %v395 = vunpack.c.l.b16 %v80
  %v396 = vunpack.c.h.b16 %v80
  %v397 = vunpack.c.l.b16 %v81
  %v398 = vunpack.c.h.b16 %v81
  %v399 = vunpack.c.l.b16 %v82
  %v400 = vunpack.c.h.b16 %v82
  %v401 = vunpack.c.l.b16 %v83
  %v402 = vunpack.c.h.b16 %v83
  %v403 = vunpack.c.l.b16 %v84
  %v404 = vunpack.c.h.b16 %v84
  %v405 = vunpack.c.l.b16 %v85
  %v406 = vunpack.c.h.b16 %v85
  %v407 = vunpack.c.l.b16 %v86
  %v408 = vunpack.c.h.b16 %v86
  %v409 = vunpack.c.l.b16 %v87
  %v410 = vunpack.c.h.b16 %v87
  %v411 = vunpack.c.l.b16 %v88
  %v412 = vunpack.c.h.b16 %v88
  %v413 = vunpack.c.l.b16 %v89
  %v414 = vunpack.c.h.b16 %v89
  %v415 = vunpack.c.l.b16 %v90
  %v416 = vunpack.c.h.b16 %v90
  %v417 = vunpack.c.l.b16 %v91
  %v418 = vunpack.c.h.b16 %v91
  %v419 = vunpack.c.l.b16 %v92
  %v420 = vunpack.c.h.b16 %v92
  %v421 = vunpack.c.l.b16 %v93
  %v422 = vunpack.c.h.b16 %v93
  %v423 = vunpack.c.l.b16 %v94
  %v424 = vunpack.c.h.b16 %v94
  %v425 = vunpack.c.l.b16 %v95
  %v426 = vunpack.c.h.b16 %v95
  %v427 = vunpack.c.l.b16 %v96
  %v428 = vunpack.c.h.b16 %v96
  %v429 = vunpack.c.l.b16 %v97
  %v430 = vunpack.c.h.b16 %v97
  %v431 = vunpack.c.l.b16 %v98
  %v432 = vunpack.c.h.b16 %v98
  %v433 = vunpack.c.l.b16 %v99
  %v434 = vunpack.c.h.b16 %v99
  %v435 = vunpack.c.l.b16 %v100
  %v436 = vunpack.c.h.b16 %v100
  %v437 = vunpack.c.l.b16 %v101
  %v438 = vunpack.c.h.b16 %v101
  %v439 = vunpack.c.l.b16 %v102
  %v440 = vunpack.c.h.b16 %v102
  %v441 = vunpack.c.l.b16 %v103
  %v442 = vunpack.c.h.b16 %v103
  %v443 = vunpack.c.l.b16 %v104
  %v444 = vunpack.c.h.b16 %v104
  %v445 = vunpack.c.l.b16 %v105
  %v446 = vunpack.c.h.b16 %v105
  %v447 = vunpack.c.l.b16 %v106
  %v448 = vunpack.c.h.b16 %v106
  %v449 = vunpack.c.l.b16 %v107
  %v450 = vunpack.c.h.b16 %v107
  %v451 = vunpack.c.l.b16 %v108
  %v452 = vunpack.c.h.b16 %v108
  %v453 = vunpack.c.l.b16 %v109
  %v454 = vunpack.c.h.b16 %v109
  %v455 = vunpack.c.l.b16 %v110
  %v456 = vunpack.c.h.b16 %v110
  %v457 = vunpack.c.l.b16 %v111
  %v458 = vunpack.c.h.b16 %v111
  %v459 = vunpack.c.l.b16 %v112
  %v460 = vunpack.c.h.b16 %v112
  %v461 = vpack.c.b16 %v269, %v265
  %v462 = vpack.c.b16 %v270, %v266
  %v463 = vpack.c.b16 %v271, %v267
  %v464 = vpack.c.b16 %v272, %v268
  %v465 = vpack.c.b16 %v277, %v273
  %v466 = vpack.c.b16 %v278, %v274
  %v467 = vpack.c.b16 %v279, %v275
  %v468 = vpack.c.b16 %v280, %v276
  %v469 = vpack.c.b16 %v285, %v281
  %v470 = vpack.c.b16 %v286, %v282
  %v471 = vpack.c.b16 %v287, %v283
  %v472 = vpack.c.b16 %v288, %v284
  %v473 = vpack.c.b16 %v293, %v289
  %v474 = vpack.c.b16 %v294, %v290
  %v475 = vpack.c.b16 %v295, %v291
  %v476 = vpack.c.b16 %v296, %v292
  %v477 = vpack.c.b16 %v301, %v297
  %v478 = vpack.c.b16 %v302, %v298
  %v479 = vpack.c.b16 %v303, %v299
  %v480 = vpack.c.b16 %v304, %v300
  %v481 = vpack.c.b16 %v309, %v305
  %v482 = vpack.c.b16 %v310, %v306
  %v483 = vpack.c.b16 %v311, %v307
  %v484 = vpack.c.b16 %v312, %v308
  %v485 = vpack.c.b16 %v317, %v313
  %v486 = vpack.c.b16 %v318, %v314
  %v487 = vpack.c.b16 %v319, %v315
  %v488 = vpack.c.b16 %v320, %v316
  %v489 = vpack.c.b16 %v325, %v321
  %v490 = vpack.c.b16 %v326, %v322
  %v491 = vpack.c.b16 %v327, %v323
  %v492 = vpack.c.b16 %v328, %v324
  %v493 = vpack.c.b16 %v333, %v329
  %v494 = vpack.c.b16 %v334, %v330
  %v495 = vpack.c.b16 %v335, %v331
  %v496 = vpack.c.b16 %v336, %v332
  %v497 = vpack.c.b16 %v341, %v337
  %v498 = vpack.c.b16 %v342, %v338
  %v499 = vpack.c.b16 %v343, %v339
  %v500 = vpack.c.b16 %v344, %v340
  %v501 = vpack.c.b16 %v349, %v345
  %v502 = vpack.c.b16 %v350, %v346
  %v503 = vpack.c.b16 %v351, %v347
  %v504 = vpack.c.b16 %v352, %v348
  %v505 = vpack.c.b16 %v357, %v353
  %v506 = vpack.c.b16 %v358, %v354
  %v507 = vpack.c.b16 %v359, %v355
  %v508 = vpack.c.b16 %v360, %v356
  %v509 = vpack.c.b16 %v365, %v361
  %v510 = vpack.c.b16 %v366, %v362
  %v511 = vpack.c.b16 %v367, %v363
  %v512 = vpack.c.b16 %v368, %v364
  %v513 = vpack.c.b16 %v373, %v369
  %v514 = vpack.c.b16 %v374, %v370
  %v515 = vpack.c.b16 %v375, %v371
  %v516 = vpack.c.b16 %v376, %v372
  %v517 = vpack.c.b16 %v381, %v377
  %v518 = vpack.c.b16 %v382, %v378
  %v519 = vpack.c.b16 %v383, %v379
  %v520 = vpack.c.b16 %v384, %v380
  %v521 = vpack.c.b16 %v389, %v385
  %v522 = vpack.c.b16 %v390, %v386
  %v523 = vpack.c.b16 %v391, %v387
  %v524 = vpack.c.b16 %v392, %v388
  %v525 = vpack.c.b16 %v397, %v393
  %v526 = vpack.c.b16 %v398, %v394
  %v527 = vpack.c.b16 %v399, %v395
  %v528 = vpack.c.b16 %v400, %v396
  %v529 = vpack.c.b16 %v405, %v401
  %v530 = vpack.c.b16 %v406, %v402
  %v531 = vpack.c.b16 %v407, %v403
  %v532 = vpack.c.b16 %v408, %v404
  %v533 = vpack.c.b16 %v413, %v409
  %v534 = vpack.c.b16 %v414, %v410
  %v535 = vpack.c.b16 %v415, %v411
  %v536 = vpack.c.b16 %v416, %v412
  %v537 = vpack.c.b16 %v421, %v417
  %v538 = vpack.c.b16 %v422, %v418
  %v539 = vpack.c.b16 %v423, %v419
  %v540 = vpack.c.b16 %v424, %v420
  %v541 = vpack.c.b16 %v429, %v425
  %v542 = vpack.c.b16 %v430, %v426
  %v543 = vpack.c.b16 %v431, %v427
  %v544 = vpack.c.b16 %v432, %v428
  %v545 = vpack.c.b16 %v437, %v433
  %v546 = vpack.c.b16 %v438, %v434
  %v547 = vpack.c.b16 %v439, %v435
  %v548 = vpack.c.b16 %v440, %v436
  %v549 = vpack.c.b16 %v445, %v441
  %v550 = vpack.c.b16 %v446, %v442
  %v551 = vpack.c.b16 %v447, %v443
  %v552 = vpack.c.b16 %v448, %v444
  %v553 = vpack.c.b16 %v453, %v449
  %v554 = vpack.c.b16 %v454, %v450
  %v555 = vpack.c.b16 %v455, %v451
  %v556 = vpack.c.b16 %v456, %v452
  %v557 = vpack.c.b16 %v457, %v457
  %v558 = vpack.c.b16 %v458, %v458
  %v559 = vpack.c.b16 %v459, %v459
  %v560 = vpack.c.b16 %v460, %v460
  %v686 = vunpack.c.l.b16 %v113
  %v687 = vunpack.c.l.b16 %v114
  %v688 = vunpack.c.l.b16 %v115
  %v689 = vunpack.c.l.b16 %v116
  %v690 = vunpack.c.l.b16 %v117
  %v691 = vunpack.c.l.b16 %v118
  %v692 = vunpack.c.l.b16 %v119
  %v693 = vunpack.c.l.b16 %v120
  %v694 = vunpack.c.l.b16 %v121
  %v695 = vunpack.c.l.b16 %v122
  %v696 = vunpack.c.l.b16 %v123
  %v697 = vunpack.c.l.b16 %v124
  %v698 = vunpack.c.l.b16 %v125
  %v699 = vunpack.c.l.b16 %v126
  %v700 = vunpack.c.l.b16 %v127
  %v701 = vunpack.c.l.b16 %v128
  %v702 = vunpack.c.l.b16 %v129
  %v703 = vunpack.c.l.b16 %v130
  %v704 = vunpack.c.l.b16 %v131
  %v705 = vunpack.c.l.b16 %v132
  %v706 = vunpack.c.l.b16 %v133
  %v707 = vunpack.c.l.b16 %v134
  %v708 = vunpack.c.l.b16 %v135
  %v709 = vunpack.c.l.b16 %v136
  %v710 = vunpack.c.l.b16 %v137
  %v711 = vunpack.c.l.b16 %v138
  %v712 = vunpack.c.l.b16 %v139
  %v713 = vunpack.c.l.b16 %v140
  %v714 = vunpack.c.l.b16 %v141
  %v715 = vunpack.c.l.b16 %v142
  %v716 = vunpack.c.l.b16 %v143
  %v717 = vunpack.c.l.b16 %v144
  %v718 = vunpack.c.l.b16 %v145
  %v719 = vunpack.c.l.b16 %v146
  %v720 = vunpack.c.l.b16 %v147
  %v721 = vunpack.c.l.b16 %v148
  %v722 = vunpack.c.l.b16 %v149
  %v723 = vunpack.c.l.b16 %v150
  %v724 = vunpack.c.l.b16 %v151
  %v725 = vunpack.c.l.b16 %v152
  %v726 = vunpack.c.l.b16 %v153
  %v727 = vunpack.c.l.b16 %v154
  %v728 = vunpack.c.l.b16 %v155
  %v729 = vunpack.c.l.b16 %v156
  %v730 = vunpack.c.l.b16 %v157
  %v731 = vunpack.c.l.b16 %v158
  %v732 = vunpack.c.l.b16 %v159
  %v733 = vunpack.c.l.b16 %v160
  %v734 = vunpack.c.l.b16 %v161
  %v735 = vunpack.c.l.b16 %v162
  %v736 = vpack.c.b16 %v687, %v686
  %v737 = vpack.c.b16 %v689, %v688
  %v738 = vpack.c.b16 %v691, %v690
  %v739 = vpack.c.b16 %v693, %v692
  %v740 = vpack.c.b16 %v695, %v694
  %v741 = vpack.c.b16 %v697, %v696
  %v742 = vpack.c.b16 %v699, %v698
  %v743 = vpack.c.b16 %v701, %v700
  %v744 = vpack.c.b16 %v703, %v702
  %v745 = vpack.c.b16 %v705, %v704
  %v746 = vpack.c.b16 %v707, %v706
  %v747 = vpack.c.b16 %v709, %v708
  %v748 = vpack.c.b16 %v711, %v710
  %v749 = vpack.c.b16 %v713, %v712
  %v750 = vpack.c.b16 %v715, %v714
  %v751 = vpack.c.b16 %v717, %v716
  %v752 = vpack.c.b16 %v719, %v718
  %v753 = vpack.c.b16 %v721, %v720
  %v754 = vpack.c.b16 %v723, %v722
  %v755 = vpack.c.b16 %v725, %v724
  %v756 = vpack.c.b16 %v727, %v726
  %v757 = vpack.c.b16 %v729, %v728
  %v758 = vpack.c.b16 %v731, %v730
  %v759 = vpack.c.b16 %v733, %v732
  %v760 = vpack.c.b16 %v735, %v734
  %vm786 = vcmask 130048
  %v788 = vsel %vm786, %v464, 0
  %v791 = vsel %vm786, %v468, 0
  %v794 = vsel %vm786, %v472, 0
  %v797 = vsel %vm786, %v476, 0
  %v800 = vsel %vm786, %v480, 0
  %v803 = vsel %vm786, %v484, 0
  %v806 = vsel %vm786, %v488, 0
  %v809 = vsel %vm786, %v492, 0
  %v812 = vsel %vm786, %v496, 0
  %v815 = vsel %vm786, %v500, 0
  %v818 = vsel %vm786, %v504, 0
  %v821 = vsel %vm786, %v508, 0
  %v824 = vsel %vm786, %v512, 0
  %v827 = vsel %vm786, %v516, 0
  %v830 = vsel %vm786, %v520, 0
  %v833 = vsel %vm786, %v524, 0
  %v836 = vsel %vm786, %v528, 0
  %v839 = vsel %vm786, %v532, 0
  %v842 = vsel %vm786, %v536, 0
  %v845 = vsel %vm786, %v540, 0
  %v848 = vsel %vm786, %v544, 0
  %v851 = vsel %vm786, %v548, 0
  %v854 = vsel %vm786, %v552, 0
  %v857 = vsel %vm786, %v556, 0
  %v860 = vsel %vm786, %v560, 0
  %862 = vmatpush.bf16.msra.mxu0 %v743
  %863 = vmatpush.bf16.msra.mxu0 %v742
  %864 = vmatpush.bf16.msra.mxu0 %v741
  %865 = vmatpush.bf16.msra.mxu0 %v740
  %866 = vmatpush.bf16.msra.mxu0 %v739
  %867 = vmatpush.bf16.msra.mxu0 %v738
  %868 = vmatpush.bf16.msra.mxu0 %v737
  %869 = vmatpush.bf16.msra.mxu0 %v736
  %870 = vmatmul.bf16.gmra.mxu0 %v461
  %v871 = vpop.f32.mrf.mxu0
  %v872 = vadd.f32 %v165, %v871
  %v873 = vpop.f32.mrf.mxu0
  %v874 = vadd.f32 %v165, %v873
  %875 = vmatmul.bf16.gmra.mxu0 %v465
  %v876 = vpop.f32.mrf.mxu0
  %v877 = vadd.f32 %v165, %v876
  %v878 = vpop.f32.mrf.mxu0
  %v879 = vadd.f32 %v165, %v878
  %880 = vmatmul.bf16.gmra.mxu0 %v469
  %v881 = vpop.f32.mrf.mxu0
  %v882 = vadd.f32 %v165, %v881
  %v883 = vpop.f32.mrf.mxu0
  %v884 = vadd.f32 %v165, %v883
  %885 = vmatmul.bf16.gmra.mxu0 %v473
  %v886 = vpop.f32.mrf.mxu0
  %v887 = vadd.f32 %v165, %v886
  %v888 = vpop.f32.mrf.mxu0
  %v889 = vadd.f32 %v165, %v888
  %890 = vmatmul.bf16.gmra.mxu0 %v477
  %v891 = vpop.f32.mrf.mxu0
  %v892 = vadd.f32 %v165, %v891
  %v893 = vpop.f32.mrf.mxu0
  %v894 = vadd.f32 %v165, %v893
  %895 = vmatmul.bf16.gmra.mxu0 %v481
  %v896 = vpop.f32.mrf.mxu0
  %v897 = vadd.f32 %v165, %v896
  %v898 = vpop.f32.mrf.mxu0
  %v899 = vadd.f32 %v165, %v898
  %900 = vmatmul.bf16.gmra.mxu0 %v485
  %v901 = vpop.f32.mrf.mxu0
  %v902 = vadd.f32 %v165, %v901
  %v903 = vpop.f32.mrf.mxu0
  %v904 = vadd.f32 %v165, %v903
  %905 = vmatmul.bf16.gmra.mxu0 %v489
  %v906 = vpop.f32.mrf.mxu0
  %v907 = vadd.f32 %v165, %v906
  %v908 = vpop.f32.mrf.mxu0
  %v909 = vadd.f32 %v165, %v908
  %910 = vmatmul.bf16.gmra.mxu0 %v493
  %v911 = vpop.f32.mrf.mxu0
  %v912 = vadd.f32 %v165, %v911
  %v913 = vpop.f32.mrf.mxu0
  %v914 = vadd.f32 %v165, %v913
  %915 = vmatmul.bf16.gmra.mxu0 %v497
  %v916 = vpop.f32.mrf.mxu0
  %v917 = vadd.f32 %v165, %v916
  %v918 = vpop.f32.mrf.mxu0
  %v919 = vadd.f32 %v165, %v918
  %920 = vmatmul.bf16.gmra.mxu0 %v501
  %v921 = vpop.f32.mrf.mxu0
  %v922 = vadd.f32 %v165, %v921
  %v923 = vpop.f32.mrf.mxu0
  %v924 = vadd.f32 %v165, %v923
  %925 = vmatmul.bf16.gmra.mxu0 %v505
  %v926 = vpop.f32.mrf.mxu0
  %v927 = vadd.f32 %v165, %v926
  %v928 = vpop.f32.mrf.mxu0
  %v929 = vadd.f32 %v165, %v928
  %930 = vmatmul.bf16.gmra.mxu0 %v509
  %v931 = vpop.f32.mrf.mxu0
  %v932 = vadd.f32 %v165, %v931
  %v933 = vpop.f32.mrf.mxu0
  %v934 = vadd.f32 %v165, %v933
  %935 = vmatmul.bf16.gmra.mxu0 %v513
  %v936 = vpop.f32.mrf.mxu0
  %v937 = vadd.f32 %v165, %v936
  %v938 = vpop.f32.mrf.mxu0
  %v939 = vadd.f32 %v165, %v938
  %940 = vmatmul.bf16.gmra.mxu0 %v517
  %v941 = vpop.f32.mrf.mxu0
  %v942 = vadd.f32 %v165, %v941
  %v943 = vpop.f32.mrf.mxu0
  %v944 = vadd.f32 %v165, %v943
  %945 = vmatmul.bf16.gmra.mxu0 %v521
  %v946 = vpop.f32.mrf.mxu0
  %v947 = vadd.f32 %v165, %v946
  %v948 = vpop.f32.mrf.mxu0
  %v949 = vadd.f32 %v165, %v948
  %950 = vmatmul.bf16.gmra.mxu0 %v525
  %v951 = vpop.f32.mrf.mxu0
  %v952 = vadd.f32 %v165, %v951
  %v953 = vpop.f32.mrf.mxu0
  %v954 = vadd.f32 %v165, %v953
  %955 = vmatmul.bf16.gmra.mxu0 %v529
  %v956 = vpop.f32.mrf.mxu0
  %v957 = vadd.f32 %v165, %v956
  %v958 = vpop.f32.mrf.mxu0
  %v959 = vadd.f32 %v165, %v958
  %960 = vmatmul.bf16.gmra.mxu0 %v533
  %v961 = vpop.f32.mrf.mxu0
  %v962 = vadd.f32 %v165, %v961
  %v963 = vpop.f32.mrf.mxu0
  %v964 = vadd.f32 %v165, %v963
  %965 = vmatmul.bf16.gmra.mxu0 %v537
  %v966 = vpop.f32.mrf.mxu0
  %v967 = vadd.f32 %v165, %v966
  %v968 = vpop.f32.mrf.mxu0
  %v969 = vadd.f32 %v165, %v968
  %970 = vmatmul.bf16.gmra.mxu0 %v541
  %v971 = vpop.f32.mrf.mxu0
  %v972 = vadd.f32 %v165, %v971
  %v973 = vpop.f32.mrf.mxu0
  %v974 = vadd.f32 %v165, %v973
  %975 = vmatmul.bf16.gmra.mxu0 %v545
  %v976 = vpop.f32.mrf.mxu0
  %v977 = vadd.f32 %v165, %v976
  %v978 = vpop.f32.mrf.mxu0
  %v979 = vadd.f32 %v165, %v978
  %980 = vmatmul.bf16.gmra.mxu0 %v549
  %v981 = vpop.f32.mrf.mxu0
  %v982 = vadd.f32 %v165, %v981
  %v983 = vpop.f32.mrf.mxu0
  %v984 = vadd.f32 %v165, %v983
  %985 = vmatmul.bf16.gmra.mxu0 %v553
  %v986 = vpop.f32.mrf.mxu0
  %v987 = vadd.f32 %v165, %v986
  %v988 = vpop.f32.mrf.mxu0
  %v989 = vadd.f32 %v165, %v988
  %990 = vmatmul.bf16.gmra.mxu0 %v557
  %v991 = vpop.f32.mrf.mxu0
  %v992 = vadd.f32 %v165, %v991
  %v993 = vpop.f32.mrf.mxu0
  %994 = vdwg.mxu0
  %995 = vmatpush.bf16.msra.mxu0 %v751
  %996 = vmatpush.bf16.msra.mxu0 %v750
  %997 = vmatpush.bf16.msra.mxu0 %v749
  %998 = vmatpush.bf16.msra.mxu0 %v748
  %999 = vmatpush.bf16.msra.mxu0 %v747
  %1000 = vmatpush.bf16.msra.mxu0 %v746
  %1001 = vmatpush.bf16.msra.mxu0 %v745
  %1002 = vmatpush.bf16.msra.mxu0 %v744
  %1003 = vmatmul.bf16.gmra.mxu0 %v462
  %v1004 = vpop.f32.mrf.mxu0
  %v1005 = vadd.f32 %v872, %v1004
  %v1006 = vpop.f32.mrf.mxu0
  %v1007 = vadd.f32 %v874, %v1006
  %1008 = vmatmul.bf16.gmra.mxu0 %v466
  %v1009 = vpop.f32.mrf.mxu0
  %v1010 = vadd.f32 %v877, %v1009
  %v1011 = vpop.f32.mrf.mxu0
  %v1012 = vadd.f32 %v879, %v1011
  %1013 = vmatmul.bf16.gmra.mxu0 %v470
  %v1014 = vpop.f32.mrf.mxu0
  %v1015 = vadd.f32 %v882, %v1014
  %v1016 = vpop.f32.mrf.mxu0
  %v1017 = vadd.f32 %v884, %v1016
  %1018 = vmatmul.bf16.gmra.mxu0 %v474
  %v1019 = vpop.f32.mrf.mxu0
  %v1020 = vadd.f32 %v887, %v1019
  %v1021 = vpop.f32.mrf.mxu0
  %v1022 = vadd.f32 %v889, %v1021
  %1023 = vmatmul.bf16.gmra.mxu0 %v478
  %v1024 = vpop.f32.mrf.mxu0
  %v1025 = vadd.f32 %v892, %v1024
  %v1026 = vpop.f32.mrf.mxu0
  %v1027 = vadd.f32 %v894, %v1026
  %1028 = vmatmul.bf16.gmra.mxu0 %v482
  %v1029 = vpop.f32.mrf.mxu0
  %v1030 = vadd.f32 %v897, %v1029
  %v1031 = vpop.f32.mrf.mxu0
  %v1032 = vadd.f32 %v899, %v1031
  %1033 = vmatmul.bf16.gmra.mxu0 %v486
  %v1034 = vpop.f32.mrf.mxu0
  %v1035 = vadd.f32 %v902, %v1034
  %v1036 = vpop.f32.mrf.mxu0
  %v1037 = vadd.f32 %v904, %v1036
  %1038 = vmatmul.bf16.gmra.mxu0 %v490
  %v1039 = vpop.f32.mrf.mxu0
  %v1040 = vadd.f32 %v907, %v1039
  %v1041 = vpop.f32.mrf.mxu0
  %v1042 = vadd.f32 %v909, %v1041
  %1043 = vmatmul.bf16.gmra.mxu0 %v494
  %v1044 = vpop.f32.mrf.mxu0
  %v1045 = vadd.f32 %v912, %v1044
  %v1046 = vpop.f32.mrf.mxu0
  %v1047 = vadd.f32 %v914, %v1046
  %1048 = vmatmul.bf16.gmra.mxu0 %v498
  %v1049 = vpop.f32.mrf.mxu0
  %v1050 = vadd.f32 %v917, %v1049
  %v1051 = vpop.f32.mrf.mxu0
  %v1052 = vadd.f32 %v919, %v1051
  %1053 = vmatmul.bf16.gmra.mxu0 %v502
  %v1054 = vpop.f32.mrf.mxu0
  %v1055 = vadd.f32 %v922, %v1054
  %v1056 = vpop.f32.mrf.mxu0
  %v1057 = vadd.f32 %v924, %v1056
  %1058 = vmatmul.bf16.gmra.mxu0 %v506
  %v1059 = vpop.f32.mrf.mxu0
  %v1060 = vadd.f32 %v927, %v1059
  %v1061 = vpop.f32.mrf.mxu0
  %v1062 = vadd.f32 %v929, %v1061
  %1063 = vmatmul.bf16.gmra.mxu0 %v510
  %v1064 = vpop.f32.mrf.mxu0
  %v1065 = vadd.f32 %v932, %v1064
  %v1066 = vpop.f32.mrf.mxu0
  %v1067 = vadd.f32 %v934, %v1066
  %1068 = vmatmul.bf16.gmra.mxu0 %v514
  %v1069 = vpop.f32.mrf.mxu0
  %v1070 = vadd.f32 %v937, %v1069
  %v1071 = vpop.f32.mrf.mxu0
  %v1072 = vadd.f32 %v939, %v1071
  %1073 = vmatmul.bf16.gmra.mxu0 %v518
  %v1074 = vpop.f32.mrf.mxu0
  %v1075 = vadd.f32 %v942, %v1074
  %v1076 = vpop.f32.mrf.mxu0
  %v1077 = vadd.f32 %v944, %v1076
  %1078 = vmatmul.bf16.gmra.mxu0 %v522
  %v1079 = vpop.f32.mrf.mxu0
  %v1080 = vadd.f32 %v947, %v1079
  %v1081 = vpop.f32.mrf.mxu0
  %v1082 = vadd.f32 %v949, %v1081
  %1083 = vmatmul.bf16.gmra.mxu0 %v526
  %v1084 = vpop.f32.mrf.mxu0
  %v1085 = vadd.f32 %v952, %v1084
  %v1086 = vpop.f32.mrf.mxu0
  %v1087 = vadd.f32 %v954, %v1086
  %1088 = vmatmul.bf16.gmra.mxu0 %v530
  %v1089 = vpop.f32.mrf.mxu0
  %v1090 = vadd.f32 %v957, %v1089
  %v1091 = vpop.f32.mrf.mxu0
  %v1092 = vadd.f32 %v959, %v1091
  %1093 = vmatmul.bf16.gmra.mxu0 %v534
  %v1094 = vpop.f32.mrf.mxu0
  %v1095 = vadd.f32 %v962, %v1094
  %v1096 = vpop.f32.mrf.mxu0
  %v1097 = vadd.f32 %v964, %v1096
  %1098 = vmatmul.bf16.gmra.mxu0 %v538
  %v1099 = vpop.f32.mrf.mxu0
  %v1100 = vadd.f32 %v967, %v1099
  %v1101 = vpop.f32.mrf.mxu0
  %v1102 = vadd.f32 %v969, %v1101
  %1103 = vmatmul.bf16.gmra.mxu0 %v542
  %v1104 = vpop.f32.mrf.mxu0
  %v1105 = vadd.f32 %v972, %v1104
  %v1106 = vpop.f32.mrf.mxu0
  %v1107 = vadd.f32 %v974, %v1106
  %1108 = vmatmul.bf16.gmra.mxu0 %v546
  %v1109 = vpop.f32.mrf.mxu0
  %v1110 = vadd.f32 %v977, %v1109
  %v1111 = vpop.f32.mrf.mxu0
  %v1112 = vadd.f32 %v979, %v1111
  %1113 = vmatmul.bf16.gmra.mxu0 %v550
  %v1114 = vpop.f32.mrf.mxu0
  %v1115 = vadd.f32 %v982, %v1114
  %v1116 = vpop.f32.mrf.mxu0
  %v1117 = vadd.f32 %v984, %v1116
  %1118 = vmatmul.bf16.gmra.mxu0 %v554
  %v1119 = vpop.f32.mrf.mxu0
  %v1120 = vadd.f32 %v987, %v1119
  %v1121 = vpop.f32.mrf.mxu0
  %v1122 = vadd.f32 %v989, %v1121
  %1123 = vmatmul.bf16.gmra.mxu0 %v558
  %v1124 = vpop.f32.mrf.mxu0
  %v1125 = vadd.f32 %v992, %v1124
  %v1126 = vpop.f32.mrf.mxu0
  %1127 = vdwg.mxu0
  %1128 = vmatpush.bf16.msra.mxu0 %v759
  %1129 = vmatpush.bf16.msra.mxu0 %v758
  %1130 = vmatpush.bf16.msra.mxu0 %v757
  %1131 = vmatpush.bf16.msra.mxu0 %v756
  %1132 = vmatpush.bf16.msra.mxu0 %v755
  %1133 = vmatpush.bf16.msra.mxu0 %v754
  %1134 = vmatpush.bf16.msra.mxu0 %v753
  %1135 = vmatpush.bf16.msra.mxu0 %v752
  %1136 = vmatmul.bf16.gmra.mxu0 %v463
  %v1137 = vpop.f32.mrf.mxu0
  %v1138 = vadd.f32 %v1005, %v1137
  %v1139 = vpop.f32.mrf.mxu0
  %v1140 = vadd.f32 %v1007, %v1139
  %1141 = vmatmul.bf16.gmra.mxu0 %v467
  %v1142 = vpop.f32.mrf.mxu0
  %v1143 = vadd.f32 %v1010, %v1142
  %v1144 = vpop.f32.mrf.mxu0
  %v1145 = vadd.f32 %v1012, %v1144
  %1146 = vmatmul.bf16.gmra.mxu0 %v471
  %v1147 = vpop.f32.mrf.mxu0
  %v1148 = vadd.f32 %v1015, %v1147
  %v1149 = vpop.f32.mrf.mxu0
  %v1150 = vadd.f32 %v1017, %v1149
  %1151 = vmatmul.bf16.gmra.mxu0 %v475
  %v1152 = vpop.f32.mrf.mxu0
  %v1153 = vadd.f32 %v1020, %v1152
  %v1154 = vpop.f32.mrf.mxu0
  %v1155 = vadd.f32 %v1022, %v1154
  %1156 = vmatmul.bf16.gmra.mxu0 %v479
  %v1157 = vpop.f32.mrf.mxu0
  %v1158 = vadd.f32 %v1025, %v1157
  %v1159 = vpop.f32.mrf.mxu0
  %v1160 = vadd.f32 %v1027, %v1159
  %1161 = vmatmul.bf16.gmra.mxu0 %v483
  %v1162 = vpop.f32.mrf.mxu0
  %v1163 = vadd.f32 %v1030, %v1162
  %v1164 = vpop.f32.mrf.mxu0
  %v1165 = vadd.f32 %v1032, %v1164
  %1166 = vmatmul.bf16.gmra.mxu0 %v487
  %v1167 = vpop.f32.mrf.mxu0
  %v1168 = vadd.f32 %v1035, %v1167
  %v1169 = vpop.f32.mrf.mxu0
  %v1170 = vadd.f32 %v1037, %v1169
  %1171 = vmatmul.bf16.gmra.mxu0 %v491
  %v1172 = vpop.f32.mrf.mxu0
  %v1173 = vadd.f32 %v1040, %v1172
  %v1174 = vpop.f32.mrf.mxu0
  %v1175 = vadd.f32 %v1042, %v1174
  %1176 = vmatmul.bf16.gmra.mxu0 %v495
  %v1177 = vpop.f32.mrf.mxu0
  %v1178 = vadd.f32 %v1045, %v1177
  %v1179 = vpop.f32.mrf.mxu0
  %v1180 = vadd.f32 %v1047, %v1179
  %1181 = vmatmul.bf16.gmra.mxu0 %v499
  %v1182 = vpop.f32.mrf.mxu0
  %v1183 = vadd.f32 %v1050, %v1182
  %v1184 = vpop.f32.mrf.mxu0
  %v1185 = vadd.f32 %v1052, %v1184
  %1186 = vmatmul.bf16.gmra.mxu0 %v503
  %v1187 = vpop.f32.mrf.mxu0
  %v1188 = vadd.f32 %v1055, %v1187
  %v1189 = vpop.f32.mrf.mxu0
  %v1190 = vadd.f32 %v1057, %v1189
  %1191 = vmatmul.bf16.gmra.mxu0 %v507
  %v1192 = vpop.f32.mrf.mxu0
  %v1193 = vadd.f32 %v1060, %v1192
  %v1194 = vpop.f32.mrf.mxu0
  %v1195 = vadd.f32 %v1062, %v1194
  %1196 = vmatmul.bf16.gmra.mxu0 %v511
  %v1197 = vpop.f32.mrf.mxu0
  %v1198 = vadd.f32 %v1065, %v1197
  %v1199 = vpop.f32.mrf.mxu0
  %v1200 = vadd.f32 %v1067, %v1199
  %1201 = vmatmul.bf16.gmra.mxu0 %v515
  %v1202 = vpop.f32.mrf.mxu0
  %v1203 = vadd.f32 %v1070, %v1202
  %v1204 = vpop.f32.mrf.mxu0
  %v1205 = vadd.f32 %v1072, %v1204
  %1206 = vmatmul.bf16.gmra.mxu0 %v519
  %v1207 = vpop.f32.mrf.mxu0
  %v1208 = vadd.f32 %v1075, %v1207
  %v1209 = vpop.f32.mrf.mxu0
  %v1210 = vadd.f32 %v1077, %v1209
  %1211 = vmatmul.bf16.gmra.mxu0 %v523
  %v1212 = vpop.f32.mrf.mxu0
  %v1213 = vadd.f32 %v1080, %v1212
  %v1214 = vpop.f32.mrf.mxu0
  %v1215 = vadd.f32 %v1082, %v1214
  %1216 = vmatmul.bf16.gmra.mxu0 %v527
  %v1217 = vpop.f32.mrf.mxu0
  %v1218 = vadd.f32 %v1085, %v1217
  %v1219 = vpop.f32.mrf.mxu0
  %v1220 = vadd.f32 %v1087, %v1219
  %1221 = vmatmul.bf16.gmra.mxu0 %v531
  %v1222 = vpop.f32.mrf.mxu0
  %v1223 = vadd.f32 %v1090, %v1222
  %v1224 = vpop.f32.mrf.mxu0
  %v1225 = vadd.f32 %v1092, %v1224
  %1226 = vmatmul.bf16.gmra.mxu0 %v535
  %v1227 = vpop.f32.mrf.mxu0
  %v1228 = vadd.f32 %v1095, %v1227
  %v1229 = vpop.f32.mrf.mxu0
  %v1230 = vadd.f32 %v1097, %v1229
  %1231 = vmatmul.bf16.gmra.mxu0 %v539
  %v1232 = vpop.f32.mrf.mxu0
  %v1233 = vadd.f32 %v1100, %v1232
  %v1234 = vpop.f32.mrf.mxu0
  %v1235 = vadd.f32 %v1102, %v1234
  %1236 = vmatmul.bf16.gmra.mxu0 %v543
  %v1237 = vpop.f32.mrf.mxu0
  %v1238 = vadd.f32 %v1105, %v1237
  %v1239 = vpop.f32.mrf.mxu0
  %v1240 = vadd.f32 %v1107, %v1239
  %1241 = vmatmul.bf16.gmra.mxu0 %v547
  %v1242 = vpop.f32.mrf.mxu0
  %v1243 = vadd.f32 %v1110, %v1242
  %v1244 = vpop.f32.mrf.mxu0
  %v1245 = vadd.f32 %v1112, %v1244
  %1246 = vmatmul.bf16.gmra.mxu0 %v551
  %v1247 = vpop.f32.mrf.mxu0
  %v1248 = vadd.f32 %v1115, %v1247
  %v1249 = vpop.f32.mrf.mxu0
  %v1250 = vadd.f32 %v1117, %v1249
  %1251 = vmatmul.bf16.gmra.mxu0 %v555
  %v1252 = vpop.f32.mrf.mxu0
  %v1253 = vadd.f32 %v1120, %v1252
  %v1254 = vpop.f32.mrf.mxu0
  %v1255 = vadd.f32 %v1122, %v1254
  %1256 = vmatmul.bf16.gmra.mxu0 %v559
  %v1257 = vpop.f32.mrf.mxu0
  %v1258 = vadd.f32 %v1125, %v1257
  %v1259 = vpop.f32.mrf.mxu0
  %1260 = vdwg.mxu0
  %1261 = vmatpush.bf16.msra.mxu0 0
  %1262 = vmatpush.bf16.msra.mxu0 0
  %1263 = vmatpush.bf16.msra.mxu0 0
  %1264 = vmatpush.bf16.msra.mxu0 0
  %1265 = vmatpush.bf16.msra.mxu0 0
  %1266 = vmatpush.bf16.msra.mxu0 0
  %1267 = vmatpush.bf16.msra.mxu0 0
  %1268 = vmatpush.bf16.msra.mxu0 %v760
  %1269 = vmatmul.bf16.gmra.mxu0 %v788
  %v1270 = vpop.f32.mrf.mxu0
  %v1271 = vadd.f32 %v1138, %v1270
  %v1272 = vpop.f32.mrf.mxu0
  %v1273 = vadd.f32 %v1140, %v1272
  %1274 = vmatmul.bf16.gmra.mxu0 %v791
  %v1275 = vpop.f32.mrf.mxu0
  %v1276 = vadd.f32 %v1143, %v1275
  %v1277 = vpop.f32.mrf.mxu0
  %v1278 = vadd.f32 %v1145, %v1277
  %1279 = vmatmul.bf16.gmra.mxu0 %v794
  %v1280 = vpop.f32.mrf.mxu0
  %v1281 = vadd.f32 %v1148, %v1280
  %v1282 = vpop.f32.mrf.mxu0
  %v1283 = vadd.f32 %v1150, %v1282
  %1284 = vmatmul.bf16.gmra.mxu0 %v797
  %v1285 = vpop.f32.mrf.mxu0
  %v1286 = vadd.f32 %v1153, %v1285
  %v1287 = vpop.f32.mrf.mxu0
  %v1288 = vadd.f32 %v1155, %v1287
  %1289 = vmatmul.bf16.gmra.mxu0 %v800
  %v1290 = vpop.f32.mrf.mxu0
  %v1291 = vadd.f32 %v1158, %v1290
  %v1292 = vpop.f32.mrf.mxu0
  %v1293 = vadd.f32 %v1160, %v1292
  %1294 = vmatmul.bf16.gmra.mxu0 %v803
  %v1295 = vpop.f32.mrf.mxu0
  %v1296 = vadd.f32 %v1163, %v1295
  %v1297 = vpop.f32.mrf.mxu0
  %v1298 = vadd.f32 %v1165, %v1297
  %1299 = vmatmul.bf16.gmra.mxu0 %v806
  %v1300 = vpop.f32.mrf.mxu0
  %v1301 = vadd.f32 %v1168, %v1300
  %v1302 = vpop.f32.mrf.mxu0
  %v1303 = vadd.f32 %v1170, %v1302
  %1304 = vmatmul.bf16.gmra.mxu0 %v809
  %v1305 = vpop.f32.mrf.mxu0
  %v1306 = vadd.f32 %v1173, %v1305
  %v1307 = vpop.f32.mrf.mxu0
  %v1308 = vadd.f32 %v1175, %v1307
  %1309 = vmatmul.bf16.gmra.mxu0 %v812
  %v1310 = vpop.f32.mrf.mxu0
  %v1311 = vadd.f32 %v1178, %v1310
  %v1312 = vpop.f32.mrf.mxu0
  %v1313 = vadd.f32 %v1180, %v1312
  %1314 = vmatmul.bf16.gmra.mxu0 %v815
  %v1315 = vpop.f32.mrf.mxu0
  %v1316 = vadd.f32 %v1183, %v1315
  %v1317 = vpop.f32.mrf.mxu0
  %v1318 = vadd.f32 %v1185, %v1317
  %1319 = vmatmul.bf16.gmra.mxu0 %v818
  %v1320 = vpop.f32.mrf.mxu0
  %v1321 = vadd.f32 %v1188, %v1320
  %v1322 = vpop.f32.mrf.mxu0
  %v1323 = vadd.f32 %v1190, %v1322
  %1324 = vmatmul.bf16.gmra.mxu0 %v821
  %v1325 = vpop.f32.mrf.mxu0
  %v1326 = vadd.f32 %v1193, %v1325
  %v1327 = vpop.f32.mrf.mxu0
  %v1328 = vadd.f32 %v1195, %v1327
  %1329 = vmatmul.bf16.gmra.mxu0 %v824
  %v1330 = vpop.f32.mrf.mxu0
  %v1331 = vadd.f32 %v1198, %v1330
  %v1332 = vpop.f32.mrf.mxu0
  %v1333 = vadd.f32 %v1200, %v1332
  %1334 = vmatmul.bf16.gmra.mxu0 %v827
  %v1335 = vpop.f32.mrf.mxu0
  %v1336 = vadd.f32 %v1203, %v1335
  %v1337 = vpop.f32.mrf.mxu0
  %v1338 = vadd.f32 %v1205, %v1337
  %1339 = vmatmul.bf16.gmra.mxu0 %v830
  %v1340 = vpop.f32.mrf.mxu0
  %v1341 = vadd.f32 %v1208, %v1340
  %v1342 = vpop.f32.mrf.mxu0
  %v1343 = vadd.f32 %v1210, %v1342
  %1344 = vmatmul.bf16.gmra.mxu0 %v833
  %v1345 = vpop.f32.mrf.mxu0
  %v1346 = vadd.f32 %v1213, %v1345
  %v1347 = vpop.f32.mrf.mxu0
  %v1348 = vadd.f32 %v1215, %v1347
  %1349 = vmatmul.bf16.gmra.mxu0 %v836
  %v1350 = vpop.f32.mrf.mxu0
  %v1351 = vadd.f32 %v1218, %v1350
  %v1352 = vpop.f32.mrf.mxu0
  %v1353 = vadd.f32 %v1220, %v1352
  %1354 = vmatmul.bf16.gmra.mxu0 %v839
  %v1355 = vpop.f32.mrf.mxu0
  %v1356 = vadd.f32 %v1223, %v1355
  %v1357 = vpop.f32.mrf.mxu0
  %v1358 = vadd.f32 %v1225, %v1357
  %1359 = vmatmul.bf16.gmra.mxu0 %v842
  %v1360 = vpop.f32.mrf.mxu0
  %v1361 = vadd.f32 %v1228, %v1360
  %v1362 = vpop.f32.mrf.mxu0
  %v1363 = vadd.f32 %v1230, %v1362
  %1364 = vmatmul.bf16.gmra.mxu0 %v845
  %v1365 = vpop.f32.mrf.mxu0
  %v1366 = vadd.f32 %v1233, %v1365
  %v1367 = vpop.f32.mrf.mxu0
  %v1368 = vadd.f32 %v1235, %v1367
  %1369 = vmatmul.bf16.gmra.mxu0 %v848
  %v1370 = vpop.f32.mrf.mxu0
  %v1371 = vadd.f32 %v1238, %v1370
  %v1372 = vpop.f32.mrf.mxu0
  %v1373 = vadd.f32 %v1240, %v1372
  %1374 = vmatmul.bf16.gmra.mxu0 %v851
  %v1375 = vpop.f32.mrf.mxu0
  %v1376 = vadd.f32 %v1243, %v1375
  %v1377 = vpop.f32.mrf.mxu0
  %v1378 = vadd.f32 %v1245, %v1377
  %1379 = vmatmul.bf16.gmra.mxu0 %v854
  %v1380 = vpop.f32.mrf.mxu0
  %v1381 = vadd.f32 %v1248, %v1380
  %v1382 = vpop.f32.mrf.mxu0
  %v1383 = vadd.f32 %v1250, %v1382
  %1384 = vmatmul.bf16.gmra.mxu0 %v857
  %v1385 = vpop.f32.mrf.mxu0
  %v1386 = vadd.f32 %v1253, %v1385
  %v1387 = vpop.f32.mrf.mxu0
  %v1388 = vadd.f32 %v1255, %v1387
  %1389 = vmatmul.bf16.gmra.mxu0 %v860
  %v1390 = vpop.f32.mrf.mxu0
  %v1391 = vadd.f32 %v1258, %v1390
  %v1392 = vpop.f32.mrf.mxu0
  %1393 = vdwg.mxu0
  %v1394 = vpack.c.bf16 %v1271, %v1271
  %v1395 = vpack.c.bf16 %v1273, %v1273
  %v1396 = vpack.c.bf16 %v1276, %v1276
  %v1397 = vpack.c.bf16 %v1278, %v1278
  %v1398 = vpack.c.bf16 %v1281, %v1281
  %v1399 = vpack.c.bf16 %v1283, %v1283
  %v1400 = vpack.c.bf16 %v1286, %v1286
  %v1401 = vpack.c.bf16 %v1288, %v1288
  %v1402 = vpack.c.bf16 %v1291, %v1291
  %v1403 = vpack.c.bf16 %v1293, %v1293
  %v1404 = vpack.c.bf16 %v1296, %v1296
  %v1405 = vpack.c.bf16 %v1298, %v1298
  %v1406 = vpack.c.bf16 %v1301, %v1301
  %v1407 = vpack.c.bf16 %v1303, %v1303
  %v1408 = vpack.c.bf16 %v1306, %v1306
  %v1409 = vpack.c.bf16 %v1308, %v1308
  %v1410 = vpack.c.bf16 %v1311, %v1311
  %v1411 = vpack.c.bf16 %v1313, %v1313
  %v1412 = vpack.c.bf16 %v1316, %v1316
  %v1413 = vpack.c.bf16 %v1318, %v1318
  %v1414 = vpack.c.bf16 %v1321, %v1321
  %v1415 = vpack.c.bf16 %v1323, %v1323
  %v1416 = vpack.c.bf16 %v1326, %v1326
  %v1417 = vpack.c.bf16 %v1328, %v1328
  %v1418 = vpack.c.bf16 %v1331, %v1331
  %v1419 = vpack.c.bf16 %v1333, %v1333
  %v1420 = vpack.c.bf16 %v1336, %v1336
  %v1421 = vpack.c.bf16 %v1338, %v1338
  %v1422 = vpack.c.bf16 %v1341, %v1341
  %v1423 = vpack.c.bf16 %v1343, %v1343
  %v1424 = vpack.c.bf16 %v1346, %v1346
  %v1425 = vpack.c.bf16 %v1348, %v1348
  %v1426 = vpack.c.bf16 %v1351, %v1351
  %v1427 = vpack.c.bf16 %v1353, %v1353
  %v1428 = vpack.c.bf16 %v1356, %v1356
  %v1429 = vpack.c.bf16 %v1358, %v1358
  %v1430 = vpack.c.bf16 %v1361, %v1361
  %v1431 = vpack.c.bf16 %v1363, %v1363
  %v1432 = vpack.c.bf16 %v1366, %v1366
  %v1433 = vpack.c.bf16 %v1368, %v1368
  %v1434 = vpack.c.bf16 %v1371, %v1371
  %v1435 = vpack.c.bf16 %v1373, %v1373
  %v1436 = vpack.c.bf16 %v1376, %v1376
  %v1437 = vpack.c.bf16 %v1378, %v1378
  %v1438 = vpack.c.bf16 %v1381, %v1381
  %v1439 = vpack.c.bf16 %v1383, %v1383
  %v1440 = vpack.c.bf16 %v1386, %v1386
  %v1441 = vpack.c.bf16 %v1388, %v1388
  %v1442 = vpack.c.bf16 %v1391, %v1391
  %vm1443 = vcmask 191488
  %1444 = vst.msk [vmem:[%s3] sm:$0xf] %vm1443, %v1394
  %1445 = vst.msk [vmem:[%s3 + $0x4] sm:$0xf] %vm1443, %v1395
  %1446 = vst.msk [vmem:[%s3 + $0x8] sm:$0xf] %vm1443, %v1396
  %1447 = vst.msk [vmem:[%s3 + $0xc] sm:$0xf] %vm1443, %v1397
  %1448 = vst.msk [vmem:[%s3 + $0x10] sm:$0xf] %vm1443, %v1398
  %1449 = vst.msk [vmem:[%s3 + $0x14] sm:$0xf] %vm1443, %v1399
  %1450 = vst.msk [vmem:[%s3 + $0x18] sm:$0xf] %vm1443, %v1400
  %1451 = vst.msk [vmem:[%s3 + $0x1c] sm:$0xf] %vm1443, %v1401
  %1452 = vst.msk [vmem:[%s3 + $0x20] sm:$0xf] %vm1443, %v1402
  %1453 = vst.msk [vmem:[%s3 + $0x24] sm:$0xf] %vm1443, %v1403
  %1454 = vst.msk [vmem:[%s3 + $0x28] sm:$0xf] %vm1443, %v1404
  %1455 = vst.msk [vmem:[%s3 + $0x2c] sm:$0xf] %vm1443, %v1405
  %1456 = vst.msk [vmem:[%s3 + $0x30] sm:$0xf] %vm1443, %v1406
  %1457 = vst.msk [vmem:[%s3 + $0x34] sm:$0xf] %vm1443, %v1407
  %1458 = vst.msk [vmem:[%s3 + $0x38] sm:$0xf] %vm1443, %v1408
  %1459 = vst.msk [vmem:[%s3 + $0x3c] sm:$0xf] %vm1443, %v1409
  %1460 = vst.msk [vmem:[%s3 + $0x40] sm:$0xf] %vm1443, %v1410
  %1461 = vst.msk [vmem:[%s3 + $0x44] sm:$0xf] %vm1443, %v1411
  %1462 = vst.msk [vmem:[%s3 + $0x48] sm:$0xf] %vm1443, %v1412
  %1463 = vst.msk [vmem:[%s3 + $0x4c] sm:$0xf] %vm1443, %v1413
  %1464 = vst.msk [vmem:[%s3 + $0x50] sm:$0xf] %vm1443, %v1414
  %1465 = vst.msk [vmem:[%s3 + $0x54] sm:$0xf] %vm1443, %v1415
  %1466 = vst.msk [vmem:[%s3 + $0x58] sm:$0xf] %vm1443, %v1416
  %1467 = vst.msk [vmem:[%s3 + $0x5c] sm:$0xf] %vm1443, %v1417
  %1468 = vst.msk [vmem:[%s3 + $0x60] sm:$0xf] %vm1443, %v1418
  %1469 = vst.msk [vmem:[%s3 + $0x64] sm:$0xf] %vm1443, %v1419
  %1470 = vst.msk [vmem:[%s3 + $0x68] sm:$0xf] %vm1443, %v1420
  %1471 = vst.msk [vmem:[%s3 + $0x6c] sm:$0xf] %vm1443, %v1421
  %1472 = vst.msk [vmem:[%s3 + $0x70] sm:$0xf] %vm1443, %v1422
  %1473 = vst.msk [vmem:[%s3 + $0x74] sm:$0xf] %vm1443, %v1423
  %1474 = vst.msk [vmem:[%s3 + $0x78] sm:$0xf] %vm1443, %v1424
  %1475 = vst.msk [vmem:[%s3 + $0x7c] sm:$0xf] %vm1443, %v1425
  %1476 = vst.msk [vmem:[%s3 + $0x80] sm:$0xf] %vm1443, %v1426
  %1477 = vst.msk [vmem:[%s3 + $0x84] sm:$0xf] %vm1443, %v1427
  %1478 = vst.msk [vmem:[%s3 + $0x88] sm:$0xf] %vm1443, %v1428
  %1479 = vst.msk [vmem:[%s3 + $0x8c] sm:$0xf] %vm1443, %v1429
  %1480 = vst.msk [vmem:[%s3 + $0x90] sm:$0xf] %vm1443, %v1430
  %1481 = vst.msk [vmem:[%s3 + $0x94] sm:$0xf] %vm1443, %v1431
  %1482 = vst.msk [vmem:[%s3 + $0x98] sm:$0xf] %vm1443, %v1432
  %1483 = vst.msk [vmem:[%s3 + $0x9c] sm:$0xf] %vm1443, %v1433
  %1484 = vst.msk [vmem:[%s3 + $0xa0] sm:$0xf] %vm1443, %v1434
  %1485 = vst.msk [vmem:[%s3 + $0xa4] sm:$0xf] %vm1443, %v1435
  %1486 = vst.msk [vmem:[%s3 + $0xa8] sm:$0xf] %vm1443, %v1436
  %1487 = vst.msk [vmem:[%s3 + $0xac] sm:$0xf] %vm1443, %v1437
  %1488 = vst.msk [vmem:[%s3 + $0xb0] sm:$0xf] %vm1443, %v1438
  %1489 = vst.msk [vmem:[%s3 + $0xb4] sm:$0xf] %vm1443, %v1439
  %1490 = vst.msk [vmem:[%s3 + $0xb8] sm:$0xf] %vm1443, %v1440
  %1491 = vst.msk [vmem:[%s3 + $0xbc] sm:$0xf] %vm1443, %v1441
  %1492 = vst.msk [vmem:[%s3 + $0xc0] sm:$0xf] %vm1443, %v1442
  // Predicated region
  $region14: #{net_forward.17} parent=0 // pred_check
    _
  $region15: #{net_forward.17} parent=0 // pred_check_branch
    %1494 = sbr.rel (0) target = $region17
  $region16: #{net_forward.17} parent=0 // pred_region
    _
  $region17: #{net_forward.17} parent=0 // pred_fallthru
    _
  // Predicated region
  $region18: #{net_forward.17} parent=0 // pred_check
    _
  $region19: #{net_forward.17} parent=0 // pred_check_branch
    %1496 = sbr.rel (0) target = $region21
  $region20: #{net_forward.17} parent=0 // pred_region
    _
  $region21: #{net_forward.17} parent=0 // pred_fallthru
    _

// kernel: net_forward.18
$region0: #{net_forward.18}
  #allocation0 [shape = 'u32[]', space=smem, size = 0x4, offset = 0x4, fixed_abs, tag = 'smem constant byte address 0x4 - core index']
  #allocation1 [shape = 'u32[72,128]{1,0:T(1,128)}', space=vmem, size = 0x9000, scoped, tag = 'internal scratch']
  %s0 = inlined_call_operand.vmem [shape: bf16[392,90], index: 0, kind: input, shape index: {}]
  %s1 = inlined_call_operand.vmem [shape: bf16[90,24], index: 1, kind: input, shape index: {}]
  %s2 = inlined_call_operand.vmem [shape: f32[1,24], index: 2, kind: input, shape index: {}]
  %s3 = inlined_call_operand.vmem [shape: bf16[392,24], index: 3, kind: output, shape index: {}]
  %s4 = sld [smem:[#allocation0]]
  $region22: #{net_forward.18} parent=0
    _
  %s6 = ssub.s32 1, %s4
  %s7 = scalar_select 0, %s6, %s4
  // Predicated region
  $region2: #{net_forward.18} parent=0 // pred_check
    _
  $region3: #{net_forward.18} parent=0 // pred_check_branch
    %9 = sbr.rel (0) target = $region5
  $region4: #{net_forward.18} parent=0 // pred_region
    _
  $region5: #{net_forward.18} parent=0 // pred_fallthru
    _
  // Predicated region
  $region6: #{net_forward.18} parent=0 // pred_check
    _
  $region7: #{net_forward.18} parent=0 // pred_check_branch
    %11 = sbr.rel (0) target = $region9
  $region8: #{net_forward.18} parent=0 // pred_region
    _
  $region9: #{net_forward.18} parent=0 // pred_fallthru
    _
  // Predicated region
  $region10: #{net_forward.18} parent=0 // pred_check
    _
  $region11: #{net_forward.18} parent=0 // pred_check_branch
    %13 = sbr.rel (0) target = $region13
  $region12: #{net_forward.18} parent=0 // pred_region
    _
  $region13: #{net_forward.18} parent=0 // pred_fallthru
    _
  %v15 = vld [vmem:[%s0] sm:$0xf]
  %v16 = vld [vmem:[%s0 + $0x4] sm:$0xf]
  %v17 = vld [vmem:[%s0 + $0x8] sm:$0xf]
  %v18 = vld [vmem:[%s0 + $0xc] sm:$0xf]
  %v19 = vld [vmem:[%s0 + $0x10] sm:$0xf]
  %v20 = vld [vmem:[%s0 + $0x14] sm:$0xf]
  %v21 = vld [vmem:[%s0 + $0x18] sm:$0xf]
  %v22 = vld [vmem:[%s0 + $0x1c] sm:$0xf]
  %v23 = vld [vmem:[%s0 + $0x20] sm:$0xf]
  %v24 = vld [vmem:[%s0 + $0x24] sm:$0xf]
  %v25 = vld [vmem:[%s0 + $0x28] sm:$0xf]
  %v26 = vld [vmem:[%s0 + $0x2c] sm:$0xf]
  %v27 = vld [vmem:[%s0 + $0x30] sm:$0xf]
  %v28 = vld [vmem:[%s0 + $0x34] sm:$0xf]
  %v29 = vld [vmem:[%s0 + $0x38] sm:$0xf]
  %v30 = vld [vmem:[%s0 + $0x3c] sm:$0xf]
  %v31 = vld [vmem:[%s0 + $0x40] sm:$0xf]
  %v32 = vld [vmem:[%s0 + $0x44] sm:$0xf]
  %v33 = vld [vmem:[%s0 + $0x48] sm:$0xf]
  %v34 = vld [vmem:[%s0 + $0x4c] sm:$0xf]
  %v35 = vld [vmem:[%s0 + $0x50] sm:$0xf]
  %v36 = vld [vmem:[%s0 + $0x54] sm:$0xf]
  %v37 = vld [vmem:[%s0 + $0x58] sm:$0xf]
  %v38 = vld [vmem:[%s0 + $0x5c] sm:$0xf]
  %v39 = vld [vmem:[%s0 + $0x60] sm:$0xf]
  %v40 = vld [vmem:[%s0 + $0x64] sm:$0xf]
  %v41 = vld [vmem:[%s0 + $0x68] sm:$0xf]
  %v42 = vld [vmem:[%s0 + $0x6c] sm:$0xf]
  %v43 = vld [vmem:[%s0 + $0x70] sm:$0xf]
  %v44 = vld [vmem:[%s0 + $0x74] sm:$0xf]
  %v45 = vld [vmem:[%s0 + $0x78] sm:$0xf]
  %v46 = vld [vmem:[%s0 + $0x7c] sm:$0xf]
  %v47 = vld [vmem:[%s0 + $0x80] sm:$0xf]
  %v48 = vld [vmem:[%s0 + $0x84] sm:$0xf]
  %v49 = vld [vmem:[%s0 + $0x88] sm:$0xf]
  %v50 = vld [vmem:[%s0 + $0x8c] sm:$0xf]
  %v51 = vld [vmem:[%s0 + $0x90] sm:$0xf]
  %v52 = vld [vmem:[%s0 + $0x94] sm:$0xf]
  %v53 = vld [vmem:[%s0 + $0x98] sm:$0xf]
  %v54 = vld [vmem:[%s0 + $0x9c] sm:$0xf]
  %v55 = vld [vmem:[%s0 + $0xa0] sm:$0xf]
  %v56 = vld [vmem:[%s0 + $0xa4] sm:$0xf]
  %v57 = vld [vmem:[%s0 + $0xa8] sm:$0xf]
  %v58 = vld [vmem:[%s0 + $0xac] sm:$0xf]
  %v59 = vld [vmem:[%s0 + $0xb0] sm:$0xf]
  %v60 = vld [vmem:[%s0 + $0xb4] sm:$0xf]
  %v61 = vld [vmem:[%s0 + $0xb8] sm:$0xf]
  %v62 = vld [vmem:[%s0 + $0xbc] sm:$0xf]
  %v63 = vld [vmem:[%s0 + $0xc0] sm:$0xf]
  %v64 = vld [vmem:[%s1] sm:$0xf]
  %v65 = vld [vmem:[%s1 + $0x4] sm:$0xf]
  %v66 = vld [vmem:[%s1 + $0x8] sm:$0xf]
  %v67 = vld [vmem:[%s1 + $0xc] sm:$0xf]
  %v68 = vld [vmem:[%s1 + $0x10] sm:$0xf]
  %v69 = vld [vmem:[%s1 + $0x14] sm:$0xf]
  %v70 = vld [vmem:[%s1 + $0x18] sm:$0xf]
  %v71 = vld [vmem:[%s1 + $0x1c] sm:$0xf]
  %v72 = vld [vmem:[%s1 + $0x20] sm:$0xf]
  %v73 = vld [vmem:[%s1 + $0x24] sm:$0xf]
  %v74 = vld [vmem:[%s1 + $0x28] sm:$0xf]
  %v75 = vld [vmem:[%s1 + $0x2c] sm:$0x1]
  %v76 = vld [vmem:[%s2] sm:$0x1]
  %v78 = vperm.slane %v76, 0
  %v129 = vunpack.c.l.b16 %v15
  %v130 = vunpack.c.l.b16 %v16
  %v131 = vunpack.c.l.b16 %v17
  %v132 = vunpack.c.l.b16 %v18
  %v133 = vunpack.c.l.b16 %v19
  %v134 = vunpack.c.l.b16 %v20
  %v135 = vunpack.c.l.b16 %v21
  %v136 = vunpack.c.l.b16 %v22
  %v137 = vunpack.c.l.b16 %v23
  %v138 = vunpack.c.l.b16 %v24
  %v139 = vunpack.c.l.b16 %v25
  %v140 = vunpack.c.l.b16 %v26
  %v141 = vunpack.c.l.b16 %v27
  %v142 = vunpack.c.l.b16 %v28
  %v143 = vunpack.c.l.b16 %v29
  %v144 = vunpack.c.l.b16 %v30
  %v145 = vunpack.c.l.b16 %v31
  %v146 = vunpack.c.l.b16 %v32
  %v147 = vunpack.c.l.b16 %v33
  %v148 = vunpack.c.l.b16 %v34
  %v149 = vunpack.c.l.b16 %v35
  %v150 = vunpack.c.l.b16 %v36
  %v151 = vunpack.c.l.b16 %v37
  %v152 = vunpack.c.l.b16 %v38
  %v153 = vunpack.c.l.b16 %v39
  %v154 = vunpack.c.l.b16 %v40
  %v155 = vunpack.c.l.b16 %v41
  %v156 = vunpack.c.l.b16 %v42
  %v157 = vunpack.c.l.b16 %v43
  %v158 = vunpack.c.l.b16 %v44
  %v159 = vunpack.c.l.b16 %v45
  %v160 = vunpack.c.l.b16 %v46
  %v161 = vunpack.c.l.b16 %v47
  %v162 = vunpack.c.l.b16 %v48
  %v163 = vunpack.c.l.b16 %v49
  %v164 = vunpack.c.l.b16 %v50
  %v165 = vunpack.c.l.b16 %v51
  %v166 = vunpack.c.l.b16 %v52
  %v167 = vunpack.c.l.b16 %v53
  %v168 = vunpack.c.l.b16 %v54
  %v169 = vunpack.c.l.b16 %v55
  %v170 = vunpack.c.l.b16 %v56
  %v171 = vunpack.c.l.b16 %v57
  %v172 = vunpack.c.l.b16 %v58
  %v173 = vunpack.c.l.b16 %v59
  %v174 = vunpack.c.l.b16 %v60
  %v175 = vunpack.c.l.b16 %v61
  %v176 = vunpack.c.l.b16 %v62
  %v177 = vunpack.c.l.b16 %v63
  %v178 = vpack.c.b16 %v130, %v129
  %v179 = vpack.c.b16 %v132, %v131
  %v180 = vpack.c.b16 %v134, %v133
  %v181 = vpack.c.b16 %v136, %v135
  %v182 = vpack.c.b16 %v138, %v137
  %v183 = vpack.c.b16 %v140, %v139
  %v184 = vpack.c.b16 %v142, %v141
  %v185 = vpack.c.b16 %v144, %v143
  %v186 = vpack.c.b16 %v146, %v145
  %v187 = vpack.c.b16 %v148, %v147
  %v188 = vpack.c.b16 %v150, %v149
  %v189 = vpack.c.b16 %v152, %v151
  %v190 = vpack.c.b16 %v154, %v153
  %v191 = vpack.c.b16 %v156, %v155
  %v192 = vpack.c.b16 %v158, %v157
  %v193 = vpack.c.b16 %v160, %v159
  %v194 = vpack.c.b16 %v162, %v161
  %v195 = vpack.c.b16 %v164, %v163
  %v196 = vpack.c.b16 %v166, %v165
  %v197 = vpack.c.b16 %v168, %v167
  %v198 = vpack.c.b16 %v170, %v169
  %v199 = vpack.c.b16 %v172, %v171
  %v200 = vpack.c.b16 %v174, %v173
  %v201 = vpack.c.b16 %v176, %v175
  %v202 = vpack.c.b16 %v177, %v177
  %v215 = vunpack.c.l.b16 %v64
  %v216 = vunpack.c.l.b16 %v65
  %v217 = vunpack.c.l.b16 %v66
  %v218 = vunpack.c.l.b16 %v67
  %v219 = vunpack.c.l.b16 %v68
  %v220 = vunpack.c.l.b16 %v69
  %v221 = vunpack.c.l.b16 %v70
  %v222 = vunpack.c.l.b16 %v71
  %v223 = vunpack.c.l.b16 %v72
  %v224 = vunpack.c.l.b16 %v73
  %v225 = vunpack.c.l.b16 %v74
  %v226 = vunpack.c.l.b16 %v75
  %v227 = vpack.c.b16 %v216, %v215
  %v228 = vpack.c.b16 %v218, %v217
  %v229 = vpack.c.b16 %v220, %v219
  %v230 = vpack.c.b16 %v222, %v221
  %v231 = vpack.c.b16 %v224, %v223
  %v232 = vpack.c.b16 %v226, %v225
  %vm238 = vcmask 736256
  %v240 = vsel %vm238, %v178, 0
  %v243 = vsel %vm238, %v179, 0
  %v246 = vsel %vm238, %v180, 0
  %v249 = vsel %vm238, %v181, 0
  %v252 = vsel %vm238, %v182, 0
  %v255 = vsel %vm238, %v183, 0
  %v258 = vsel %vm238, %v184, 0
  %v261 = vsel %vm238, %v185, 0
  %v264 = vsel %vm238, %v186, 0
  %v267 = vsel %vm238, %v187, 0
  %v270 = vsel %vm238, %v188, 0
  %v273 = vsel %vm238, %v189, 0
  %v276 = vsel %vm238, %v190, 0
  %v279 = vsel %vm238, %v191, 0
  %v282 = vsel %vm238, %v192, 0
  %v285 = vsel %vm238, %v193, 0
  %v288 = vsel %vm238, %v194, 0
  %v291 = vsel %vm238, %v195, 0
  %v294 = vsel %vm238, %v196, 0
  %v297 = vsel %vm238, %v197, 0
  %v300 = vsel %vm238, %v198, 0
  %v303 = vsel %vm238, %v199, 0
  %v306 = vsel %vm238, %v200, 0
  %v309 = vsel %vm238, %v201, 0
  %v312 = vsel %vm238, %v202, 0
  %vm314 = vcmask 1044480
  %v316 = vsel %vm314, %v232, 0
  %318 = vmatpush.bf16.msra.mxu0 0
  %319 = vmatpush.bf16.msra.mxu0 0
  %320 = vmatpush.bf16.msra.mxu0 %v316
  %321 = vmatpush.bf16.msra.mxu0 %v231
  %322 = vmatpush.bf16.msra.mxu0 %v230
  %323 = vmatpush.bf16.msra.mxu0 %v229
  %324 = vmatpush.bf16.msra.mxu0 %v228
  %325 = vmatpush.bf16.msra.mxu0 %v227
  %326 = vmatmul.bf16.gmra.mxu0 %v240
  %v327 = vpop.f32.mrf.mxu0
  %v328 = vadd.f32 %v78, %v327
  %v329 = vpop.f32.mrf.mxu0
  %v330 = vadd.f32 %v78, %v329
  %331 = vmatmul.bf16.gmra.mxu0 %v243
  %v332 = vpop.f32.mrf.mxu0
  %v333 = vadd.f32 %v78, %v332
  %v334 = vpop.f32.mrf.mxu0
  %v335 = vadd.f32 %v78, %v334
  %336 = vmatmul.bf16.gmra.mxu0 %v246
  %v337 = vpop.f32.mrf.mxu0
  %v338 = vadd.f32 %v78, %v337
  %v339 = vpop.f32.mrf.mxu0
  %v340 = vadd.f32 %v78, %v339
  %341 = vmatmul.bf16.gmra.mxu0 %v249
  %v342 = vpop.f32.mrf.mxu0
  %v343 = vadd.f32 %v78, %v342
  %v344 = vpop.f32.mrf.mxu0
  %v345 = vadd.f32 %v78, %v344
  %346 = vmatmul.bf16.gmra.mxu0 %v252
  %v347 = vpop.f32.mrf.mxu0
  %v348 = vadd.f32 %v78, %v347
  %v349 = vpop.f32.mrf.mxu0
  %v350 = vadd.f32 %v78, %v349
  %351 = vmatmul.bf16.gmra.mxu0 %v255
  %v352 = vpop.f32.mrf.mxu0
  %v353 = vadd.f32 %v78, %v352
  %v354 = vpop.f32.mrf.mxu0
  %v355 = vadd.f32 %v78, %v354
  %356 = vmatmul.bf16.gmra.mxu0 %v258
  %v357 = vpop.f32.mrf.mxu0
  %v358 = vadd.f32 %v78, %v357
  %v359 = vpop.f32.mrf.mxu0
  %v360 = vadd.f32 %v78, %v359
  %361 = vmatmul.bf16.gmra.mxu0 %v261
  %v362 = vpop.f32.mrf.mxu0
  %v363 = vadd.f32 %v78, %v362
  %v364 = vpop.f32.mrf.mxu0
  %v365 = vadd.f32 %v78, %v364
  %366 = vmatmul.bf16.gmra.mxu0 %v264
  %v367 = vpop.f32.mrf.mxu0
  %v368 = vadd.f32 %v78, %v367
  %v369 = vpop.f32.mrf.mxu0
  %v370 = vadd.f32 %v78, %v369
  %371 = vmatmul.bf16.gmra.mxu0 %v267
  %v372 = vpop.f32.mrf.mxu0
  %v373 = vadd.f32 %v78, %v372
  %v374 = vpop.f32.mrf.mxu0
  %v375 = vadd.f32 %v78, %v374
  %376 = vmatmul.bf16.gmra.mxu0 %v270
  %v377 = vpop.f32.mrf.mxu0
  %v378 = vadd.f32 %v78, %v377
  %v379 = vpop.f32.mrf.mxu0
  %v380 = vadd.f32 %v78, %v379
  %381 = vmatmul.bf16.gmra.mxu0 %v273
  %v382 = vpop.f32.mrf.mxu0
  %v383 = vadd.f32 %v78, %v382
  %v384 = vpop.f32.mrf.mxu0
  %v385 = vadd.f32 %v78, %v384
  %386 = vmatmul.bf16.gmra.mxu0 %v276
  %v387 = vpop.f32.mrf.mxu0
  %v388 = vadd.f32 %v78, %v387
  %v389 = vpop.f32.mrf.mxu0
  %v390 = vadd.f32 %v78, %v389
  %391 = vmatmul.bf16.gmra.mxu0 %v279
  %v392 = vpop.f32.mrf.mxu0
  %v393 = vadd.f32 %v78, %v392
  %v394 = vpop.f32.mrf.mxu0
  %v395 = vadd.f32 %v78, %v394
  %396 = vmatmul.bf16.gmra.mxu0 %v282
  %v397 = vpop.f32.mrf.mxu0
  %v398 = vadd.f32 %v78, %v397
  %v399 = vpop.f32.mrf.mxu0
  %v400 = vadd.f32 %v78, %v399
  %401 = vmatmul.bf16.gmra.mxu0 %v285
  %v402 = vpop.f32.mrf.mxu0
  %v403 = vadd.f32 %v78, %v402
  %v404 = vpop.f32.mrf.mxu0
  %v405 = vadd.f32 %v78, %v404
  %406 = vmatmul.bf16.gmra.mxu0 %v288
  %v407 = vpop.f32.mrf.mxu0
  %v408 = vadd.f32 %v78, %v407
  %v409 = vpop.f32.mrf.mxu0
  %v410 = vadd.f32 %v78, %v409
  %411 = vmatmul.bf16.gmra.mxu0 %v291
  %v412 = vpop.f32.mrf.mxu0
  %v413 = vadd.f32 %v78, %v412
  %v414 = vpop.f32.mrf.mxu0
  %v415 = vadd.f32 %v78, %v414
  %416 = vmatmul.bf16.gmra.mxu0 %v294
  %v417 = vpop.f32.mrf.mxu0
  %v418 = vadd.f32 %v78, %v417
  %v419 = vpop.f32.mrf.mxu0
  %v420 = vadd.f32 %v78, %v419
  %421 = vmatmul.bf16.gmra.mxu0 %v297
  %v422 = vpop.f32.mrf.mxu0
  %v423 = vadd.f32 %v78, %v422
  %v424 = vpop.f32.mrf.mxu0
  %v425 = vadd.f32 %v78, %v424
  %426 = vmatmul.bf16.gmra.mxu0 %v300
  %v427 = vpop.f32.mrf.mxu0
  %v428 = vadd.f32 %v78, %v427
  %v429 = vpop.f32.mrf.mxu0
  %v430 = vadd.f32 %v78, %v429
  %431 = vmatmul.bf16.gmra.mxu0 %v303
  %v432 = vpop.f32.mrf.mxu0
  %v433 = vadd.f32 %v78, %v432
  %v434 = vpop.f32.mrf.mxu0
  %v435 = vadd.f32 %v78, %v434
  %436 = vmatmul.bf16.gmra.mxu0 %v306
  %v437 = vpop.f32.mrf.mxu0
  %v438 = vadd.f32 %v78, %v437
  %v439 = vpop.f32.mrf.mxu0
  %v440 = vadd.f32 %v78, %v439
  %441 = vmatmul.bf16.gmra.mxu0 %v309
  %v442 = vpop.f32.mrf.mxu0
  %v443 = vadd.f32 %v78, %v442
  %v444 = vpop.f32.mrf.mxu0
  %v445 = vadd.f32 %v78, %v444
  %446 = vmatmul.bf16.gmra.mxu0 %v312
  %v447 = vpop.f32.mrf.mxu0
  %v448 = vadd.f32 %v78, %v447
  %v449 = vpop.f32.mrf.mxu0
  %450 = vdwg.mxu0
  %v451 = vpack.c.bf16 %v328, %v328
  %v452 = vpack.c.bf16 %v330, %v330
  %v453 = vpack.c.bf16 %v333, %v333
  %v454 = vpack.c.bf16 %v335, %v335
  %v455 = vpack.c.bf16 %v338, %v338
  %v456 = vpack.c.bf16 %v340, %v340
  %v457 = vpack.c.bf16 %v343, %v343
  %v458 = vpack.c.bf16 %v345, %v345
  %v459 = vpack.c.bf16 %v348, %v348
  %v460 = vpack.c.bf16 %v350, %v350
  %v461 = vpack.c.bf16 %v353, %v353
  %v462 = vpack.c.bf16 %v355, %v355
  %v463 = vpack.c.bf16 %v358, %v358
  %v464 = vpack.c.bf16 %v360, %v360
  %v465 = vpack.c.bf16 %v363, %v363
  %v466 = vpack.c.bf16 %v365, %v365
  %v467 = vpack.c.bf16 %v368, %v368
  %v468 = vpack.c.bf16 %v370, %v370
  %v469 = vpack.c.bf16 %v373, %v373
  %v470 = vpack.c.bf16 %v375, %v375
  %v471 = vpack.c.bf16 %v378, %v378
  %v472 = vpack.c.bf16 %v380, %v380
  %v473 = vpack.c.bf16 %v383, %v383
  %v474 = vpack.c.bf16 %v385, %v385
  %v475 = vpack.c.bf16 %v388, %v388
  %v476 = vpack.c.bf16 %v390, %v390
  %v477 = vpack.c.bf16 %v393, %v393
  %v478 = vpack.c.bf16 %v395, %v395
  %v479 = vpack.c.bf16 %v398, %v398
  %v480 = vpack.c.bf16 %v400, %v400
  %v481 = vpack.c.bf16 %v403, %v403
  %v482 = vpack.c.bf16 %v405, %v405
  %v483 = vpack.c.bf16 %v408, %v408
  %v484 = vpack.c.bf16 %v410, %v410
  %v485 = vpack.c.bf16 %v413, %v413
  %v486 = vpack.c.bf16 %v415, %v415
  %v487 = vpack.c.bf16 %v418, %v418
  %v488 = vpack.c.bf16 %v420, %v420
  %v489 = vpack.c.bf16 %v423, %v423
  %v490 = vpack.c.bf16 %v425, %v425
  %v491 = vpack.c.bf16 %v428, %v428
  %v492 = vpack.c.bf16 %v430, %v430
  %v493 = vpack.c.bf16 %v433, %v433
  %v494 = vpack.c.bf16 %v435, %v435
  %v495 = vpack.c.bf16 %v438, %v438
  %v496 = vpack.c.bf16 %v440, %v440
  %v497 = vpack.c.bf16 %v443, %v443
  %v498 = vpack.c.bf16 %v445, %v445
  %v499 = vpack.c.bf16 %v448, %v448
  %vm500 = vcmask 191488
  %501 = vst.msk [vmem:[%s3] sm:$0xf] %vm500, %v451
  %502 = vst.msk [vmem:[%s3 + $0x4] sm:$0xf] %vm500, %v452
  %503 = vst.msk [vmem:[%s3 + $0x8] sm:$0xf] %vm500, %v453
  %504 = vst.msk [vmem:[%s3 + $0xc] sm:$0xf] %vm500, %v454
  %505 = vst.msk [vmem:[%s3 + $0x10] sm:$0xf] %vm500, %v455
  %506 = vst.msk [vmem:[%s3 + $0x14] sm:$0xf] %vm500, %v456
  %507 = vst.msk [vmem:[%s3 + $0x18] sm:$0xf] %vm500, %v457
  %508 = vst.msk [vmem:[%s3 + $0x1c] sm:$0xf] %vm500, %v458
  %509 = vst.msk [vmem:[%s3 + $0x20] sm:$0xf] %vm500, %v459
  %510 = vst.msk [vmem:[%s3 + $0x24] sm:$0xf] %vm500, %v460
  %511 = vst.msk [vmem:[%s3 + $0x28] sm:$0xf] %vm500, %v461
  %512 = vst.msk [vmem:[%s3 + $0x2c] sm:$0xf] %vm500, %v462
  %513 = vst.msk [vmem:[%s3 + $0x30] sm:$0xf] %vm500, %v463
  %514 = vst.msk [vmem:[%s3 + $0x34] sm:$0xf] %vm500, %v464
  %515 = vst.msk [vmem:[%s3 + $0x38] sm:$0xf] %vm500, %v465
  %516 = vst.msk [vmem:[%s3 + $0x3c] sm:$0xf] %vm500, %v466
  %517 = vst.msk [vmem:[%s3 + $0x40] sm:$0xf] %vm500, %v467
  %518 = vst.msk [vmem:[%s3 + $0x44] sm:$0xf] %vm500, %v468
  %519 = vst.msk [vmem:[%s3 + $0x48] sm:$0xf] %vm500, %v469
  %520 = vst.msk [vmem:[%s3 + $0x4c] sm:$0xf] %vm500, %v470
  %521 = vst.msk [vmem:[%s3 + $0x50] sm:$0xf] %vm500, %v471
  %522 = vst.msk [vmem:[%s3 + $0x54] sm:$0xf] %vm500, %v472
  %523 = vst.msk [vmem:[%s3 + $0x58] sm:$0xf] %vm500, %v473
  %524 = vst.msk [vmem:[%s3 + $0x5c] sm:$0xf] %vm500, %v474
  %525 = vst.msk [vmem:[%s3 + $0x60] sm:$0xf] %vm500, %v475
  %526 = vst.msk [vmem:[%s3 + $0x64] sm:$0xf] %vm500, %v476
  %527 = vst.msk [vmem:[%s3 + $0x68] sm:$0xf] %vm500, %v477
  %528 = vst.msk [vmem:[%s3 + $0x6c] sm:$0xf] %vm500, %v478
  %529 = vst.msk [vmem:[%s3 + $0x70] sm:$0xf] %vm500, %v479
  %530 = vst.msk [vmem:[%s3 + $0x74] sm:$0xf] %vm500, %v480
  %531 = vst.msk [vmem:[%s3 + $0x78] sm:$0xf] %vm500, %v481
  %532 = vst.msk [vmem:[%s3 + $0x7c] sm:$0xf] %vm500, %v482
  %533 = vst.msk [vmem:[%s3 + $0x80] sm:$0xf] %vm500, %v483
  %534 = vst.msk [vmem:[%s3 + $0x84] sm:$0xf] %vm500, %v484
  %535 = vst.msk [vmem:[%s3 + $0x88] sm:$0xf] %vm500, %v485
  %536 = vst.msk [vmem:[%s3 + $0x8c] sm:$0xf] %vm500, %v486
  %537 = vst.msk [vmem:[%s3 + $0x90] sm:$0xf] %vm500, %v487
  %538 = vst.msk [vmem:[%s3 + $0x94] sm:$0xf] %vm500, %v488
  %539 = vst.msk [vmem:[%s3 + $0x98] sm:$0xf] %vm500, %v489
  %540 = vst.msk [vmem:[%s3 + $0x9c] sm:$0xf] %vm500, %v490
  %541 = vst.msk [vmem:[%s3 + $0xa0] sm:$0xf] %vm500, %v491
  %542 = vst.msk [vmem:[%s3 + $0xa4] sm:$0xf] %vm500, %v492
  %543 = vst.msk [vmem:[%s3 + $0xa8] sm:$0xf] %vm500, %v493
  %544 = vst.msk [vmem:[%s3 + $0xac] sm:$0xf] %vm500, %v494
  %545 = vst.msk [vmem:[%s3 + $0xb0] sm:$0xf] %vm500, %v495
  %546 = vst.msk [vmem:[%s3 + $0xb4] sm:$0xf] %vm500, %v496
  %547 = vst.msk [vmem:[%s3 + $0xb8] sm:$0xf] %vm500, %v497
  %548 = vst.msk [vmem:[%s3 + $0xbc] sm:$0xf] %vm500, %v498
  %549 = vst.msk [vmem:[%s3 + $0xc0] sm:$0xf] %vm500, %v499
  // Predicated region
  $region14: #{net_forward.18} parent=0 // pred_check
    _
  $region15: #{net_forward.18} parent=0 // pred_check_branch
    %551 = sbr.rel (0) target = $region17
  $region16: #{net_forward.18} parent=0 // pred_region
    _
  $region17: #{net_forward.18} parent=0 // pred_fallthru
    _
  // Predicated region
  $region18: #{net_forward.18} parent=0 // pred_check
    _
  $region19: #{net_forward.18} parent=0 // pred_check_branch
    %553 = sbr.rel (0) target = $region21
  $region20: #{net_forward.18} parent=0 // pred_region
    _
  $region21: #{net_forward.18} parent=0 // pred_fallthru
    _

// kernel: net_forward.20
$region0: #{net_forward.20}
  #allocation0 [shape = 'u32[]', space=smem, size = 0x4, offset = 0x4, fixed_abs, tag = 'smem constant byte address 0x4 - core index']
  #allocation1 [shape = 'u32[72,128]{1,0:T(1,128)}', space=vmem, size = 0x9000, scoped, tag = 'internal scratch']
  %s0 = inlined_call_operand.vmem [shape: bf16[50,20], index: 0, kind: input, shape index: {}]
  %s1 = inlined_call_operand.vmem [shape: bf16[20,48], index: 1, kind: input, shape index: {}]
  %s2 = inlined_call_operand.vmem [shape: f32[1,48], index: 2, kind: input, shape index: {}]
  %s3 = inlined_call_operand.vmem [shape: bf16[50,48], index: 3, kind: output, shape index: {}]
  %s4 = sld [smem:[#allocation0]]
  $region22: #{net_forward.20} parent=0
    _
  %s6 = ssub.s32 1, %s4
  %s7 = scalar_select 0, %s6, %s4
  // Predicated region
  $region2: #{net_forward.20} parent=0 // pred_check
    _
  $region3: #{net_forward.20} parent=0 // pred_check_branch
    %9 = sbr.rel (0) target = $region5
  $region4: #{net_forward.20} parent=0 // pred_region
    _
  $region5: #{net_forward.20} parent=0 // pred_fallthru
    _
  // Predicated region
  $region6: #{net_forward.20} parent=0 // pred_check
    _
  $region7: #{net_forward.20} parent=0 // pred_check_branch
    %11 = sbr.rel (0) target = $region9
  $region8: #{net_forward.20} parent=0 // pred_region
    _
  $region9: #{net_forward.20} parent=0 // pred_fallthru
    _
  // Predicated region
  $region10: #{net_forward.20} parent=0 // pred_check
    _
  $region11: #{net_forward.20} parent=0 // pred_check_branch
    %13 = sbr.rel (0) target = $region13
  $region12: #{net_forward.20} parent=0 // pred_region
    _
  $region13: #{net_forward.20} parent=0 // pred_fallthru
    _
  %v15 = vld [vmem:[%s0] sm:$0xf]
  %v16 = vld [vmem:[%s0 + $0x4] sm:$0xf]
  %v17 = vld [vmem:[%s0 + $0x8] sm:$0xf]
  %v18 = vld [vmem:[%s0 + $0xc] sm:$0xf]
  %v19 = vld [vmem:[%s0 + $0x10] sm:$0xf]
  %v20 = vld [vmem:[%s0 + $0x14] sm:$0xf]
  %v21 = vld [vmem:[%s0 + $0x18] sm:$0x1]
  %v22 = vld [vmem:[%s1] sm:$0xf]
  %v23 = vld [vmem:[%s1 + $0x4] sm:$0xf]
  %v24 = vld [vmem:[%s1 + $0x8] sm:$0x3]
  %v25 = vld [vmem:[%s2] sm:$0x1]
  %v27 = vperm.slane %v25, 0
  %v36 = vunpack.c.l.b16 %v15
  %v37 = vunpack.c.l.b16 %v16
  %v38 = vunpack.c.l.b16 %v17
  %v39 = vunpack.c.l.b16 %v18
  %v40 = vunpack.c.l.b16 %v19
  %v41 = vunpack.c.l.b16 %v20
  %v42 = vunpack.c.l.b16 %v21
  %v43 = vpack.c.b16 %v37, %v36
  %v44 = vpack.c.b16 %v39, %v38
  %v45 = vpack.c.b16 %v41, %v40
  %v46 = vpack.c.b16 %v42, %v42
  %v50 = vunpack.c.l.b16 %v22
  %v51 = vunpack.c.l.b16 %v23
  %v52 = vunpack.c.l.b16 %v24
  %v53 = vpack.c.b16 %v51, %v50
  %v54 = vpack.c.b16 %v52, %v52
  %vm56 = vcmask 162816
  %v58 = vsel %vm56, %v43, 0
  %v61 = vsel %vm56, %v44, 0
  %v64 = vsel %vm56, %v45, 0
  %v67 = vsel %vm56, %v46, 0
  %vm69 = vcmask 1041408
  %v71 = vsel %vm69, %v54, 0
  %73 = vmatpush.bf16.msra.mxu0 0
  %74 = vmatpush.bf16.msra.mxu0 0
  %75 = vmatpush.bf16.msra.mxu0 0
  %76 = vmatpush.bf16.msra.mxu0 0
  %77 = vmatpush.bf16.msra.mxu0 0
  %78 = vmatpush.bf16.msra.mxu0 0
  %79 = vmatpush.bf16.msra.mxu0 %v71
  %80 = vmatpush.bf16.msra.mxu0 %v53
  %81 = vmatmul.bf16.gmra.mxu0 %v58
  %v82 = vpop.f32.mrf.mxu0
  %v83 = vadd.f32 %v27, %v82
  %v84 = vpop.f32.mrf.mxu0
  %v85 = vadd.f32 %v27, %v84
  %86 = vmatmul.bf16.gmra.mxu0 %v61
  %v87 = vpop.f32.mrf.mxu0
  %v88 = vadd.f32 %v27, %v87
  %v89 = vpop.f32.mrf.mxu0
  %v90 = vadd.f32 %v27, %v89
  %91 = vmatmul.bf16.gmra.mxu0 %v64
  %v92 = vpop.f32.mrf.mxu0
  %v93 = vadd.f32 %v27, %v92
  %v94 = vpop.f32.mrf.mxu0
  %v95 = vadd.f32 %v27, %v94
  %96 = vmatmul.bf16.gmra.mxu0 %v67
  %v97 = vpop.f32.mrf.mxu0
  %v98 = vadd.f32 %v27, %v97
  %v99 = vpop.f32.mrf.mxu0
  %100 = vdwg.mxu0
  %v101 = vpack.c.bf16 %v83, %v83
  %v102 = vpack.c.bf16 %v85, %v85
  %v103 = vpack.c.bf16 %v88, %v88
  %v104 = vpack.c.bf16 %v90, %v90
  %v105 = vpack.c.bf16 %v93, %v93
  %v106 = vpack.c.bf16 %v95, %v95
  %v107 = vpack.c.bf16 %v98, %v98
  %vm108 = vcmask 388096
  %109 = vst.msk [vmem:[%s3] sm:$0xf] %vm108, %v101
  %110 = vst.msk [vmem:[%s3 + $0x4] sm:$0xf] %vm108, %v102
  %111 = vst.msk [vmem:[%s3 + $0x8] sm:$0xf] %vm108, %v103
  %112 = vst.msk [vmem:[%s3 + $0xc] sm:$0xf] %vm108, %v104
  %113 = vst.msk [vmem:[%s3 + $0x10] sm:$0xf] %vm108, %v105
  %114 = vst.msk [vmem:[%s3 + $0x14] sm:$0xf] %vm108, %v106
  %vm115 = vcmask 385024
  %116 = vst.msk [vmem:[%s3 + $0x18] sm:$0x1] %vm115, %v107
  // Predicated region
  $region14: #{net_forward.20} parent=0 // pred_check
    _
  $region15: #{net_forward.20} parent=0 // pred_check_branch
    %118 = sbr.rel (0) target = $region17
  $region16: #{net_forward.20} parent=0 // pred_region
    _
  $region17: #{net_forward.20} parent=0 // pred_fallthru
    _
  // Predicated region
  $region18: #{net_forward.20} parent=0 // pred_check
    _
  $region19: #{net_forward.20} parent=0 // pred_check_branch
    %120 = sbr.rel (0) target = $region21
  $region20: #{net_forward.20} parent=0 // pred_region
    _
  $region21: #{net_forward.20} parent=0 // pred_fallthru
    _

// kernel: net_forward.19
$region0: #{net_forward.19}
  #allocation0 [shape = 'u32[]', space=smem, size = 0x4, offset = 0x4, fixed_abs, tag = 'smem constant byte address 0x4 - core index']
  #allocation1 [shape = 'u32[72,128]{1,0:T(1,128)}', space=vmem, size = 0x9000, scoped, tag = 'internal scratch']
  %s0 = inlined_call_operand.vmem [shape: bf16[200,2200], index: 0, kind: input, shape index: {}]
  %s1 = inlined_call_operand.vmem [shape: bf16[2200,20], index: 1, kind: input, shape index: {}]
  %s2 = inlined_call_operand.vmem [shape: f32[1,20], index: 2, kind: input, shape index: {}]
  %s3 = inlined_call_operand.vmem [shape: bf16[200,20], index: 3, kind: output, shape index: {}]
  %s4 = sld [smem:[#allocation0]]
  $region22: #{net_forward.19} parent=0
    _
  %s6 = ssub.s32 1, %s4
  %s7 = scalar_select 0, %s6, %s4
  // Predicated region
  $region2: #{net_forward.19} parent=0 // pred_check
    _
  $region3: #{net_forward.19} parent=0 // pred_check_branch
    %9 = sbr.rel (0) target = $region5
  $region4: #{net_forward.19} parent=0 // pred_region
    _
  $region5: #{net_forward.19} parent=0 // pred_fallthru
    _
  // Predicated region
  $region6: #{net_forward.19} parent=0 // pred_check
    _
  $region7: #{net_forward.19} parent=0 // pred_check_branch
    %11 = sbr.rel (0) target = $region9
  $region8: #{net_forward.19} parent=0 // pred_region
    _
  $region9: #{net_forward.19} parent=0 // pred_fallthru
    _
  // Predicated region
  $region10: #{net_forward.19} parent=0 // pred_check
    _
  $region11: #{net_forward.19} parent=0 // pred_check_branch
    %13 = sbr.rel (0) target = $region13
  $region12: #{net_forward.19} parent=0 // pred_region
    _
  $region13: #{net_forward.19} parent=0 // pred_fallthru
    _
  %v15 = vld [vmem:[%s0] sm:$0xff]
  %v16 = vld [vmem:[%s0 + $0x8] sm:$0xff]
  %v17 = vld [vmem:[%s0 + $0x10] sm:$0xff]
  %v18 = vld [vmem:[%s0 + $0x18] sm:$0xff]
  %v19 = vld [vmem:[%s0 + $0x20] sm:$0xff]
  %v20 = vld [vmem:[%s0 + $0x28] sm:$0xff]
  %v21 = vld [vmem:[%s0 + $0x30] sm:$0xff]
  %v22 = vld [vmem:[%s0 + $0x38] sm:$0xff]
  %v23 = vld [vmem:[%s0 + $0x40] sm:$0xff]
  %v24 = vld [vmem:[%s0 + $0x48] sm:$0xff]
  %v25 = vld [vmem:[%s0 + $0x50] sm:$0xff]
  %v26 = vld [vmem:[%s0 + $0x58] sm:$0xff]
  %v27 = vld [vmem:[%s0 + $0x60] sm:$0xff]
  %v28 = vld [vmem:[%s0 + $0x68] sm:$0xff]
  %v29 = vld [vmem:[%s0 + $0x70] sm:$0xff]
  %v30 = vld [vmem:[%s0 + $0x78] sm:$0xff]
  %v31 = vld [vmem:[%s0 + $0x80] sm:$0xff]
  %v32 = vld [vmem:[%s0 + $0x88] sm:$0xff]
  %v33 = vld [vmem:[%s0 + $0x90] sm:$0xff]
  %v34 = vld [vmem:[%s0 + $0x98] sm:$0xff]
  %v35 = vld [vmem:[%s0 + $0xa0] sm:$0xff]
  %v36 = vld [vmem:[%s0 + $0xa8] sm:$0xff]
  %v37 = vld [vmem:[%s0 + $0xb0] sm:$0xff]
  %v38 = vld [vmem:[%s0 + $0xb8] sm:$0xff]
  %v39 = vld [vmem:[%s0 + $0xc0] sm:$0xff]
  %v40 = vld [vmem:[%s0 + $0xc8] sm:$0xff]
  %v41 = vld [vmem:[%s0 + $0xd0] sm:$0xff]
  %v42 = vld [vmem:[%s0 + $0xd8] sm:$0xff]
  %v43 = vld [vmem:[%s0 + $0xe0] sm:$0xff]
  %v44 = vld [vmem:[%s0 + $0xe8] sm:$0xff]
  %v45 = vld [vmem:[%s0 + $0xf0] sm:$0xff]
  %v46 = vld [vmem:[%s0 + $0xf8] sm:$0xff]
  %v47 = vld [vmem:[%s0 + $0x100] sm:$0xff]
  %v48 = vld [vmem:[%s0 + $0x108] sm:$0xff]
  %v49 = vld [vmem:[%s0 + $0x110] sm:$0xff]
  %v50 = vld [vmem:[%s0 + $0x118] sm:$0xff]
  %v51 = vld [vmem:[%s0 + $0x120] sm:$0xff]
  %v52 = vld [vmem:[%s0 + $0x128] sm:$0xff]
  %v53 = vld [vmem:[%s0 + $0x130] sm:$0xff]
  %v54 = vld [vmem:[%s0 + $0x138] sm:$0xff]
  %v55 = vld [vmem:[%s0 + $0x140] sm:$0xff]
  %v56 = vld [vmem:[%s0 + $0x148] sm:$0xff]
  %v57 = vld [vmem:[%s0 + $0x150] sm:$0xff]
  %v58 = vld [vmem:[%s0 + $0x158] sm:$0xff]
  %v59 = vld [vmem:[%s0 + $0x160] sm:$0xff]
  %v60 = vld [vmem:[%s0 + $0x168] sm:$0xff]
  %v61 = vld [vmem:[%s0 + $0x170] sm:$0xff]
  %v62 = vld [vmem:[%s0 + $0x178] sm:$0xff]
  %v63 = vld [vmem:[%s0 + $0x180] sm:$0xff]
  %v64 = vld [vmem:[%s0 + $0x188] sm:$0xff]
  %v65 = vld [vmem:[%s0 + $0x190] sm:$0xff]
  %v66 = vld [vmem:[%s0 + $0x198] sm:$0xff]
  %v67 = vld [vmem:[%s0 + $0x1a0] sm:$0xff]
  %v68 = vld [vmem:[%s0 + $0x1a8] sm:$0xff]
  %v69 = vld [vmem:[%s0 + $0x1b0] sm:$0xff]
  %v70 = vld [vmem:[%s0 + $0x1b8] sm:$0xff]
  %v71 = vld [vmem:[%s0 + $0x1c0] sm:$0xff]
  %v72 = vld [vmem:[%s0 + $0x1c8] sm:$0xff]
  %v73 = vld [vmem:[%s0 + $0x1d0] sm:$0xff]
  %v74 = vld [vmem:[%s0 + $0x1d8] sm:$0xff]
  %v75 = vld [vmem:[%s0 + $0x1e0] sm:$0xff]
  %v76 = vld [vmem:[%s0 + $0x1e8] sm:$0xff]
  %v77 = vld [vmem:[%s0 + $0x1f0] sm:$0xff]
  %v78 = vld [vmem:[%s0 + $0x1f8] sm:$0xff]
  %v79 = vld [vmem:[%s0 + $0x200] sm:$0xff]
  %v80 = vld [vmem:[%s0 + $0x208] sm:$0xff]
  %v81 = vld [vmem:[%s0 + $0x210] sm:$0xff]
  %v82 = vld [vmem:[%s0 + $0x218] sm:$0xff]
  %v83 = vld [vmem:[%s0 + $0x220] sm:$0xff]
  %v84 = vld [vmem:[%s0 + $0x228] sm:$0xff]
  %v85 = vld [vmem:[%s0 + $0x230] sm:$0xff]
  %v86 = vld [vmem:[%s0 + $0x238] sm:$0xff]
  %v87 = vld [vmem:[%s0 + $0x240] sm:$0xff]
  %v88 = vld [vmem:[%s0 + $0x248] sm:$0xff]
  %v89 = vld [vmem:[%s0 + $0x250] sm:$0xff]
  %v90 = vld [vmem:[%s0 + $0x258] sm:$0xff]
  %v91 = vld [vmem:[%s0 + $0x260] sm:$0xff]
  %v92 = vld [vmem:[%s0 + $0x268] sm:$0xff]
  %v93 = vld [vmem:[%s0 + $0x270] sm:$0xff]
  %v94 = vld [vmem:[%s0 + $0x278] sm:$0xff]
  %v95 = vld [vmem:[%s0 + $0x280] sm:$0xff]
  %v96 = vld [vmem:[%s0 + $0x288] sm:$0xff]
  %v97 = vld [vmem:[%s0 + $0x290] sm:$0xff]
  %v98 = vld [vmem:[%s0 + $0x298] sm:$0xff]
  %v99 = vld [vmem:[%s0 + $0x2a0] sm:$0xff]
  %v100 = vld [vmem:[%s0 + $0x2a8] sm:$0xff]
  %v101 = vld [vmem:[%s0 + $0x2b0] sm:$0xff]
  %v102 = vld [vmem:[%s0 + $0x2b8] sm:$0xff]
  %v103 = vld [vmem:[%s0 + $0x2c0] sm:$0xff]
  %v104 = vld [vmem:[%s0 + $0x2c8] sm:$0xff]
  %v105 = vld [vmem:[%s0 + $0x2d0] sm:$0xff]
  %v106 = vld [vmem:[%s0 + $0x2d8] sm:$0xff]
  %v107 = vld [vmem:[%s0 + $0x2e0] sm:$0xff]
  %v108 = vld [vmem:[%s0 + $0x2e8] sm:$0xff]
  %v109 = vld [vmem:[%s0 + $0x2f0] sm:$0xff]
  %v110 = vld [vmem:[%s0 + $0x2f8] sm:$0xff]
  %v111 = vld [vmem:[%s0 + $0x300] sm:$0xff]
  %v112 = vld [vmem:[%s0 + $0x308] sm:$0xff]
  %v113 = vld [vmem:[%s0 + $0x310] sm:$0xff]
  %v114 = vld [vmem:[%s0 + $0x318] sm:$0xff]
  %v115 = vld [vmem:[%s0 + $0x320] sm:$0xff]
  %v116 = vld [vmem:[%s0 + $0x328] sm:$0xff]
  %v117 = vld [vmem:[%s0 + $0x330] sm:$0xff]
  %v118 = vld [vmem:[%s0 + $0x338] sm:$0xff]
  %v119 = vld [vmem:[%s0 + $0x340] sm:$0xff]
  %v120 = vld [vmem:[%s0 + $0x348] sm:$0xff]
  %v121 = vld [vmem:[%s0 + $0x350] sm:$0xff]
  %v122 = vld [vmem:[%s0 + $0x358] sm:$0xff]
  %v123 = vld [vmem:[%s0 + $0x360] sm:$0xff]
  %v124 = vld [vmem:[%s0 + $0x368] sm:$0xff]
  %v125 = vld [vmem:[%s0 + $0x370] sm:$0xff]
  %v126 = vld [vmem:[%s0 + $0x378] sm:$0xff]
  %v127 = vld [vmem:[%s0 + $0x380] sm:$0xff]
  %v128 = vld [vmem:[%s0 + $0x388] sm:$0xff]
  %v129 = vld [vmem:[%s0 + $0x390] sm:$0xff]
  %v130 = vld [vmem:[%s0 + $0x398] sm:$0xff]
  %v131 = vld [vmem:[%s0 + $0x3a0] sm:$0xff]
  %v132 = vld [vmem:[%s0 + $0x3a8] sm:$0xff]
  %v133 = vld [vmem:[%s0 + $0x3b0] sm:$0xff]
  %v134 = vld [vmem:[%s0 + $0x3b8] sm:$0xff]
  %v135 = vld [vmem:[%s0 + $0x3c0] sm:$0xff]
  %v136 = vld [vmem:[%s0 + $0x3c8] sm:$0xff]
  %v137 = vld [vmem:[%s0 + $0x3d0] sm:$0xff]
  %v138 = vld [vmem:[%s0 + $0x3d8] sm:$0xff]
  %v139 = vld [vmem:[%s0 + $0x3e0] sm:$0xff]
  %v140 = vld [vmem:[%s0 + $0x3e8] sm:$0xff]
  %v141 = vld [vmem:[%s0 + $0x3f0] sm:$0xff]
  %v142 = vld [vmem:[%s0 + $0x3f8] sm:$0xff]
  %v143 = vld [vmem:[%s0 + $0x400] sm:$0xff]
  %v144 = vld [vmem:[%s0 + $0x408] sm:$0xff]
  %v145 = vld [vmem:[%s0 + $0x410] sm:$0xff]
  %v146 = vld [vmem:[%s0 + $0x418] sm:$0xff]
  %v147 = vld [vmem:[%s0 + $0x420] sm:$0xff]
  %v148 = vld [vmem:[%s0 + $0x428] sm:$0xff]
  %v149 = vld [vmem:[%s0 + $0x430] sm:$0xff]
  %v150 = vld [vmem:[%s0 + $0x438] sm:$0xff]
  %v151 = vld [vmem:[%s0 + $0x440] sm:$0xff]
  %v152 = vld [vmem:[%s0 + $0x448] sm:$0xff]
  %v153 = vld [vmem:[%s0 + $0x450] sm:$0xff]
  %v154 = vld [vmem:[%s0 + $0x458] sm:$0xff]
  %v155 = vld [vmem:[%s0 + $0x460] sm:$0xff]
  %v156 = vld [vmem:[%s0 + $0x468] sm:$0xff]
  %v157 = vld [vmem:[%s0 + $0x470] sm:$0xff]
  %v158 = vld [vmem:[%s0 + $0x478] sm:$0xff]
  %v159 = vld [vmem:[%s0 + $0x480] sm:$0xff]
  %v160 = vld [vmem:[%s0 + $0x488] sm:$0xff]
  %v161 = vld [vmem:[%s0 + $0x490] sm:$0xff]
  %v162 = vld [vmem:[%s0 + $0x498] sm:$0xff]
  %v163 = vld [vmem:[%s0 + $0x4a0] sm:$0xff]
  %v164 = vld [vmem:[%s0 + $0x4a8] sm:$0xff]
  %v165 = vld [vmem:[%s0 + $0x4b0] sm:$0xff]
  %v166 = vld [vmem:[%s0 + $0x4b8] sm:$0xff]
  %v167 = vld [vmem:[%s0 + $0x4c0] sm:$0xff]
  %v168 = vld [vmem:[%s0 + $0x4c8] sm:$0xff]
  %v169 = vld [vmem:[%s0 + $0x4d0] sm:$0xff]
  %v170 = vld [vmem:[%s0 + $0x4d8] sm:$0xff]
  %v171 = vld [vmem:[%s0 + $0x4e0] sm:$0xff]
  %v172 = vld [vmem:[%s0 + $0x4e8] sm:$0xff]
  %v173 = vld [vmem:[%s0 + $0x4f0] sm:$0xff]
  %v174 = vld [vmem:[%s0 + $0x4f8] sm:$0xff]
  %v175 = vld [vmem:[%s0 + $0x500] sm:$0xff]
  %v176 = vld [vmem:[%s0 + $0x508] sm:$0xff]
  %v177 = vld [vmem:[%s0 + $0x510] sm:$0xff]
  %v178 = vld [vmem:[%s0 + $0x518] sm:$0xff]
  %v179 = vld [vmem:[%s0 + $0x520] sm:$0xff]
  %v180 = vld [vmem:[%s0 + $0x528] sm:$0xff]
  %v181 = vld [vmem:[%s0 + $0x530] sm:$0xff]
  %v182 = vld [vmem:[%s0 + $0x538] sm:$0xff]
  %v183 = vld [vmem:[%s0 + $0x540] sm:$0xff]
  %v184 = vld [vmem:[%s0 + $0x548] sm:$0xff]
  %v185 = vld [vmem:[%s0 + $0x550] sm:$0xff]
  %v186 = vld [vmem:[%s0 + $0x558] sm:$0xff]
  %v187 = vld [vmem:[%s0 + $0x560] sm:$0xff]
  %v188 = vld [vmem:[%s0 + $0x568] sm:$0xff]
  %v189 = vld [vmem:[%s0 + $0x570] sm:$0xff]
  %v190 = vld [vmem:[%s0 + $0x578] sm:$0xff]
  %v191 = vld [vmem:[%s0 + $0x580] sm:$0xff]
  %v192 = vld [vmem:[%s0 + $0x588] sm:$0xff]
  %v193 = vld [vmem:[%s0 + $0x590] sm:$0xff]
  %v194 = vld [vmem:[%s0 + $0x598] sm:$0xff]
  %v195 = vld [vmem:[%s0 + $0x5a0] sm:$0xff]
  %v196 = vld [vmem:[%s0 + $0x5a8] sm:$0xff]
  %v197 = vld [vmem:[%s0 + $0x5b0] sm:$0xff]
  %v198 = vld [vmem:[%s0 + $0x5b8] sm:$0xff]
  %v199 = vld [vmem:[%s0 + $0x5c0] sm:$0xff]
  %v200 = vld [vmem:[%s0 + $0x5c8] sm:$0xff]
  %v201 = vld [vmem:[%s0 + $0x5d0] sm:$0xff]
  %v202 = vld [vmem:[%s0 + $0x5d8] sm:$0xff]
  %v203 = vld [vmem:[%s0 + $0x5e0] sm:$0xff]
  %v204 = vld [vmem:[%s0 + $0x5e8] sm:$0xff]
  %v205 = vld [vmem:[%s0 + $0x5f0] sm:$0xff]
  %v206 = vld [vmem:[%s0 + $0x5f8] sm:$0xff]
  %v207 = vld [vmem:[%s0 + $0x600] sm:$0xff]
  %v208 = vld [vmem:[%s0 + $0x608] sm:$0xff]
  %v209 = vld [vmem:[%s0 + $0x610] sm:$0xff]
  %v210 = vld [vmem:[%s0 + $0x618] sm:$0xff]
  %v211 = vld [vmem:[%s0 + $0x620] sm:$0xff]
  %v212 = vld [vmem:[%s0 + $0x628] sm:$0xff]
  %v213 = vld [vmem:[%s0 + $0x630] sm:$0xff]
  %v214 = vld [vmem:[%s0 + $0x638] sm:$0xff]
  %v215 = vld [vmem:[%s0 + $0x640] sm:$0xff]
  %v216 = vld [vmem:[%s0 + $0x648] sm:$0xff]
  %v217 = vld [vmem:[%s0 + $0x650] sm:$0xff]
  %v218 = vld [vmem:[%s0 + $0x658] sm:$0xff]
  %v219 = vld [vmem:[%s0 + $0x660] sm:$0xff]
  %v220 = vld [vmem:[%s0 + $0x668] sm:$0xff]
  %v221 = vld [vmem:[%s0 + $0x670] sm:$0xff]
  %v222 = vld [vmem:[%s0 + $0x678] sm:$0xff]
  %v223 = vld [vmem:[%s0 + $0x680] sm:$0xff]
  %v224 = vld [vmem:[%s0 + $0x688] sm:$0xff]
  %v225 = vld [vmem:[%s0 + $0x690] sm:$0xff]
  %v226 = vld [vmem:[%s0 + $0x698] sm:$0xff]
  %v227 = vld [vmem:[%s0 + $0x6a0] sm:$0xff]
  %v228 = vld [vmem:[%s0 + $0x6a8] sm:$0xff]
  %v229 = vld [vmem:[%s0 + $0x6b0] sm:$0xff]
  %v230 = vld [vmem:[%s0 + $0x6b8] sm:$0xff]
  %v231 = vld [vmem:[%s0 + $0x6c0] sm:$0xff]
  %v232 = vld [vmem:[%s0 + $0x6c8] sm:$0xff]
  %v233 = vld [vmem:[%s0 + $0x6d0] sm:$0xff]
  %v234 = vld [vmem:[%s0 + $0x6d8] sm:$0xff]
  %v235 = vld [vmem:[%s0 + $0x6e0] sm:$0xff]
  %v236 = vld [vmem:[%s0 + $0x6e8] sm:$0xff]
  %v237 = vld [vmem:[%s0 + $0x6f0] sm:$0xff]
  %v238 = vld [vmem:[%s0 + $0x6f8] sm:$0xff]
  %v239 = vld [vmem:[%s0 + $0x700] sm:$0xff]
  %v240 = vld [vmem:[%s1] sm:$0xf]
  %v241 = vld [vmem:[%s1 + $0x4] sm:$0xf]
  %v242 = vld [vmem:[%s1 + $0x8] sm:$0xf]
  %v243 = vld [vmem:[%s1 + $0xc] sm:$0xf]
  %v244 = vld [vmem:[%s1 + $0x10] sm:$0xf]
  %v245 = vld [vmem:[%s1 + $0x14] sm:$0xf]
  %v246 = vld [vmem:[%s1 + $0x18] sm:$0xf]
  %v247 = vld [vmem:[%s1 + $0x1c] sm:$0xf]
  %v248 = vld [vmem:[%s1 + $0x20] sm:$0xf]
  %v249 = vld [vmem:[%s1 + $0x24] sm:$0xf]
  %v250 = vld [vmem:[%s1 + $0x28] sm:$0xf]
  %v251 = vld [vmem:[%s1 + $0x2c] sm:$0xf]
  %v252 = vld [vmem:[%s1 + $0x30] sm:$0xf]
  %v253 = vld [vmem:[%s1 + $0x34] sm:$0xf]
  %v254 = vld [vmem:[%s1 + $0x38] sm:$0xf]
  %v255 = vld [vmem:[%s1 + $0x3c] sm:$0xf]
  %v256 = vld [vmem:[%s1 + $0x40] sm:$0xf]
  %v257 = vld [vmem:[%s1 + $0x44] sm:$0xf]
  %v258 = vld [vmem:[%s1 + $0x48] sm:$0xf]
  %v259 = vld [vmem:[%s1 + $0x4c] sm:$0xf]
  %v260 = vld [vmem:[%s1 + $0x50] sm:$0xf]
  %v261 = vld [vmem:[%s1 + $0x54] sm:$0xf]
  %v262 = vld [vmem:[%s1 + $0x58] sm:$0xf]
  %v263 = vld [vmem:[%s1 + $0x5c] sm:$0xf]
  %v264 = vld [vmem:[%s1 + $0x60] sm:$0xf]
  %v265 = vld [vmem:[%s1 + $0x64] sm:$0xf]
  %v266 = vld [vmem:[%s1 + $0x68] sm:$0xf]
  %v267 = vld [vmem:[%s1 + $0x6c] sm:$0xf]
  %v268 = vld [vmem:[%s1 + $0x70] sm:$0xf]
  %v269 = vld [vmem:[%s1 + $0x74] sm:$0xf]
  %v270 = vld [vmem:[%s1 + $0x78] sm:$0xf]
  %v271 = vld [vmem:[%s1 + $0x7c] sm:$0xf]
  %v272 = vld [vmem:[%s1 + $0x80] sm:$0xf]
  %v273 = vld [vmem:[%s1 + $0x84] sm:$0xf]
  %v274 = vld [vmem:[%s1 + $0x88] sm:$0xf]
  %v275 = vld [vmem:[%s1 + $0x8c] sm:$0xf]
  %v276 = vld [vmem:[%s1 + $0x90] sm:$0xf]
  %v277 = vld [vmem:[%s1 + $0x94] sm:$0xf]
  %v278 = vld [vmem:[%s1 + $0x98] sm:$0xf]
  %v279 = vld [vmem:[%s1 + $0x9c] sm:$0xf]
  %v280 = vld [vmem:[%s1 + $0xa0] sm:$0xf]
  %v281 = vld [vmem:[%s1 + $0xa4] sm:$0xf]
  %v282 = vld [vmem:[%s1 + $0xa8] sm:$0xf]
  %v283 = vld [vmem:[%s1 + $0xac] sm:$0xf]
  %v284 = vld [vmem:[%s1 + $0xb0] sm:$0xf]
  %v285 = vld [vmem:[%s1 + $0xb4] sm:$0xf]
  %v286 = vld [vmem:[%s1 + $0xb8] sm:$0xf]
  %v287 = vld [vmem:[%s1 + $0xbc] sm:$0xf]
  %v288 = vld [vmem:[%s1 + $0xc0] sm:$0xf]
  %v289 = vld [vmem:[%s1 + $0xc4] sm:$0xf]
  %v290 = vld [vmem:[%s1 + $0xc8] sm:$0xf]
  %v291 = vld [vmem:[%s1 + $0xcc] sm:$0xf]
  %v292 = vld [vmem:[%s1 + $0xd0] sm:$0xf]
  %v293 = vld [vmem:[%s1 + $0xd4] sm:$0xf]
  %v294 = vld [vmem:[%s1 + $0xd8] sm:$0xf]
  %v295 = vld [vmem:[%s1 + $0xdc] sm:$0xf]
  %v296 = vld [vmem:[%s1 + $0xe0] sm:$0xf]
  %v297 = vld [vmem:[%s1 + $0xe4] sm:$0xf]
  %v298 = vld [vmem:[%s1 + $0xe8] sm:$0xf]
  %v299 = vld [vmem:[%s1 + $0xec] sm:$0xf]
  %v300 = vld [vmem:[%s1 + $0xf0] sm:$0xf]
  %v301 = vld [vmem:[%s1 + $0xf4] sm:$0xf]
  %v302 = vld [vmem:[%s1 + $0xf8] sm:$0xf]
  %v303 = vld [vmem:[%s1 + $0xfc] sm:$0xf]
  %v304 = vld [vmem:[%s1 + $0x100] sm:$0xf]
  %v305 = vld [vmem:[%s1 + $0x104] sm:$0xf]
  %v306 = vld [vmem:[%s1 + $0x108] sm:$0xf]
  %v307 = vld [vmem:[%s1 + $0x10c] sm:$0xf]
  %v308 = vld [vmem:[%s1 + $0x110] sm:$0xf]
  %v309 = vld [vmem:[%s1 + $0x114] sm:$0xf]
  %v310 = vld [vmem:[%s1 + $0x118] sm:$0xf]
  %v311 = vld [vmem:[%s1 + $0x11c] sm:$0xf]
  %v312 = vld [vmem:[%s1 + $0x120] sm:$0xf]
  %v313 = vld [vmem:[%s1 + $0x124] sm:$0xf]
  %v314 = vld [vmem:[%s1 + $0x128] sm:$0xf]
  %v315 = vld [vmem:[%s1 + $0x12c] sm:$0xf]
  %v316 = vld [vmem:[%s1 + $0x130] sm:$0xf]
  %v317 = vld [vmem:[%s1 + $0x134] sm:$0xf]
  %v318 = vld [vmem:[%s1 + $0x138] sm:$0xf]
  %v319 = vld [vmem:[%s1 + $0x13c] sm:$0xf]
  %v320 = vld [vmem:[%s1 + $0x140] sm:$0xf]
  %v321 = vld [vmem:[%s1 + $0x144] sm:$0xf]
  %v322 = vld [vmem:[%s1 + $0x148] sm:$0xf]
  %v323 = vld [vmem:[%s1 + $0x14c] sm:$0xf]
  %v324 = vld [vmem:[%s1 + $0x150] sm:$0xf]
  %v325 = vld [vmem:[%s1 + $0x154] sm:$0xf]
  %v326 = vld [vmem:[%s1 + $0x158] sm:$0xf]
  %v327 = vld [vmem:[%s1 + $0x15c] sm:$0xf]
  %v328 = vld [vmem:[%s1 + $0x160] sm:$0xf]
  %v329 = vld [vmem:[%s1 + $0x164] sm:$0xf]
  %v330 = vld [vmem:[%s1 + $0x168] sm:$0xf]
  %v331 = vld [vmem:[%s1 + $0x16c] sm:$0xf]
  %v332 = vld [vmem:[%s1 + $0x170] sm:$0xf]
  %v333 = vld [vmem:[%s1 + $0x174] sm:$0xf]
  %v334 = vld [vmem:[%s1 + $0x178] sm:$0xf]
  %v335 = vld [vmem:[%s1 + $0x17c] sm:$0xf]
  %v336 = vld [vmem:[%s1 + $0x180] sm:$0xf]
  %v337 = vld [vmem:[%s1 + $0x184] sm:$0xf]
  %v338 = vld [vmem:[%s1 + $0x188] sm:$0xf]
  %v339 = vld [vmem:[%s1 + $0x18c] sm:$0xf]
  %v340 = vld [vmem:[%s1 + $0x190] sm:$0xf]
  %v341 = vld [vmem:[%s1 + $0x194] sm:$0xf]
  %v342 = vld [vmem:[%s1 + $0x198] sm:$0xf]
  %v343 = vld [vmem:[%s1 + $0x19c] sm:$0xf]
  %v344 = vld [vmem:[%s1 + $0x1a0] sm:$0xf]
  %v345 = vld [vmem:[%s1 + $0x1a4] sm:$0xf]
  %v346 = vld [vmem:[%s1 + $0x1a8] sm:$0xf]
  %v347 = vld [vmem:[%s1 + $0x1ac] sm:$0xf]
  %v348 = vld [vmem:[%s1 + $0x1b0] sm:$0xf]
  %v349 = vld [vmem:[%s1 + $0x1b4] sm:$0xf]
  %v350 = vld [vmem:[%s1 + $0x1b8] sm:$0xf]
  %v351 = vld [vmem:[%s1 + $0x1bc] sm:$0xf]
  %v352 = vld [vmem:[%s1 + $0x1c0] sm:$0xf]
  %v353 = vld [vmem:[%s1 + $0x1c4] sm:$0xf]
  %v354 = vld [vmem:[%s1 + $0x1c8] sm:$0xf]
  %v355 = vld [vmem:[%s1 + $0x1cc] sm:$0xf]
  %v356 = vld [vmem:[%s1 + $0x1d0] sm:$0xf]
  %v357 = vld [vmem:[%s1 + $0x1d4] sm:$0xf]
  %v358 = vld [vmem:[%s1 + $0x1d8] sm:$0xf]
  %v359 = vld [vmem:[%s1 + $0x1dc] sm:$0xf]
  %v360 = vld [vmem:[%s1 + $0x1e0] sm:$0xf]
  %v361 = vld [vmem:[%s1 + $0x1e4] sm:$0xf]
  %v362 = vld [vmem:[%s1 + $0x1e8] sm:$0xf]
  %v363 = vld [vmem:[%s1 + $0x1ec] sm:$0xf]
  %v364 = vld [vmem:[%s1 + $0x1f0] sm:$0xf]
  %v365 = vld [vmem:[%s1 + $0x1f4] sm:$0xf]
  %v366 = vld [vmem:[%s1 + $0x1f8] sm:$0xf]
  %v367 = vld [vmem:[%s1 + $0x1fc] sm:$0xf]
  %v368 = vld [vmem:[%s1 + $0x200] sm:$0xf]
  %v369 = vld [vmem:[%s1 + $0x204] sm:$0xf]
  %v370 = vld [vmem:[%s1 + $0x208] sm:$0xf]
  %v371 = vld [vmem:[%s1 + $0x20c] sm:$0xf]
  %v372 = vld [vmem:[%s1 + $0x210] sm:$0xf]
  %v373 = vld [vmem:[%s1 + $0x214] sm:$0xf]
  %v374 = vld [vmem:[%s1 + $0x218] sm:$0xf]
  %v375 = vld [vmem:[%s1 + $0x21c] sm:$0xf]
  %v376 = vld [vmem:[%s1 + $0x220] sm:$0xf]
  %v377 = vld [vmem:[%s1 + $0x224] sm:$0xf]
  %v378 = vld [vmem:[%s1 + $0x228] sm:$0xf]
  %v379 = vld [vmem:[%s1 + $0x22c] sm:$0xf]
  %v380 = vld [vmem:[%s1 + $0x230] sm:$0xf]
  %v381 = vld [vmem:[%s1 + $0x234] sm:$0xf]
  %v382 = vld [vmem:[%s1 + $0x238] sm:$0xf]
  %v383 = vld [vmem:[%s1 + $0x23c] sm:$0xf]
  %v384 = vld [vmem:[%s1 + $0x240] sm:$0xf]
  %v385 = vld [vmem:[%s1 + $0x244] sm:$0xf]
  %v386 = vld [vmem:[%s1 + $0x248] sm:$0xf]
  %v387 = vld [vmem:[%s1 + $0x24c] sm:$0xf]
  %v388 = vld [vmem:[%s1 + $0x250] sm:$0xf]
  %v389 = vld [vmem:[%s1 + $0x254] sm:$0xf]
  %v390 = vld [vmem:[%s1 + $0x258] sm:$0xf]
  %v391 = vld [vmem:[%s1 + $0x25c] sm:$0xf]
  %v392 = vld [vmem:[%s1 + $0x260] sm:$0xf]
  %v393 = vld [vmem:[%s1 + $0x264] sm:$0xf]
  %v394 = vld [vmem:[%s1 + $0x268] sm:$0xf]
  %v395 = vld [vmem:[%s1 + $0x26c] sm:$0xf]
  %v396 = vld [vmem:[%s1 + $0x270] sm:$0xf]
  %v397 = vld [vmem:[%s1 + $0x274] sm:$0xf]
  %v398 = vld [vmem:[%s1 + $0x278] sm:$0xf]
  %v399 = vld [vmem:[%s1 + $0x27c] sm:$0xf]
  %v400 = vld [vmem:[%s1 + $0x280] sm:$0xf]
  %v401 = vld [vmem:[%s1 + $0x284] sm:$0xf]
  %v402 = vld [vmem:[%s1 + $0x288] sm:$0xf]
  %v403 = vld [vmem:[%s1 + $0x28c] sm:$0xf]
  %v404 = vld [vmem:[%s1 + $0x290] sm:$0xf]
  %v405 = vld [vmem:[%s1 + $0x294] sm:$0xf]
  %v406 = vld [vmem:[%s1 + $0x298] sm:$0xf]
  %v407 = vld [vmem:[%s1 + $0x29c] sm:$0xf]
  %v408 = vld [vmem:[%s1 + $0x2a0] sm:$0xf]
  %v409 = vld [vmem:[%s1 + $0x2a4] sm:$0xf]
  %v410 = vld [vmem:[%s1 + $0x2a8] sm:$0xf]
  %v411 = vld [vmem:[%s1 + $0x2ac] sm:$0xf]
  %v412 = vld [vmem:[%s1 + $0x2b0] sm:$0xf]
  %v413 = vld [vmem:[%s1 + $0x2b4] sm:$0xf]
  %v414 = vld [vmem:[%s1 + $0x2b8] sm:$0xf]
  %v415 = vld [vmem:[%s1 + $0x2bc] sm:$0xf]
  %v416 = vld [vmem:[%s1 + $0x2c0] sm:$0xf]
  %v417 = vld [vmem:[%s1 + $0x2c4] sm:$0xf]
  %v418 = vld [vmem:[%s1 + $0x2c8] sm:$0xf]
  %v419 = vld [vmem:[%s1 + $0x2cc] sm:$0xf]
  %v420 = vld [vmem:[%s1 + $0x2d0] sm:$0xf]
  %v421 = vld [vmem:[%s1 + $0x2d4] sm:$0xf]
  %v422 = vld [vmem:[%s1 + $0x2d8] sm:$0xf]
  %v423 = vld [vmem:[%s1 + $0x2dc] sm:$0xf]
  %v424 = vld [vmem:[%s1 + $0x2e0] sm:$0xf]
  %v425 = vld [vmem:[%s1 + $0x2e4] sm:$0xf]
  %v426 = vld [vmem:[%s1 + $0x2e8] sm:$0xf]
  %v427 = vld [vmem:[%s1 + $0x2ec] sm:$0xf]
  %v428 = vld [vmem:[%s1 + $0x2f0] sm:$0xf]
  %v429 = vld [vmem:[%s1 + $0x2f4] sm:$0xf]
  %v430 = vld [vmem:[%s1 + $0x2f8] sm:$0xf]
  %v431 = vld [vmem:[%s1 + $0x2fc] sm:$0xf]
  %v432 = vld [vmem:[%s1 + $0x300] sm:$0xf]
  %v433 = vld [vmem:[%s1 + $0x304] sm:$0xf]
  %v434 = vld [vmem:[%s1 + $0x308] sm:$0xf]
  %v435 = vld [vmem:[%s1 + $0x30c] sm:$0xf]
  %v436 = vld [vmem:[%s1 + $0x310] sm:$0xf]
  %v437 = vld [vmem:[%s1 + $0x314] sm:$0xf]
  %v438 = vld [vmem:[%s1 + $0x318] sm:$0xf]
  %v439 = vld [vmem:[%s1 + $0x31c] sm:$0xf]
  %v440 = vld [vmem:[%s1 + $0x320] sm:$0xf]
  %v441 = vld [vmem:[%s1 + $0x324] sm:$0xf]
  %v442 = vld [vmem:[%s1 + $0x328] sm:$0xf]
  %v443 = vld [vmem:[%s1 + $0x32c] sm:$0xf]
  %v444 = vld [vmem:[%s1 + $0x330] sm:$0xf]
  %v445 = vld [vmem:[%s1 + $0x334] sm:$0xf]
  %v446 = vld [vmem:[%s1 + $0x338] sm:$0xf]
  %v447 = vld [vmem:[%s1 + $0x33c] sm:$0xf]
  %v448 = vld [vmem:[%s1 + $0x340] sm:$0xf]
  %v449 = vld [vmem:[%s1 + $0x344] sm:$0xf]
  %v450 = vld [vmem:[%s1 + $0x348] sm:$0xf]
  %v451 = vld [vmem:[%s1 + $0x34c] sm:$0xf]
  %v452 = vld [vmem:[%s1 + $0x350] sm:$0xf]
  %v453 = vld [vmem:[%s1 + $0x354] sm:$0xf]
  %v454 = vld [vmem:[%s1 + $0x358] sm:$0xf]
  %v455 = vld [vmem:[%s1 + $0x35c] sm:$0xf]
  %v456 = vld [vmem:[%s1 + $0x360] sm:$0xf]
  %v457 = vld [vmem:[%s1 + $0x364] sm:$0xf]
  %v458 = vld [vmem:[%s1 + $0x368] sm:$0xf]
  %v459 = vld [vmem:[%s1 + $0x36c] sm:$0xf]
  %v460 = vld [vmem:[%s1 + $0x370] sm:$0xf]
  %v461 = vld [vmem:[%s1 + $0x374] sm:$0xf]
  %v462 = vld [vmem:[%s1 + $0x378] sm:$0xf]
  %v463 = vld [vmem:[%s1 + $0x37c] sm:$0xf]
  %v464 = vld [vmem:[%s1 + $0x380] sm:$0xf]
  %v465 = vld [vmem:[%s1 + $0x384] sm:$0xf]
  %v466 = vld [vmem:[%s1 + $0x388] sm:$0xf]
  %v467 = vld [vmem:[%s1 + $0x38c] sm:$0xf]
  %v468 = vld [vmem:[%s1 + $0x390] sm:$0xf]
  %v469 = vld [vmem:[%s1 + $0x394] sm:$0xf]
  %v470 = vld [vmem:[%s1 + $0x398] sm:$0xf]
  %v471 = vld [vmem:[%s1 + $0x39c] sm:$0xf]
  %v472 = vld [vmem:[%s1 + $0x3a0] sm:$0xf]
  %v473 = vld [vmem:[%s1 + $0x3a4] sm:$0xf]
  %v474 = vld [vmem:[%s1 + $0x3a8] sm:$0xf]
  %v475 = vld [vmem:[%s1 + $0x3ac] sm:$0xf]
  %v476 = vld [vmem:[%s1 + $0x3b0] sm:$0xf]
  %v477 = vld [vmem:[%s1 + $0x3b4] sm:$0xf]
  %v478 = vld [vmem:[%s1 + $0x3b8] sm:$0xf]
  %v479 = vld [vmem:[%s1 + $0x3bc] sm:$0xf]
  %v480 = vld [vmem:[%s1 + $0x3c0] sm:$0xf]
  %v481 = vld [vmem:[%s1 + $0x3c4] sm:$0xf]
  %v482 = vld [vmem:[%s1 + $0x3c8] sm:$0xf]
  %v483 = vld [vmem:[%s1 + $0x3cc] sm:$0xf]
  %v484 = vld [vmem:[%s1 + $0x3d0] sm:$0xf]
  %v485 = vld [vmem:[%s1 + $0x3d4] sm:$0xf]
  %v486 = vld [vmem:[%s1 + $0x3d8] sm:$0xf]
  %v487 = vld [vmem:[%s1 + $0x3dc] sm:$0xf]
  %v488 = vld [vmem:[%s1 + $0x3e0] sm:$0xf]
  %v489 = vld [vmem:[%s1 + $0x3e4] sm:$0xf]
  %v490 = vld [vmem:[%s1 + $0x3e8] sm:$0xf]
  %v491 = vld [vmem:[%s1 + $0x3ec] sm:$0xf]
  %v492 = vld [vmem:[%s1 + $0x3f0] sm:$0xf]
  %v493 = vld [vmem:[%s1 + $0x3f4] sm:$0xf]
  %v494 = vld [vmem:[%s1 + $0x3f8] sm:$0xf]
  %v495 = vld [vmem:[%s1 + $0x3fc] sm:$0xf]
  %v496 = vld [vmem:[%s1 + $0x400] sm:$0xf]
  %v497 = vld [vmem:[%s1 + $0x404] sm:$0xf]
  %v498 = vld [vmem:[%s1 + $0x408] sm:$0xf]
  %v499 = vld [vmem:[%s1 + $0x40c] sm:$0xf]
  %v500 = vld [vmem:[%s1 + $0x410] sm:$0xf]
  %v501 = vld [vmem:[%s1 + $0x414] sm:$0xf]
  %v502 = vld [vmem:[%s1 + $0x418] sm:$0xf]
  %v503 = vld [vmem:[%s1 + $0x41c] sm:$0xf]
  %v504 = vld [vmem:[%s1 + $0x420] sm:$0xf]
  %v505 = vld [vmem:[%s1 + $0x424] sm:$0xf]
  %v506 = vld [vmem:[%s1 + $0x428] sm:$0xf]
  %v507 = vld [vmem:[%s1 + $0x42c] sm:$0xf]
  %v508 = vld [vmem:[%s1 + $0x430] sm:$0xf]
  %v509 = vld [vmem:[%s1 + $0x434] sm:$0xf]
  %v510 = vld [vmem:[%s1 + $0x438] sm:$0xf]
  %v511 = vld [vmem:[%s1 + $0x43c] sm:$0xf]
  %v512 = vld [vmem:[%s1 + $0x440] sm:$0xf]
  %v513 = vld [vmem:[%s1 + $0x444] sm:$0xf]
  %v514 = vld [vmem:[%s1 + $0x448] sm:$0xf]
  %v515 = vld [vmem:[%s2] sm:$0x1]
  %v517 = vperm.slane %v515, 0
  %v744 = vunpack.c.l.b16 %v15
  %v745 = vunpack.c.h.b16 %v15
  %v746 = vunpack.c.l.b16 %v16
  %v747 = vunpack.c.h.b16 %v16
  %v748 = vunpack.c.l.b16 %v17
  %v749 = vunpack.c.h.b16 %v17
  %v750 = vunpack.c.l.b16 %v18
  %v751 = vunpack.c.h.b16 %v18
  %v752 = vunpack.c.l.b16 %v19
  %v753 = vunpack.c.h.b16 %v19
  %v754 = vunpack.c.l.b16 %v20
  %v755 = vunpack.c.h.b16 %v20
  %v756 = vunpack.c.l.b16 %v21
  %v757 = vunpack.c.h.b16 %v21
  %v758 = vunpack.c.l.b16 %v22
  %v759 = vunpack.c.h.b16 %v22
  %v760 = vunpack.c.l.b16 %v23
  %v761 = vunpack.c.h.b16 %v23
  %v762 = vunpack.c.l.b16 %v24
  %v763 = vunpack.c.h.b16 %v24
  %v764 = vunpack.c.l.b16 %v25
  %v765 = vunpack.c.h.b16 %v25
  %v766 = vunpack.c.l.b16 %v26
  %v767 = vunpack.c.h.b16 %v26
  %v768 = vunpack.c.l.b16 %v27
  %v769 = vunpack.c.h.b16 %v27
  %v770 = vunpack.c.l.b16 %v28
  %v771 = vunpack.c.h.b16 %v28
  %v772 = vunpack.c.l.b16 %v29
  %v773 = vunpack.c.h.b16 %v29
  %v774 = vunpack.c.l.b16 %v30
  %v775 = vunpack.c.h.b16 %v30
  %v776 = vunpack.c.l.b16 %v31
  %v777 = vunpack.c.h.b16 %v31
  %v778 = vunpack.c.l.b16 %v32
  %v779 = vunpack.c.h.b16 %v32
  %v780 = vunpack.c.l.b16 %v33
  %v781 = vunpack.c.h.b16 %v33
  %v782 = vunpack.c.l.b16 %v34
  %v783 = vunpack.c.h.b16 %v34
  %v784 = vunpack.c.l.b16 %v35
  %v785 = vunpack.c.h.b16 %v35
  %v786 = vunpack.c.l.b16 %v36
  %v787 = vunpack.c.h.b16 %v36
  %v788 = vunpack.c.l.b16 %v37
  %v789 = vunpack.c.h.b16 %v37
  %v790 = vunpack.c.l.b16 %v38
  %v791 = vunpack.c.h.b16 %v38
  %v792 = vunpack.c.l.b16 %v39
  %v793 = vunpack.c.h.b16 %v39
  %v794 = vunpack.c.l.b16 %v40
  %v795 = vunpack.c.h.b16 %v40
  %v796 = vunpack.c.l.b16 %v41
  %v797 = vunpack.c.h.b16 %v41
  %v798 = vunpack.c.l.b16 %v42
  %v799 = vunpack.c.h.b16 %v42
  %v800 = vunpack.c.l.b16 %v43
  %v801 = vunpack.c.h.b16 %v43
  %v802 = vunpack.c.l.b16 %v44
  %v803 = vunpack.c.h.b16 %v44
  %v804 = vunpack.c.l.b16 %v45
  %v805 = vunpack.c.h.b16 %v45
  %v806 = vunpack.c.l.b16 %v46
  %v807 = vunpack.c.h.b16 %v46
  %v808 = vunpack.c.l.b16 %v47
  %v809 = vunpack.c.h.b16 %v47
  %v810 = vunpack.c.l.b16 %v48
  %v811 = vunpack.c.h.b16 %v48
  %v812 = vunpack.c.l.b16 %v49
  %v813 = vunpack.c.h.b16 %v49
  %v814 = vunpack.c.l.b16 %v50
  %v815 = vunpack.c.h.b16 %v50
  %v816 = vunpack.c.l.b16 %v51
  %v817 = vunpack.c.h.b16 %v51
  %v818 = vunpack.c.l.b16 %v52
  %v819 = vunpack.c.h.b16 %v52
  %v820 = vunpack.c.l.b16 %v53
  %v821 = vunpack.c.h.b16 %v53
  %v822 = vunpack.c.l.b16 %v54
  %v823 = vunpack.c.h.b16 %v54
  %v824 = vunpack.c.l.b16 %v55
  %v825 = vunpack.c.h.b16 %v55
  %v826 = vunpack.c.l.b16 %v56
  %v827 = vunpack.c.h.b16 %v56
  %v828 = vunpack.c.l.b16 %v57
  %v829 = vunpack.c.h.b16 %v57
  %v830 = vunpack.c.l.b16 %v58
  %v831 = vunpack.c.h.b16 %v58
  %v832 = vunpack.c.l.b16 %v59
  %v833 = vunpack.c.h.b16 %v59
  %v834 = vunpack.c.l.b16 %v60
  %v835 = vunpack.c.h.b16 %v60
  %v836 = vunpack.c.l.b16 %v61
  %v837 = vunpack.c.h.b16 %v61
  %v838 = vunpack.c.l.b16 %v62
  %v839 = vunpack.c.h.b16 %v62
  %v840 = vunpack.c.l.b16 %v63
  %v841 = vunpack.c.h.b16 %v63
  %v842 = vunpack.c.l.b16 %v64
  %v843 = vunpack.c.h.b16 %v64
  %v844 = vunpack.c.l.b16 %v65
  %v845 = vunpack.c.h.b16 %v65
  %v846 = vunpack.c.l.b16 %v66
  %v847 = vunpack.c.h.b16 %v66
  %v848 = vunpack.c.l.b16 %v67
  %v849 = vunpack.c.h.b16 %v67
  %v850 = vunpack.c.l.b16 %v68
  %v851 = vunpack.c.h.b16 %v68
  %v852 = vunpack.c.l.b16 %v69
  %v853 = vunpack.c.h.b16 %v69
  %v854 = vunpack.c.l.b16 %v70
  %v855 = vunpack.c.h.b16 %v70
  %v856 = vunpack.c.l.b16 %v71
  %v857 = vunpack.c.h.b16 %v71
  %v858 = vunpack.c.l.b16 %v72
  %v859 = vunpack.c.h.b16 %v72
  %v860 = vunpack.c.l.b16 %v73
  %v861 = vunpack.c.h.b16 %v73
  %v862 = vunpack.c.l.b16 %v74
  %v863 = vunpack.c.h.b16 %v74
  %v864 = vunpack.c.l.b16 %v75
  %v865 = vunpack.c.h.b16 %v75
  %v866 = vunpack.c.l.b16 %v76
  %v867 = vunpack.c.h.b16 %v76
  %v868 = vunpack.c.l.b16 %v77
  %v869 = vunpack.c.h.b16 %v77
  %v870 = vunpack.c.l.b16 %v78
  %v871 = vunpack.c.h.b16 %v78
  %v872 = vunpack.c.l.b16 %v79
  %v873 = vunpack.c.h.b16 %v79
  %v874 = vunpack.c.l.b16 %v80
  %v875 = vunpack.c.h.b16 %v80
  %v876 = vunpack.c.l.b16 %v81
  %v877 = vunpack.c.h.b16 %v81
  %v878 = vunpack.c.l.b16 %v82
  %v879 = vunpack.c.h.b16 %v82
  %v880 = vunpack.c.l.b16 %v83
  %v881 = vunpack.c.h.b16 %v83
  %v882 = vunpack.c.l.b16 %v84
  %v883 = vunpack.c.h.b16 %v84
  %v884 = vunpack.c.l.b16 %v85
  %v885 = vunpack.c.h.b16 %v85
  %v886 = vunpack.c.l.b16 %v86
  %v887 = vunpack.c.h.b16 %v86
  %v888 = vunpack.c.l.b16 %v87
  %v889 = vunpack.c.h.b16 %v87
  %v890 = vunpack.c.l.b16 %v88
  %v891 = vunpack.c.h.b16 %v88
  %v892 = vunpack.c.l.b16 %v89
  %v893 = vunpack.c.h.b16 %v89
  %v894 = vunpack.c.l.b16 %v90
  %v895 = vunpack.c.h.b16 %v90
  %v896 = vunpack.c.l.b16 %v91
  %v897 = vunpack.c.h.b16 %v91
  %v898 = vunpack.c.l.b16 %v92
  %v899 = vunpack.c.h.b16 %v92
  %v900 = vunpack.c.l.b16 %v93
  %v901 = vunpack.c.h.b16 %v93
  %v902 = vunpack.c.l.b16 %v94
  %v903 = vunpack.c.h.b16 %v94
  %v904 = vunpack.c.l.b16 %v95
  %v905 = vunpack.c.h.b16 %v95
  %v906 = vunpack.c.l.b16 %v96
  %v907 = vunpack.c.h.b16 %v96
  %v908 = vunpack.c.l.b16 %v97
  %v909 = vunpack.c.h.b16 %v97
  %v910 = vunpack.c.l.b16 %v98
  %v911 = vunpack.c.h.b16 %v98
  %v912 = vunpack.c.l.b16 %v99
  %v913 = vunpack.c.h.b16 %v99
  %v914 = vunpack.c.l.b16 %v100
  %v915 = vunpack.c.h.b16 %v100
  %v916 = vunpack.c.l.b16 %v101
  %v917 = vunpack.c.h.b16 %v101
  %v918 = vunpack.c.l.b16 %v102
  %v919 = vunpack.c.h.b16 %v102
  %v920 = vunpack.c.l.b16 %v103
  %v921 = vunpack.c.h.b16 %v103
  %v922 = vunpack.c.l.b16 %v104
  %v923 = vunpack.c.h.b16 %v104
  %v924 = vunpack.c.l.b16 %v105
  %v925 = vunpack.c.h.b16 %v105
  %v926 = vunpack.c.l.b16 %v106
  %v927 = vunpack.c.h.b16 %v106
  %v928 = vunpack.c.l.b16 %v107
  %v929 = vunpack.c.h.b16 %v107
  %v930 = vunpack.c.l.b16 %v108
  %v931 = vunpack.c.h.b16 %v108
  %v932 = vunpack.c.l.b16 %v109
  %v933 = vunpack.c.h.b16 %v109
  %v934 = vunpack.c.l.b16 %v110
  %v935 = vunpack.c.h.b16 %v110
  %v936 = vunpack.c.l.b16 %v111
  %v937 = vunpack.c.h.b16 %v111
  %v938 = vunpack.c.l.b16 %v112
  %v939 = vunpack.c.h.b16 %v112
  %v940 = vunpack.c.l.b16 %v113
  %v941 = vunpack.c.h.b16 %v113
  %v942 = vunpack.c.l.b16 %v114
  %v943 = vunpack.c.h.b16 %v114
  %v944 = vunpack.c.l.b16 %v115
  %v945 = vunpack.c.h.b16 %v115
  %v946 = vunpack.c.l.b16 %v116
  %v947 = vunpack.c.h.b16 %v116
  %v948 = vunpack.c.l.b16 %v117
  %v949 = vunpack.c.h.b16 %v117
  %v950 = vunpack.c.l.b16 %v118
  %v951 = vunpack.c.h.b16 %v118
  %v952 = vunpack.c.l.b16 %v119
  %v953 = vunpack.c.h.b16 %v119
  %v954 = vunpack.c.l.b16 %v120
  %v955 = vunpack.c.h.b16 %v120
  %v956 = vunpack.c.l.b16 %v121
  %v957 = vunpack.c.h.b16 %v121
  %v958 = vunpack.c.l.b16 %v122
  %v959 = vunpack.c.h.b16 %v122
  %v960 = vunpack.c.l.b16 %v123
  %v961 = vunpack.c.h.b16 %v123
  %v962 = vunpack.c.l.b16 %v124
  %v963 = vunpack.c.h.b16 %v124
  %v964 = vunpack.c.l.b16 %v125
  %v965 = vunpack.c.h.b16 %v125
  %v966 = vunpack.c.l.b16 %v126
  %v967 = vunpack.c.h.b16 %v126
  %v968 = vunpack.c.l.b16 %v127
  %v969 = vunpack.c.h.b16 %v127
  %v970 = vunpack.c.l.b16 %v128
  %v971 = vunpack.c.h.b16 %v128
  %v972 = vunpack.c.l.b16 %v129
  %v973 = vunpack.c.h.b16 %v129
  %v974 = vunpack.c.l.b16 %v130
  %v975 = vunpack.c.h.b16 %v130
  %v976 = vunpack.c.l.b16 %v131
  %v977 = vunpack.c.h.b16 %v131
  %v978 = vunpack.c.l.b16 %v132
  %v979 = vunpack.c.h.b16 %v132
  %v980 = vunpack.c.l.b16 %v133
  %v981 = vunpack.c.h.b16 %v133
  %v982 = vunpack.c.l.b16 %v134
  %v983 = vunpack.c.h.b16 %v134
  %v984 = vunpack.c.l.b16 %v135
  %v985 = vunpack.c.h.b16 %v135
  %v986 = vunpack.c.l.b16 %v136
  %v987 = vunpack.c.h.b16 %v136
  %v988 = vunpack.c.l.b16 %v137
  %v989 = vunpack.c.h.b16 %v137
  %v990 = vunpack.c.l.b16 %v138
  %v991 = vunpack.c.h.b16 %v138
  %v992 = vunpack.c.l.b16 %v139
  %v993 = vunpack.c.h.b16 %v139
  %v994 = vunpack.c.l.b16 %v140
  %v995 = vunpack.c.h.b16 %v140
  %v996 = vunpack.c.l.b16 %v141
  %v997 = vunpack.c.h.b16 %v141
  %v998 = vunpack.c.l.b16 %v142
  %v999 = vunpack.c.h.b16 %v142
  %v1000 = vunpack.c.l.b16 %v143
  %v1001 = vunpack.c.h.b16 %v143
  %v1002 = vunpack.c.l.b16 %v144
  %v1003 = vunpack.c.h.b16 %v144
  %v1004 = vunpack.c.l.b16 %v145
  %v1005 = vunpack.c.h.b16 %v145
  %v1006 = vunpack.c.l.b16 %v146
  %v1007 = vunpack.c.h.b16 %v146
  %v1008 = vunpack.c.l.b16 %v147
  %v1009 = vunpack.c.h.b16 %v147
  %v1010 = vunpack.c.l.b16 %v148
  %v1011 = vunpack.c.h.b16 %v148
  %v1012 = vunpack.c.l.b16 %v149
  %v1013 = vunpack.c.h.b16 %v149
  %v1014 = vunpack.c.l.b16 %v150
  %v1015 = vunpack.c.h.b16 %v150
  %v1016 = vunpack.c.l.b16 %v151
  %v1017 = vunpack.c.h.b16 %v151
  %v1018 = vunpack.c.l.b16 %v152
  %v1019 = vunpack.c.h.b16 %v152
  %v1020 = vunpack.c.l.b16 %v153
  %v1021 = vunpack.c.h.b16 %v153
  %v1022 = vunpack.c.l.b16 %v154
  %v1023 = vunpack.c.h.b16 %v154
  %v1024 = vunpack.c.l.b16 %v155
  %v1025 = vunpack.c.h.b16 %v155
  %v1026 = vunpack.c.l.b16 %v156
  %v1027 = vunpack.c.h.b16 %v156
  %v1028 = vunpack.c.l.b16 %v157
  %v1029 = vunpack.c.h.b16 %v157
  %v1030 = vunpack.c.l.b16 %v158
  %v1031 = vunpack.c.h.b16 %v158
  %v1032 = vunpack.c.l.b16 %v159
  %v1033 = vunpack.c.h.b16 %v159
  %v1034 = vunpack.c.l.b16 %v160
  %v1035 = vunpack.c.h.b16 %v160
  %v1036 = vunpack.c.l.b16 %v161
  %v1037 = vunpack.c.h.b16 %v161
  %v1038 = vunpack.c.l.b16 %v162
  %v1039 = vunpack.c.h.b16 %v162
  %v1040 = vunpack.c.l.b16 %v163
  %v1041 = vunpack.c.h.b16 %v163
  %v1042 = vunpack.c.l.b16 %v164
  %v1043 = vunpack.c.h.b16 %v164
  %v1044 = vunpack.c.l.b16 %v165
  %v1045 = vunpack.c.h.b16 %v165
  %v1046 = vunpack.c.l.b16 %v166
  %v1047 = vunpack.c.h.b16 %v166
  %v1048 = vunpack.c.l.b16 %v167
  %v1049 = vunpack.c.h.b16 %v167
  %v1050 = vunpack.c.l.b16 %v168
  %v1051 = vunpack.c.h.b16 %v168
  %v1052 = vunpack.c.l.b16 %v169
  %v1053 = vunpack.c.h.b16 %v169
  %v1054 = vunpack.c.l.b16 %v170
  %v1055 = vunpack.c.h.b16 %v170
  %v1056 = vunpack.c.l.b16 %v171
  %v1057 = vunpack.c.h.b16 %v171
  %v1058 = vunpack.c.l.b16 %v172
  %v1059 = vunpack.c.h.b16 %v172
  %v1060 = vunpack.c.l.b16 %v173
  %v1061 = vunpack.c.h.b16 %v173
  %v1062 = vunpack.c.l.b16 %v174
  %v1063 = vunpack.c.h.b16 %v174
  %v1064 = vunpack.c.l.b16 %v175
  %v1065 = vunpack.c.h.b16 %v175
  %v1066 = vunpack.c.l.b16 %v176
  %v1067 = vunpack.c.h.b16 %v176
  %v1068 = vunpack.c.l.b16 %v177
  %v1069 = vunpack.c.h.b16 %v177
  %v1070 = vunpack.c.l.b16 %v178
  %v1071 = vunpack.c.h.b16 %v178
  %v1072 = vunpack.c.l.b16 %v179
  %v1073 = vunpack.c.h.b16 %v179
  %v1074 = vunpack.c.l.b16 %v180
  %v1075 = vunpack.c.h.b16 %v180
  %v1076 = vunpack.c.l.b16 %v181
  %v1077 = vunpack.c.h.b16 %v181
  %v1078 = vunpack.c.l.b16 %v182
  %v1079 = vunpack.c.h.b16 %v182
  %v1080 = vunpack.c.l.b16 %v183
  %v1081 = vunpack.c.h.b16 %v183
  %v1082 = vunpack.c.l.b16 %v184
  %v1083 = vunpack.c.h.b16 %v184
  %v1084 = vunpack.c.l.b16 %v185
  %v1085 = vunpack.c.h.b16 %v185
  %v1086 = vunpack.c.l.b16 %v186
  %v1087 = vunpack.c.h.b16 %v186
  %v1088 = vunpack.c.l.b16 %v187
  %v1089 = vunpack.c.h.b16 %v187
  %v1090 = vunpack.c.l.b16 %v188
  %v1091 = vunpack.c.h.b16 %v188
  %v1092 = vunpack.c.l.b16 %v189
  %v1093 = vunpack.c.h.b16 %v189
  %v1094 = vunpack.c.l.b16 %v190
  %v1095 = vunpack.c.h.b16 %v190
  %v1096 = vunpack.c.l.b16 %v191
  %v1097 = vunpack.c.h.b16 %v191
  %v1098 = vunpack.c.l.b16 %v192
  %v1099 = vunpack.c.h.b16 %v192
  %v1100 = vunpack.c.l.b16 %v193
  %v1101 = vunpack.c.h.b16 %v193
  %v1102 = vunpack.c.l.b16 %v194
  %v1103 = vunpack.c.h.b16 %v194
  %v1104 = vunpack.c.l.b16 %v195
  %v1105 = vunpack.c.h.b16 %v195
  %v1106 = vunpack.c.l.b16 %v196
  %v1107 = vunpack.c.h.b16 %v196
  %v1108 = vunpack.c.l.b16 %v197
  %v1109 = vunpack.c.h.b16 %v197
  %v1110 = vunpack.c.l.b16 %v198
  %v1111 = vunpack.c.h.b16 %v198
  %v1112 = vunpack.c.l.b16 %v199
  %v1113 = vunpack.c.h.b16 %v199
  %v1114 = vunpack.c.l.b16 %v200
  %v1115 = vunpack.c.h.b16 %v200
  %v1116 = vunpack.c.l.b16 %v201
  %v1117 = vunpack.c.h.b16 %v201
  %v1118 = vunpack.c.l.b16 %v202
  %v1119 = vunpack.c.h.b16 %v202
  %v1120 = vunpack.c.l.b16 %v203
  %v1121 = vunpack.c.h.b16 %v203
  %v1122 = vunpack.c.l.b16 %v204
  %v1123 = vunpack.c.h.b16 %v204
  %v1124 = vunpack.c.l.b16 %v205
  %v1125 = vunpack.c.h.b16 %v205
  %v1126 = vunpack.c.l.b16 %v206
  %v1127 = vunpack.c.h.b16 %v206
  %v1128 = vunpack.c.l.b16 %v207
  %v1129 = vunpack.c.h.b16 %v207
  %v1130 = vunpack.c.l.b16 %v208
  %v1131 = vunpack.c.h.b16 %v208
  %v1132 = vunpack.c.l.b16 %v209
  %v1133 = vunpack.c.h.b16 %v209
  %v1134 = vunpack.c.l.b16 %v210
  %v1135 = vunpack.c.h.b16 %v210
  %v1136 = vunpack.c.l.b16 %v211
  %v1137 = vunpack.c.h.b16 %v211
  %v1138 = vunpack.c.l.b16 %v212
  %v1139 = vunpack.c.h.b16 %v212
  %v1140 = vunpack.c.l.b16 %v213
  %v1141 = vunpack.c.h.b16 %v213
  %v1142 = vunpack.c.l.b16 %v214
  %v1143 = vunpack.c.h.b16 %v214
  %v1144 = vunpack.c.l.b16 %v215
  %v1145 = vunpack.c.h.b16 %v215
  %v1146 = vunpack.c.l.b16 %v216
  %v1147 = vunpack.c.h.b16 %v216
  %v1148 = vunpack.c.l.b16 %v217
  %v1149 = vunpack.c.h.b16 %v217
  %v1150 = vunpack.c.l.b16 %v218
  %v1151 = vunpack.c.h.b16 %v218
  %v1152 = vunpack.c.l.b16 %v219
  %v1153 = vunpack.c.h.b16 %v219
  %v1154 = vunpack.c.l.b16 %v220
  %v1155 = vunpack.c.h.b16 %v220
  %v1156 = vunpack.c.l.b16 %v221
  %v1157 = vunpack.c.h.b16 %v221
  %v1158 = vunpack.c.l.b16 %v222
  %v1159 = vunpack.c.h.b16 %v222
  %v1160 = vunpack.c.l.b16 %v223
  %v1161 = vunpack.c.h.b16 %v223
  %v1162 = vunpack.c.l.b16 %v224
  %v1163 = vunpack.c.h.b16 %v224
  %v1164 = vunpack.c.l.b16 %v225
  %v1165 = vunpack.c.h.b16 %v225
  %v1166 = vunpack.c.l.b16 %v226
  %v1167 = vunpack.c.h.b16 %v226
  %v1168 = vunpack.c.l.b16 %v227
  %v1169 = vunpack.c.h.b16 %v227
  %v1170 = vunpack.c.l.b16 %v228
  %v1171 = vunpack.c.h.b16 %v228
  %v1172 = vunpack.c.l.b16 %v229
  %v1173 = vunpack.c.h.b16 %v229
  %v1174 = vunpack.c.l.b16 %v230
  %v1175 = vunpack.c.h.b16 %v230
  %v1176 = vunpack.c.l.b16 %v231
  %v1177 = vunpack.c.h.b16 %v231
  %v1178 = vunpack.c.l.b16 %v232
  %v1179 = vunpack.c.h.b16 %v232
  %v1180 = vunpack.c.l.b16 %v233
  %v1181 = vunpack.c.h.b16 %v233
  %v1182 = vunpack.c.l.b16 %v234
  %v1183 = vunpack.c.h.b16 %v234
  %v1184 = vunpack.c.l.b16 %v235
  %v1185 = vunpack.c.h.b16 %v235
  %v1186 = vunpack.c.l.b16 %v236
  %v1187 = vunpack.c.h.b16 %v236
  %v1188 = vunpack.c.l.b16 %v237
  %v1189 = vunpack.c.h.b16 %v237
  %v1190 = vunpack.c.l.b16 %v238
  %v1191 = vunpack.c.h.b16 %v238
  %v1192 = vunpack.c.l.b16 %v239
  %v1193 = vunpack.c.h.b16 %v239
  %v1194 = vpack.c.b16 %v762, %v744
  %v1195 = vpack.c.b16 %v763, %v745
  %v1196 = vpack.c.b16 %v764, %v746
  %v1197 = vpack.c.b16 %v765, %v747
  %v1198 = vpack.c.b16 %v766, %v748
  %v1199 = vpack.c.b16 %v767, %v749
  %v1200 = vpack.c.b16 %v768, %v750
  %v1201 = vpack.c.b16 %v769, %v751
  %v1202 = vpack.c.b16 %v770, %v752
  %v1203 = vpack.c.b16 %v771, %v753
  %v1204 = vpack.c.b16 %v772, %v754
  %v1205 = vpack.c.b16 %v773, %v755
  %v1206 = vpack.c.b16 %v774, %v756
  %v1207 = vpack.c.b16 %v775, %v757
  %v1208 = vpack.c.b16 %v776, %v758
  %v1209 = vpack.c.b16 %v777, %v759
  %v1210 = vpack.c.b16 %v778, %v760
  %v1211 = vpack.c.b16 %v779, %v761
  %v1212 = vpack.c.b16 %v798, %v780
  %v1213 = vpack.c.b16 %v799, %v781
  %v1214 = vpack.c.b16 %v800, %v782
  %v1215 = vpack.c.b16 %v801, %v783
  %v1216 = vpack.c.b16 %v802, %v784
  %v1217 = vpack.c.b16 %v803, %v785
  %v1218 = vpack.c.b16 %v804, %v786
  %v1219 = vpack.c.b16 %v805, %v787
  %v1220 = vpack.c.b16 %v806, %v788
  %v1221 = vpack.c.b16 %v807, %v789
  %v1222 = vpack.c.b16 %v808, %v790
  %v1223 = vpack.c.b16 %v809, %v791
  %v1224 = vpack.c.b16 %v810, %v792
  %v1225 = vpack.c.b16 %v811, %v793
  %v1226 = vpack.c.b16 %v812, %v794
  %v1227 = vpack.c.b16 %v813, %v795
  %v1228 = vpack.c.b16 %v814, %v796
  %v1229 = vpack.c.b16 %v815, %v797
  %v1230 = vpack.c.b16 %v834, %v816
  %v1231 = vpack.c.b16 %v835, %v817
  %v1232 = vpack.c.b16 %v836, %v818
  %v1233 = vpack.c.b16 %v837, %v819
  %v1234 = vpack.c.b16 %v838, %v820
  %v1235 = vpack.c.b16 %v839, %v821
  %v1236 = vpack.c.b16 %v840, %v822
  %v1237 = vpack.c.b16 %v841, %v823
  %v1238 = vpack.c.b16 %v842, %v824
  %v1239 = vpack.c.b16 %v843, %v825
  %v1240 = vpack.c.b16 %v844, %v826
  %v1241 = vpack.c.b16 %v845, %v827
  %v1242 = vpack.c.b16 %v846, %v828
  %v1243 = vpack.c.b16 %v847, %v829
  %v1244 = vpack.c.b16 %v848, %v830
  %v1245 = vpack.c.b16 %v849, %v831
  %v1246 = vpack.c.b16 %v850, %v832
  %v1247 = vpack.c.b16 %v851, %v833
  %v1248 = vpack.c.b16 %v870, %v852
  %v1249 = vpack.c.b16 %v871, %v853
  %v1250 = vpack.c.b16 %v872, %v854
  %v1251 = vpack.c.b16 %v873, %v855
  %v1252 = vpack.c.b16 %v874, %v856
  %v1253 = vpack.c.b16 %v875, %v857
  %v1254 = vpack.c.b16 %v876, %v858
  %v1255 = vpack.c.b16 %v877, %v859
  %v1256 = vpack.c.b16 %v878, %v860
  %v1257 = vpack.c.b16 %v879, %v861
  %v1258 = vpack.c.b16 %v880, %v862
  %v1259 = vpack.c.b16 %v881, %v863
  %v1260 = vpack.c.b16 %v882, %v864
  %v1261 = vpack.c.b16 %v883, %v865
  %v1262 = vpack.c.b16 %v884, %v866
  %v1263 = vpack.c.b16 %v885, %v867
  %v1264 = vpack.c.b16 %v886, %v868
  %v1265 = vpack.c.b16 %v887, %v869
  %v1266 = vpack.c.b16 %v906, %v888
  %v1267 = vpack.c.b16 %v907, %v889
  %v1268 = vpack.c.b16 %v908, %v890
  %v1269 = vpack.c.b16 %v909, %v891
  %v1270 = vpack.c.b16 %v910, %v892
  %v1271 = vpack.c.b16 %v911, %v893
  %v1272 = vpack.c.b16 %v912, %v894
  %v1273 = vpack.c.b16 %v913, %v895
  %v1274 = vpack.c.b16 %v914, %v896
  %v1275 = vpack.c.b16 %v915, %v897
  %v1276 = vpack.c.b16 %v916, %v898
  %v1277 = vpack.c.b16 %v917, %v899
  %v1278 = vpack.c.b16 %v918, %v900
  %v1279 = vpack.c.b16 %v919, %v901
  %v1280 = vpack.c.b16 %v920, %v902
  %v1281 = vpack.c.b16 %v921, %v903
  %v1282 = vpack.c.b16 %v922, %v904
  %v1283 = vpack.c.b16 %v923, %v905
  %v1284 = vpack.c.b16 %v942, %v924
  %v1285 = vpack.c.b16 %v943, %v925
  %v1286 = vpack.c.b16 %v944, %v926
  %v1287 = vpack.c.b16 %v945, %v927
  %v1288 = vpack.c.b16 %v946, %v928
  %v1289 = vpack.c.b16 %v947, %v929
  %v1290 = vpack.c.b16 %v948, %v930
  %v1291 = vpack.c.b16 %v949, %v931
  %v1292 = vpack.c.b16 %v950, %v932
  %v1293 = vpack.c.b16 %v951, %v933
  %v1294 = vpack.c.b16 %v952, %v934
  %v1295 = vpack.c.b16 %v953, %v935
  %v1296 = vpack.c.b16 %v954, %v936
  %v1297 = vpack.c.b16 %v955, %v937
  %v1298 = vpack.c.b16 %v956, %v938
  %v1299 = vpack.c.b16 %v957, %v939
  %v1300 = vpack.c.b16 %v958, %v940
  %v1301 = vpack.c.b16 %v959, %v941
  %v1302 = vpack.c.b16 %v978, %v960
  %v1303 = vpack.c.b16 %v979, %v961
  %v1304 = vpack.c.b16 %v980, %v962
  %v1305 = vpack.c.b16 %v981, %v963
  %v1306 = vpack.c.b16 %v982, %v964
  %v1307 = vpack.c.b16 %v983, %v965
  %v1308 = vpack.c.b16 %v984, %v966
  %v1309 = vpack.c.b16 %v985, %v967
  %v1310 = vpack.c.b16 %v986, %v968
  %v1311 = vpack.c.b16 %v987, %v969
  %v1312 = vpack.c.b16 %v988, %v970
  %v1313 = vpack.c.b16 %v989, %v971
  %v1314 = vpack.c.b16 %v990, %v972
  %v1315 = vpack.c.b16 %v991, %v973
  %v1316 = vpack.c.b16 %v992, %v974
  %v1317 = vpack.c.b16 %v993, %v975
  %v1318 = vpack.c.b16 %v994, %v976
  %v1319 = vpack.c.b16 %v995, %v977
  %v1320 = vpack.c.b16 %v1014, %v996
  %v1321 = vpack.c.b16 %v1015, %v997
  %v1322 = vpack.c.b16 %v1016, %v998
  %v1323 = vpack.c.b16 %v1017, %v999
  %v1324 = vpack.c.b16 %v1018, %v1000
  %v1325 = vpack.c.b16 %v1019, %v1001
  %v1326 = vpack.c.b16 %v1020, %v1002
  %v1327 = vpack.c.b16 %v1021, %v1003
  %v1328 = vpack.c.b16 %v1022, %v1004
  %v1329 = vpack.c.b16 %v1023, %v1005
  %v1330 = vpack.c.b16 %v1024, %v1006
  %v1331 = vpack.c.b16 %v1025, %v1007
  %v1332 = vpack.c.b16 %v1026, %v1008
  %v1333 = vpack.c.b16 %v1027, %v1009
  %v1334 = vpack.c.b16 %v1028, %v1010
  %v1335 = vpack.c.b16 %v1029, %v1011
  %v1336 = vpack.c.b16 %v1030, %v1012
  %v1337 = vpack.c.b16 %v1031, %v1013
  %v1338 = vpack.c.b16 %v1050, %v1032
  %v1339 = vpack.c.b16 %v1051, %v1033
  %v1340 = vpack.c.b16 %v1052, %v1034
  %v1341 = vpack.c.b16 %v1053, %v1035
  %v1342 = vpack.c.b16 %v1054, %v1036
  %v1343 = vpack.c.b16 %v1055, %v1037
  %v1344 = vpack.c.b16 %v1056, %v1038
  %v1345 = vpack.c.b16 %v1057, %v1039
  %v1346 = vpack.c.b16 %v1058, %v1040
  %v1347 = vpack.c.b16 %v1059, %v1041
  %v1348 = vpack.c.b16 %v1060, %v1042
  %v1349 = vpack.c.b16 %v1061, %v1043
  %v1350 = vpack.c.b16 %v1062, %v1044
  %v1351 = vpack.c.b16 %v1063, %v1045
  %v1352 = vpack.c.b16 %v1064, %v1046
  %v1353 = vpack.c.b16 %v1065, %v1047
  %v1354 = vpack.c.b16 %v1066, %v1048
  %v1355 = vpack.c.b16 %v1067, %v1049
  %v1356 = vpack.c.b16 %v1086, %v1068
  %v1357 = vpack.c.b16 %v1087, %v1069
  %v1358 = vpack.c.b16 %v1088, %v1070
  %v1359 = vpack.c.b16 %v1089, %v1071
  %v1360 = vpack.c.b16 %v1090, %v1072
  %v1361 = vpack.c.b16 %v1091, %v1073
  %v1362 = vpack.c.b16 %v1092, %v1074
  %v1363 = vpack.c.b16 %v1093, %v1075
  %v1364 = vpack.c.b16 %v1094, %v1076
  %v1365 = vpack.c.b16 %v1095, %v1077
  %v1366 = vpack.c.b16 %v1096, %v1078
  %v1367 = vpack.c.b16 %v1097, %v1079
  %v1368 = vpack.c.b16 %v1098, %v1080
  %v1369 = vpack.c.b16 %v1099, %v1081
  %v1370 = vpack.c.b16 %v1100, %v1082
  %v1371 = vpack.c.b16 %v1101, %v1083
  %v1372 = vpack.c.b16 %v1102, %v1084
  %v1373 = vpack.c.b16 %v1103, %v1085
  %v1374 = vpack.c.b16 %v1122, %v1104
  %v1375 = vpack.c.b16 %v1123, %v1105
  %v1376 = vpack.c.b16 %v1124, %v1106
  %v1377 = vpack.c.b16 %v1125, %v1107
  %v1378 = vpack.c.b16 %v1126, %v1108
  %v1379 = vpack.c.b16 %v1127, %v1109
  %v1380 = vpack.c.b16 %v1128, %v1110
  %v1381 = vpack.c.b16 %v1129, %v1111
  %v1382 = vpack.c.b16 %v1130, %v1112
  %v1383 = vpack.c.b16 %v1131, %v1113
  %v1384 = vpack.c.b16 %v1132, %v1114
  %v1385 = vpack.c.b16 %v1133, %v1115
  %v1386 = vpack.c.b16 %v1134, %v1116
  %v1387 = vpack.c.b16 %v1135, %v1117
  %v1388 = vpack.c.b16 %v1136, %v1118
  %v1389 = vpack.c.b16 %v1137, %v1119
  %v1390 = vpack.c.b16 %v1138, %v1120
  %v1391 = vpack.c.b16 %v1139, %v1121
  %v1392 = vpack.c.b16 %v1158, %v1140
  %v1393 = vpack.c.b16 %v1159, %v1141
  %v1394 = vpack.c.b16 %v1160, %v1142
  %v1395 = vpack.c.b16 %v1161, %v1143
  %v1396 = vpack.c.b16 %v1162, %v1144
  %v1397 = vpack.c.b16 %v1163, %v1145
  %v1398 = vpack.c.b16 %v1164, %v1146
  %v1399 = vpack.c.b16 %v1165, %v1147
  %v1400 = vpack.c.b16 %v1166, %v1148
  %v1401 = vpack.c.b16 %v1167, %v1149
  %v1402 = vpack.c.b16 %v1168, %v1150
  %v1403 = vpack.c.b16 %v1169, %v1151
  %v1404 = vpack.c.b16 %v1170, %v1152
  %v1405 = vpack.c.b16 %v1171, %v1153
  %v1406 = vpack.c.b16 %v1172, %v1154
  %v1407 = vpack.c.b16 %v1173, %v1155
  %v1408 = vpack.c.b16 %v1174, %v1156
  %v1409 = vpack.c.b16 %v1175, %v1157
  %v1410 = vpack.c.b16 %v1176, %v1176
  %v1411 = vpack.c.b16 %v1177, %v1177
  %v1412 = vpack.c.b16 %v1178, %v1178
  %v1413 = vpack.c.b16 %v1179, %v1179
  %v1414 = vpack.c.b16 %v1180, %v1180
  %v1415 = vpack.c.b16 %v1181, %v1181
  %v1416 = vpack.c.b16 %v1182, %v1182
  %v1417 = vpack.c.b16 %v1183, %v1183
  %v1418 = vpack.c.b16 %v1184, %v1184
  %v1419 = vpack.c.b16 %v1185, %v1185
  %v1420 = vpack.c.b16 %v1186, %v1186
  %v1421 = vpack.c.b16 %v1187, %v1187
  %v1422 = vpack.c.b16 %v1188, %v1188
  %v1423 = vpack.c.b16 %v1189, %v1189
  %v1424 = vpack.c.b16 %v1190, %v1190
  %v1425 = vpack.c.b16 %v1191, %v1191
  %v1426 = vpack.c.b16 %v1192, %v1192
  %v1427 = vpack.c.b16 %v1193, %v1193
  %v1924 = vunpack.c.l.b16 %v240
  %v1925 = vunpack.c.l.b16 %v241
  %v1926 = vunpack.c.l.b16 %v242
  %v1927 = vunpack.c.l.b16 %v243
  %v1928 = vunpack.c.l.b16 %v244
  %v1929 = vunpack.c.l.b16 %v245
  %v1930 = vunpack.c.l.b16 %v246
  %v1931 = vunpack.c.l.b16 %v247
  %v1932 = vunpack.c.l.b16 %v248
  %v1933 = vunpack.c.l.b16 %v249
  %v1934 = vunpack.c.l.b16 %v250
  %v1935 = vunpack.c.l.b16 %v251
  %v1936 = vunpack.c.l.b16 %v252
  %v1937 = vunpack.c.l.b16 %v253
  %v1938 = vunpack.c.l.b16 %v254
  %v1939 = vunpack.c.l.b16 %v255
  %v1940 = vunpack.c.l.b16 %v256
  %v1941 = vunpack.c.l.b16 %v257
  %v1942 = vunpack.c.l.b16 %v258
  %v1943 = vunpack.c.l.b16 %v259
  %v1944 = vunpack.c.l.b16 %v260
  %v1945 = vunpack.c.l.b16 %v261
  %v1946 = vunpack.c.l.b16 %v262
  %v1947 = vunpack.c.l.b16 %v263
  %v1948 = vunpack.c.l.b16 %v264
  %v1949 = vunpack.c.l.b16 %v265
  %v1950 = vunpack.c.l.b16 %v266
  %v1951 = vunpack.c.l.b16 %v267
  %v1952 = vunpack.c.l.b16 %v268
  %v1953 = vunpack.c.l.b16 %v269
  %v1954 = vunpack.c.l.b16 %v270
  %v1955 = vunpack.c.l.b16 %v271
  %v1956 = vunpack.c.l.b16 %v272
  %v1957 = vunpack.c.l.b16 %v273
  %v1958 = vunpack.c.l.b16 %v274
  %v1959 = vunpack.c.l.b16 %v275
  %v1960 = vunpack.c.l.b16 %v276
  %v1961 = vunpack.c.l.b16 %v277
  %v1962 = vunpack.c.l.b16 %v278
  %v1963 = vunpack.c.l.b16 %v279
  %v1964 = vunpack.c.l.b16 %v280
  %v1965 = vunpack.c.l.b16 %v281
  %v1966 = vunpack.c.l.b16 %v282
  %v1967 = vunpack.c.l.b16 %v283
  %v1968 = vunpack.c.l.b16 %v284
  %v1969 = vunpack.c.l.b16 %v285
  %v1970 = vunpack.c.l.b16 %v286
  %v1971 = vunpack.c.l.b16 %v287
  %v1972 = vunpack.c.l.b16 %v288
  %v1973 = vunpack.c.l.b16 %v289
  %v1974 = vunpack.c.l.b16 %v290
  %v1975 = vunpack.c.l.b16 %v291
  %v1976 = vunpack.c.l.b16 %v292
  %v1977 = vunpack.c.l.b16 %v293
  %v1978 = vunpack.c.l.b16 %v294
  %v1979 = vunpack.c.l.b16 %v295
  %v1980 = vunpack.c.l.b16 %v296
  %v1981 = vunpack.c.l.b16 %v297
  %v1982 = vunpack.c.l.b16 %v298
  %v1983 = vunpack.c.l.b16 %v299
  %v1984 = vunpack.c.l.b16 %v300
  %v1985 = vunpack.c.l.b16 %v301
  %v1986 = vunpack.c.l.b16 %v302
  %v1987 = vunpack.c.l.b16 %v303
  %v1988 = vunpack.c.l.b16 %v304
  %v1989 = vunpack.c.l.b16 %v305
  %v1990 = vunpack.c.l.b16 %v306
  %v1991 = vunpack.c.l.b16 %v307
  %v1992 = vunpack.c.l.b16 %v308
  %v1993 = vunpack.c.l.b16 %v309
  %v1994 = vunpack.c.l.b16 %v310
  %v1995 = vunpack.c.l.b16 %v311
  %v1996 = vunpack.c.l.b16 %v312
  %v1997 = vunpack.c.l.b16 %v313
  %v1998 = vunpack.c.l.b16 %v314
  %v1999 = vunpack.c.l.b16 %v315
  %v2000 = vunpack.c.l.b16 %v316
  %v2001 = vunpack.c.l.b16 %v317
  %v2002 = vunpack.c.l.b16 %v318
  %v2003 = vunpack.c.l.b16 %v319
  %v2004 = vunpack.c.l.b16 %v320
  %v2005 = vunpack.c.l.b16 %v321
  %v2006 = vunpack.c.l.b16 %v322
  %v2007 = vunpack.c.l.b16 %v323
  %v2008 = vunpack.c.l.b16 %v324
  %v2009 = vunpack.c.l.b16 %v325
  %v2010 = vunpack.c.l.b16 %v326
  %v2011 = vunpack.c.l.b16 %v327
  %v2012 = vunpack.c.l.b16 %v328
  %v2013 = vunpack.c.l.b16 %v329
  %v2014 = vunpack.c.l.b16 %v330
  %v2015 = vunpack.c.l.b16 %v331
  %v2016 = vunpack.c.l.b16 %v332
  %v2017 = vunpack.c.l.b16 %v333
  %v2018 = vunpack.c.l.b16 %v334
  %v2019 = vunpack.c.l.b16 %v335
  %v2020 = vunpack.c.l.b16 %v336
  %v2021 = vunpack.c.l.b16 %v337
  %v2022 = vunpack.c.l.b16 %v338
  %v2023 = vunpack.c.l.b16 %v339
  %v2024 = vunpack.c.l.b16 %v340
  %v2025 = vunpack.c.l.b16 %v341
  %v2026 = vunpack.c.l.b16 %v342
  %v2027 = vunpack.c.l.b16 %v343
  %v2028 = vunpack.c.l.b16 %v344
  %v2029 = vunpack.c.l.b16 %v345
  %v2030 = vunpack.c.l.b16 %v346
  %v2031 = vunpack.c.l.b16 %v347
  %v2032 = vunpack.c.l.b16 %v348
  %v2033 = vunpack.c.l.b16 %v349
  %v2034 = vunpack.c.l.b16 %v350
  %v2035 = vunpack.c.l.b16 %v351
  %v2036 = vunpack.c.l.b16 %v352
  %v2037 = vunpack.c.l.b16 %v353
  %v2038 = vunpack.c.l.b16 %v354
  %v2039 = vunpack.c.l.b16 %v355
  %v2040 = vunpack.c.l.b16 %v356
  %v2041 = vunpack.c.l.b16 %v357
  %v2042 = vunpack.c.l.b16 %v358
  %v2043 = vunpack.c.l.b16 %v359
  %v2044 = vunpack.c.l.b16 %v360
  %v2045 = vunpack.c.l.b16 %v361
  %v2046 = vunpack.c.l.b16 %v362
  %v2047 = vunpack.c.l.b16 %v363
  %v2048 = vunpack.c.l.b16 %v364
  %v2049 = vunpack.c.l.b16 %v365
  %v2050 = vunpack.c.l.b16 %v366
  %v2051 = vunpack.c.l.b16 %v367
  %v2052 = vunpack.c.l.b16 %v368
  %v2053 = vunpack.c.l.b16 %v369
  %v2054 = vunpack.c.l.b16 %v370
  %v2055 = vunpack.c.l.b16 %v371
  %v2056 = vunpack.c.l.b16 %v372
  %v2057 = vunpack.c.l.b16 %v373
  %v2058 = vunpack.c.l.b16 %v374
  %v2059 = vunpack.c.l.b16 %v375
  %v2060 = vunpack.c.l.b16 %v376
  %v2061 = vunpack.c.l.b16 %v377
  %v2062 = vunpack.c.l.b16 %v378
  %v2063 = vunpack.c.l.b16 %v379
  %v2064 = vunpack.c.l.b16 %v380
  %v2065 = vunpack.c.l.b16 %v381
  %v2066 = vunpack.c.l.b16 %v382
  %v2067 = vunpack.c.l.b16 %v383
  %v2068 = vunpack.c.l.b16 %v384
  %v2069 = vunpack.c.l.b16 %v385
  %v2070 = vunpack.c.l.b16 %v386
  %v2071 = vunpack.c.l.b16 %v387
  %v2072 = vunpack.c.l.b16 %v388
  %v2073 = vunpack.c.l.b16 %v389
  %v2074 = vunpack.c.l.b16 %v390
  %v2075 = vunpack.c.l.b16 %v391
  %v2076 = vunpack.c.l.b16 %v392
  %v2077 = vunpack.c.l.b16 %v393
  %v2078 = vunpack.c.l.b16 %v394
  %v2079 = vunpack.c.l.b16 %v395
  %v2080 = vunpack.c.l.b16 %v396
  %v2081 = vunpack.c.l.b16 %v397
  %v2082 = vunpack.c.l.b16 %v398
  %v2083 = vunpack.c.l.b16 %v399
  %v2084 = vunpack.c.l.b16 %v400
  %v2085 = vunpack.c.l.b16 %v401
  %v2086 = vunpack.c.l.b16 %v402
  %v2087 = vunpack.c.l.b16 %v403
  %v2088 = vunpack.c.l.b16 %v404
  %v2089 = vunpack.c.l.b16 %v405
  %v2090 = vunpack.c.l.b16 %v406
  %v2091 = vunpack.c.l.b16 %v407
  %v2092 = vunpack.c.l.b16 %v408
  %v2093 = vunpack.c.l.b16 %v409
  %v2094 = vunpack.c.l.b16 %v410
  %v2095 = vunpack.c.l.b16 %v411
  %v2096 = vunpack.c.l.b16 %v412
  %v2097 = vunpack.c.l.b16 %v413
  %v2098 = vunpack.c.l.b16 %v414
  %v2099 = vunpack.c.l.b16 %v415
  %v2100 = vunpack.c.l.b16 %v416
  %v2101 = vunpack.c.l.b16 %v417
  %v2102 = vunpack.c.l.b16 %v418
  %v2103 = vunpack.c.l.b16 %v419
  %v2104 = vunpack.c.l.b16 %v420
  %v2105 = vunpack.c.l.b16 %v421
  %v2106 = vunpack.c.l.b16 %v422
  %v2107 = vunpack.c.l.b16 %v423
  %v2108 = vunpack.c.l.b16 %v424
  %v2109 = vunpack.c.l.b16 %v425
  %v2110 = vunpack.c.l.b16 %v426
  %v2111 = vunpack.c.l.b16 %v427
  %v2112 = vunpack.c.l.b16 %v428
  %v2113 = vunpack.c.l.b16 %v429
  %v2114 = vunpack.c.l.b16 %v430
  %v2115 = vunpack.c.l.b16 %v431
  %v2116 = vunpack.c.l.b16 %v432
  %v2117 = vunpack.c.l.b16 %v433
  %v2118 = vunpack.c.l.b16 %v434
  %v2119 = vunpack.c.l.b16 %v435
  %v2120 = vunpack.c.l.b16 %v436
  %v2121 = vunpack.c.l.b16 %v437
  %v2122 = vunpack.c.l.b16 %v438
  %v2123 = vunpack.c.l.b16 %v439
  %v2124 = vunpack.c.l.b16 %v440
  %v2125 = vunpack.c.l.b16 %v441
  %v2126 = vunpack.c.l.b16 %v442
  %v2127 = vunpack.c.l.b16 %v443
  %v2128 = vunpack.c.l.b16 %v444
  %v2129 = vunpack.c.l.b16 %v445
  %v2130 = vunpack.c.l.b16 %v446
  %v2131 = vunpack.c.l.b16 %v447
  %v2132 = vunpack.c.l.b16 %v448
  %v2133 = vunpack.c.l.b16 %v449
  %v2134 = vunpack.c.l.b16 %v450
  %v2135 = vunpack.c.l.b16 %v451
  %v2136 = vunpack.c.l.b16 %v452
  %v2137 = vunpack.c.l.b16 %v453
  %v2138 = vunpack.c.l.b16 %v454
  %v2139 = vunpack.c.l.b16 %v455
  %v2140 = vunpack.c.l.b16 %v456
  %v2141 = vunpack.c.l.b16 %v457
  %v2142 = vunpack.c.l.b16 %v458
  %v2143 = vunpack.c.l.b16 %v459
  %v2144 = vunpack.c.l.b16 %v460
  %v2145 = vunpack.c.l.b16 %v461
  %v2146 = vunpack.c.l.b16 %v462
  %v2147 = vunpack.c.l.b16 %v463
  %v2148 = vunpack.c.l.b16 %v464
  %v2149 = vunpack.c.l.b16 %v465
  %v2150 = vunpack.c.l.b16 %v466
  %v2151 = vunpack.c.l.b16 %v467
  %v2152 = vunpack.c.l.b16 %v468
  %v2153 = vunpack.c.l.b16 %v469
  %v2154 = vunpack.c.l.b16 %v470
  %v2155 = vunpack.c.l.b16 %v471
  %v2156 = vunpack.c.l.b16 %v472
  %v2157 = vunpack.c.l.b16 %v473
  %v2158 = vunpack.c.l.b16 %v474
  %v2159 = vunpack.c.l.b16 %v475
  %v2160 = vunpack.c.l.b16 %v476
  %v2161 = vunpack.c.l.b16 %v477
  %v2162 = vunpack.c.l.b16 %v478
  %v2163 = vunpack.c.l.b16 %v479
  %v2164 = vunpack.c.l.b16 %v480
  %v2165 = vunpack.c.l.b16 %v481
  %v2166 = vunpack.c.l.b16 %v482
  %v2167 = vunpack.c.l.b16 %v483
  %v2168 = vunpack.c.l.b16 %v484
  %v2169 = vunpack.c.l.b16 %v485
  %v2170 = vunpack.c.l.b16 %v486
  %v2171 = vunpack.c.l.b16 %v487
  %v2172 = vunpack.c.l.b16 %v488
  %v2173 = vunpack.c.l.b16 %v489
  %v2174 = vunpack.c.l.b16 %v490
  %v2175 = vunpack.c.l.b16 %v491
  %v2176 = vunpack.c.l.b16 %v492
  %v2177 = vunpack.c.l.b16 %v493
  %v2178 = vunpack.c.l.b16 %v494
  %v2179 = vunpack.c.l.b16 %v495
  %v2180 = vunpack.c.l.b16 %v496
  %v2181 = vunpack.c.l.b16 %v497
  %v2182 = vunpack.c.l.b16 %v498
  %v2183 = vunpack.c.l.b16 %v499
  %v2184 = vunpack.c.l.b16 %v500
  %v2185 = vunpack.c.l.b16 %v501
  %v2186 = vunpack.c.l.b16 %v502
  %v2187 = vunpack.c.l.b16 %v503
  %v2188 = vunpack.c.l.b16 %v504
  %v2189 = vunpack.c.l.b16 %v505
  %v2190 = vunpack.c.l.b16 %v506
  %v2191 = vunpack.c.l.b16 %v507
  %v2192 = vunpack.c.l.b16 %v508
  %v2193 = vunpack.c.l.b16 %v509
  %v2194 = vunpack.c.l.b16 %v510
  %v2195 = vunpack.c.l.b16 %v511
  %v2196 = vunpack.c.l.b16 %v512
  %v2197 = vunpack.c.l.b16 %v513
  %v2198 = vunpack.c.l.b16 %v514
  %v2199 = vpack.c.b16 %v1925, %v1924
  %v2200 = vpack.c.b16 %v1927, %v1926
  %v2201 = vpack.c.b16 %v1929, %v1928
  %v2202 = vpack.c.b16 %v1931, %v1930
  %v2203 = vpack.c.b16 %v1933, %v1932
  %v2204 = vpack.c.b16 %v1935, %v1934
  %v2205 = vpack.c.b16 %v1937, %v1936
  %v2206 = vpack.c.b16 %v1939, %v1938
  %v2207 = vpack.c.b16 %v1941, %v1940
  %v2208 = vpack.c.b16 %v1943, %v1942
  %v2209 = vpack.c.b16 %v1945, %v1944
  %v2210 = vpack.c.b16 %v1947, %v1946
  %v2211 = vpack.c.b16 %v1949, %v1948
  %v2212 = vpack.c.b16 %v1951, %v1950
  %v2213 = vpack.c.b16 %v1953, %v1952
  %v2214 = vpack.c.b16 %v1955, %v1954
  %v2215 = vpack.c.b16 %v1957, %v1956
  %v2216 = vpack.c.b16 %v1959, %v1958
  %v2217 = vpack.c.b16 %v1961, %v1960
  %v2218 = vpack.c.b16 %v1963, %v1962
  %v2219 = vpack.c.b16 %v1965, %v1964
  %v2220 = vpack.c.b16 %v1967, %v1966
  %v2221 = vpack.c.b16 %v1969, %v1968
  %v2222 = vpack.c.b16 %v1971, %v1970
  %v2223 = vpack.c.b16 %v1973, %v1972
  %v2224 = vpack.c.b16 %v1975, %v1974
  %v2225 = vpack.c.b16 %v1977, %v1976
  %v2226 = vpack.c.b16 %v1979, %v1978
  %v2227 = vpack.c.b16 %v1981, %v1980
  %v2228 = vpack.c.b16 %v1983, %v1982
  %v2229 = vpack.c.b16 %v1985, %v1984
  %v2230 = vpack.c.b16 %v1987, %v1986
  %v2231 = vpack.c.b16 %v1989, %v1988
  %v2232 = vpack.c.b16 %v1991, %v1990
  %v2233 = vpack.c.b16 %v1993, %v1992
  %v2234 = vpack.c.b16 %v1995, %v1994
  %v2235 = vpack.c.b16 %v1997, %v1996
  %v2236 = vpack.c.b16 %v1999, %v1998
  %v2237 = vpack.c.b16 %v2001, %v2000
  %v2238 = vpack.c.b16 %v2003, %v2002
  %v2239 = vpack.c.b16 %v2005, %v2004
  %v2240 = vpack.c.b16 %v2007, %v2006
  %v2241 = vpack.c.b16 %v2009, %v2008
  %v2242 = vpack.c.b16 %v2011, %v2010
  %v2243 = vpack.c.b16 %v2013, %v2012
  %v2244 = vpack.c.b16 %v2015, %v2014
  %v2245 = vpack.c.b16 %v2017, %v2016
  %v2246 = vpack.c.b16 %v2019, %v2018
  %v2247 = vpack.c.b16 %v2021, %v2020
  %v2248 = vpack.c.b16 %v2023, %v2022
  %v2249 = vpack.c.b16 %v2025, %v2024
  %v2250 = vpack.c.b16 %v2027, %v2026
  %v2251 = vpack.c.b16 %v2029, %v2028
  %v2252 = vpack.c.b16 %v2031, %v2030
  %v2253 = vpack.c.b16 %v2033, %v2032
  %v2254 = vpack.c.b16 %v2035, %v2034
  %v2255 = vpack.c.b16 %v2037, %v2036
  %v2256 = vpack.c.b16 %v2039, %v2038
  %v2257 = vpack.c.b16 %v2041, %v2040
  %v2258 = vpack.c.b16 %v2043, %v2042
  %v2259 = vpack.c.b16 %v2045, %v2044
  %v2260 = vpack.c.b16 %v2047, %v2046
  %v2261 = vpack.c.b16 %v2049, %v2048
  %v2262 = vpack.c.b16 %v2051, %v2050
  %v2263 = vpack.c.b16 %v2053, %v2052
  %v2264 = vpack.c.b16 %v2055, %v2054
  %v2265 = vpack.c.b16 %v2057, %v2056
  %v2266 = vpack.c.b16 %v2059, %v2058
  %v2267 = vpack.c.b16 %v2061, %v2060
  %v2268 = vpack.c.b16 %v2063, %v2062
  %v2269 = vpack.c.b16 %v2065, %v2064
  %v2270 = vpack.c.b16 %v2067, %v2066
  %v2271 = vpack.c.b16 %v2069, %v2068
  %v2272 = vpack.c.b16 %v2071, %v2070
  %v2273 = vpack.c.b16 %v2073, %v2072
  %v2274 = vpack.c.b16 %v2075, %v2074
  %v2275 = vpack.c.b16 %v2077, %v2076
  %v2276 = vpack.c.b16 %v2079, %v2078
  %v2277 = vpack.c.b16 %v2081, %v2080
  %v2278 = vpack.c.b16 %v2083, %v2082
  %v2279 = vpack.c.b16 %v2085, %v2084
  %v2280 = vpack.c.b16 %v2087, %v2086
  %v2281 = vpack.c.b16 %v2089, %v2088
  %v2282 = vpack.c.b16 %v2091, %v2090
  %v2283 = vpack.c.b16 %v2093, %v2092
  %v2284 = vpack.c.b16 %v2095, %v2094
  %v2285 = vpack.c.b16 %v2097, %v2096
  %v2286 = vpack.c.b16 %v2099, %v2098
  %v2287 = vpack.c.b16 %v2101, %v2100
  %v2288 = vpack.c.b16 %v2103, %v2102
  %v2289 = vpack.c.b16 %v2105, %v2104
  %v2290 = vpack.c.b16 %v2107, %v2106
  %v2291 = vpack.c.b16 %v2109, %v2108
  %v2292 = vpack.c.b16 %v2111, %v2110
  %v2293 = vpack.c.b16 %v2113, %v2112
  %v2294 = vpack.c.b16 %v2115, %v2114
  %v2295 = vpack.c.b16 %v2117, %v2116
  %v2296 = vpack.c.b16 %v2119, %v2118
  %v2297 = vpack.c.b16 %v2121, %v2120
  %v2298 = vpack.c.b16 %v2123, %v2122
  %v2299 = vpack.c.b16 %v2125, %v2124
  %v2300 = vpack.c.b16 %v2127, %v2126
  %v2301 = vpack.c.b16 %v2129, %v2128
  %v2302 = vpack.c.b16 %v2131, %v2130
  %v2303 = vpack.c.b16 %v2133, %v2132
  %v2304 = vpack.c.b16 %v2135, %v2134
  %v2305 = vpack.c.b16 %v2137, %v2136
  %v2306 = vpack.c.b16 %v2139, %v2138
  %v2307 = vpack.c.b16 %v2141, %v2140
  %v2308 = vpack.c.b16 %v2143, %v2142
  %v2309 = vpack.c.b16 %v2145, %v2144
  %v2310 = vpack.c.b16 %v2147, %v2146
  %v2311 = vpack.c.b16 %v2149, %v2148
  %v2312 = vpack.c.b16 %v2151, %v2150
  %v2313 = vpack.c.b16 %v2153, %v2152
  %v2314 = vpack.c.b16 %v2155, %v2154
  %v2315 = vpack.c.b16 %v2157, %v2156
  %v2316 = vpack.c.b16 %v2159, %v2158
  %v2317 = vpack.c.b16 %v2161, %v2160
  %v2318 = vpack.c.b16 %v2163, %v2162
  %v2319 = vpack.c.b16 %v2165, %v2164
  %v2320 = vpack.c.b16 %v2167, %v2166
  %v2321 = vpack.c.b16 %v2169, %v2168
  %v2322 = vpack.c.b16 %v2171, %v2170
  %v2323 = vpack.c.b16 %v2173, %v2172
  %v2324 = vpack.c.b16 %v2175, %v2174
  %v2325 = vpack.c.b16 %v2177, %v2176
  %v2326 = vpack.c.b16 %v2179, %v2178
  %v2327 = vpack.c.b16 %v2181, %v2180
  %v2328 = vpack.c.b16 %v2183, %v2182
  %v2329 = vpack.c.b16 %v2185, %v2184
  %v2330 = vpack.c.b16 %v2187, %v2186
  %v2331 = vpack.c.b16 %v2189, %v2188
  %v2332 = vpack.c.b16 %v2191, %v2190
  %v2333 = vpack.c.b16 %v2193, %v2192
  %v2334 = vpack.c.b16 %v2195, %v2194
  %v2335 = vpack.c.b16 %v2197, %v2196
  %v2336 = vpack.c.b16 %v2198, %v2198
  %vm2474 = vcmask 195584
  %v2476 = vsel %vm2474, %v1211, 0
  %v2479 = vsel %vm2474, %v1229, 0
  %v2482 = vsel %vm2474, %v1247, 0
  %v2485 = vsel %vm2474, %v1265, 0
  %v2488 = vsel %vm2474, %v1283, 0
  %v2491 = vsel %vm2474, %v1301, 0
  %v2494 = vsel %vm2474, %v1319, 0
  %v2497 = vsel %vm2474, %v1337, 0
  %v2500 = vsel %vm2474, %v1355, 0
  %v2503 = vsel %vm2474, %v1373, 0
  %v2506 = vsel %vm2474, %v1391, 0
  %v2509 = vsel %vm2474, %v1409, 0
  %v2512 = vsel %vm2474, %v1427, 0
  %vm2514 = vcmask 1043456
  %v2516 = vsel %vm2514, %v2336, 0
  %2518 = vmatpush.bf16.msra.mxu0 %v2206
  %2519 = vmatpush.bf16.msra.mxu0 %v2205
  %2520 = vmatpush.bf16.msra.mxu0 %v2204
  %2521 = vmatpush.bf16.msra.mxu0 %v2203
  %2522 = vmatpush.bf16.msra.mxu0 %v2202
  %2523 = vmatpush.bf16.msra.mxu0 %v2201
  %2524 = vmatpush.bf16.msra.mxu0 %v2200
  %2525 = vmatpush.bf16.msra.mxu0 %v2199
  %2526 = vmatmul.bf16.gmra.mxu0 %v1194
  %v2527 = vpop.f32.mrf.mxu0
  %v2528 = vadd.f32 %v517, %v2527
  %v2529 = vpop.f32.mrf.mxu0
  %v2530 = vadd.f32 %v517, %v2529
  %2531 = vmatmul.bf16.gmra.mxu0 %v1212
  %v2532 = vpop.f32.mrf.mxu0
  %v2533 = vadd.f32 %v517, %v2532
  %v2534 = vpop.f32.mrf.mxu0
  %v2535 = vadd.f32 %v517, %v2534
  %2536 = vmatmul.bf16.gmra.mxu0 %v1230
  %v2537 = vpop.f32.mrf.mxu0
  %v2538 = vadd.f32 %v517, %v2537
  %v2539 = vpop.f32.mrf.mxu0
  %v2540 = vadd.f32 %v517, %v2539
  %2541 = vmatmul.bf16.gmra.mxu0 %v1248
  %v2542 = vpop.f32.mrf.mxu0
  %v2543 = vadd.f32 %v517, %v2542
  %v2544 = vpop.f32.mrf.mxu0
  %v2545 = vadd.f32 %v517, %v2544
  %2546 = vmatmul.bf16.gmra.mxu0 %v1266
  %v2547 = vpop.f32.mrf.mxu0
  %v2548 = vadd.f32 %v517, %v2547
  %v2549 = vpop.f32.mrf.mxu0
  %v2550 = vadd.f32 %v517, %v2549
  %2551 = vmatmul.bf16.gmra.mxu0 %v1284
  %v2552 = vpop.f32.mrf.mxu0
  %v2553 = vadd.f32 %v517, %v2552
  %v2554 = vpop.f32.mrf.mxu0
  %v2555 = vadd.f32 %v517, %v2554
  %2556 = vmatmul.bf16.gmra.mxu0 %v1302
  %v2557 = vpop.f32.mrf.mxu0
  %v2558 = vadd.f32 %v517, %v2557
  %v2559 = vpop.f32.mrf.mxu0
  %v2560 = vadd.f32 %v517, %v2559
  %2561 = vmatmul.bf16.gmra.mxu0 %v1320
  %v2562 = vpop.f32.mrf.mxu0
  %v2563 = vadd.f32 %v517, %v2562
  %v2564 = vpop.f32.mrf.mxu0
  %v2565 = vadd.f32 %v517, %v2564
  %2566 = vmatmul.bf16.gmra.mxu0 %v1338
  %v2567 = vpop.f32.mrf.mxu0
  %v2568 = vadd.f32 %v517, %v2567
  %v2569 = vpop.f32.mrf.mxu0
  %v2570 = vadd.f32 %v517, %v2569
  %2571 = vmatmul.bf16.gmra.mxu0 %v1356
  %v2572 = vpop.f32.mrf.mxu0
  %v2573 = vadd.f32 %v517, %v2572
  %v2574 = vpop.f32.mrf.mxu0
  %v2575 = vadd.f32 %v517, %v2574
  %2576 = vmatmul.bf16.gmra.mxu0 %v1374
  %v2577 = vpop.f32.mrf.mxu0
  %v2578 = vadd.f32 %v517, %v2577
  %v2579 = vpop.f32.mrf.mxu0
  %v2580 = vadd.f32 %v517, %v2579
  %2581 = vmatmul.bf16.gmra.mxu0 %v1392
  %v2582 = vpop.f32.mrf.mxu0
  %v2583 = vadd.f32 %v517, %v2582
  %v2584 = vpop.f32.mrf.mxu0
  %v2585 = vadd.f32 %v517, %v2584
  %2586 = vmatmul.bf16.gmra.mxu0 %v1410
  %v2587 = vpop.f32.mrf.mxu0
  %v2588 = vadd.f32 %v517, %v2587
  %v2589 = vpop.f32.mrf.mxu0
  %2590 = vdwg.mxu0
  %2591 = vmatpush.bf16.msra.mxu0 %v2214
  %2592 = vmatpush.bf16.msra.mxu0 %v2213
  %2593 = vmatpush.bf16.msra.mxu0 %v2212
  %2594 = vmatpush.bf16.msra.mxu0 %v2211
  %2595 = vmatpush.bf16.msra.mxu0 %v2210
  %2596 = vmatpush.bf16.msra.mxu0 %v2209
  %2597 = vmatpush.bf16.msra.mxu0 %v2208
  %2598 = vmatpush.bf16.msra.mxu0 %v2207
  %2599 = vmatmul.bf16.gmra.mxu0 %v1195
  %v2600 = vpop.f32.mrf.mxu0
  %v2601 = vadd.f32 %v2528, %v2600
  %v2602 = vpop.f32.mrf.mxu0
  %v2603 = vadd.f32 %v2530, %v2602
  %2604 = vmatmul.bf16.gmra.mxu0 %v1213
  %v2605 = vpop.f32.mrf.mxu0
  %v2606 = vadd.f32 %v2533, %v2605
  %v2607 = vpop.f32.mrf.mxu0
  %v2608 = vadd.f32 %v2535, %v2607
  %2609 = vmatmul.bf16.gmra.mxu0 %v1231
  %v2610 = vpop.f32.mrf.mxu0
  %v2611 = vadd.f32 %v2538, %v2610
  %v2612 = vpop.f32.mrf.mxu0
  %v2613 = vadd.f32 %v2540, %v2612
  %2614 = vmatmul.bf16.gmra.mxu0 %v1249
  %v2615 = vpop.f32.mrf.mxu0
  %v2616 = vadd.f32 %v2543, %v2615
  %v2617 = vpop.f32.mrf.mxu0
  %v2618 = vadd.f32 %v2545, %v2617
  %2619 = vmatmul.bf16.gmra.mxu0 %v1267
  %v2620 = vpop.f32.mrf.mxu0
  %v2621 = vadd.f32 %v2548, %v2620
  %v2622 = vpop.f32.mrf.mxu0
  %v2623 = vadd.f32 %v2550, %v2622
  %2624 = vmatmul.bf16.gmra.mxu0 %v1285
  %v2625 = vpop.f32.mrf.mxu0
  %v2626 = vadd.f32 %v2553, %v2625
  %v2627 = vpop.f32.mrf.mxu0
  %v2628 = vadd.f32 %v2555, %v2627
  %2629 = vmatmul.bf16.gmra.mxu0 %v1303
  %v2630 = vpop.f32.mrf.mxu0
  %v2631 = vadd.f32 %v2558, %v2630
  %v2632 = vpop.f32.mrf.mxu0
  %v2633 = vadd.f32 %v2560, %v2632
  %2634 = vmatmul.bf16.gmra.mxu0 %v1321
  %v2635 = vpop.f32.mrf.mxu0
  %v2636 = vadd.f32 %v2563, %v2635
  %v2637 = vpop.f32.mrf.mxu0
  %v2638 = vadd.f32 %v2565, %v2637
  %2639 = vmatmul.bf16.gmra.mxu0 %v1339
  %v2640 = vpop.f32.mrf.mxu0
  %v2641 = vadd.f32 %v2568, %v2640
  %v2642 = vpop.f32.mrf.mxu0
  %v2643 = vadd.f32 %v2570, %v2642
  %2644 = vmatmul.bf16.gmra.mxu0 %v1357
  %v2645 = vpop.f32.mrf.mxu0
  %v2646 = vadd.f32 %v2573, %v2645
  %v2647 = vpop.f32.mrf.mxu0
  %v2648 = vadd.f32 %v2575, %v2647
  %2649 = vmatmul.bf16.gmra.mxu0 %v1375
  %v2650 = vpop.f32.mrf.mxu0
  %v2651 = vadd.f32 %v2578, %v2650
  %v2652 = vpop.f32.mrf.mxu0
  %v2653 = vadd.f32 %v2580, %v2652
  %2654 = vmatmul.bf16.gmra.mxu0 %v1393
  %v2655 = vpop.f32.mrf.mxu0
  %v2656 = vadd.f32 %v2583, %v2655
  %v2657 = vpop.f32.mrf.mxu0
  %v2658 = vadd.f32 %v2585, %v2657
  %2659 = vmatmul.bf16.gmra.mxu0 %v1411
  %v2660 = vpop.f32.mrf.mxu0
  %v2661 = vadd.f32 %v2588, %v2660
  %v2662 = vpop.f32.mrf.mxu0
  %2663 = vdwg.mxu0
  %2664 = vmatpush.bf16.msra.mxu0 %v2222
  %2665 = vmatpush.bf16.msra.mxu0 %v2221
  %2666 = vmatpush.bf16.msra.mxu0 %v2220
  %2667 = vmatpush.bf16.msra.mxu0 %v2219
  %2668 = vmatpush.bf16.msra.mxu0 %v2218
  %2669 = vmatpush.bf16.msra.mxu0 %v2217
  %2670 = vmatpush.bf16.msra.mxu0 %v2216
  %2671 = vmatpush.bf16.msra.mxu0 %v2215
  %2672 = vmatmul.bf16.gmra.mxu0 %v1196
  %v2673 = vpop.f32.mrf.mxu0
  %v2674 = vadd.f32 %v2601, %v2673
  %v2675 = vpop.f32.mrf.mxu0
  %v2676 = vadd.f32 %v2603, %v2675
  %2677 = vmatmul.bf16.gmra.mxu0 %v1214
  %v2678 = vpop.f32.mrf.mxu0
  %v2679 = vadd.f32 %v2606, %v2678
  %v2680 = vpop.f32.mrf.mxu0
  %v2681 = vadd.f32 %v2608, %v2680
  %2682 = vmatmul.bf16.gmra.mxu0 %v1232
  %v2683 = vpop.f32.mrf.mxu0
  %v2684 = vadd.f32 %v2611, %v2683
  %v2685 = vpop.f32.mrf.mxu0
  %v2686 = vadd.f32 %v2613, %v2685
  %2687 = vmatmul.bf16.gmra.mxu0 %v1250
  %v2688 = vpop.f32.mrf.mxu0
  %v2689 = vadd.f32 %v2616, %v2688
  %v2690 = vpop.f32.mrf.mxu0
  %v2691 = vadd.f32 %v2618, %v2690
  %2692 = vmatmul.bf16.gmra.mxu0 %v1268
  %v2693 = vpop.f32.mrf.mxu0
  %v2694 = vadd.f32 %v2621, %v2693
  %v2695 = vpop.f32.mrf.mxu0
  %v2696 = vadd.f32 %v2623, %v2695
  %2697 = vmatmul.bf16.gmra.mxu0 %v1286
  %v2698 = vpop.f32.mrf.mxu0
  %v2699 = vadd.f32 %v2626, %v2698
  %v2700 = vpop.f32.mrf.mxu0
  %v2701 = vadd.f32 %v2628, %v2700
  %2702 = vmatmul.bf16.gmra.mxu0 %v1304
  %v2703 = vpop.f32.mrf.mxu0
  %v2704 = vadd.f32 %v2631, %v2703
  %v2705 = vpop.f32.mrf.mxu0
  %v2706 = vadd.f32 %v2633, %v2705
  %2707 = vmatmul.bf16.gmra.mxu0 %v1322
  %v2708 = vpop.f32.mrf.mxu0
  %v2709 = vadd.f32 %v2636, %v2708
  %v2710 = vpop.f32.mrf.mxu0
  %v2711 = vadd.f32 %v2638, %v2710
  %2712 = vmatmul.bf16.gmra.mxu0 %v1340
  %v2713 = vpop.f32.mrf.mxu0
  %v2714 = vadd.f32 %v2641, %v2713
  %v2715 = vpop.f32.mrf.mxu0
  %v2716 = vadd.f32 %v2643, %v2715
  %2717 = vmatmul.bf16.gmra.mxu0 %v1358
  %v2718 = vpop.f32.mrf.mxu0
  %v2719 = vadd.f32 %v2646, %v2718
  %v2720 = vpop.f32.mrf.mxu0
  %v2721 = vadd.f32 %v2648, %v2720
  %2722 = vmatmul.bf16.gmra.mxu0 %v1376
  %v2723 = vpop.f32.mrf.mxu0
  %v2724 = vadd.f32 %v2651, %v2723
  %v2725 = vpop.f32.mrf.mxu0
  %v2726 = vadd.f32 %v2653, %v2725
  %2727 = vmatmul.bf16.gmra.mxu0 %v1394
  %v2728 = vpop.f32.mrf.mxu0
  %v2729 = vadd.f32 %v2656, %v2728
  %v2730 = vpop.f32.mrf.mxu0
  %v2731 = vadd.f32 %v2658, %v2730
  %2732 = vmatmul.bf16.gmra.mxu0 %v1412
  %v2733 = vpop.f32.mrf.mxu0
  %v2734 = vadd.f32 %v2661, %v2733
  %v2735 = vpop.f32.mrf.mxu0
  %2736 = vdwg.mxu0
  %2737 = vmatpush.bf16.msra.mxu0 %v2230
  %2738 = vmatpush.bf16.msra.mxu0 %v2229
  %2739 = vmatpush.bf16.msra.mxu0 %v2228
  %2740 = vmatpush.bf16.msra.mxu0 %v2227
  %2741 = vmatpush.bf16.msra.mxu0 %v2226
  %2742 = vmatpush.bf16.msra.mxu0 %v2225
  %2743 = vmatpush.bf16.msra.mxu0 %v2224
  %2744 = vmatpush.bf16.msra.mxu0 %v2223
  %2745 = vmatmul.bf16.gmra.mxu0 %v1197
  %v2746 = vpop.f32.mrf.mxu0
  %v2747 = vadd.f32 %v2674, %v2746
  %v2748 = vpop.f32.mrf.mxu0
  %v2749 = vadd.f32 %v2676, %v2748
  %2750 = vmatmul.bf16.gmra.mxu0 %v1215
  %v2751 = vpop.f32.mrf.mxu0
  %v2752 = vadd.f32 %v2679, %v2751
  %v2753 = vpop.f32.mrf.mxu0
  %v2754 = vadd.f32 %v2681, %v2753
  %2755 = vmatmul.bf16.gmra.mxu0 %v1233
  %v2756 = vpop.f32.mrf.mxu0
  %v2757 = vadd.f32 %v2684, %v2756
  %v2758 = vpop.f32.mrf.mxu0
  %v2759 = vadd.f32 %v2686, %v2758
  %2760 = vmatmul.bf16.gmra.mxu0 %v1251
  %v2761 = vpop.f32.mrf.mxu0
  %v2762 = vadd.f32 %v2689, %v2761
  %v2763 = vpop.f32.mrf.mxu0
  %v2764 = vadd.f32 %v2691, %v2763
  %2765 = vmatmul.bf16.gmra.mxu0 %v1269
  %v2766 = vpop.f32.mrf.mxu0
  %v2767 = vadd.f32 %v2694, %v2766
  %v2768 = vpop.f32.mrf.mxu0
  %v2769 = vadd.f32 %v2696, %v2768
  %2770 = vmatmul.bf16.gmra.mxu0 %v1287
  %v2771 = vpop.f32.mrf.mxu0
  %v2772 = vadd.f32 %v2699, %v2771
  %v2773 = vpop.f32.mrf.mxu0
  %v2774 = vadd.f32 %v2701, %v2773
  %2775 = vmatmul.bf16.gmra.mxu0 %v1305
  %v2776 = vpop.f32.mrf.mxu0
  %v2777 = vadd.f32 %v2704, %v2776
  %v2778 = vpop.f32.mrf.mxu0
  %v2779 = vadd.f32 %v2706, %v2778
  %2780 = vmatmul.bf16.gmra.mxu0 %v1323
  %v2781 = vpop.f32.mrf.mxu0
  %v2782 = vadd.f32 %v2709, %v2781
  %v2783 = vpop.f32.mrf.mxu0
  %v2784 = vadd.f32 %v2711, %v2783
  %2785 = vmatmul.bf16.gmra.mxu0 %v1341
  %v2786 = vpop.f32.mrf.mxu0
  %v2787 = vadd.f32 %v2714, %v2786
  %v2788 = vpop.f32.mrf.mxu0
  %v2789 = vadd.f32 %v2716, %v2788
  %2790 = vmatmul.bf16.gmra.mxu0 %v1359
  %v2791 = vpop.f32.mrf.mxu0
  %v2792 = vadd.f32 %v2719, %v2791
  %v2793 = vpop.f32.mrf.mxu0
  %v2794 = vadd.f32 %v2721, %v2793
  %2795 = vmatmul.bf16.gmra.mxu0 %v1377
  %v2796 = vpop.f32.mrf.mxu0
  %v2797 = vadd.f32 %v2724, %v2796
  %v2798 = vpop.f32.mrf.mxu0
  %v2799 = vadd.f32 %v2726, %v2798
  %2800 = vmatmul.bf16.gmra.mxu0 %v1395
  %v2801 = vpop.f32.mrf.mxu0
  %v2802 = vadd.f32 %v2729, %v2801
  %v2803 = vpop.f32.mrf.mxu0
  %v2804 = vadd.f32 %v2731, %v2803
  %2805 = vmatmul.bf16.gmra.mxu0 %v1413
  %v2806 = vpop.f32.mrf.mxu0
  %v2807 = vadd.f32 %v2734, %v2806
  %v2808 = vpop.f32.mrf.mxu0
  %2809 = vdwg.mxu0
  %2810 = vmatpush.bf16.msra.mxu0 %v2238
  %2811 = vmatpush.bf16.msra.mxu0 %v2237
  %2812 = vmatpush.bf16.msra.mxu0 %v2236
  %2813 = vmatpush.bf16.msra.mxu0 %v2235
  %2814 = vmatpush.bf16.msra.mxu0 %v2234
  %2815 = vmatpush.bf16.msra.mxu0 %v2233
  %2816 = vmatpush.bf16.msra.mxu0 %v2232
  %2817 = vmatpush.bf16.msra.mxu0 %v2231
  %2818 = vmatmul.bf16.gmra.mxu0 %v1198
  %v2819 = vpop.f32.mrf.mxu0
  %v2820 = vadd.f32 %v2747, %v2819
  %v2821 = vpop.f32.mrf.mxu0
  %v2822 = vadd.f32 %v2749, %v2821
  %2823 = vmatmul.bf16.gmra.mxu0 %v1216
  %v2824 = vpop.f32.mrf.mxu0
  %v2825 = vadd.f32 %v2752, %v2824
  %v2826 = vpop.f32.mrf.mxu0
  %v2827 = vadd.f32 %v2754, %v2826
  %2828 = vmatmul.bf16.gmra.mxu0 %v1234
  %v2829 = vpop.f32.mrf.mxu0
  %v2830 = vadd.f32 %v2757, %v2829
  %v2831 = vpop.f32.mrf.mxu0
  %v2832 = vadd.f32 %v2759, %v2831
  %2833 = vmatmul.bf16.gmra.mxu0 %v1252
  %v2834 = vpop.f32.mrf.mxu0
  %v2835 = vadd.f32 %v2762, %v2834
  %v2836 = vpop.f32.mrf.mxu0
  %v2837 = vadd.f32 %v2764, %v2836
  %2838 = vmatmul.bf16.gmra.mxu0 %v1270
  %v2839 = vpop.f32.mrf.mxu0
  %v2840 = vadd.f32 %v2767, %v2839
  %v2841 = vpop.f32.mrf.mxu0
  %v2842 = vadd.f32 %v2769, %v2841
  %2843 = vmatmul.bf16.gmra.mxu0 %v1288
  %v2844 = vpop.f32.mrf.mxu0
  %v2845 = vadd.f32 %v2772, %v2844
  %v2846 = vpop.f32.mrf.mxu0
  %v2847 = vadd.f32 %v2774, %v2846
  %2848 = vmatmul.bf16.gmra.mxu0 %v1306
  %v2849 = vpop.f32.mrf.mxu0
  %v2850 = vadd.f32 %v2777, %v2849
  %v2851 = vpop.f32.mrf.mxu0
  %v2852 = vadd.f32 %v2779, %v2851
  %2853 = vmatmul.bf16.gmra.mxu0 %v1324
  %v2854 = vpop.f32.mrf.mxu0
  %v2855 = vadd.f32 %v2782, %v2854
  %v2856 = vpop.f32.mrf.mxu0
  %v2857 = vadd.f32 %v2784, %v2856
  %2858 = vmatmul.bf16.gmra.mxu0 %v1342
  %v2859 = vpop.f32.mrf.mxu0
  %v2860 = vadd.f32 %v2787, %v2859
  %v2861 = vpop.f32.mrf.mxu0
  %v2862 = vadd.f32 %v2789, %v2861
  %2863 = vmatmul.bf16.gmra.mxu0 %v1360
  %v2864 = vpop.f32.mrf.mxu0
  %v2865 = vadd.f32 %v2792, %v2864
  %v2866 = vpop.f32.mrf.mxu0
  %v2867 = vadd.f32 %v2794, %v2866
  %2868 = vmatmul.bf16.gmra.mxu0 %v1378
  %v2869 = vpop.f32.mrf.mxu0
  %v2870 = vadd.f32 %v2797, %v2869
  %v2871 = vpop.f32.mrf.mxu0
  %v2872 = vadd.f32 %v2799, %v2871
  %2873 = vmatmul.bf16.gmra.mxu0 %v1396
  %v2874 = vpop.f32.mrf.mxu0
  %v2875 = vadd.f32 %v2802, %v2874
  %v2876 = vpop.f32.mrf.mxu0
  %v2877 = vadd.f32 %v2804, %v2876
  %2878 = vmatmul.bf16.gmra.mxu0 %v1414
  %v2879 = vpop.f32.mrf.mxu0
  %v2880 = vadd.f32 %v2807, %v2879
  %v2881 = vpop.f32.mrf.mxu0
  %2882 = vdwg.mxu0
  %2883 = vmatpush.bf16.msra.mxu0 %v2246
  %2884 = vmatpush.bf16.msra.mxu0 %v2245
  %2885 = vmatpush.bf16.msra.mxu0 %v2244
  %2886 = vmatpush.bf16.msra.mxu0 %v2243
  %2887 = vmatpush.bf16.msra.mxu0 %v2242
  %2888 = vmatpush.bf16.msra.mxu0 %v2241
  %2889 = vmatpush.bf16.msra.mxu0 %v2240
  %2890 = vmatpush.bf16.msra.mxu0 %v2239
  %2891 = vmatmul.bf16.gmra.mxu0 %v1199
  %v2892 = vpop.f32.mrf.mxu0
  %v2893 = vadd.f32 %v2820, %v2892
  %v2894 = vpop.f32.mrf.mxu0
  %v2895 = vadd.f32 %v2822, %v2894
  %2896 = vmatmul.bf16.gmra.mxu0 %v1217
  %v2897 = vpop.f32.mrf.mxu0
  %v2898 = vadd.f32 %v2825, %v2897
  %v2899 = vpop.f32.mrf.mxu0
  %v2900 = vadd.f32 %v2827, %v2899
  %2901 = vmatmul.bf16.gmra.mxu0 %v1235
  %v2902 = vpop.f32.mrf.mxu0
  %v2903 = vadd.f32 %v2830, %v2902
  %v2904 = vpop.f32.mrf.mxu0
  %v2905 = vadd.f32 %v2832, %v2904
  %2906 = vmatmul.bf16.gmra.mxu0 %v1253
  %v2907 = vpop.f32.mrf.mxu0
  %v2908 = vadd.f32 %v2835, %v2907
  %v2909 = vpop.f32.mrf.mxu0
  %v2910 = vadd.f32 %v2837, %v2909
  %2911 = vmatmul.bf16.gmra.mxu0 %v1271
  %v2912 = vpop.f32.mrf.mxu0
  %v2913 = vadd.f32 %v2840, %v2912
  %v2914 = vpop.f32.mrf.mxu0
  %v2915 = vadd.f32 %v2842, %v2914
  %2916 = vmatmul.bf16.gmra.mxu0 %v1289
  %v2917 = vpop.f32.mrf.mxu0
  %v2918 = vadd.f32 %v2845, %v2917
  %v2919 = vpop.f32.mrf.mxu0
  %v2920 = vadd.f32 %v2847, %v2919
  %2921 = vmatmul.bf16.gmra.mxu0 %v1307
  %v2922 = vpop.f32.mrf.mxu0
  %v2923 = vadd.f32 %v2850, %v2922
  %v2924 = vpop.f32.mrf.mxu0
  %v2925 = vadd.f32 %v2852, %v2924
  %2926 = vmatmul.bf16.gmra.mxu0 %v1325
  %v2927 = vpop.f32.mrf.mxu0
  %v2928 = vadd.f32 %v2855, %v2927
  %v2929 = vpop.f32.mrf.mxu0
  %v2930 = vadd.f32 %v2857, %v2929
  %2931 = vmatmul.bf16.gmra.mxu0 %v1343
  %v2932 = vpop.f32.mrf.mxu0
  %v2933 = vadd.f32 %v2860, %v2932
  %v2934 = vpop.f32.mrf.mxu0
  %v2935 = vadd.f32 %v2862, %v2934
  %2936 = vmatmul.bf16.gmra.mxu0 %v1361
  %v2937 = vpop.f32.mrf.mxu0
  %v2938 = vadd.f32 %v2865, %v2937
  %v2939 = vpop.f32.mrf.mxu0
  %v2940 = vadd.f32 %v2867, %v2939
  %2941 = vmatmul.bf16.gmra.mxu0 %v1379
  %v2942 = vpop.f32.mrf.mxu0
  %v2943 = vadd.f32 %v2870, %v2942
  %v2944 = vpop.f32.mrf.mxu0
  %v2945 = vadd.f32 %v2872, %v2944
  %2946 = vmatmul.bf16.gmra.mxu0 %v1397
  %v2947 = vpop.f32.mrf.mxu0
  %v2948 = vadd.f32 %v2875, %v2947
  %v2949 = vpop.f32.mrf.mxu0
  %v2950 = vadd.f32 %v2877, %v2949
  %2951 = vmatmul.bf16.gmra.mxu0 %v1415
  %v2952 = vpop.f32.mrf.mxu0
  %v2953 = vadd.f32 %v2880, %v2952
  %v2954 = vpop.f32.mrf.mxu0
  %2955 = vdwg.mxu0
  %2956 = vmatpush.bf16.msra.mxu0 %v2254
  %2957 = vmatpush.bf16.msra.mxu0 %v2253
  %2958 = vmatpush.bf16.msra.mxu0 %v2252
  %2959 = vmatpush.bf16.msra.mxu0 %v2251
  %2960 = vmatpush.bf16.msra.mxu0 %v2250
  %2961 = vmatpush.bf16.msra.mxu0 %v2249
  %2962 = vmatpush.bf16.msra.mxu0 %v2248
  %2963 = vmatpush.bf16.msra.mxu0 %v2247
  %2964 = vmatmul.bf16.gmra.mxu0 %v1200
  %v2965 = vpop.f32.mrf.mxu0
  %v2966 = vadd.f32 %v2893, %v2965
  %v2967 = vpop.f32.mrf.mxu0
  %v2968 = vadd.f32 %v2895, %v2967
  %2969 = vmatmul.bf16.gmra.mxu0 %v1218
  %v2970 = vpop.f32.mrf.mxu0
  %v2971 = vadd.f32 %v2898, %v2970
  %v2972 = vpop.f32.mrf.mxu0
  %v2973 = vadd.f32 %v2900, %v2972
  %2974 = vmatmul.bf16.gmra.mxu0 %v1236
  %v2975 = vpop.f32.mrf.mxu0
  %v2976 = vadd.f32 %v2903, %v2975
  %v2977 = vpop.f32.mrf.mxu0
  %v2978 = vadd.f32 %v2905, %v2977
  %2979 = vmatmul.bf16.gmra.mxu0 %v1254
  %v2980 = vpop.f32.mrf.mxu0
  %v2981 = vadd.f32 %v2908, %v2980
  %v2982 = vpop.f32.mrf.mxu0
  %v2983 = vadd.f32 %v2910, %v2982
  %2984 = vmatmul.bf16.gmra.mxu0 %v1272
  %v2985 = vpop.f32.mrf.mxu0
  %v2986 = vadd.f32 %v2913, %v2985
  %v2987 = vpop.f32.mrf.mxu0
  %v2988 = vadd.f32 %v2915, %v2987
  %2989 = vmatmul.bf16.gmra.mxu0 %v1290
  %v2990 = vpop.f32.mrf.mxu0
  %v2991 = vadd.f32 %v2918, %v2990
  %v2992 = vpop.f32.mrf.mxu0
  %v2993 = vadd.f32 %v2920, %v2992
  %2994 = vmatmul.bf16.gmra.mxu0 %v1308
  %v2995 = vpop.f32.mrf.mxu0
  %v2996 = vadd.f32 %v2923, %v2995
  %v2997 = vpop.f32.mrf.mxu0
  %v2998 = vadd.f32 %v2925, %v2997
  %2999 = vmatmul.bf16.gmra.mxu0 %v1326
  %v3000 = vpop.f32.mrf.mxu0
  %v3001 = vadd.f32 %v2928, %v3000
  %v3002 = vpop.f32.mrf.mxu0
  %v3003 = vadd.f32 %v2930, %v3002
  %3004 = vmatmul.bf16.gmra.mxu0 %v1344
  %v3005 = vpop.f32.mrf.mxu0
  %v3006 = vadd.f32 %v2933, %v3005
  %v3007 = vpop.f32.mrf.mxu0
  %v3008 = vadd.f32 %v2935, %v3007
  %3009 = vmatmul.bf16.gmra.mxu0 %v1362
  %v3010 = vpop.f32.mrf.mxu0
  %v3011 = vadd.f32 %v2938, %v3010
  %v3012 = vpop.f32.mrf.mxu0
  %v3013 = vadd.f32 %v2940, %v3012
  %3014 = vmatmul.bf16.gmra.mxu0 %v1380
  %v3015 = vpop.f32.mrf.mxu0
  %v3016 = vadd.f32 %v2943, %v3015
  %v3017 = vpop.f32.mrf.mxu0
  %v3018 = vadd.f32 %v2945, %v3017
  %3019 = vmatmul.bf16.gmra.mxu0 %v1398
  %v3020 = vpop.f32.mrf.mxu0
  %v3021 = vadd.f32 %v2948, %v3020
  %v3022 = vpop.f32.mrf.mxu0
  %v3023 = vadd.f32 %v2950, %v3022
  %3024 = vmatmul.bf16.gmra.mxu0 %v1416
  %v3025 = vpop.f32.mrf.mxu0
  %v3026 = vadd.f32 %v2953, %v3025
  %v3027 = vpop.f32.mrf.mxu0
  %3028 = vdwg.mxu0
  %3029 = vmatpush.bf16.msra.mxu0 %v2262
  %3030 = vmatpush.bf16.msra.mxu0 %v2261
  %3031 = vmatpush.bf16.msra.mxu0 %v2260
  %3032 = vmatpush.bf16.msra.mxu0 %v2259
  %3033 = vmatpush.bf16.msra.mxu0 %v2258
  %3034 = vmatpush.bf16.msra.mxu0 %v2257
  %3035 = vmatpush.bf16.msra.mxu0 %v2256
  %3036 = vmatpush.bf16.msra.mxu0 %v2255
  %3037 = vmatmul.bf16.gmra.mxu0 %v1201
  %v3038 = vpop.f32.mrf.mxu0
  %v3039 = vadd.f32 %v2966, %v3038
  %v3040 = vpop.f32.mrf.mxu0
  %v3041 = vadd.f32 %v2968, %v3040
  %3042 = vmatmul.bf16.gmra.mxu0 %v1219
  %v3043 = vpop.f32.mrf.mxu0
  %v3044 = vadd.f32 %v2971, %v3043
  %v3045 = vpop.f32.mrf.mxu0
  %v3046 = vadd.f32 %v2973, %v3045
  %3047 = vmatmul.bf16.gmra.mxu0 %v1237
  %v3048 = vpop.f32.mrf.mxu0
  %v3049 = vadd.f32 %v2976, %v3048
  %v3050 = vpop.f32.mrf.mxu0
  %v3051 = vadd.f32 %v2978, %v3050
  %3052 = vmatmul.bf16.gmra.mxu0 %v1255
  %v3053 = vpop.f32.mrf.mxu0
  %v3054 = vadd.f32 %v2981, %v3053
  %v3055 = vpop.f32.mrf.mxu0
  %v3056 = vadd.f32 %v2983, %v3055
  %3057 = vmatmul.bf16.gmra.mxu0 %v1273
  %v3058 = vpop.f32.mrf.mxu0
  %v3059 = vadd.f32 %v2986, %v3058
  %v3060 = vpop.f32.mrf.mxu0
  %v3061 = vadd.f32 %v2988, %v3060
  %3062 = vmatmul.bf16.gmra.mxu0 %v1291
  %v3063 = vpop.f32.mrf.mxu0
  %v3064 = vadd.f32 %v2991, %v3063
  %v3065 = vpop.f32.mrf.mxu0
  %v3066 = vadd.f32 %v2993, %v3065
  %3067 = vmatmul.bf16.gmra.mxu0 %v1309
  %v3068 = vpop.f32.mrf.mxu0
  %v3069 = vadd.f32 %v2996, %v3068
  %v3070 = vpop.f32.mrf.mxu0
  %v3071 = vadd.f32 %v2998, %v3070
  %3072 = vmatmul.bf16.gmra.mxu0 %v1327
  %v3073 = vpop.f32.mrf.mxu0
  %v3074 = vadd.f32 %v3001, %v3073
  %v3075 = vpop.f32.mrf.mxu0
  %v3076 = vadd.f32 %v3003, %v3075
  %3077 = vmatmul.bf16.gmra.mxu0 %v1345
  %v3078 = vpop.f32.mrf.mxu0
  %v3079 = vadd.f32 %v3006, %v3078
  %v3080 = vpop.f32.mrf.mxu0
  %v3081 = vadd.f32 %v3008, %v3080
  %3082 = vmatmul.bf16.gmra.mxu0 %v1363
  %v3083 = vpop.f32.mrf.mxu0
  %v3084 = vadd.f32 %v3011, %v3083
  %v3085 = vpop.f32.mrf.mxu0
  %v3086 = vadd.f32 %v3013, %v3085
  %3087 = vmatmul.bf16.gmra.mxu0 %v1381
  %v3088 = vpop.f32.mrf.mxu0
  %v3089 = vadd.f32 %v3016, %v3088
  %v3090 = vpop.f32.mrf.mxu0
  %v3091 = vadd.f32 %v3018, %v3090
  %3092 = vmatmul.bf16.gmra.mxu0 %v1399
  %v3093 = vpop.f32.mrf.mxu0
  %v3094 = vadd.f32 %v3021, %v3093
  %v3095 = vpop.f32.mrf.mxu0
  %v3096 = vadd.f32 %v3023, %v3095
  %3097 = vmatmul.bf16.gmra.mxu0 %v1417
  %v3098 = vpop.f32.mrf.mxu0
  %v3099 = vadd.f32 %v3026, %v3098
  %v3100 = vpop.f32.mrf.mxu0
  %3101 = vdwg.mxu0
  %3102 = vmatpush.bf16.msra.mxu0 %v2270
  %3103 = vmatpush.bf16.msra.mxu0 %v2269
  %3104 = vmatpush.bf16.msra.mxu0 %v2268
  %3105 = vmatpush.bf16.msra.mxu0 %v2267
  %3106 = vmatpush.bf16.msra.mxu0 %v2266
  %3107 = vmatpush.bf16.msra.mxu0 %v2265
  %3108 = vmatpush.bf16.msra.mxu0 %v2264
  %3109 = vmatpush.bf16.msra.mxu0 %v2263
  %3110 = vmatmul.bf16.gmra.mxu0 %v1202
  %v3111 = vpop.f32.mrf.mxu0
  %v3112 = vadd.f32 %v3039, %v3111
  %v3113 = vpop.f32.mrf.mxu0
  %v3114 = vadd.f32 %v3041, %v3113
  %3115 = vmatmul.bf16.gmra.mxu0 %v1220
  %v3116 = vpop.f32.mrf.mxu0
  %v3117 = vadd.f32 %v3044, %v3116
  %v3118 = vpop.f32.mrf.mxu0
  %v3119 = vadd.f32 %v3046, %v3118
  %3120 = vmatmul.bf16.gmra.mxu0 %v1238
  %v3121 = vpop.f32.mrf.mxu0
  %v3122 = vadd.f32 %v3049, %v3121
  %v3123 = vpop.f32.mrf.mxu0
  %v3124 = vadd.f32 %v3051, %v3123
  %3125 = vmatmul.bf16.gmra.mxu0 %v1256
  %v3126 = vpop.f32.mrf.mxu0
  %v3127 = vadd.f32 %v3054, %v3126
  %v3128 = vpop.f32.mrf.mxu0
  %v3129 = vadd.f32 %v3056, %v3128
  %3130 = vmatmul.bf16.gmra.mxu0 %v1274
  %v3131 = vpop.f32.mrf.mxu0
  %v3132 = vadd.f32 %v3059, %v3131
  %v3133 = vpop.f32.mrf.mxu0
  %v3134 = vadd.f32 %v3061, %v3133
  %3135 = vmatmul.bf16.gmra.mxu0 %v1292
  %v3136 = vpop.f32.mrf.mxu0
  %v3137 = vadd.f32 %v3064, %v3136
  %v3138 = vpop.f32.mrf.mxu0
  %v3139 = vadd.f32 %v3066, %v3138
  %3140 = vmatmul.bf16.gmra.mxu0 %v1310
  %v3141 = vpop.f32.mrf.mxu0
  %v3142 = vadd.f32 %v3069, %v3141
  %v3143 = vpop.f32.mrf.mxu0
  %v3144 = vadd.f32 %v3071, %v3143
  %3145 = vmatmul.bf16.gmra.mxu0 %v1328
  %v3146 = vpop.f32.mrf.mxu0
  %v3147 = vadd.f32 %v3074, %v3146
  %v3148 = vpop.f32.mrf.mxu0
  %v3149 = vadd.f32 %v3076, %v3148
  %3150 = vmatmul.bf16.gmra.mxu0 %v1346
  %v3151 = vpop.f32.mrf.mxu0
  %v3152 = vadd.f32 %v3079, %v3151
  %v3153 = vpop.f32.mrf.mxu0
  %v3154 = vadd.f32 %v3081, %v3153
  %3155 = vmatmul.bf16.gmra.mxu0 %v1364
  %v3156 = vpop.f32.mrf.mxu0
  %v3157 = vadd.f32 %v3084, %v3156
  %v3158 = vpop.f32.mrf.mxu0
  %v3159 = vadd.f32 %v3086, %v3158
  %3160 = vmatmul.bf16.gmra.mxu0 %v1382
  %v3161 = vpop.f32.mrf.mxu0
  %v3162 = vadd.f32 %v3089, %v3161
  %v3163 = vpop.f32.mrf.mxu0
  %v3164 = vadd.f32 %v3091, %v3163
  %3165 = vmatmul.bf16.gmra.mxu0 %v1400
  %v3166 = vpop.f32.mrf.mxu0
  %v3167 = vadd.f32 %v3094, %v3166
  %v3168 = vpop.f32.mrf.mxu0
  %v3169 = vadd.f32 %v3096, %v3168
  %3170 = vmatmul.bf16.gmra.mxu0 %v1418
  %v3171 = vpop.f32.mrf.mxu0
  %v3172 = vadd.f32 %v3099, %v3171
  %v3173 = vpop.f32.mrf.mxu0
  %3174 = vdwg.mxu0
  %3175 = vmatpush.bf16.msra.mxu0 %v2278
  %3176 = vmatpush.bf16.msra.mxu0 %v2277
  %3177 = vmatpush.bf16.msra.mxu0 %v2276
  %3178 = vmatpush.bf16.msra.mxu0 %v2275
  %3179 = vmatpush.bf16.msra.mxu0 %v2274
  %3180 = vmatpush.bf16.msra.mxu0 %v2273
  %3181 = vmatpush.bf16.msra.mxu0 %v2272
  %3182 = vmatpush.bf16.msra.mxu0 %v2271
  %3183 = vmatmul.bf16.gmra.mxu0 %v1203
  %v3184 = vpop.f32.mrf.mxu0
  %v3185 = vadd.f32 %v3112, %v3184
  %v3186 = vpop.f32.mrf.mxu0
  %v3187 = vadd.f32 %v3114, %v3186
  %3188 = vmatmul.bf16.gmra.mxu0 %v1221
  %v3189 = vpop.f32.mrf.mxu0
  %v3190 = vadd.f32 %v3117, %v3189
  %v3191 = vpop.f32.mrf.mxu0
  %v3192 = vadd.f32 %v3119, %v3191
  %3193 = vmatmul.bf16.gmra.mxu0 %v1239
  %v3194 = vpop.f32.mrf.mxu0
  %v3195 = vadd.f32 %v3122, %v3194
  %v3196 = vpop.f32.mrf.mxu0
  %v3197 = vadd.f32 %v3124, %v3196
  %3198 = vmatmul.bf16.gmra.mxu0 %v1257
  %v3199 = vpop.f32.mrf.mxu0
  %v3200 = vadd.f32 %v3127, %v3199
  %v3201 = vpop.f32.mrf.mxu0
  %v3202 = vadd.f32 %v3129, %v3201
  %3203 = vmatmul.bf16.gmra.mxu0 %v1275
  %v3204 = vpop.f32.mrf.mxu0
  %v3205 = vadd.f32 %v3132, %v3204
  %v3206 = vpop.f32.mrf.mxu0
  %v3207 = vadd.f32 %v3134, %v3206
  %3208 = vmatmul.bf16.gmra.mxu0 %v1293
  %v3209 = vpop.f32.mrf.mxu0
  %v3210 = vadd.f32 %v3137, %v3209
  %v3211 = vpop.f32.mrf.mxu0
  %v3212 = vadd.f32 %v3139, %v3211
  %3213 = vmatmul.bf16.gmra.mxu0 %v1311
  %v3214 = vpop.f32.mrf.mxu0
  %v3215 = vadd.f32 %v3142, %v3214
  %v3216 = vpop.f32.mrf.mxu0
  %v3217 = vadd.f32 %v3144, %v3216
  %3218 = vmatmul.bf16.gmra.mxu0 %v1329
  %v3219 = vpop.f32.mrf.mxu0
  %v3220 = vadd.f32 %v3147, %v3219
  %v3221 = vpop.f32.mrf.mxu0
  %v3222 = vadd.f32 %v3149, %v3221
  %3223 = vmatmul.bf16.gmra.mxu0 %v1347
  %v3224 = vpop.f32.mrf.mxu0
  %v3225 = vadd.f32 %v3152, %v3224
  %v3226 = vpop.f32.mrf.mxu0
  %v3227 = vadd.f32 %v3154, %v3226
  %3228 = vmatmul.bf16.gmra.mxu0 %v1365
  %v3229 = vpop.f32.mrf.mxu0
  %v3230 = vadd.f32 %v3157, %v3229
  %v3231 = vpop.f32.mrf.mxu0
  %v3232 = vadd.f32 %v3159, %v3231
  %3233 = vmatmul.bf16.gmra.mxu0 %v1383
  %v3234 = vpop.f32.mrf.mxu0
  %v3235 = vadd.f32 %v3162, %v3234
  %v3236 = vpop.f32.mrf.mxu0
  %v3237 = vadd.f32 %v3164, %v3236
  %3238 = vmatmul.bf16.gmra.mxu0 %v1401
  %v3239 = vpop.f32.mrf.mxu0
  %v3240 = vadd.f32 %v3167, %v3239
  %v3241 = vpop.f32.mrf.mxu0
  %v3242 = vadd.f32 %v3169, %v3241
  %3243 = vmatmul.bf16.gmra.mxu0 %v1419
  %v3244 = vpop.f32.mrf.mxu0
  %v3245 = vadd.f32 %v3172, %v3244
  %v3246 = vpop.f32.mrf.mxu0
  %3247 = vdwg.mxu0
  %3248 = vmatpush.bf16.msra.mxu0 %v2286
  %3249 = vmatpush.bf16.msra.mxu0 %v2285
  %3250 = vmatpush.bf16.msra.mxu0 %v2284
  %3251 = vmatpush.bf16.msra.mxu0 %v2283
  %3252 = vmatpush.bf16.msra.mxu0 %v2282
  %3253 = vmatpush.bf16.msra.mxu0 %v2281
  %3254 = vmatpush.bf16.msra.mxu0 %v2280
  %3255 = vmatpush.bf16.msra.mxu0 %v2279
  %3256 = vmatmul.bf16.gmra.mxu0 %v1204
  %v3257 = vpop.f32.mrf.mxu0
  %v3258 = vadd.f32 %v3185, %v3257
  %v3259 = vpop.f32.mrf.mxu0
  %v3260 = vadd.f32 %v3187, %v3259
  %3261 = vmatmul.bf16.gmra.mxu0 %v1222
  %v3262 = vpop.f32.mrf.mxu0
  %v3263 = vadd.f32 %v3190, %v3262
  %v3264 = vpop.f32.mrf.mxu0
  %v3265 = vadd.f32 %v3192, %v3264
  %3266 = vmatmul.bf16.gmra.mxu0 %v1240
  %v3267 = vpop.f32.mrf.mxu0
  %v3268 = vadd.f32 %v3195, %v3267
  %v3269 = vpop.f32.mrf.mxu0
  %v3270 = vadd.f32 %v3197, %v3269
  %3271 = vmatmul.bf16.gmra.mxu0 %v1258
  %v3272 = vpop.f32.mrf.mxu0
  %v3273 = vadd.f32 %v3200, %v3272
  %v3274 = vpop.f32.mrf.mxu0
  %v3275 = vadd.f32 %v3202, %v3274
  %3276 = vmatmul.bf16.gmra.mxu0 %v1276
  %v3277 = vpop.f32.mrf.mxu0
  %v3278 = vadd.f32 %v3205, %v3277
  %v3279 = vpop.f32.mrf.mxu0
  %v3280 = vadd.f32 %v3207, %v3279
  %3281 = vmatmul.bf16.gmra.mxu0 %v1294
  %v3282 = vpop.f32.mrf.mxu0
  %v3283 = vadd.f32 %v3210, %v3282
  %v3284 = vpop.f32.mrf.mxu0
  %v3285 = vadd.f32 %v3212, %v3284
  %3286 = vmatmul.bf16.gmra.mxu0 %v1312
  %v3287 = vpop.f32.mrf.mxu0
  %v3288 = vadd.f32 %v3215, %v3287
  %v3289 = vpop.f32.mrf.mxu0
  %v3290 = vadd.f32 %v3217, %v3289
  %3291 = vmatmul.bf16.gmra.mxu0 %v1330
  %v3292 = vpop.f32.mrf.mxu0
  %v3293 = vadd.f32 %v3220, %v3292
  %v3294 = vpop.f32.mrf.mxu0
  %v3295 = vadd.f32 %v3222, %v3294
  %3296 = vmatmul.bf16.gmra.mxu0 %v1348
  %v3297 = vpop.f32.mrf.mxu0
  %v3298 = vadd.f32 %v3225, %v3297
  %v3299 = vpop.f32.mrf.mxu0
  %v3300 = vadd.f32 %v3227, %v3299
  %3301 = vmatmul.bf16.gmra.mxu0 %v1366
  %v3302 = vpop.f32.mrf.mxu0
  %v3303 = vadd.f32 %v3230, %v3302
  %v3304 = vpop.f32.mrf.mxu0
  %v3305 = vadd.f32 %v3232, %v3304
  %3306 = vmatmul.bf16.gmra.mxu0 %v1384
  %v3307 = vpop.f32.mrf.mxu0
  %v3308 = vadd.f32 %v3235, %v3307
  %v3309 = vpop.f32.mrf.mxu0
  %v3310 = vadd.f32 %v3237, %v3309
  %3311 = vmatmul.bf16.gmra.mxu0 %v1402
  %v3312 = vpop.f32.mrf.mxu0
  %v3313 = vadd.f32 %v3240, %v3312
  %v3314 = vpop.f32.mrf.mxu0
  %v3315 = vadd.f32 %v3242, %v3314
  %3316 = vmatmul.bf16.gmra.mxu0 %v1420
  %v3317 = vpop.f32.mrf.mxu0
  %v3318 = vadd.f32 %v3245, %v3317
  %v3319 = vpop.f32.mrf.mxu0
  %3320 = vdwg.mxu0
  %3321 = vmatpush.bf16.msra.mxu0 %v2294
  %3322 = vmatpush.bf16.msra.mxu0 %v2293
  %3323 = vmatpush.bf16.msra.mxu0 %v2292
  %3324 = vmatpush.bf16.msra.mxu0 %v2291
  %3325 = vmatpush.bf16.msra.mxu0 %v2290
  %3326 = vmatpush.bf16.msra.mxu0 %v2289
  %3327 = vmatpush.bf16.msra.mxu0 %v2288
  %3328 = vmatpush.bf16.msra.mxu0 %v2287
  %3329 = vmatmul.bf16.gmra.mxu0 %v1205
  %v3330 = vpop.f32.mrf.mxu0
  %v3331 = vadd.f32 %v3258, %v3330
  %v3332 = vpop.f32.mrf.mxu0
  %v3333 = vadd.f32 %v3260, %v3332
  %3334 = vmatmul.bf16.gmra.mxu0 %v1223
  %v3335 = vpop.f32.mrf.mxu0
  %v3336 = vadd.f32 %v3263, %v3335
  %v3337 = vpop.f32.mrf.mxu0
  %v3338 = vadd.f32 %v3265, %v3337
  %3339 = vmatmul.bf16.gmra.mxu0 %v1241
  %v3340 = vpop.f32.mrf.mxu0
  %v3341 = vadd.f32 %v3268, %v3340
  %v3342 = vpop.f32.mrf.mxu0
  %v3343 = vadd.f32 %v3270, %v3342
  %3344 = vmatmul.bf16.gmra.mxu0 %v1259
  %v3345 = vpop.f32.mrf.mxu0
  %v3346 = vadd.f32 %v3273, %v3345
  %v3347 = vpop.f32.mrf.mxu0
  %v3348 = vadd.f32 %v3275, %v3347
  %3349 = vmatmul.bf16.gmra.mxu0 %v1277
  %v3350 = vpop.f32.mrf.mxu0
  %v3351 = vadd.f32 %v3278, %v3350
  %v3352 = vpop.f32.mrf.mxu0
  %v3353 = vadd.f32 %v3280, %v3352
  %3354 = vmatmul.bf16.gmra.mxu0 %v1295
  %v3355 = vpop.f32.mrf.mxu0
  %v3356 = vadd.f32 %v3283, %v3355
  %v3357 = vpop.f32.mrf.mxu0
  %v3358 = vadd.f32 %v3285, %v3357
  %3359 = vmatmul.bf16.gmra.mxu0 %v1313
  %v3360 = vpop.f32.mrf.mxu0
  %v3361 = vadd.f32 %v3288, %v3360
  %v3362 = vpop.f32.mrf.mxu0
  %v3363 = vadd.f32 %v3290, %v3362
  %3364 = vmatmul.bf16.gmra.mxu0 %v1331
  %v3365 = vpop.f32.mrf.mxu0
  %v3366 = vadd.f32 %v3293, %v3365
  %v3367 = vpop.f32.mrf.mxu0
  %v3368 = vadd.f32 %v3295, %v3367
  %3369 = vmatmul.bf16.gmra.mxu0 %v1349
  %v3370 = vpop.f32.mrf.mxu0
  %v3371 = vadd.f32 %v3298, %v3370
  %v3372 = vpop.f32.mrf.mxu0
  %v3373 = vadd.f32 %v3300, %v3372
  %3374 = vmatmul.bf16.gmra.mxu0 %v1367
  %v3375 = vpop.f32.mrf.mxu0
  %v3376 = vadd.f32 %v3303, %v3375
  %v3377 = vpop.f32.mrf.mxu0
  %v3378 = vadd.f32 %v3305, %v3377
  %3379 = vmatmul.bf16.gmra.mxu0 %v1385
  %v3380 = vpop.f32.mrf.mxu0
  %v3381 = vadd.f32 %v3308, %v3380
  %v3382 = vpop.f32.mrf.mxu0
  %v3383 = vadd.f32 %v3310, %v3382
  %3384 = vmatmul.bf16.gmra.mxu0 %v1403
  %v3385 = vpop.f32.mrf.mxu0
  %v3386 = vadd.f32 %v3313, %v3385
  %v3387 = vpop.f32.mrf.mxu0
  %v3388 = vadd.f32 %v3315, %v3387
  %3389 = vmatmul.bf16.gmra.mxu0 %v1421
  %v3390 = vpop.f32.mrf.mxu0
  %v3391 = vadd.f32 %v3318, %v3390
  %v3392 = vpop.f32.mrf.mxu0
  %3393 = vdwg.mxu0
  %3394 = vmatpush.bf16.msra.mxu0 %v2302
  %3395 = vmatpush.bf16.msra.mxu0 %v2301
  %3396 = vmatpush.bf16.msra.mxu0 %v2300
  %3397 = vmatpush.bf16.msra.mxu0 %v2299
  %3398 = vmatpush.bf16.msra.mxu0 %v2298
  %3399 = vmatpush.bf16.msra.mxu0 %v2297
  %3400 = vmatpush.bf16.msra.mxu0 %v2296
  %3401 = vmatpush.bf16.msra.mxu0 %v2295
  %3402 = vmatmul.bf16.gmra.mxu0 %v1206
  %v3403 = vpop.f32.mrf.mxu0
  %v3404 = vadd.f32 %v3331, %v3403
  %v3405 = vpop.f32.mrf.mxu0
  %v3406 = vadd.f32 %v3333, %v3405
  %3407 = vmatmul.bf16.gmra.mxu0 %v1224
  %v3408 = vpop.f32.mrf.mxu0
  %v3409 = vadd.f32 %v3336, %v3408
  %v3410 = vpop.f32.mrf.mxu0
  %v3411 = vadd.f32 %v3338, %v3410
  %3412 = vmatmul.bf16.gmra.mxu0 %v1242
  %v3413 = vpop.f32.mrf.mxu0
  %v3414 = vadd.f32 %v3341, %v3413
  %v3415 = vpop.f32.mrf.mxu0
  %v3416 = vadd.f32 %v3343, %v3415
  %3417 = vmatmul.bf16.gmra.mxu0 %v1260
  %v3418 = vpop.f32.mrf.mxu0
  %v3419 = vadd.f32 %v3346, %v3418
  %v3420 = vpop.f32.mrf.mxu0
  %v3421 = vadd.f32 %v3348, %v3420
  %3422 = vmatmul.bf16.gmra.mxu0 %v1278
  %v3423 = vpop.f32.mrf.mxu0
  %v3424 = vadd.f32 %v3351, %v3423
  %v3425 = vpop.f32.mrf.mxu0
  %v3426 = vadd.f32 %v3353, %v3425
  %3427 = vmatmul.bf16.gmra.mxu0 %v1296
  %v3428 = vpop.f32.mrf.mxu0
  %v3429 = vadd.f32 %v3356, %v3428
  %v3430 = vpop.f32.mrf.mxu0
  %v3431 = vadd.f32 %v3358, %v3430
  %3432 = vmatmul.bf16.gmra.mxu0 %v1314
  %v3433 = vpop.f32.mrf.mxu0
  %v3434 = vadd.f32 %v3361, %v3433
  %v3435 = vpop.f32.mrf.mxu0
  %v3436 = vadd.f32 %v3363, %v3435
  %3437 = vmatmul.bf16.gmra.mxu0 %v1332
  %v3438 = vpop.f32.mrf.mxu0
  %v3439 = vadd.f32 %v3366, %v3438
  %v3440 = vpop.f32.mrf.mxu0
  %v3441 = vadd.f32 %v3368, %v3440
  %3442 = vmatmul.bf16.gmra.mxu0 %v1350
  %v3443 = vpop.f32.mrf.mxu0
  %v3444 = vadd.f32 %v3371, %v3443
  %v3445 = vpop.f32.mrf.mxu0
  %v3446 = vadd.f32 %v3373, %v3445
  %3447 = vmatmul.bf16.gmra.mxu0 %v1368
  %v3448 = vpop.f32.mrf.mxu0
  %v3449 = vadd.f32 %v3376, %v3448
  %v3450 = vpop.f32.mrf.mxu0
  %v3451 = vadd.f32 %v3378, %v3450
  %3452 = vmatmul.bf16.gmra.mxu0 %v1386
  %v3453 = vpop.f32.mrf.mxu0
  %v3454 = vadd.f32 %v3381, %v3453
  %v3455 = vpop.f32.mrf.mxu0
  %v3456 = vadd.f32 %v3383, %v3455
  %3457 = vmatmul.bf16.gmra.mxu0 %v1404
  %v3458 = vpop.f32.mrf.mxu0
  %v3459 = vadd.f32 %v3386, %v3458
  %v3460 = vpop.f32.mrf.mxu0
  %v3461 = vadd.f32 %v3388, %v3460
  %3462 = vmatmul.bf16.gmra.mxu0 %v1422
  %v3463 = vpop.f32.mrf.mxu0
  %v3464 = vadd.f32 %v3391, %v3463
  %v3465 = vpop.f32.mrf.mxu0
  %3466 = vdwg.mxu0
  %3467 = vmatpush.bf16.msra.mxu0 %v2310
  %3468 = vmatpush.bf16.msra.mxu0 %v2309
  %3469 = vmatpush.bf16.msra.mxu0 %v2308
  %3470 = vmatpush.bf16.msra.mxu0 %v2307
  %3471 = vmatpush.bf16.msra.mxu0 %v2306
  %3472 = vmatpush.bf16.msra.mxu0 %v2305
  %3473 = vmatpush.bf16.msra.mxu0 %v2304
  %3474 = vmatpush.bf16.msra.mxu0 %v2303
  %3475 = vmatmul.bf16.gmra.mxu0 %v1207
  %v3476 = vpop.f32.mrf.mxu0
  %v3477 = vadd.f32 %v3404, %v3476
  %v3478 = vpop.f32.mrf.mxu0
  %v3479 = vadd.f32 %v3406, %v3478
  %3480 = vmatmul.bf16.gmra.mxu0 %v1225
  %v3481 = vpop.f32.mrf.mxu0
  %v3482 = vadd.f32 %v3409, %v3481
  %v3483 = vpop.f32.mrf.mxu0
  %v3484 = vadd.f32 %v3411, %v3483
  %3485 = vmatmul.bf16.gmra.mxu0 %v1243
  %v3486 = vpop.f32.mrf.mxu0
  %v3487 = vadd.f32 %v3414, %v3486
  %v3488 = vpop.f32.mrf.mxu0
  %v3489 = vadd.f32 %v3416, %v3488
  %3490 = vmatmul.bf16.gmra.mxu0 %v1261
  %v3491 = vpop.f32.mrf.mxu0
  %v3492 = vadd.f32 %v3419, %v3491
  %v3493 = vpop.f32.mrf.mxu0
  %v3494 = vadd.f32 %v3421, %v3493
  %3495 = vmatmul.bf16.gmra.mxu0 %v1279
  %v3496 = vpop.f32.mrf.mxu0
  %v3497 = vadd.f32 %v3424, %v3496
  %v3498 = vpop.f32.mrf.mxu0
  %v3499 = vadd.f32 %v3426, %v3498
  %3500 = vmatmul.bf16.gmra.mxu0 %v1297
  %v3501 = vpop.f32.mrf.mxu0
  %v3502 = vadd.f32 %v3429, %v3501
  %v3503 = vpop.f32.mrf.mxu0
  %v3504 = vadd.f32 %v3431, %v3503
  %3505 = vmatmul.bf16.gmra.mxu0 %v1315
  %v3506 = vpop.f32.mrf.mxu0
  %v3507 = vadd.f32 %v3434, %v3506
  %v3508 = vpop.f32.mrf.mxu0
  %v3509 = vadd.f32 %v3436, %v3508
  %3510 = vmatmul.bf16.gmra.mxu0 %v1333
  %v3511 = vpop.f32.mrf.mxu0
  %v3512 = vadd.f32 %v3439, %v3511
  %v3513 = vpop.f32.mrf.mxu0
  %v3514 = vadd.f32 %v3441, %v3513
  %3515 = vmatmul.bf16.gmra.mxu0 %v1351
  %v3516 = vpop.f32.mrf.mxu0
  %v3517 = vadd.f32 %v3444, %v3516
  %v3518 = vpop.f32.mrf.mxu0
  %v3519 = vadd.f32 %v3446, %v3518
  %3520 = vmatmul.bf16.gmra.mxu0 %v1369
  %v3521 = vpop.f32.mrf.mxu0
  %v3522 = vadd.f32 %v3449, %v3521
  %v3523 = vpop.f32.mrf.mxu0
  %v3524 = vadd.f32 %v3451, %v3523
  %3525 = vmatmul.bf16.gmra.mxu0 %v1387
  %v3526 = vpop.f32.mrf.mxu0
  %v3527 = vadd.f32 %v3454, %v3526
  %v3528 = vpop.f32.mrf.mxu0
  %v3529 = vadd.f32 %v3456, %v3528
  %3530 = vmatmul.bf16.gmra.mxu0 %v1405
  %v3531 = vpop.f32.mrf.mxu0
  %v3532 = vadd.f32 %v3459, %v3531
  %v3533 = vpop.f32.mrf.mxu0
  %v3534 = vadd.f32 %v3461, %v3533
  %3535 = vmatmul.bf16.gmra.mxu0 %v1423
  %v3536 = vpop.f32.mrf.mxu0
  %v3537 = vadd.f32 %v3464, %v3536
  %v3538 = vpop.f32.mrf.mxu0
  %3539 = vdwg.mxu0
  %3540 = vmatpush.bf16.msra.mxu0 %v2318
  %3541 = vmatpush.bf16.msra.mxu0 %v2317
  %3542 = vmatpush.bf16.msra.mxu0 %v2316
  %3543 = vmatpush.bf16.msra.mxu0 %v2315
  %3544 = vmatpush.bf16.msra.mxu0 %v2314
  %3545 = vmatpush.bf16.msra.mxu0 %v2313
  %3546 = vmatpush.bf16.msra.mxu0 %v2312
  %3547 = vmatpush.bf16.msra.mxu0 %v2311
  %3548 = vmatmul.bf16.gmra.mxu0 %v1208
  %v3549 = vpop.f32.mrf.mxu0
  %v3550 = vadd.f32 %v3477, %v3549
  %v3551 = vpop.f32.mrf.mxu0
  %v3552 = vadd.f32 %v3479, %v3551
  %3553 = vmatmul.bf16.gmra.mxu0 %v1226
  %v3554 = vpop.f32.mrf.mxu0
  %v3555 = vadd.f32 %v3482, %v3554
  %v3556 = vpop.f32.mrf.mxu0
  %v3557 = vadd.f32 %v3484, %v3556
  %3558 = vmatmul.bf16.gmra.mxu0 %v1244
  %v3559 = vpop.f32.mrf.mxu0
  %v3560 = vadd.f32 %v3487, %v3559
  %v3561 = vpop.f32.mrf.mxu0
  %v3562 = vadd.f32 %v3489, %v3561
  %3563 = vmatmul.bf16.gmra.mxu0 %v1262
  %v3564 = vpop.f32.mrf.mxu0
  %v3565 = vadd.f32 %v3492, %v3564
  %v3566 = vpop.f32.mrf.mxu0
  %v3567 = vadd.f32 %v3494, %v3566
  %3568 = vmatmul.bf16.gmra.mxu0 %v1280
  %v3569 = vpop.f32.mrf.mxu0
  %v3570 = vadd.f32 %v3497, %v3569
  %v3571 = vpop.f32.mrf.mxu0
  %v3572 = vadd.f32 %v3499, %v3571
  %3573 = vmatmul.bf16.gmra.mxu0 %v1298
  %v3574 = vpop.f32.mrf.mxu0
  %v3575 = vadd.f32 %v3502, %v3574
  %v3576 = vpop.f32.mrf.mxu0
  %v3577 = vadd.f32 %v3504, %v3576
  %3578 = vmatmul.bf16.gmra.mxu0 %v1316
  %v3579 = vpop.f32.mrf.mxu0
  %v3580 = vadd.f32 %v3507, %v3579
  %v3581 = vpop.f32.mrf.mxu0
  %v3582 = vadd.f32 %v3509, %v3581
  %3583 = vmatmul.bf16.gmra.mxu0 %v1334
  %v3584 = vpop.f32.mrf.mxu0
  %v3585 = vadd.f32 %v3512, %v3584
  %v3586 = vpop.f32.mrf.mxu0
  %v3587 = vadd.f32 %v3514, %v3586
  %3588 = vmatmul.bf16.gmra.mxu0 %v1352
  %v3589 = vpop.f32.mrf.mxu0
  %v3590 = vadd.f32 %v3517, %v3589
  %v3591 = vpop.f32.mrf.mxu0
  %v3592 = vadd.f32 %v3519, %v3591
  %3593 = vmatmul.bf16.gmra.mxu0 %v1370
  %v3594 = vpop.f32.mrf.mxu0
  %v3595 = vadd.f32 %v3522, %v3594
  %v3596 = vpop.f32.mrf.mxu0
  %v3597 = vadd.f32 %v3524, %v3596
  %3598 = vmatmul.bf16.gmra.mxu0 %v1388
  %v3599 = vpop.f32.mrf.mxu0
  %v3600 = vadd.f32 %v3527, %v3599
  %v3601 = vpop.f32.mrf.mxu0
  %v3602 = vadd.f32 %v3529, %v3601
  %3603 = vmatmul.bf16.gmra.mxu0 %v1406
  %v3604 = vpop.f32.mrf.mxu0
  %v3605 = vadd.f32 %v3532, %v3604
  %v3606 = vpop.f32.mrf.mxu0
  %v3607 = vadd.f32 %v3534, %v3606
  %3608 = vmatmul.bf16.gmra.mxu0 %v1424
  %v3609 = vpop.f32.mrf.mxu0
  %v3610 = vadd.f32 %v3537, %v3609
  %v3611 = vpop.f32.mrf.mxu0
  %3612 = vdwg.mxu0
  %3613 = vmatpush.bf16.msra.mxu0 %v2326
  %3614 = vmatpush.bf16.msra.mxu0 %v2325
  %3615 = vmatpush.bf16.msra.mxu0 %v2324
  %3616 = vmatpush.bf16.msra.mxu0 %v2323
  %3617 = vmatpush.bf16.msra.mxu0 %v2322
  %3618 = vmatpush.bf16.msra.mxu0 %v2321
  %3619 = vmatpush.bf16.msra.mxu0 %v2320
  %3620 = vmatpush.bf16.msra.mxu0 %v2319
  %3621 = vmatmul.bf16.gmra.mxu0 %v1209
  %v3622 = vpop.f32.mrf.mxu0
  %v3623 = vadd.f32 %v3550, %v3622
  %v3624 = vpop.f32.mrf.mxu0
  %v3625 = vadd.f32 %v3552, %v3624
  %3626 = vmatmul.bf16.gmra.mxu0 %v1227
  %v3627 = vpop.f32.mrf.mxu0
  %v3628 = vadd.f32 %v3555, %v3627
  %v3629 = vpop.f32.mrf.mxu0
  %v3630 = vadd.f32 %v3557, %v3629
  %3631 = vmatmul.bf16.gmra.mxu0 %v1245
  %v3632 = vpop.f32.mrf.mxu0
  %v3633 = vadd.f32 %v3560, %v3632
  %v3634 = vpop.f32.mrf.mxu0
  %v3635 = vadd.f32 %v3562, %v3634
  %3636 = vmatmul.bf16.gmra.mxu0 %v1263
  %v3637 = vpop.f32.mrf.mxu0
  %v3638 = vadd.f32 %v3565, %v3637
  %v3639 = vpop.f32.mrf.mxu0
  %v3640 = vadd.f32 %v3567, %v3639
  %3641 = vmatmul.bf16.gmra.mxu0 %v1281
  %v3642 = vpop.f32.mrf.mxu0
  %v3643 = vadd.f32 %v3570, %v3642
  %v3644 = vpop.f32.mrf.mxu0
  %v3645 = vadd.f32 %v3572, %v3644
  %3646 = vmatmul.bf16.gmra.mxu0 %v1299
  %v3647 = vpop.f32.mrf.mxu0
  %v3648 = vadd.f32 %v3575, %v3647
  %v3649 = vpop.f32.mrf.mxu0
  %v3650 = vadd.f32 %v3577, %v3649
  %3651 = vmatmul.bf16.gmra.mxu0 %v1317
  %v3652 = vpop.f32.mrf.mxu0
  %v3653 = vadd.f32 %v3580, %v3652
  %v3654 = vpop.f32.mrf.mxu0
  %v3655 = vadd.f32 %v3582, %v3654
  %3656 = vmatmul.bf16.gmra.mxu0 %v1335
  %v3657 = vpop.f32.mrf.mxu0
  %v3658 = vadd.f32 %v3585, %v3657
  %v3659 = vpop.f32.mrf.mxu0
  %v3660 = vadd.f32 %v3587, %v3659
  %3661 = vmatmul.bf16.gmra.mxu0 %v1353
  %v3662 = vpop.f32.mrf.mxu0
  %v3663 = vadd.f32 %v3590, %v3662
  %v3664 = vpop.f32.mrf.mxu0
  %v3665 = vadd.f32 %v3592, %v3664
  %3666 = vmatmul.bf16.gmra.mxu0 %v1371
  %v3667 = vpop.f32.mrf.mxu0
  %v3668 = vadd.f32 %v3595, %v3667
  %v3669 = vpop.f32.mrf.mxu0
  %v3670 = vadd.f32 %v3597, %v3669
  %3671 = vmatmul.bf16.gmra.mxu0 %v1389
  %v3672 = vpop.f32.mrf.mxu0
  %v3673 = vadd.f32 %v3600, %v3672
  %v3674 = vpop.f32.mrf.mxu0
  %v3675 = vadd.f32 %v3602, %v3674
  %3676 = vmatmul.bf16.gmra.mxu0 %v1407
  %v3677 = vpop.f32.mrf.mxu0
  %v3678 = vadd.f32 %v3605, %v3677
  %v3679 = vpop.f32.mrf.mxu0
  %v3680 = vadd.f32 %v3607, %v3679
  %3681 = vmatmul.bf16.gmra.mxu0 %v1425
  %v3682 = vpop.f32.mrf.mxu0
  %v3683 = vadd.f32 %v3610, %v3682
  %v3684 = vpop.f32.mrf.mxu0
  %3685 = vdwg.mxu0
  %3686 = vmatpush.bf16.msra.mxu0 %v2334
  %3687 = vmatpush.bf16.msra.mxu0 %v2333
  %3688 = vmatpush.bf16.msra.mxu0 %v2332
  %3689 = vmatpush.bf16.msra.mxu0 %v2331
  %3690 = vmatpush.bf16.msra.mxu0 %v2330
  %3691 = vmatpush.bf16.msra.mxu0 %v2329
  %3692 = vmatpush.bf16.msra.mxu0 %v2328
  %3693 = vmatpush.bf16.msra.mxu0 %v2327
  %3694 = vmatmul.bf16.gmra.mxu0 %v1210
  %v3695 = vpop.f32.mrf.mxu0
  %v3696 = vadd.f32 %v3623, %v3695
  %v3697 = vpop.f32.mrf.mxu0
  %v3698 = vadd.f32 %v3625, %v3697
  %3699 = vmatmul.bf16.gmra.mxu0 %v1228
  %v3700 = vpop.f32.mrf.mxu0
  %v3701 = vadd.f32 %v3628, %v3700
  %v3702 = vpop.f32.mrf.mxu0
  %v3703 = vadd.f32 %v3630, %v3702
  %3704 = vmatmul.bf16.gmra.mxu0 %v1246
  %v3705 = vpop.f32.mrf.mxu0
  %v3706 = vadd.f32 %v3633, %v3705
  %v3707 = vpop.f32.mrf.mxu0
  %v3708 = vadd.f32 %v3635, %v3707
  %3709 = vmatmul.bf16.gmra.mxu0 %v1264
  %v3710 = vpop.f32.mrf.mxu0
  %v3711 = vadd.f32 %v3638, %v3710
  %v3712 = vpop.f32.mrf.mxu0
  %v3713 = vadd.f32 %v3640, %v3712
  %3714 = vmatmul.bf16.gmra.mxu0 %v1282
  %v3715 = vpop.f32.mrf.mxu0
  %v3716 = vadd.f32 %v3643, %v3715
  %v3717 = vpop.f32.mrf.mxu0
  %v3718 = vadd.f32 %v3645, %v3717
  %3719 = vmatmul.bf16.gmra.mxu0 %v1300
  %v3720 = vpop.f32.mrf.mxu0
  %v3721 = vadd.f32 %v3648, %v3720
  %v3722 = vpop.f32.mrf.mxu0
  %v3723 = vadd.f32 %v3650, %v3722
  %3724 = vmatmul.bf16.gmra.mxu0 %v1318
  %v3725 = vpop.f32.mrf.mxu0
  %v3726 = vadd.f32 %v3653, %v3725
  %v3727 = vpop.f32.mrf.mxu0
  %v3728 = vadd.f32 %v3655, %v3727
  %3729 = vmatmul.bf16.gmra.mxu0 %v1336
  %v3730 = vpop.f32.mrf.mxu0
  %v3731 = vadd.f32 %v3658, %v3730
  %v3732 = vpop.f32.mrf.mxu0
  %v3733 = vadd.f32 %v3660, %v3732
  %3734 = vmatmul.bf16.gmra.mxu0 %v1354
  %v3735 = vpop.f32.mrf.mxu0
  %v3736 = vadd.f32 %v3663, %v3735
  %v3737 = vpop.f32.mrf.mxu0
  %v3738 = vadd.f32 %v3665, %v3737
  %3739 = vmatmul.bf16.gmra.mxu0 %v1372
  %v3740 = vpop.f32.mrf.mxu0
  %v3741 = vadd.f32 %v3668, %v3740
  %v3742 = vpop.f32.mrf.mxu0
  %v3743 = vadd.f32 %v3670, %v3742
  %3744 = vmatmul.bf16.gmra.mxu0 %v1390
  %v3745 = vpop.f32.mrf.mxu0
  %v3746 = vadd.f32 %v3673, %v3745
  %v3747 = vpop.f32.mrf.mxu0
  %v3748 = vadd.f32 %v3675, %v3747
  %3749 = vmatmul.bf16.gmra.mxu0 %v1408
  %v3750 = vpop.f32.mrf.mxu0
  %v3751 = vadd.f32 %v3678, %v3750
  %v3752 = vpop.f32.mrf.mxu0
  %v3753 = vadd.f32 %v3680, %v3752
  %3754 = vmatmul.bf16.gmra.mxu0 %v1426
  %v3755 = vpop.f32.mrf.mxu0
  %v3756 = vadd.f32 %v3683, %v3755
  %v3757 = vpop.f32.mrf.mxu0
  %3758 = vdwg.mxu0
  %3759 = vmatpush.bf16.msra.mxu0 0
  %3760 = vmatpush.bf16.msra.mxu0 0
  %3761 = vmatpush.bf16.msra.mxu0 0
  %3762 = vmatpush.bf16.msra.mxu0 0
  %3763 = vmatpush.bf16.msra.mxu0 0
  %3764 = vmatpush.bf16.msra.mxu0 0
  %3765 = vmatpush.bf16.msra.mxu0 %v2516
  %3766 = vmatpush.bf16.msra.mxu0 %v2335
  %3767 = vmatmul.bf16.gmra.mxu0 %v2476
  %v3768 = vpop.f32.mrf.mxu0
  %v3769 = vadd.f32 %v3696, %v3768
  %v3770 = vpop.f32.mrf.mxu0
  %v3771 = vadd.f32 %v3698, %v3770
  %3772 = vmatmul.bf16.gmra.mxu0 %v2479
  %v3773 = vpop.f32.mrf.mxu0
  %v3774 = vadd.f32 %v3701, %v3773
  %v3775 = vpop.f32.mrf.mxu0
  %v3776 = vadd.f32 %v3703, %v3775
  %3777 = vmatmul.bf16.gmra.mxu0 %v2482
  %v3778 = vpop.f32.mrf.mxu0
  %v3779 = vadd.f32 %v3706, %v3778
  %v3780 = vpop.f32.mrf.mxu0
  %v3781 = vadd.f32 %v3708, %v3780
  %3782 = vmatmul.bf16.gmra.mxu0 %v2485
  %v3783 = vpop.f32.mrf.mxu0
  %v3784 = vadd.f32 %v3711, %v3783
  %v3785 = vpop.f32.mrf.mxu0
  %v3786 = vadd.f32 %v3713, %v3785
  %3787 = vmatmul.bf16.gmra.mxu0 %v2488
  %v3788 = vpop.f32.mrf.mxu0
  %v3789 = vadd.f32 %v3716, %v3788
  %v3790 = vpop.f32.mrf.mxu0
  %v3791 = vadd.f32 %v3718, %v3790
  %3792 = vmatmul.bf16.gmra.mxu0 %v2491
  %v3793 = vpop.f32.mrf.mxu0
  %v3794 = vadd.f32 %v3721, %v3793
  %v3795 = vpop.f32.mrf.mxu0
  %v3796 = vadd.f32 %v3723, %v3795
  %3797 = vmatmul.bf16.gmra.mxu0 %v2494
  %v3798 = vpop.f32.mrf.mxu0
  %v3799 = vadd.f32 %v3726, %v3798
  %v3800 = vpop.f32.mrf.mxu0
  %v3801 = vadd.f32 %v3728, %v3800
  %3802 = vmatmul.bf16.gmra.mxu0 %v2497
  %v3803 = vpop.f32.mrf.mxu0
  %v3804 = vadd.f32 %v3731, %v3803
  %v3805 = vpop.f32.mrf.mxu0
  %v3806 = vadd.f32 %v3733, %v3805
  %3807 = vmatmul.bf16.gmra.mxu0 %v2500
  %v3808 = vpop.f32.mrf.mxu0
  %v3809 = vadd.f32 %v3736, %v3808
  %v3810 = vpop.f32.mrf.mxu0
  %v3811 = vadd.f32 %v3738, %v3810
  %3812 = vmatmul.bf16.gmra.mxu0 %v2503
  %v3813 = vpop.f32.mrf.mxu0
  %v3814 = vadd.f32 %v3741, %v3813
  %v3815 = vpop.f32.mrf.mxu0
  %v3816 = vadd.f32 %v3743, %v3815
  %3817 = vmatmul.bf16.gmra.mxu0 %v2506
  %v3818 = vpop.f32.mrf.mxu0
  %v3819 = vadd.f32 %v3746, %v3818
  %v3820 = vpop.f32.mrf.mxu0
  %v3821 = vadd.f32 %v3748, %v3820
  %3822 = vmatmul.bf16.gmra.mxu0 %v2509
  %v3823 = vpop.f32.mrf.mxu0
  %v3824 = vadd.f32 %v3751, %v3823
  %v3825 = vpop.f32.mrf.mxu0
  %v3826 = vadd.f32 %v3753, %v3825
  %3827 = vmatmul.bf16.gmra.mxu0 %v2512
  %v3828 = vpop.f32.mrf.mxu0
  %v3829 = vadd.f32 %v3756, %v3828
  %v3830 = vpop.f32.mrf.mxu0
  %3831 = vdwg.mxu0
  %v3832 = vmax.f32 %v3769, 0.0
  %v3833 = vmax.f32 %v3771, 0.0
  %v3834 = vmax.f32 %v3774, 0.0
  %v3835 = vmax.f32 %v3776, 0.0
  %v3836 = vmax.f32 %v3779, 0.0
  %v3837 = vmax.f32 %v3781, 0.0
  %v3838 = vmax.f32 %v3784, 0.0
  %v3839 = vmax.f32 %v3786, 0.0
  %v3840 = vmax.f32 %v3789, 0.0
  %v3841 = vmax.f32 %v3791, 0.0
  %v3842 = vmax.f32 %v3794, 0.0
  %v3843 = vmax.f32 %v3796, 0.0
  %v3844 = vmax.f32 %v3799, 0.0
  %v3845 = vmax.f32 %v3801, 0.0
  %v3846 = vmax.f32 %v3804, 0.0
  %v3847 = vmax.f32 %v3806, 0.0
  %v3848 = vmax.f32 %v3809, 0.0
  %v3849 = vmax.f32 %v3811, 0.0
  %v3850 = vmax.f32 %v3814, 0.0
  %v3851 = vmax.f32 %v3816, 0.0
  %v3852 = vmax.f32 %v3819, 0.0
  %v3853 = vmax.f32 %v3821, 0.0
  %v3854 = vmax.f32 %v3824, 0.0
  %v3855 = vmax.f32 %v3826, 0.0
  %v3856 = vmax.f32 %v3829, 0.0
  %v3857 = vpack.c.bf16 %v3832, %v3832
  %v3858 = vpack.c.bf16 %v3833, %v3833
  %v3859 = vpack.c.bf16 %v3834, %v3834
  %v3860 = vpack.c.bf16 %v3835, %v3835
  %v3861 = vpack.c.bf16 %v3836, %v3836
  %v3862 = vpack.c.bf16 %v3837, %v3837
  %v3863 = vpack.c.bf16 %v3838, %v3838
  %v3864 = vpack.c.bf16 %v3839, %v3839
  %v3865 = vpack.c.bf16 %v3840, %v3840
  %v3866 = vpack.c.bf16 %v3841, %v3841
  %v3867 = vpack.c.bf16 %v3842, %v3842
  %v3868 = vpack.c.bf16 %v3843, %v3843
  %v3869 = vpack.c.bf16 %v3844, %v3844
  %v3870 = vpack.c.bf16 %v3845, %v3845
  %v3871 = vpack.c.bf16 %v3846, %v3846
  %v3872 = vpack.c.bf16 %v3847, %v3847
  %v3873 = vpack.c.bf16 %v3848, %v3848
  %v3874 = vpack.c.bf16 %v3849, %v3849
  %v3875 = vpack.c.bf16 %v3850, %v3850
  %v3876 = vpack.c.bf16 %v3851, %v3851
  %v3877 = vpack.c.bf16 %v3852, %v3852
  %v3878 = vpack.c.bf16 %v3853, %v3853
  %v3879 = vpack.c.bf16 %v3854, %v3854
  %v3880 = vpack.c.bf16 %v3855, %v3855
  %v3881 = vpack.c.bf16 %v3856, %v3856
  %vm3882 = vcmask 158720
  %3883 = vst.msk [vmem:[%s3] sm:$0xf] %vm3882, %v3857
  %3884 = vst.msk [vmem:[%s3 + $0x4] sm:$0xf] %vm3882, %v3858
  %3885 = vst.msk [vmem:[%s3 + $0x8] sm:$0xf] %vm3882, %v3859
  %3886 = vst.msk [vmem:[%s3 + $0xc] sm:$0xf] %vm3882, %v3860
  %3887 = vst.msk [vmem:[%s3 + $0x10] sm:$0xf] %vm3882, %v3861
  %3888 = vst.msk [vmem:[%s3 + $0x14] sm:$0xf] %vm3882, %v3862
  %3889 = vst.msk [vmem:[%s3 + $0x18] sm:$0xf] %vm3882, %v3863
  %3890 = vst.msk [vmem:[%s3 + $0x1c] sm:$0xf] %vm3882, %v3864
  %3891 = vst.msk [vmem:[%s3 + $0x20] sm:$0xf] %vm3882, %v3865
  %3892 = vst.msk [vmem:[%s3 + $0x24] sm:$0xf] %vm3882, %v3866
  %3893 = vst.msk [vmem:[%s3 + $0x28] sm:$0xf] %vm3882, %v3867
  %3894 = vst.msk [vmem:[%s3 + $0x2c] sm:$0xf] %vm3882, %v3868
  %3895 = vst.msk [vmem:[%s3 + $0x30] sm:$0xf] %vm3882, %v3869
  %3896 = vst.msk [vmem:[%s3 + $0x34] sm:$0xf] %vm3882, %v3870
  %3897 = vst.msk [vmem:[%s3 + $0x38] sm:$0xf] %vm3882, %v3871
  %3898 = vst.msk [vmem:[%s3 + $0x3c] sm:$0xf] %vm3882, %v3872
  %3899 = vst.msk [vmem:[%s3 + $0x40] sm:$0xf] %vm3882, %v3873
  %3900 = vst.msk [vmem:[%s3 + $0x44] sm:$0xf] %vm3882, %v3874
  %3901 = vst.msk [vmem:[%s3 + $0x48] sm:$0xf] %vm3882, %v3875
  %3902 = vst.msk [vmem:[%s3 + $0x4c] sm:$0xf] %vm3882, %v3876
  %3903 = vst.msk [vmem:[%s3 + $0x50] sm:$0xf] %vm3882, %v3877
  %3904 = vst.msk [vmem:[%s3 + $0x54] sm:$0xf] %vm3882, %v3878
  %3905 = vst.msk [vmem:[%s3 + $0x58] sm:$0xf] %vm3882, %v3879
  %3906 = vst.msk [vmem:[%s3 + $0x5c] sm:$0xf] %vm3882, %v3880
  %3907 = vst.msk [vmem:[%s3 + $0x60] sm:$0xf] %vm3882, %v3881
  // Predicated region
  $region14: #{net_forward.19} parent=0 // pred_check
    _
  $region15: #{net_forward.19} parent=0 // pred_check_branch
    %3909 = sbr.rel (0) target = $region17
  $region16: #{net_forward.19} parent=0 // pred_region
    _
  $region17: #{net_forward.19} parent=0 // pred_fallthru
    _
  // Predicated region
  $region18: #{net_forward.19} parent=0 // pred_check
    _
  $region19: #{net_forward.19} parent=0 // pred_check_branch
    %3911 = sbr.rel (0) target = $region21
  $region20: #{net_forward.19} parent=0 // pred_region
    _
  $region21: #{net_forward.19} parent=0 // pred_fallthru
    _

// kernel: net_forward.21
$region0: #{net_forward.21}
  #allocation0 [shape = 'u32[]', space=smem, size = 0x4, offset = 0x4, fixed_abs, tag = 'smem constant byte address 0x4 - core index']
  #allocation1 [shape = 'u32[72,128]{1,0:T(1,128)}', space=vmem, size = 0x9000, scoped, tag = 'internal scratch']
  %s0 = inlined_call_operand.vmem [shape: bf16[50,144], index: 0, kind: input, shape index: {}]
  %s1 = inlined_call_operand.vmem [shape: bf16[144,24], index: 1, kind: input, shape index: {}]
  %s2 = inlined_call_operand.vmem [shape: f32[1,24], index: 2, kind: input, shape index: {}]
  %s3 = inlined_call_operand.vmem [shape: bf16[50,24], index: 3, kind: output, shape index: {}]
  %s4 = sld [smem:[#allocation0]]
  $region22: #{net_forward.21} parent=0
    _
  %s6 = ssub.s32 1, %s4
  %s7 = scalar_select 0, %s6, %s4
  // Predicated region
  $region2: #{net_forward.21} parent=0 // pred_check
    _
  $region3: #{net_forward.21} parent=0 // pred_check_branch
    %9 = sbr.rel (0) target = $region5
  $region4: #{net_forward.21} parent=0 // pred_region
    _
  $region5: #{net_forward.21} parent=0 // pred_fallthru
    _
  // Predicated region
  $region6: #{net_forward.21} parent=0 // pred_check
    _
  $region7: #{net_forward.21} parent=0 // pred_check_branch
    %11 = sbr.rel (0) target = $region9
  $region8: #{net_forward.21} parent=0 // pred_region
    _
  $region9: #{net_forward.21} parent=0 // pred_fallthru
    _
  // Predicated region
  $region10: #{net_forward.21} parent=0 // pred_check
    _
  $region11: #{net_forward.21} parent=0 // pred_check_branch
    %13 = sbr.rel (0) target = $region13
  $region12: #{net_forward.21} parent=0 // pred_region
    _
  $region13: #{net_forward.21} parent=0 // pred_fallthru
    _
  %v15 = vld [vmem:[%s0] sm:$0xff]
  %v16 = vld [vmem:[%s0 + $0x8] sm:$0xff]
  %v17 = vld [vmem:[%s0 + $0x10] sm:$0xff]
  %v18 = vld [vmem:[%s0 + $0x18] sm:$0xff]
  %v19 = vld [vmem:[%s0 + $0x20] sm:$0xff]
  %v20 = vld [vmem:[%s0 + $0x28] sm:$0xff]
  %v21 = vld [vmem:[%s0 + $0x30] sm:$0x11]
  %v22 = vld [vmem:[%s1] sm:$0xf]
  %v23 = vld [vmem:[%s1 + $0x4] sm:$0xf]
  %v24 = vld [vmem:[%s1 + $0x8] sm:$0xf]
  %v25 = vld [vmem:[%s1 + $0xc] sm:$0xf]
  %v26 = vld [vmem:[%s1 + $0x10] sm:$0xf]
  %v27 = vld [vmem:[%s1 + $0x14] sm:$0xf]
  %v28 = vld [vmem:[%s1 + $0x18] sm:$0xf]
  %v29 = vld [vmem:[%s1 + $0x1c] sm:$0xf]
  %v30 = vld [vmem:[%s1 + $0x20] sm:$0xf]
  %v31 = vld [vmem:[%s1 + $0x24] sm:$0xf]
  %v32 = vld [vmem:[%s1 + $0x28] sm:$0xf]
  %v33 = vld [vmem:[%s1 + $0x2c] sm:$0xf]
  %v34 = vld [vmem:[%s1 + $0x30] sm:$0xf]
  %v35 = vld [vmem:[%s1 + $0x34] sm:$0xf]
  %v36 = vld [vmem:[%s1 + $0x38] sm:$0xf]
  %v37 = vld [vmem:[%s1 + $0x3c] sm:$0xf]
  %v38 = vld [vmem:[%s1 + $0x40] sm:$0xf]
  %v39 = vld [vmem:[%s1 + $0x44] sm:$0xf]
  %v40 = vld [vmem:[%s2] sm:$0x1]
  %v42 = vperm.slane %v40, 0
  %v51 = vunpack.c.l.b16 %v15
  %v52 = vunpack.c.h.b16 %v15
  %v53 = vunpack.c.l.b16 %v16
  %v54 = vunpack.c.h.b16 %v16
  %v55 = vunpack.c.l.b16 %v17
  %v56 = vunpack.c.h.b16 %v17
  %v57 = vunpack.c.l.b16 %v18
  %v58 = vunpack.c.h.b16 %v18
  %v59 = vunpack.c.l.b16 %v19
  %v60 = vunpack.c.h.b16 %v19
  %v61 = vunpack.c.l.b16 %v20
  %v62 = vunpack.c.h.b16 %v20
  %v63 = vunpack.c.l.b16 %v21
  %v64 = vunpack.c.h.b16 %v21
  %v65 = vpack.c.b16 %v53, %v51
  %v66 = vpack.c.b16 %v54, %v52
  %v67 = vpack.c.b16 %v57, %v55
  %v68 = vpack.c.b16 %v58, %v56
  %v69 = vpack.c.b16 %v61, %v59
  %v70 = vpack.c.b16 %v62, %v60
  %v71 = vpack.c.b16 %v63, %v63
  %v72 = vpack.c.b16 %v64, %v64
  %v95 = vunpack.c.l.b16 %v22
  %v96 = vunpack.c.l.b16 %v23
  %v97 = vunpack.c.l.b16 %v24
  %v98 = vunpack.c.l.b16 %v25
  %v99 = vunpack.c.l.b16 %v26
  %v100 = vunpack.c.l.b16 %v27
  %v101 = vunpack.c.l.b16 %v28
  %v102 = vunpack.c.l.b16 %v29
  %v103 = vunpack.c.l.b16 %v30
  %v104 = vunpack.c.l.b16 %v31
  %v105 = vunpack.c.l.b16 %v32
  %v106 = vunpack.c.l.b16 %v33
  %v107 = vunpack.c.l.b16 %v34
  %v108 = vunpack.c.l.b16 %v35
  %v109 = vunpack.c.l.b16 %v36
  %v110 = vunpack.c.l.b16 %v37
  %v111 = vunpack.c.l.b16 %v38
  %v112 = vunpack.c.l.b16 %v39
  %v113 = vpack.c.b16 %v96, %v95
  %v114 = vpack.c.b16 %v98, %v97
  %v115 = vpack.c.b16 %v100, %v99
  %v116 = vpack.c.b16 %v102, %v101
  %v117 = vpack.c.b16 %v104, %v103
  %v118 = vpack.c.b16 %v106, %v105
  %v119 = vpack.c.b16 %v108, %v107
  %v120 = vpack.c.b16 %v110, %v109
  %v121 = vpack.c.b16 %v112, %v111
  %vm131 = vcmask 130048
  %v133 = vsel %vm131, %v66, 0
  %v136 = vsel %vm131, %v68, 0
  %v139 = vsel %vm131, %v70, 0
  %v142 = vsel %vm131, %v72, 0
  %144 = vmatpush.bf16.msra.mxu0 %v120
  %145 = vmatpush.bf16.msra.mxu0 %v119
  %146 = vmatpush.bf16.msra.mxu0 %v118
  %147 = vmatpush.bf16.msra.mxu0 %v117
  %148 = vmatpush.bf16.msra.mxu0 %v116
  %149 = vmatpush.bf16.msra.mxu0 %v115
  %150 = vmatpush.bf16.msra.mxu0 %v114
  %151 = vmatpush.bf16.msra.mxu0 %v113
  %152 = vmatmul.bf16.gmra.mxu0 %v65
  %v153 = vpop.f32.mrf.mxu0
  %v154 = vadd.f32 %v42, %v153
  %v155 = vpop.f32.mrf.mxu0
  %v156 = vadd.f32 %v42, %v155
  %157 = vmatmul.bf16.gmra.mxu0 %v67
  %v158 = vpop.f32.mrf.mxu0
  %v159 = vadd.f32 %v42, %v158
  %v160 = vpop.f32.mrf.mxu0
  %v161 = vadd.f32 %v42, %v160
  %162 = vmatmul.bf16.gmra.mxu0 %v69
  %v163 = vpop.f32.mrf.mxu0
  %v164 = vadd.f32 %v42, %v163
  %v165 = vpop.f32.mrf.mxu0
  %v166 = vadd.f32 %v42, %v165
  %167 = vmatmul.bf16.gmra.mxu0 %v71
  %v168 = vpop.f32.mrf.mxu0
  %v169 = vadd.f32 %v42, %v168
  %v170 = vpop.f32.mrf.mxu0
  %171 = vdwg.mxu0
  %172 = vmatpush.bf16.msra.mxu0 0
  %173 = vmatpush.bf16.msra.mxu0 0
  %174 = vmatpush.bf16.msra.mxu0 0
  %175 = vmatpush.bf16.msra.mxu0 0
  %176 = vmatpush.bf16.msra.mxu0 0
  %177 = vmatpush.bf16.msra.mxu0 0
  %178 = vmatpush.bf16.msra.mxu0 0
  %179 = vmatpush.bf16.msra.mxu0 %v121
  %180 = vmatmul.bf16.gmra.mxu0 %v133
  %v181 = vpop.f32.mrf.mxu0
  %v182 = vadd.f32 %v154, %v181
  %v183 = vpop.f32.mrf.mxu0
  %v184 = vadd.f32 %v156, %v183
  %185 = vmatmul.bf16.gmra.mxu0 %v136
  %v186 = vpop.f32.mrf.mxu0
  %v187 = vadd.f32 %v159, %v186
  %v188 = vpop.f32.mrf.mxu0
  %v189 = vadd.f32 %v161, %v188
  %190 = vmatmul.bf16.gmra.mxu0 %v139
  %v191 = vpop.f32.mrf.mxu0
  %v192 = vadd.f32 %v164, %v191
  %v193 = vpop.f32.mrf.mxu0
  %v194 = vadd.f32 %v166, %v193
  %195 = vmatmul.bf16.gmra.mxu0 %v142
  %v196 = vpop.f32.mrf.mxu0
  %v197 = vadd.f32 %v169, %v196
  %v198 = vpop.f32.mrf.mxu0
  %199 = vdwg.mxu0
  %v200 = vpack.c.bf16 %v182, %v182
  %v201 = vpack.c.bf16 %v184, %v184
  %v202 = vpack.c.bf16 %v187, %v187
  %v203 = vpack.c.bf16 %v189, %v189
  %v204 = vpack.c.bf16 %v192, %v192
  %v205 = vpack.c.bf16 %v194, %v194
  %v206 = vpack.c.bf16 %v197, %v197
  %vm207 = vcmask 191488
  %208 = vst.msk [vmem:[%s3] sm:$0xf] %vm207, %v200
  %209 = vst.msk [vmem:[%s3 + $0x4] sm:$0xf] %vm207, %v201
  %210 = vst.msk [vmem:[%s3 + $0x8] sm:$0xf] %vm207, %v202
  %211 = vst.msk [vmem:[%s3 + $0xc] sm:$0xf] %vm207, %v203
  %212 = vst.msk [vmem:[%s3 + $0x10] sm:$0xf] %vm207, %v204
  %213 = vst.msk [vmem:[%s3 + $0x14] sm:$0xf] %vm207, %v205
  %vm214 = vcmask 188416
  %215 = vst.msk [vmem:[%s3 + $0x18] sm:$0x1] %vm214, %v206
  // Predicated region
  $region14: #{net_forward.21} parent=0 // pred_check
    _
  $region15: #{net_forward.21} parent=0 // pred_check_branch
    %217 = sbr.rel (0) target = $region17
  $region16: #{net_forward.21} parent=0 // pred_region
    _
  $region17: #{net_forward.21} parent=0 // pred_fallthru
    _
  // Predicated region
  $region18: #{net_forward.21} parent=0 // pred_check
    _
  $region19: #{net_forward.21} parent=0 // pred_check_branch
    %219 = sbr.rel (0) target = $region21
  $region20: #{net_forward.21} parent=0 // pred_region
    _
  $region21: #{net_forward.21} parent=0 // pred_fallthru
    _

// kernel: net_forward.22
$region0: #{net_forward.22}
  #allocation0 [shape = 'u32[]', space=smem, size = 0x4, offset = 0x4, fixed_abs, tag = 'smem constant byte address 0x4 - core index']
  #allocation1 [shape = 'u32[72,128]{1,0:T(1,128)}', space=vmem, size = 0x9000, scoped, tag = 'internal scratch']
  %s0 = inlined_call_operand.vmem [shape: bf16[50,216], index: 0, kind: input, shape index: {}]
  %s1 = inlined_call_operand.vmem [shape: bf16[216,24], index: 1, kind: input, shape index: {}]
  %s2 = inlined_call_operand.vmem [shape: f32[1,24], index: 2, kind: input, shape index: {}]
  %s3 = inlined_call_operand.vmem [shape: bf16[50,24], index: 3, kind: output, shape index: {}]
  %s4 = sld [smem:[#allocation0]]
  $region22: #{net_forward.22} parent=0
    _
  %s6 = ssub.s32 1, %s4
  %s7 = scalar_select 0, %s6, %s4
  // Predicated region
  $region2: #{net_forward.22} parent=0 // pred_check
    _
  $region3: #{net_forward.22} parent=0 // pred_check_branch
    %9 = sbr.rel (0) target = $region5
  $region4: #{net_forward.22} parent=0 // pred_region
    _
  $region5: #{net_forward.22} parent=0 // pred_fallthru
    _
  // Predicated region
  $region6: #{net_forward.22} parent=0 // pred_check
    _
  $region7: #{net_forward.22} parent=0 // pred_check_branch
    %11 = sbr.rel (0) target = $region9
  $region8: #{net_forward.22} parent=0 // pred_region
    _
  $region9: #{net_forward.22} parent=0 // pred_fallthru
    _
  // Predicated region
  $region10: #{net_forward.22} parent=0 // pred_check
    _
  $region11: #{net_forward.22} parent=0 // pred_check_branch
    %13 = sbr.rel (0) target = $region13
  $region12: #{net_forward.22} parent=0 // pred_region
    _
  $region13: #{net_forward.22} parent=0 // pred_fallthru
    _
  %v15 = vld [vmem:[%s0] sm:$0xff]
  %v16 = vld [vmem:[%s0 + $0x8] sm:$0xff]
  %v17 = vld [vmem:[%s0 + $0x10] sm:$0xff]
  %v18 = vld [vmem:[%s0 + $0x18] sm:$0xff]
  %v19 = vld [vmem:[%s0 + $0x20] sm:$0xff]
  %v20 = vld [vmem:[%s0 + $0x28] sm:$0xff]
  %v21 = vld [vmem:[%s0 + $0x30] sm:$0x11]
  %v22 = vld [vmem:[%s1] sm:$0xf]
  %v23 = vld [vmem:[%s1 + $0x4] sm:$0xf]
  %v24 = vld [vmem:[%s1 + $0x8] sm:$0xf]
  %v25 = vld [vmem:[%s1 + $0xc] sm:$0xf]
  %v26 = vld [vmem:[%s1 + $0x10] sm:$0xf]
  %v27 = vld [vmem:[%s1 + $0x14] sm:$0xf]
  %v28 = vld [vmem:[%s1 + $0x18] sm:$0xf]
  %v29 = vld [vmem:[%s1 + $0x1c] sm:$0xf]
  %v30 = vld [vmem:[%s1 + $0x20] sm:$0xf]
  %v31 = vld [vmem:[%s1 + $0x24] sm:$0xf]
  %v32 = vld [vmem:[%s1 + $0x28] sm:$0xf]
  %v33 = vld [vmem:[%s1 + $0x2c] sm:$0xf]
  %v34 = vld [vmem:[%s1 + $0x30] sm:$0xf]
  %v35 = vld [vmem:[%s1 + $0x34] sm:$0xf]
  %v36 = vld [vmem:[%s1 + $0x38] sm:$0xf]
  %v37 = vld [vmem:[%s1 + $0x3c] sm:$0xf]
  %v38 = vld [vmem:[%s1 + $0x40] sm:$0xf]
  %v39 = vld [vmem:[%s1 + $0x44] sm:$0xf]
  %v40 = vld [vmem:[%s1 + $0x48] sm:$0xf]
  %v41 = vld [vmem:[%s1 + $0x4c] sm:$0xf]
  %v42 = vld [vmem:[%s1 + $0x50] sm:$0xf]
  %v43 = vld [vmem:[%s1 + $0x54] sm:$0xf]
  %v44 = vld [vmem:[%s1 + $0x58] sm:$0xf]
  %v45 = vld [vmem:[%s1 + $0x5c] sm:$0xf]
  %v46 = vld [vmem:[%s1 + $0x60] sm:$0xf]
  %v47 = vld [vmem:[%s1 + $0x64] sm:$0xf]
  %v48 = vld [vmem:[%s1 + $0x68] sm:$0xf]
  %v49 = vld [vmem:[%s2] sm:$0x1]
  %v51 = vperm.slane %v49, 0
  %v60 = vunpack.c.l.b16 %v15
  %v61 = vunpack.c.h.b16 %v15
  %v62 = vunpack.c.l.b16 %v16
  %v63 = vunpack.c.h.b16 %v16
  %v64 = vunpack.c.l.b16 %v17
  %v65 = vunpack.c.h.b16 %v17
  %v66 = vunpack.c.l.b16 %v18
  %v67 = vunpack.c.h.b16 %v18
  %v68 = vunpack.c.l.b16 %v19
  %v69 = vunpack.c.h.b16 %v19
  %v70 = vunpack.c.l.b16 %v20
  %v71 = vunpack.c.h.b16 %v20
  %v72 = vunpack.c.l.b16 %v21
  %v73 = vunpack.c.h.b16 %v21
  %v74 = vpack.c.b16 %v62, %v60
  %v75 = vpack.c.b16 %v63, %v61
  %v76 = vpack.c.b16 %v66, %v64
  %v77 = vpack.c.b16 %v67, %v65
  %v78 = vpack.c.b16 %v70, %v68
  %v79 = vpack.c.b16 %v71, %v69
  %v80 = vpack.c.b16 %v72, %v72
  %v81 = vpack.c.b16 %v73, %v73
  %v113 = vunpack.c.l.b16 %v22
  %v114 = vunpack.c.l.b16 %v23
  %v115 = vunpack.c.l.b16 %v24
  %v116 = vunpack.c.l.b16 %v25
  %v117 = vunpack.c.l.b16 %v26
  %v118 = vunpack.c.l.b16 %v27
  %v119 = vunpack.c.l.b16 %v28
  %v120 = vunpack.c.l.b16 %v29
  %v121 = vunpack.c.l.b16 %v30
  %v122 = vunpack.c.l.b16 %v31
  %v123 = vunpack.c.l.b16 %v32
  %v124 = vunpack.c.l.b16 %v33
  %v125 = vunpack.c.l.b16 %v34
  %v126 = vunpack.c.l.b16 %v35
  %v127 = vunpack.c.l.b16 %v36
  %v128 = vunpack.c.l.b16 %v37
  %v129 = vunpack.c.l.b16 %v38
  %v130 = vunpack.c.l.b16 %v39
  %v131 = vunpack.c.l.b16 %v40
  %v132 = vunpack.c.l.b16 %v41
  %v133 = vunpack.c.l.b16 %v42
  %v134 = vunpack.c.l.b16 %v43
  %v135 = vunpack.c.l.b16 %v44
  %v136 = vunpack.c.l.b16 %v45
  %v137 = vunpack.c.l.b16 %v46
  %v138 = vunpack.c.l.b16 %v47
  %v139 = vunpack.c.l.b16 %v48
  %v140 = vpack.c.b16 %v114, %v113
  %v141 = vpack.c.b16 %v116, %v115
  %v142 = vpack.c.b16 %v118, %v117
  %v143 = vpack.c.b16 %v120, %v119
  %v144 = vpack.c.b16 %v122, %v121
  %v145 = vpack.c.b16 %v124, %v123
  %v146 = vpack.c.b16 %v126, %v125
  %v147 = vpack.c.b16 %v128, %v127
  %v148 = vpack.c.b16 %v130, %v129
  %v149 = vpack.c.b16 %v132, %v131
  %v150 = vpack.c.b16 %v134, %v133
  %v151 = vpack.c.b16 %v136, %v135
  %v152 = vpack.c.b16 %v138, %v137
  %v153 = vpack.c.b16 %v139, %v139
  %vm167 = vcmask 719872
  %v169 = vsel %vm167, %v75, 0
  %v172 = vsel %vm167, %v77, 0
  %v175 = vsel %vm167, %v79, 0
  %v178 = vsel %vm167, %v81, 0
  %vm180 = vcmask 1043456
  %v182 = vsel %vm180, %v153, 0
  %184 = vmatpush.bf16.msra.mxu0 %v147
  %185 = vmatpush.bf16.msra.mxu0 %v146
  %186 = vmatpush.bf16.msra.mxu0 %v145
  %187 = vmatpush.bf16.msra.mxu0 %v144
  %188 = vmatpush.bf16.msra.mxu0 %v143
  %189 = vmatpush.bf16.msra.mxu0 %v142
  %190 = vmatpush.bf16.msra.mxu0 %v141
  %191 = vmatpush.bf16.msra.mxu0 %v140
  %192 = vmatmul.bf16.gmra.mxu0 %v74
  %v193 = vpop.f32.mrf.mxu0
  %v194 = vadd.f32 %v51, %v193
  %v195 = vpop.f32.mrf.mxu0
  %v196 = vadd.f32 %v51, %v195
  %197 = vmatmul.bf16.gmra.mxu0 %v76
  %v198 = vpop.f32.mrf.mxu0
  %v199 = vadd.f32 %v51, %v198
  %v200 = vpop.f32.mrf.mxu0
  %v201 = vadd.f32 %v51, %v200
  %202 = vmatmul.bf16.gmra.mxu0 %v78
  %v203 = vpop.f32.mrf.mxu0
  %v204 = vadd.f32 %v51, %v203
  %v205 = vpop.f32.mrf.mxu0
  %v206 = vadd.f32 %v51, %v205
  %207 = vmatmul.bf16.gmra.mxu0 %v80
  %v208 = vpop.f32.mrf.mxu0
  %v209 = vadd.f32 %v51, %v208
  %v210 = vpop.f32.mrf.mxu0
  %211 = vdwg.mxu0
  %212 = vmatpush.bf16.msra.mxu0 0
  %213 = vmatpush.bf16.msra.mxu0 0
  %214 = vmatpush.bf16.msra.mxu0 %v182
  %215 = vmatpush.bf16.msra.mxu0 %v152
  %216 = vmatpush.bf16.msra.mxu0 %v151
  %217 = vmatpush.bf16.msra.mxu0 %v150
  %218 = vmatpush.bf16.msra.mxu0 %v149
  %219 = vmatpush.bf16.msra.mxu0 %v148
  %220 = vmatmul.bf16.gmra.mxu0 %v169
  %v221 = vpop.f32.mrf.mxu0
  %v222 = vadd.f32 %v194, %v221
  %v223 = vpop.f32.mrf.mxu0
  %v224 = vadd.f32 %v196, %v223
  %225 = vmatmul.bf16.gmra.mxu0 %v172
  %v226 = vpop.f32.mrf.mxu0
  %v227 = vadd.f32 %v199, %v226
  %v228 = vpop.f32.mrf.mxu0
  %v229 = vadd.f32 %v201, %v228
  %230 = vmatmul.bf16.gmra.mxu0 %v175
  %v231 = vpop.f32.mrf.mxu0
  %v232 = vadd.f32 %v204, %v231
  %v233 = vpop.f32.mrf.mxu0
  %v234 = vadd.f32 %v206, %v233
  %235 = vmatmul.bf16.gmra.mxu0 %v178
  %v236 = vpop.f32.mrf.mxu0
  %v237 = vadd.f32 %v209, %v236
  %v238 = vpop.f32.mrf.mxu0
  %239 = vdwg.mxu0
  %v240 = vpack.c.bf16 %v222, %v222
  %v241 = vpack.c.bf16 %v224, %v224
  %v242 = vpack.c.bf16 %v227, %v227
  %v243 = vpack.c.bf16 %v229, %v229
  %v244 = vpack.c.bf16 %v232, %v232
  %v245 = vpack.c.bf16 %v234, %v234
  %v246 = vpack.c.bf16 %v237, %v237
  %vm247 = vcmask 191488
  %248 = vst.msk [vmem:[%s3] sm:$0xf] %vm247, %v240
  %249 = vst.msk [vmem:[%s3 + $0x4] sm:$0xf] %vm247, %v241
  %250 = vst.msk [vmem:[%s3 + $0x8] sm:$0xf] %vm247, %v242
  %251 = vst.msk [vmem:[%s3 + $0xc] sm:$0xf] %vm247, %v243
  %252 = vst.msk [vmem:[%s3 + $0x10] sm:$0xf] %vm247, %v244
  %253 = vst.msk [vmem:[%s3 + $0x14] sm:$0xf] %vm247, %v245
  %vm254 = vcmask 188416
  %255 = vst.msk [vmem:[%s3 + $0x18] sm:$0x1] %vm254, %v246
  // Predicated region
  $region14: #{net_forward.22} parent=0 // pred_check
    _
  $region15: #{net_forward.22} parent=0 // pred_check_branch
    %257 = sbr.rel (0) target = $region17
  $region16: #{net_forward.22} parent=0 // pred_region
    _
  $region17: #{net_forward.22} parent=0 // pred_fallthru
    _
  // Predicated region
  $region18: #{net_forward.22} parent=0 // pred_check
    _
  $region19: #{net_forward.22} parent=0 // pred_check_branch
    %259 = sbr.rel (0) target = $region21
  $region20: #{net_forward.22} parent=0 // pred_region
    _
  $region21: #{net_forward.22} parent=0 // pred_fallthru
    _

// kernel: net_forward.23
$region0: #{net_forward.23}
  #allocation0 [shape = 'u32[]', space=smem, size = 0x4, offset = 0x4, fixed_abs, tag = 'smem constant byte address 0x4 - core index']
  #allocation1 [shape = 'u32[72,128]{1,0:T(1,128)}', space=vmem, size = 0x9000, scoped, tag = 'internal scratch']
  %s0 = inlined_call_operand.vmem [shape: bf16[50,400], index: 0, kind: input, shape index: {}]
  %s1 = inlined_call_operand.vmem [shape: bf16[400,24], index: 1, kind: input, shape index: {}]
  %s2 = inlined_call_operand.vmem [shape: f32[1,24], index: 2, kind: input, shape index: {}]
  %s3 = inlined_call_operand.vmem [shape: bf16[50,24], index: 3, kind: output, shape index: {}]
  %s4 = sld [smem:[#allocation0]]
  $region22: #{net_forward.23} parent=0
    _
  %s6 = ssub.s32 1, %s4
  %s7 = scalar_select 0, %s6, %s4
  // Predicated region
  $region2: #{net_forward.23} parent=0 // pred_check
    _
  $region3: #{net_forward.23} parent=0 // pred_check_branch
    %9 = sbr.rel (0) target = $region5
  $region4: #{net_forward.23} parent=0 // pred_region
    _
  $region5: #{net_forward.23} parent=0 // pred_fallthru
    _
  // Predicated region
  $region6: #{net_forward.23} parent=0 // pred_check
    _
  $region7: #{net_forward.23} parent=0 // pred_check_branch
    %11 = sbr.rel (0) target = $region9
  $region8: #{net_forward.23} parent=0 // pred_region
    _
  $region9: #{net_forward.23} parent=0 // pred_fallthru
    _
  // Predicated region
  $region10: #{net_forward.23} parent=0 // pred_check
    _
  $region11: #{net_forward.23} parent=0 // pred_check_branch
    %13 = sbr.rel (0) target = $region13
  $region12: #{net_forward.23} parent=0 // pred_region
    _
  $region13: #{net_forward.23} parent=0 // pred_fallthru
    _
  %v15 = vld [vmem:[%s0] sm:$0xff]
  %v16 = vld [vmem:[%s0 + $0x8] sm:$0xff]
  %v17 = vld [vmem:[%s0 + $0x10] sm:$0xff]
  %v18 = vld [vmem:[%s0 + $0x18] sm:$0xff]
  %v19 = vld [vmem:[%s0 + $0x20] sm:$0xff]
  %v20 = vld [vmem:[%s0 + $0x28] sm:$0xff]
  %v21 = vld [vmem:[%s0 + $0x30] sm:$0xff]
  %v22 = vld [vmem:[%s0 + $0x38] sm:$0xff]
  %v23 = vld [vmem:[%s0 + $0x40] sm:$0xff]
  %v24 = vld [vmem:[%s0 + $0x48] sm:$0xff]
  %v25 = vld [vmem:[%s0 + $0x50] sm:$0xff]
  %v26 = vld [vmem:[%s0 + $0x58] sm:$0xff]
  %v27 = vld [vmem:[%s0 + $0x60] sm:$0x11]
  %v28 = vld [vmem:[%s0 + $0x68] sm:$0x11]
  %v29 = vld [vmem:[%s1] sm:$0xf]
  %v30 = vld [vmem:[%s1 + $0x4] sm:$0xf]
  %v31 = vld [vmem:[%s1 + $0x8] sm:$0xf]
  %v32 = vld [vmem:[%s1 + $0xc] sm:$0xf]
  %v33 = vld [vmem:[%s1 + $0x10] sm:$0xf]
  %v34 = vld [vmem:[%s1 + $0x14] sm:$0xf]
  %v35 = vld [vmem:[%s1 + $0x18] sm:$0xf]
  %v36 = vld [vmem:[%s1 + $0x1c] sm:$0xf]
  %v37 = vld [vmem:[%s1 + $0x20] sm:$0xf]
  %v38 = vld [vmem:[%s1 + $0x24] sm:$0xf]
  %v39 = vld [vmem:[%s1 + $0x28] sm:$0xf]
  %v40 = vld [vmem:[%s1 + $0x2c] sm:$0xf]
  %v41 = vld [vmem:[%s1 + $0x30] sm:$0xf]
  %v42 = vld [vmem:[%s1 + $0x34] sm:$0xf]
  %v43 = vld [vmem:[%s1 + $0x38] sm:$0xf]
  %v44 = vld [vmem:[%s1 + $0x3c] sm:$0xf]
  %v45 = vld [vmem:[%s1 + $0x40] sm:$0xf]
  %v46 = vld [vmem:[%s1 + $0x44] sm:$0xf]
  %v47 = vld [vmem:[%s1 + $0x48] sm:$0xf]
  %v48 = vld [vmem:[%s1 + $0x4c] sm:$0xf]
  %v49 = vld [vmem:[%s1 + $0x50] sm:$0xf]
  %v50 = vld [vmem:[%s1 + $0x54] sm:$0xf]
  %v51 = vld [vmem:[%s1 + $0x58] sm:$0xf]
  %v52 = vld [vmem:[%s1 + $0x5c] sm:$0xf]
  %v53 = vld [vmem:[%s1 + $0x60] sm:$0xf]
  %v54 = vld [vmem:[%s1 + $0x64] sm:$0xf]
  %v55 = vld [vmem:[%s1 + $0x68] sm:$0xf]
  %v56 = vld [vmem:[%s1 + $0x6c] sm:$0xf]
  %v57 = vld [vmem:[%s1 + $0x70] sm:$0xf]
  %v58 = vld [vmem:[%s1 + $0x74] sm:$0xf]
  %v59 = vld [vmem:[%s1 + $0x78] sm:$0xf]
  %v60 = vld [vmem:[%s1 + $0x7c] sm:$0xf]
  %v61 = vld [vmem:[%s1 + $0x80] sm:$0xf]
  %v62 = vld [vmem:[%s1 + $0x84] sm:$0xf]
  %v63 = vld [vmem:[%s1 + $0x88] sm:$0xf]
  %v64 = vld [vmem:[%s1 + $0x8c] sm:$0xf]
  %v65 = vld [vmem:[%s1 + $0x90] sm:$0xf]
  %v66 = vld [vmem:[%s1 + $0x94] sm:$0xf]
  %v67 = vld [vmem:[%s1 + $0x98] sm:$0xf]
  %v68 = vld [vmem:[%s1 + $0x9c] sm:$0xf]
  %v69 = vld [vmem:[%s1 + $0xa0] sm:$0xf]
  %v70 = vld [vmem:[%s1 + $0xa4] sm:$0xf]
  %v71 = vld [vmem:[%s1 + $0xa8] sm:$0xf]
  %v72 = vld [vmem:[%s1 + $0xac] sm:$0xf]
  %v73 = vld [vmem:[%s1 + $0xb0] sm:$0xf]
  %v74 = vld [vmem:[%s1 + $0xb4] sm:$0xf]
  %v75 = vld [vmem:[%s1 + $0xb8] sm:$0xf]
  %v76 = vld [vmem:[%s1 + $0xbc] sm:$0xf]
  %v77 = vld [vmem:[%s1 + $0xc0] sm:$0xf]
  %v78 = vld [vmem:[%s1 + $0xc4] sm:$0xf]
  %v79 = vld [vmem:[%s2] sm:$0x1]
  %v81 = vperm.slane %v79, 0
  %v97 = vunpack.c.l.b16 %v15
  %v98 = vunpack.c.h.b16 %v15
  %v99 = vunpack.c.l.b16 %v16
  %v100 = vunpack.c.h.b16 %v16
  %v101 = vunpack.c.l.b16 %v17
  %v102 = vunpack.c.h.b16 %v17
  %v103 = vunpack.c.l.b16 %v18
  %v104 = vunpack.c.h.b16 %v18
  %v105 = vunpack.c.l.b16 %v19
  %v106 = vunpack.c.h.b16 %v19
  %v107 = vunpack.c.l.b16 %v20
  %v108 = vunpack.c.h.b16 %v20
  %v109 = vunpack.c.l.b16 %v21
  %v110 = vunpack.c.h.b16 %v21
  %v111 = vunpack.c.l.b16 %v22
  %v112 = vunpack.c.h.b16 %v22
  %v113 = vunpack.c.l.b16 %v23
  %v114 = vunpack.c.h.b16 %v23
  %v115 = vunpack.c.l.b16 %v24
  %v116 = vunpack.c.h.b16 %v24
  %v117 = vunpack.c.l.b16 %v25
  %v118 = vunpack.c.h.b16 %v25
  %v119 = vunpack.c.l.b16 %v26
  %v120 = vunpack.c.h.b16 %v26
  %v121 = vunpack.c.l.b16 %v27
  %v122 = vunpack.c.h.b16 %v27
  %v123 = vunpack.c.l.b16 %v28
  %v124 = vunpack.c.h.b16 %v28
  %v125 = vpack.c.b16 %v101, %v97
  %v126 = vpack.c.b16 %v102, %v98
  %v127 = vpack.c.b16 %v103, %v99
  %v128 = vpack.c.b16 %v104, %v100
  %v129 = vpack.c.b16 %v109, %v105
  %v130 = vpack.c.b16 %v110, %v106
  %v131 = vpack.c.b16 %v111, %v107
  %v132 = vpack.c.b16 %v112, %v108
  %v133 = vpack.c.b16 %v117, %v113
  %v134 = vpack.c.b16 %v118, %v114
  %v135 = vpack.c.b16 %v119, %v115
  %v136 = vpack.c.b16 %v120, %v116
  %v137 = vpack.c.b16 %v121, %v121
  %v138 = vpack.c.b16 %v122, %v122
  %v139 = vpack.c.b16 %v123, %v123
  %v140 = vpack.c.b16 %v124, %v124
  %v203 = vunpack.c.l.b16 %v29
  %v204 = vunpack.c.l.b16 %v30
  %v205 = vunpack.c.l.b16 %v31
  %v206 = vunpack.c.l.b16 %v32
  %v207 = vunpack.c.l.b16 %v33
  %v208 = vunpack.c.l.b16 %v34
  %v209 = vunpack.c.l.b16 %v35
  %v210 = vunpack.c.l.b16 %v36
  %v211 = vunpack.c.l.b16 %v37
  %v212 = vunpack.c.l.b16 %v38
  %v213 = vunpack.c.l.b16 %v39
  %v214 = vunpack.c.l.b16 %v40
  %v215 = vunpack.c.l.b16 %v41
  %v216 = vunpack.c.l.b16 %v42
  %v217 = vunpack.c.l.b16 %v43
  %v218 = vunpack.c.l.b16 %v44
  %v219 = vunpack.c.l.b16 %v45
  %v220 = vunpack.c.l.b16 %v46
  %v221 = vunpack.c.l.b16 %v47
  %v222 = vunpack.c.l.b16 %v48
  %v223 = vunpack.c.l.b16 %v49
  %v224 = vunpack.c.l.b16 %v50
  %v225 = vunpack.c.l.b16 %v51
  %v226 = vunpack.c.l.b16 %v52
  %v227 = vunpack.c.l.b16 %v53
  %v228 = vunpack.c.l.b16 %v54
  %v229 = vunpack.c.l.b16 %v55
  %v230 = vunpack.c.l.b16 %v56
  %v231 = vunpack.c.l.b16 %v57
  %v232 = vunpack.c.l.b16 %v58
  %v233 = vunpack.c.l.b16 %v59
  %v234 = vunpack.c.l.b16 %v60
  %v235 = vunpack.c.l.b16 %v61
  %v236 = vunpack.c.l.b16 %v62
  %v237 = vunpack.c.l.b16 %v63
  %v238 = vunpack.c.l.b16 %v64
  %v239 = vunpack.c.l.b16 %v65
  %v240 = vunpack.c.l.b16 %v66
  %v241 = vunpack.c.l.b16 %v67
  %v242 = vunpack.c.l.b16 %v68
  %v243 = vunpack.c.l.b16 %v69
  %v244 = vunpack.c.l.b16 %v70
  %v245 = vunpack.c.l.b16 %v71
  %v246 = vunpack.c.l.b16 %v72
  %v247 = vunpack.c.l.b16 %v73
  %v248 = vunpack.c.l.b16 %v74
  %v249 = vunpack.c.l.b16 %v75
  %v250 = vunpack.c.l.b16 %v76
  %v251 = vunpack.c.l.b16 %v77
  %v252 = vunpack.c.l.b16 %v78
  %v253 = vpack.c.b16 %v204, %v203
  %v254 = vpack.c.b16 %v206, %v205
  %v255 = vpack.c.b16 %v208, %v207
  %v256 = vpack.c.b16 %v210, %v209
  %v257 = vpack.c.b16 %v212, %v211
  %v258 = vpack.c.b16 %v214, %v213
  %v259 = vpack.c.b16 %v216, %v215
  %v260 = vpack.c.b16 %v218, %v217
  %v261 = vpack.c.b16 %v220, %v219
  %v262 = vpack.c.b16 %v222, %v221
  %v263 = vpack.c.b16 %v224, %v223
  %v264 = vpack.c.b16 %v226, %v225
  %v265 = vpack.c.b16 %v228, %v227
  %v266 = vpack.c.b16 %v230, %v229
  %v267 = vpack.c.b16 %v232, %v231
  %v268 = vpack.c.b16 %v234, %v233
  %v269 = vpack.c.b16 %v236, %v235
  %v270 = vpack.c.b16 %v238, %v237
  %v271 = vpack.c.b16 %v240, %v239
  %v272 = vpack.c.b16 %v242, %v241
  %v273 = vpack.c.b16 %v244, %v243
  %v274 = vpack.c.b16 %v246, %v245
  %v275 = vpack.c.b16 %v248, %v247
  %v276 = vpack.c.b16 %v250, %v249
  %v277 = vpack.c.b16 %v252, %v251
  %vm303 = vcmask 130048
  %v305 = vsel %vm303, %v128, 0
  %v308 = vsel %vm303, %v132, 0
  %v311 = vsel %vm303, %v136, 0
  %v314 = vsel %vm303, %v140, 0
  %316 = vmatpush.bf16.msra.mxu0 %v260
  %317 = vmatpush.bf16.msra.mxu0 %v259
  %318 = vmatpush.bf16.msra.mxu0 %v258
  %319 = vmatpush.bf16.msra.mxu0 %v257
  %320 = vmatpush.bf16.msra.mxu0 %v256
  %321 = vmatpush.bf16.msra.mxu0 %v255
  %322 = vmatpush.bf16.msra.mxu0 %v254
  %323 = vmatpush.bf16.msra.mxu0 %v253
  %324 = vmatmul.bf16.gmra.mxu0 %v125
  %v325 = vpop.f32.mrf.mxu0
  %v326 = vadd.f32 %v81, %v325
  %v327 = vpop.f32.mrf.mxu0
  %v328 = vadd.f32 %v81, %v327
  %329 = vmatmul.bf16.gmra.mxu0 %v129
  %v330 = vpop.f32.mrf.mxu0
  %v331 = vadd.f32 %v81, %v330
  %v332 = vpop.f32.mrf.mxu0
  %v333 = vadd.f32 %v81, %v332
  %334 = vmatmul.bf16.gmra.mxu0 %v133
  %v335 = vpop.f32.mrf.mxu0
  %v336 = vadd.f32 %v81, %v335
  %v337 = vpop.f32.mrf.mxu0
  %v338 = vadd.f32 %v81, %v337
  %339 = vmatmul.bf16.gmra.mxu0 %v137
  %v340 = vpop.f32.mrf.mxu0
  %v341 = vadd.f32 %v81, %v340
  %v342 = vpop.f32.mrf.mxu0
  %343 = vdwg.mxu0
  %344 = vmatpush.bf16.msra.mxu0 %v268
  %345 = vmatpush.bf16.msra.mxu0 %v267
  %346 = vmatpush.bf16.msra.mxu0 %v266
  %347 = vmatpush.bf16.msra.mxu0 %v265
  %348 = vmatpush.bf16.msra.mxu0 %v264
  %349 = vmatpush.bf16.msra.mxu0 %v263
  %350 = vmatpush.bf16.msra.mxu0 %v262
  %351 = vmatpush.bf16.msra.mxu0 %v261
  %352 = vmatmul.bf16.gmra.mxu0 %v126
  %v353 = vpop.f32.mrf.mxu0
  %v354 = vadd.f32 %v326, %v353
  %v355 = vpop.f32.mrf.mxu0
  %v356 = vadd.f32 %v328, %v355
  %357 = vmatmul.bf16.gmra.mxu0 %v130
  %v358 = vpop.f32.mrf.mxu0
  %v359 = vadd.f32 %v331, %v358
  %v360 = vpop.f32.mrf.mxu0
  %v361 = vadd.f32 %v333, %v360
  %362 = vmatmul.bf16.gmra.mxu0 %v134
  %v363 = vpop.f32.mrf.mxu0
  %v364 = vadd.f32 %v336, %v363
  %v365 = vpop.f32.mrf.mxu0
  %v366 = vadd.f32 %v338, %v365
  %367 = vmatmul.bf16.gmra.mxu0 %v138
  %v368 = vpop.f32.mrf.mxu0
  %v369 = vadd.f32 %v341, %v368
  %v370 = vpop.f32.mrf.mxu0
  %371 = vdwg.mxu0
  %372 = vmatpush.bf16.msra.mxu0 %v276
  %373 = vmatpush.bf16.msra.mxu0 %v275
  %374 = vmatpush.bf16.msra.mxu0 %v274
  %375 = vmatpush.bf16.msra.mxu0 %v273
  %376 = vmatpush.bf16.msra.mxu0 %v272
  %377 = vmatpush.bf16.msra.mxu0 %v271
  %378 = vmatpush.bf16.msra.mxu0 %v270
  %379 = vmatpush.bf16.msra.mxu0 %v269
  %380 = vmatmul.bf16.gmra.mxu0 %v127
  %v381 = vpop.f32.mrf.mxu0
  %v382 = vadd.f32 %v354, %v381
  %v383 = vpop.f32.mrf.mxu0
  %v384 = vadd.f32 %v356, %v383
  %385 = vmatmul.bf16.gmra.mxu0 %v131
  %v386 = vpop.f32.mrf.mxu0
  %v387 = vadd.f32 %v359, %v386
  %v388 = vpop.f32.mrf.mxu0
  %v389 = vadd.f32 %v361, %v388
  %390 = vmatmul.bf16.gmra.mxu0 %v135
  %v391 = vpop.f32.mrf.mxu0
  %v392 = vadd.f32 %v364, %v391
  %v393 = vpop.f32.mrf.mxu0
  %v394 = vadd.f32 %v366, %v393
  %395 = vmatmul.bf16.gmra.mxu0 %v139
  %v396 = vpop.f32.mrf.mxu0
  %v397 = vadd.f32 %v369, %v396
  %v398 = vpop.f32.mrf.mxu0
  %399 = vdwg.mxu0
  %400 = vmatpush.bf16.msra.mxu0 0
  %401 = vmatpush.bf16.msra.mxu0 0
  %402 = vmatpush.bf16.msra.mxu0 0
  %403 = vmatpush.bf16.msra.mxu0 0
  %404 = vmatpush.bf16.msra.mxu0 0
  %405 = vmatpush.bf16.msra.mxu0 0
  %406 = vmatpush.bf16.msra.mxu0 0
  %407 = vmatpush.bf16.msra.mxu0 %v277
  %408 = vmatmul.bf16.gmra.mxu0 %v305
  %v409 = vpop.f32.mrf.mxu0
  %v410 = vadd.f32 %v382, %v409
  %v411 = vpop.f32.mrf.mxu0
  %v412 = vadd.f32 %v384, %v411
  %413 = vmatmul.bf16.gmra.mxu0 %v308
  %v414 = vpop.f32.mrf.mxu0
  %v415 = vadd.f32 %v387, %v414
  %v416 = vpop.f32.mrf.mxu0
  %v417 = vadd.f32 %v389, %v416
  %418 = vmatmul.bf16.gmra.mxu0 %v311
  %v419 = vpop.f32.mrf.mxu0
  %v420 = vadd.f32 %v392, %v419
  %v421 = vpop.f32.mrf.mxu0
  %v422 = vadd.f32 %v394, %v421
  %423 = vmatmul.bf16.gmra.mxu0 %v314
  %v424 = vpop.f32.mrf.mxu0
  %v425 = vadd.f32 %v397, %v424
  %v426 = vpop.f32.mrf.mxu0
  %427 = vdwg.mxu0
  %v428 = vpack.c.bf16 %v410, %v410
  %v429 = vpack.c.bf16 %v412, %v412
  %v430 = vpack.c.bf16 %v415, %v415
  %v431 = vpack.c.bf16 %v417, %v417
  %v432 = vpack.c.bf16 %v420, %v420
  %v433 = vpack.c.bf16 %v422, %v422
  %v434 = vpack.c.bf16 %v425, %v425
  %vm435 = vcmask 191488
  %436 = vst.msk [vmem:[%s3] sm:$0xf] %vm435, %v428
  %437 = vst.msk [vmem:[%s3 + $0x4] sm:$0xf] %vm435, %v429
  %438 = vst.msk [vmem:[%s3 + $0x8] sm:$0xf] %vm435, %v430
  %439 = vst.msk [vmem:[%s3 + $0xc] sm:$0xf] %vm435, %v431
  %440 = vst.msk [vmem:[%s3 + $0x10] sm:$0xf] %vm435, %v432
  %441 = vst.msk [vmem:[%s3 + $0x14] sm:$0xf] %vm435, %v433
  %vm442 = vcmask 188416
  %443 = vst.msk [vmem:[%s3 + $0x18] sm:$0x1] %vm442, %v434
  // Predicated region
  $region14: #{net_forward.23} parent=0 // pred_check
    _
  $region15: #{net_forward.23} parent=0 // pred_check_branch
    %445 = sbr.rel (0) target = $region17
  $region16: #{net_forward.23} parent=0 // pred_region
    _
  $region17: #{net_forward.23} parent=0 // pred_fallthru
    _
  // Predicated region
  $region18: #{net_forward.23} parent=0 // pred_check
    _
  $region19: #{net_forward.23} parent=0 // pred_check_branch
    %447 = sbr.rel (0) target = $region21
  $region20: #{net_forward.23} parent=0 // pred_region
    _
  $region21: #{net_forward.23} parent=0 // pred_fallthru
    _

// kernel: net_forward.24
$region0: #{net_forward.24}
  #allocation0 [shape = 'u32[]', space=smem, size = 0x4, offset = 0x4, fixed_abs, tag = 'smem constant byte address 0x4 - core index']
  #allocation1 [shape = 'u32[72,128]{1,0:T(1,128)}', space=vmem, size = 0x9000, scoped, tag = 'internal scratch']
  %s0 = inlined_call_operand.vmem [shape: bf16[50,180], index: 0, kind: input, shape index: {}]
  %s1 = inlined_call_operand.vmem [shape: bf16[180,24], index: 1, kind: input, shape index: {}]
  %s2 = inlined_call_operand.vmem [shape: f32[1,24], index: 2, kind: input, shape index: {}]
  %s3 = inlined_call_operand.vmem [shape: bf16[50,24], index: 3, kind: output, shape index: {}]
  %s4 = sld [smem:[#allocation0]]
  $region22: #{net_forward.24} parent=0
    _
  %s6 = ssub.s32 1, %s4
  %s7 = scalar_select 0, %s6, %s4
  // Predicated region
  $region2: #{net_forward.24} parent=0 // pred_check
    _
  $region3: #{net_forward.24} parent=0 // pred_check_branch
    %9 = sbr.rel (0) target = $region5
  $region4: #{net_forward.24} parent=0 // pred_region
    _
  $region5: #{net_forward.24} parent=0 // pred_fallthru
    _
  // Predicated region
  $region6: #{net_forward.24} parent=0 // pred_check
    _
  $region7: #{net_forward.24} parent=0 // pred_check_branch
    %11 = sbr.rel (0) target = $region9
  $region8: #{net_forward.24} parent=0 // pred_region
    _
  $region9: #{net_forward.24} parent=0 // pred_fallthru
    _
  // Predicated region
  $region10: #{net_forward.24} parent=0 // pred_check
    _
  $region11: #{net_forward.24} parent=0 // pred_check_branch
    %13 = sbr.rel (0) target = $region13
  $region12: #{net_forward.24} parent=0 // pred_region
    _
  $region13: #{net_forward.24} parent=0 // pred_fallthru
    _
  %v15 = vld [vmem:[%s0] sm:$0xff]
  %v16 = vld [vmem:[%s0 + $0x8] sm:$0xff]
  %v17 = vld [vmem:[%s0 + $0x10] sm:$0xff]
  %v18 = vld [vmem:[%s0 + $0x18] sm:$0xff]
  %v19 = vld [vmem:[%s0 + $0x20] sm:$0xff]
  %v20 = vld [vmem:[%s0 + $0x28] sm:$0xff]
  %v21 = vld [vmem:[%s0 + $0x30] sm:$0x11]
  %v22 = vld [vmem:[%s1] sm:$0xf]
  %v23 = vld [vmem:[%s1 + $0x4] sm:$0xf]
  %v24 = vld [vmem:[%s1 + $0x8] sm:$0xf]
  %v25 = vld [vmem:[%s1 + $0xc] sm:$0xf]
  %v26 = vld [vmem:[%s1 + $0x10] sm:$0xf]
  %v27 = vld [vmem:[%s1 + $0x14] sm:$0xf]
  %v28 = vld [vmem:[%s1 + $0x18] sm:$0xf]
  %v29 = vld [vmem:[%s1 + $0x1c] sm:$0xf]
  %v30 = vld [vmem:[%s1 + $0x20] sm:$0xf]
  %v31 = vld [vmem:[%s1 + $0x24] sm:$0xf]
  %v32 = vld [vmem:[%s1 + $0x28] sm:$0xf]
  %v33 = vld [vmem:[%s1 + $0x2c] sm:$0xf]
  %v34 = vld [vmem:[%s1 + $0x30] sm:$0xf]
  %v35 = vld [vmem:[%s1 + $0x34] sm:$0xf]
  %v36 = vld [vmem:[%s1 + $0x38] sm:$0xf]
  %v37 = vld [vmem:[%s1 + $0x3c] sm:$0xf]
  %v38 = vld [vmem:[%s1 + $0x40] sm:$0xf]
  %v39 = vld [vmem:[%s1 + $0x44] sm:$0xf]
  %v40 = vld [vmem:[%s1 + $0x48] sm:$0xf]
  %v41 = vld [vmem:[%s1 + $0x4c] sm:$0xf]
  %v42 = vld [vmem:[%s1 + $0x50] sm:$0xf]
  %v43 = vld [vmem:[%s1 + $0x54] sm:$0xf]
  %v44 = vld [vmem:[%s1 + $0x58] sm:$0x3]
  %v45 = vld [vmem:[%s2] sm:$0x1]
  %v47 = vperm.slane %v45, 0
  %v56 = vunpack.c.l.b16 %v15
  %v57 = vunpack.c.h.b16 %v15
  %v58 = vunpack.c.l.b16 %v16
  %v59 = vunpack.c.h.b16 %v16
  %v60 = vunpack.c.l.b16 %v17
  %v61 = vunpack.c.h.b16 %v17
  %v62 = vunpack.c.l.b16 %v18
  %v63 = vunpack.c.h.b16 %v18
  %v64 = vunpack.c.l.b16 %v19
  %v65 = vunpack.c.h.b16 %v19
  %v66 = vunpack.c.l.b16 %v20
  %v67 = vunpack.c.h.b16 %v20
  %v68 = vunpack.c.l.b16 %v21
  %v69 = vunpack.c.h.b16 %v21
  %v70 = vpack.c.b16 %v58, %v56
  %v71 = vpack.c.b16 %v59, %v57
  %v72 = vpack.c.b16 %v62, %v60
  %v73 = vpack.c.b16 %v63, %v61
  %v74 = vpack.c.b16 %v66, %v64
  %v75 = vpack.c.b16 %v67, %v65
  %v76 = vpack.c.b16 %v68, %v68
  %v77 = vpack.c.b16 %v69, %v69
  %v105 = vunpack.c.l.b16 %v22
  %v106 = vunpack.c.l.b16 %v23
  %v107 = vunpack.c.l.b16 %v24
  %v108 = vunpack.c.l.b16 %v25
  %v109 = vunpack.c.l.b16 %v26
  %v110 = vunpack.c.l.b16 %v27
  %v111 = vunpack.c.l.b16 %v28
  %v112 = vunpack.c.l.b16 %v29
  %v113 = vunpack.c.l.b16 %v30
  %v114 = vunpack.c.l.b16 %v31
  %v115 = vunpack.c.l.b16 %v32
  %v116 = vunpack.c.l.b16 %v33
  %v117 = vunpack.c.l.b16 %v34
  %v118 = vunpack.c.l.b16 %v35
  %v119 = vunpack.c.l.b16 %v36
  %v120 = vunpack.c.l.b16 %v37
  %v121 = vunpack.c.l.b16 %v38
  %v122 = vunpack.c.l.b16 %v39
  %v123 = vunpack.c.l.b16 %v40
  %v124 = vunpack.c.l.b16 %v41
  %v125 = vunpack.c.l.b16 %v42
  %v126 = vunpack.c.l.b16 %v43
  %v127 = vunpack.c.l.b16 %v44
  %v128 = vpack.c.b16 %v106, %v105
  %v129 = vpack.c.b16 %v108, %v107
  %v130 = vpack.c.b16 %v110, %v109
  %v131 = vpack.c.b16 %v112, %v111
  %v132 = vpack.c.b16 %v114, %v113
  %v133 = vpack.c.b16 %v116, %v115
  %v134 = vpack.c.b16 %v118, %v117
  %v135 = vpack.c.b16 %v120, %v119
  %v136 = vpack.c.b16 %v122, %v121
  %v137 = vpack.c.b16 %v124, %v123
  %v138 = vpack.c.b16 %v126, %v125
  %v139 = vpack.c.b16 %v127, %v127
  %vm151 = vcmask 424960
  %v153 = vsel %vm151, %v71, 0
  %v156 = vsel %vm151, %v73, 0
  %v159 = vsel %vm151, %v75, 0
  %v162 = vsel %vm151, %v77, 0
  %vm164 = vcmask 1041408
  %v166 = vsel %vm164, %v139, 0
  %168 = vmatpush.bf16.msra.mxu0 %v135
  %169 = vmatpush.bf16.msra.mxu0 %v134
  %170 = vmatpush.bf16.msra.mxu0 %v133
  %171 = vmatpush.bf16.msra.mxu0 %v132
  %172 = vmatpush.bf16.msra.mxu0 %v131
  %173 = vmatpush.bf16.msra.mxu0 %v130
  %174 = vmatpush.bf16.msra.mxu0 %v129
  %175 = vmatpush.bf16.msra.mxu0 %v128
  %176 = vmatmul.bf16.gmra.mxu0 %v70
  %v177 = vpop.f32.mrf.mxu0
  %v178 = vadd.f32 %v47, %v177
  %v179 = vpop.f32.mrf.mxu0
  %v180 = vadd.f32 %v47, %v179
  %181 = vmatmul.bf16.gmra.mxu0 %v72
  %v182 = vpop.f32.mrf.mxu0
  %v183 = vadd.f32 %v47, %v182
  %v184 = vpop.f32.mrf.mxu0
  %v185 = vadd.f32 %v47, %v184
  %186 = vmatmul.bf16.gmra.mxu0 %v74
  %v187 = vpop.f32.mrf.mxu0
  %v188 = vadd.f32 %v47, %v187
  %v189 = vpop.f32.mrf.mxu0
  %v190 = vadd.f32 %v47, %v189
  %191 = vmatmul.bf16.gmra.mxu0 %v76
  %v192 = vpop.f32.mrf.mxu0
  %v193 = vadd.f32 %v47, %v192
  %v194 = vpop.f32.mrf.mxu0
  %195 = vdwg.mxu0
  %196 = vmatpush.bf16.msra.mxu0 0
  %197 = vmatpush.bf16.msra.mxu0 0
  %198 = vmatpush.bf16.msra.mxu0 0
  %199 = vmatpush.bf16.msra.mxu0 0
  %200 = vmatpush.bf16.msra.mxu0 %v166
  %201 = vmatpush.bf16.msra.mxu0 %v138
  %202 = vmatpush.bf16.msra.mxu0 %v137
  %203 = vmatpush.bf16.msra.mxu0 %v136
  %204 = vmatmul.bf16.gmra.mxu0 %v153
  %v205 = vpop.f32.mrf.mxu0
  %v206 = vadd.f32 %v178, %v205
  %v207 = vpop.f32.mrf.mxu0
  %v208 = vadd.f32 %v180, %v207
  %209 = vmatmul.bf16.gmra.mxu0 %v156
  %v210 = vpop.f32.mrf.mxu0
  %v211 = vadd.f32 %v183, %v210
  %v212 = vpop.f32.mrf.mxu0
  %v213 = vadd.f32 %v185, %v212
  %214 = vmatmul.bf16.gmra.mxu0 %v159
  %v215 = vpop.f32.mrf.mxu0
  %v216 = vadd.f32 %v188, %v215
  %v217 = vpop.f32.mrf.mxu0
  %v218 = vadd.f32 %v190, %v217
  %219 = vmatmul.bf16.gmra.mxu0 %v162
  %v220 = vpop.f32.mrf.mxu0
  %v221 = vadd.f32 %v193, %v220
  %v222 = vpop.f32.mrf.mxu0
  %223 = vdwg.mxu0
  %v224 = vpack.c.bf16 %v206, %v206
  %v225 = vpack.c.bf16 %v208, %v208
  %v226 = vpack.c.bf16 %v211, %v211
  %v227 = vpack.c.bf16 %v213, %v213
  %v228 = vpack.c.bf16 %v216, %v216
  %v229 = vpack.c.bf16 %v218, %v218
  %v230 = vpack.c.bf16 %v221, %v221
  %vm231 = vcmask 191488
  %232 = vst.msk [vmem:[%s3] sm:$0xf] %vm231, %v224
  %233 = vst.msk [vmem:[%s3 + $0x4] sm:$0xf] %vm231, %v225
  %234 = vst.msk [vmem:[%s3 + $0x8] sm:$0xf] %vm231, %v226
  %235 = vst.msk [vmem:[%s3 + $0xc] sm:$0xf] %vm231, %v227
  %236 = vst.msk [vmem:[%s3 + $0x10] sm:$0xf] %vm231, %v228
  %237 = vst.msk [vmem:[%s3 + $0x14] sm:$0xf] %vm231, %v229
  %vm238 = vcmask 188416
  %239 = vst.msk [vmem:[%s3 + $0x18] sm:$0x1] %vm238, %v230
  // Predicated region
  $region14: #{net_forward.24} parent=0 // pred_check
    _
  $region15: #{net_forward.24} parent=0 // pred_check_branch
    %241 = sbr.rel (0) target = $region17
  $region16: #{net_forward.24} parent=0 // pred_region
    _
  $region17: #{net_forward.24} parent=0 // pred_fallthru
    _
  // Predicated region
  $region18: #{net_forward.24} parent=0 // pred_check
    _
  $region19: #{net_forward.24} parent=0 // pred_check_branch
    %243 = sbr.rel (0) target = $region21
  $region20: #{net_forward.24} parent=0 // pred_region
    _
  $region21: #{net_forward.24} parent=0 // pred_fallthru
    _

// kernel: net_forward.25
$region0: #{net_forward.25}
  #allocation0 [shape = 'u32[]', space=smem, size = 0x4, offset = 0x4, fixed_abs, tag = 'smem constant byte address 0x4 - core index']
  #allocation1 [shape = 'u32[72,128]{1,0:T(1,128)}', space=vmem, size = 0x9000, scoped, tag = 'internal scratch']
  %s0 = inlined_call_operand.vmem [shape: bf16[2,2200], index: 0, kind: input, shape index: {}]
  %s1 = inlined_call_operand.vmem [shape: bf16[2200,10], index: 1, kind: input, shape index: {}]
  %s2 = inlined_call_operand.vmem [shape: f32[1,10], index: 2, kind: input, shape index: {}]
  %s3 = inlined_call_operand.hbm [shape: f32[2,10], index: 3, kind: output, shape index: {}]
  %s4 = sld [smem:[#allocation0]]
  $region22: #{net_forward.25} parent=0
    _
  %s6 = ssub.s32 1, %s4
  %s7 = scalar_select 0, %s6, %s4
  $region1: #{net_forward.25} parent=0
    #allocation2 [shape = 'u8[1024]{0}', space=vmem, size = 0x400, scoped, tag = 'output window, operand 0, single buffered']
    #allocation3 [shape = 's32[1]{0}', space=sflag, size = 0x4, scoped, tag = 'scoped memory for net_forward.25']
    %8 = vsyncpa [#allocation3], 0
    // Predicated region
    $region2: #{net_forward.25} parent=1 // pred_check
      _
    $region3: #{net_forward.25} parent=1 // pred_check_branch
      %10 = sbr.rel (0) target = $region5
    $region4: #{net_forward.25} parent=1 // pred_region
      _
    $region5: #{net_forward.25} parent=1 // pred_fallthru
      _
    // Predicated region
    $region6: #{net_forward.25} parent=1 // pred_check
      _
    $region7: #{net_forward.25} parent=1 // pred_check_branch
      %12 = sbr.rel (0) target = $region9
    $region8: #{net_forward.25} parent=1 // pred_region
      _
    $region9: #{net_forward.25} parent=1 // pred_fallthru
      _
    // Predicated region
    $region10: #{net_forward.25} parent=1 // pred_check
      _
    $region11: #{net_forward.25} parent=1 // pred_check_branch
      %14 = sbr.rel (0) target = $region13
    $region12: #{net_forward.25} parent=1 // pred_region
      _
    $region13: #{net_forward.25} parent=1 // pred_fallthru
      _
    %v16 = vld [vmem:[%s0] sm:$0xff]
    %v17 = vld [vmem:[%s0 + $0x8] sm:$0xff]
    %v18 = vld [vmem:[%s0 + $0x10] sm:$0x3]
    %v19 = vld [vmem:[%s1] sm:$0xf]
    %v20 = vld [vmem:[%s1 + $0x4] sm:$0xf]
    %v21 = vld [vmem:[%s1 + $0x8] sm:$0xf]
    %v22 = vld [vmem:[%s1 + $0xc] sm:$0xf]
    %v23 = vld [vmem:[%s1 + $0x10] sm:$0xf]
    %v24 = vld [vmem:[%s1 + $0x14] sm:$0xf]
    %v25 = vld [vmem:[%s1 + $0x18] sm:$0xf]
    %v26 = vld [vmem:[%s1 + $0x1c] sm:$0xf]
    %v27 = vld [vmem:[%s1 + $0x20] sm:$0xf]
    %v28 = vld [vmem:[%s1 + $0x24] sm:$0xf]
    %v29 = vld [vmem:[%s1 + $0x28] sm:$0xf]
    %v30 = vld [vmem:[%s1 + $0x2c] sm:$0xf]
    %v31 = vld [vmem:[%s1 + $0x30] sm:$0xf]
    %v32 = vld [vmem:[%s1 + $0x34] sm:$0xf]
    %v33 = vld [vmem:[%s1 + $0x38] sm:$0xf]
    %v34 = vld [vmem:[%s1 + $0x3c] sm:$0xf]
    %v35 = vld [vmem:[%s1 + $0x40] sm:$0xf]
    %v36 = vld [vmem:[%s1 + $0x44] sm:$0xf]
    %v37 = vld [vmem:[%s1 + $0x48] sm:$0xf]
    %v38 = vld [vmem:[%s1 + $0x4c] sm:$0xf]
    %v39 = vld [vmem:[%s1 + $0x50] sm:$0xf]
    %v40 = vld [vmem:[%s1 + $0x54] sm:$0xf]
    %v41 = vld [vmem:[%s1 + $0x58] sm:$0xf]
    %v42 = vld [vmem:[%s1 + $0x5c] sm:$0xf]
    %v43 = vld [vmem:[%s1 + $0x60] sm:$0xf]
    %v44 = vld [vmem:[%s1 + $0x64] sm:$0xf]
    %v45 = vld [vmem:[%s1 + $0x68] sm:$0xf]
    %v46 = vld [vmem:[%s1 + $0x6c] sm:$0xf]
    %v47 = vld [vmem:[%s1 + $0x70] sm:$0xf]
    %v48 = vld [vmem:[%s1 + $0x74] sm:$0xf]
    %v49 = vld [vmem:[%s1 + $0x78] sm:$0xf]
    %v50 = vld [vmem:[%s1 + $0x7c] sm:$0xf]
    %v51 = vld [vmem:[%s1 + $0x80] sm:$0xf]
    %v52 = vld [vmem:[%s1 + $0x84] sm:$0xf]
    %v53 = vld [vmem:[%s1 + $0x88] sm:$0xf]
    %v54 = vld [vmem:[%s1 + $0x8c] sm:$0xf]
    %v55 = vld [vmem:[%s1 + $0x90] sm:$0xf]
    %v56 = vld [vmem:[%s1 + $0x94] sm:$0xf]
    %v57 = vld [vmem:[%s1 + $0x98] sm:$0xf]
    %v58 = vld [vmem:[%s1 + $0x9c] sm:$0xf]
    %v59 = vld [vmem:[%s1 + $0xa0] sm:$0xf]
    %v60 = vld [vmem:[%s1 + $0xa4] sm:$0xf]
    %v61 = vld [vmem:[%s1 + $0xa8] sm:$0xf]
    %v62 = vld [vmem:[%s1 + $0xac] sm:$0xf]
    %v63 = vld [vmem:[%s1 + $0xb0] sm:$0xf]
    %v64 = vld [vmem:[%s1 + $0xb4] sm:$0xf]
    %v65 = vld [vmem:[%s1 + $0xb8] sm:$0xf]
    %v66 = vld [vmem:[%s1 + $0xbc] sm:$0xf]
    %v67 = vld [vmem:[%s1 + $0xc0] sm:$0xf]
    %v68 = vld [vmem:[%s1 + $0xc4] sm:$0xf]
    %v69 = vld [vmem:[%s1 + $0xc8] sm:$0xf]
    %v70 = vld [vmem:[%s1 + $0xcc] sm:$0xf]
    %v71 = vld [vmem:[%s1 + $0xd0] sm:$0xf]
    %v72 = vld [vmem:[%s1 + $0xd4] sm:$0xf]
    %v73 = vld [vmem:[%s1 + $0xd8] sm:$0xf]
    %v74 = vld [vmem:[%s1 + $0xdc] sm:$0xf]
    %v75 = vld [vmem:[%s1 + $0xe0] sm:$0xf]
    %v76 = vld [vmem:[%s1 + $0xe4] sm:$0xf]
    %v77 = vld [vmem:[%s1 + $0xe8] sm:$0xf]
    %v78 = vld [vmem:[%s1 + $0xec] sm:$0xf]
    %v79 = vld [vmem:[%s1 + $0xf0] sm:$0xf]
    %v80 = vld [vmem:[%s1 + $0xf4] sm:$0xf]
    %v81 = vld [vmem:[%s1 + $0xf8] sm:$0xf]
    %v82 = vld [vmem:[%s1 + $0xfc] sm:$0xf]
    %v83 = vld [vmem:[%s1 + $0x100] sm:$0xf]
    %v84 = vld [vmem:[%s1 + $0x104] sm:$0xf]
    %v85 = vld [vmem:[%s1 + $0x108] sm:$0xf]
    %v86 = vld [vmem:[%s1 + $0x10c] sm:$0xf]
    %v87 = vld [vmem:[%s1 + $0x110] sm:$0xf]
    %v88 = vld [vmem:[%s1 + $0x114] sm:$0xf]
    %v89 = vld [vmem:[%s1 + $0x118] sm:$0xf]
    %v90 = vld [vmem:[%s1 + $0x11c] sm:$0xf]
    %v91 = vld [vmem:[%s1 + $0x120] sm:$0xf]
    %v92 = vld [vmem:[%s1 + $0x124] sm:$0xf]
    %v93 = vld [vmem:[%s1 + $0x128] sm:$0xf]
    %v94 = vld [vmem:[%s1 + $0x12c] sm:$0xf]
    %v95 = vld [vmem:[%s1 + $0x130] sm:$0xf]
    %v96 = vld [vmem:[%s1 + $0x134] sm:$0xf]
    %v97 = vld [vmem:[%s1 + $0x138] sm:$0xf]
    %v98 = vld [vmem:[%s1 + $0x13c] sm:$0xf]
    %v99 = vld [vmem:[%s1 + $0x140] sm:$0xf]
    %v100 = vld [vmem:[%s1 + $0x144] sm:$0xf]
    %v101 = vld [vmem:[%s1 + $0x148] sm:$0xf]
    %v102 = vld [vmem:[%s1 + $0x14c] sm:$0xf]
    %v103 = vld [vmem:[%s1 + $0x150] sm:$0xf]
    %v104 = vld [vmem:[%s1 + $0x154] sm:$0xf]
    %v105 = vld [vmem:[%s1 + $0x158] sm:$0xf]
    %v106 = vld [vmem:[%s1 + $0x15c] sm:$0xf]
    %v107 = vld [vmem:[%s1 + $0x160] sm:$0xf]
    %v108 = vld [vmem:[%s1 + $0x164] sm:$0xf]
    %v109 = vld [vmem:[%s1 + $0x168] sm:$0xf]
    %v110 = vld [vmem:[%s1 + $0x16c] sm:$0xf]
    %v111 = vld [vmem:[%s1 + $0x170] sm:$0xf]
    %v112 = vld [vmem:[%s1 + $0x174] sm:$0xf]
    %v113 = vld [vmem:[%s1 + $0x178] sm:$0xf]
    %v114 = vld [vmem:[%s1 + $0x17c] sm:$0xf]
    %v115 = vld [vmem:[%s1 + $0x180] sm:$0xf]
    %v116 = vld [vmem:[%s1 + $0x184] sm:$0xf]
    %v117 = vld [vmem:[%s1 + $0x188] sm:$0xf]
    %v118 = vld [vmem:[%s1 + $0x18c] sm:$0xf]
    %v119 = vld [vmem:[%s1 + $0x190] sm:$0xf]
    %v120 = vld [vmem:[%s1 + $0x194] sm:$0xf]
    %v121 = vld [vmem:[%s1 + $0x198] sm:$0xf]
    %v122 = vld [vmem:[%s1 + $0x19c] sm:$0xf]
    %v123 = vld [vmem:[%s1 + $0x1a0] sm:$0xf]
    %v124 = vld [vmem:[%s1 + $0x1a4] sm:$0xf]
    %v125 = vld [vmem:[%s1 + $0x1a8] sm:$0xf]
    %v126 = vld [vmem:[%s1 + $0x1ac] sm:$0xf]
    %v127 = vld [vmem:[%s1 + $0x1b0] sm:$0xf]
    %v128 = vld [vmem:[%s1 + $0x1b4] sm:$0xf]
    %v129 = vld [vmem:[%s1 + $0x1b8] sm:$0xf]
    %v130 = vld [vmem:[%s1 + $0x1bc] sm:$0xf]
    %v131 = vld [vmem:[%s1 + $0x1c0] sm:$0xf]
    %v132 = vld [vmem:[%s1 + $0x1c4] sm:$0xf]
    %v133 = vld [vmem:[%s1 + $0x1c8] sm:$0xf]
    %v134 = vld [vmem:[%s1 + $0x1cc] sm:$0xf]
    %v135 = vld [vmem:[%s1 + $0x1d0] sm:$0xf]
    %v136 = vld [vmem:[%s1 + $0x1d4] sm:$0xf]
    %v137 = vld [vmem:[%s1 + $0x1d8] sm:$0xf]
    %v138 = vld [vmem:[%s1 + $0x1dc] sm:$0xf]
    %v139 = vld [vmem:[%s1 + $0x1e0] sm:$0xf]
    %v140 = vld [vmem:[%s1 + $0x1e4] sm:$0xf]
    %v141 = vld [vmem:[%s1 + $0x1e8] sm:$0xf]
    %v142 = vld [vmem:[%s1 + $0x1ec] sm:$0xf]
    %v143 = vld [vmem:[%s1 + $0x1f0] sm:$0xf]
    %v144 = vld [vmem:[%s1 + $0x1f4] sm:$0xf]
    %v145 = vld [vmem:[%s1 + $0x1f8] sm:$0xf]
    %v146 = vld [vmem:[%s1 + $0x1fc] sm:$0xf]
    %v147 = vld [vmem:[%s1 + $0x200] sm:$0xf]
    %v148 = vld [vmem:[%s1 + $0x204] sm:$0xf]
    %v149 = vld [vmem:[%s1 + $0x208] sm:$0xf]
    %v150 = vld [vmem:[%s1 + $0x20c] sm:$0xf]
    %v151 = vld [vmem:[%s1 + $0x210] sm:$0xf]
    %v152 = vld [vmem:[%s1 + $0x214] sm:$0xf]
    %v153 = vld [vmem:[%s1 + $0x218] sm:$0xf]
    %v154 = vld [vmem:[%s1 + $0x21c] sm:$0xf]
    %v155 = vld [vmem:[%s1 + $0x220] sm:$0xf]
    %v156 = vld [vmem:[%s1 + $0x224] sm:$0xf]
    %v157 = vld [vmem:[%s1 + $0x228] sm:$0xf]
    %v158 = vld [vmem:[%s1 + $0x22c] sm:$0xf]
    %v159 = vld [vmem:[%s1 + $0x230] sm:$0xf]
    %v160 = vld [vmem:[%s1 + $0x234] sm:$0xf]
    %v161 = vld [vmem:[%s1 + $0x238] sm:$0xf]
    %v162 = vld [vmem:[%s1 + $0x23c] sm:$0xf]
    %v163 = vld [vmem:[%s1 + $0x240] sm:$0xf]
    %v164 = vld [vmem:[%s1 + $0x244] sm:$0xf]
    %v165 = vld [vmem:[%s1 + $0x248] sm:$0xf]
    %v166 = vld [vmem:[%s1 + $0x24c] sm:$0xf]
    %v167 = vld [vmem:[%s1 + $0x250] sm:$0xf]
    %v168 = vld [vmem:[%s1 + $0x254] sm:$0xf]
    %v169 = vld [vmem:[%s1 + $0x258] sm:$0xf]
    %v170 = vld [vmem:[%s1 + $0x25c] sm:$0xf]
    %v171 = vld [vmem:[%s1 + $0x260] sm:$0xf]
    %v172 = vld [vmem:[%s1 + $0x264] sm:$0xf]
    %v173 = vld [vmem:[%s1 + $0x268] sm:$0xf]
    %v174 = vld [vmem:[%s1 + $0x26c] sm:$0xf]
    %v175 = vld [vmem:[%s1 + $0x270] sm:$0xf]
    %v176 = vld [vmem:[%s1 + $0x274] sm:$0xf]
    %v177 = vld [vmem:[%s1 + $0x278] sm:$0xf]
    %v178 = vld [vmem:[%s1 + $0x27c] sm:$0xf]
    %v179 = vld [vmem:[%s1 + $0x280] sm:$0xf]
    %v180 = vld [vmem:[%s1 + $0x284] sm:$0xf]
    %v181 = vld [vmem:[%s1 + $0x288] sm:$0xf]
    %v182 = vld [vmem:[%s1 + $0x28c] sm:$0xf]
    %v183 = vld [vmem:[%s1 + $0x290] sm:$0xf]
    %v184 = vld [vmem:[%s1 + $0x294] sm:$0xf]
    %v185 = vld [vmem:[%s1 + $0x298] sm:$0xf]
    %v186 = vld [vmem:[%s1 + $0x29c] sm:$0xf]
    %v187 = vld [vmem:[%s1 + $0x2a0] sm:$0xf]
    %v188 = vld [vmem:[%s1 + $0x2a4] sm:$0xf]
    %v189 = vld [vmem:[%s1 + $0x2a8] sm:$0xf]
    %v190 = vld [vmem:[%s1 + $0x2ac] sm:$0xf]
    %v191 = vld [vmem:[%s1 + $0x2b0] sm:$0xf]
    %v192 = vld [vmem:[%s1 + $0x2b4] sm:$0xf]
    %v193 = vld [vmem:[%s1 + $0x2b8] sm:$0xf]
    %v194 = vld [vmem:[%s1 + $0x2bc] sm:$0xf]
    %v195 = vld [vmem:[%s1 + $0x2c0] sm:$0xf]
    %v196 = vld [vmem:[%s1 + $0x2c4] sm:$0xf]
    %v197 = vld [vmem:[%s1 + $0x2c8] sm:$0xf]
    %v198 = vld [vmem:[%s1 + $0x2cc] sm:$0xf]
    %v199 = vld [vmem:[%s1 + $0x2d0] sm:$0xf]
    %v200 = vld [vmem:[%s1 + $0x2d4] sm:$0xf]
    %v201 = vld [vmem:[%s1 + $0x2d8] sm:$0xf]
    %v202 = vld [vmem:[%s1 + $0x2dc] sm:$0xf]
    %v203 = vld [vmem:[%s1 + $0x2e0] sm:$0xf]
    %v204 = vld [vmem:[%s1 + $0x2e4] sm:$0xf]
    %v205 = vld [vmem:[%s1 + $0x2e8] sm:$0xf]
    %v206 = vld [vmem:[%s1 + $0x2ec] sm:$0xf]
    %v207 = vld [vmem:[%s1 + $0x2f0] sm:$0xf]
    %v208 = vld [vmem:[%s1 + $0x2f4] sm:$0xf]
    %v209 = vld [vmem:[%s1 + $0x2f8] sm:$0xf]
    %v210 = vld [vmem:[%s1 + $0x2fc] sm:$0xf]
    %v211 = vld [vmem:[%s1 + $0x300] sm:$0xf]
    %v212 = vld [vmem:[%s1 + $0x304] sm:$0xf]
    %v213 = vld [vmem:[%s1 + $0x308] sm:$0xf]
    %v214 = vld [vmem:[%s1 + $0x30c] sm:$0xf]
    %v215 = vld [vmem:[%s1 + $0x310] sm:$0xf]
    %v216 = vld [vmem:[%s1 + $0x314] sm:$0xf]
    %v217 = vld [vmem:[%s1 + $0x318] sm:$0xf]
    %v218 = vld [vmem:[%s1 + $0x31c] sm:$0xf]
    %v219 = vld [vmem:[%s1 + $0x320] sm:$0xf]
    %v220 = vld [vmem:[%s1 + $0x324] sm:$0xf]
    %v221 = vld [vmem:[%s1 + $0x328] sm:$0xf]
    %v222 = vld [vmem:[%s1 + $0x32c] sm:$0xf]
    %v223 = vld [vmem:[%s1 + $0x330] sm:$0xf]
    %v224 = vld [vmem:[%s1 + $0x334] sm:$0xf]
    %v225 = vld [vmem:[%s1 + $0x338] sm:$0xf]
    %v226 = vld [vmem:[%s1 + $0x33c] sm:$0xf]
    %v227 = vld [vmem:[%s1 + $0x340] sm:$0xf]
    %v228 = vld [vmem:[%s1 + $0x344] sm:$0xf]
    %v229 = vld [vmem:[%s1 + $0x348] sm:$0xf]
    %v230 = vld [vmem:[%s1 + $0x34c] sm:$0xf]
    %v231 = vld [vmem:[%s1 + $0x350] sm:$0xf]
    %v232 = vld [vmem:[%s1 + $0x354] sm:$0xf]
    %v233 = vld [vmem:[%s1 + $0x358] sm:$0xf]
    %v234 = vld [vmem:[%s1 + $0x35c] sm:$0xf]
    %v235 = vld [vmem:[%s1 + $0x360] sm:$0xf]
    %v236 = vld [vmem:[%s1 + $0x364] sm:$0xf]
    %v237 = vld [vmem:[%s1 + $0x368] sm:$0xf]
    %v238 = vld [vmem:[%s1 + $0x36c] sm:$0xf]
    %v239 = vld [vmem:[%s1 + $0x370] sm:$0xf]
    %v240 = vld [vmem:[%s1 + $0x374] sm:$0xf]
    %v241 = vld [vmem:[%s1 + $0x378] sm:$0xf]
    %v242 = vld [vmem:[%s1 + $0x37c] sm:$0xf]
    %v243 = vld [vmem:[%s1 + $0x380] sm:$0xf]
    %v244 = vld [vmem:[%s1 + $0x384] sm:$0xf]
    %v245 = vld [vmem:[%s1 + $0x388] sm:$0xf]
    %v246 = vld [vmem:[%s1 + $0x38c] sm:$0xf]
    %v247 = vld [vmem:[%s1 + $0x390] sm:$0xf]
    %v248 = vld [vmem:[%s1 + $0x394] sm:$0xf]
    %v249 = vld [vmem:[%s1 + $0x398] sm:$0xf]
    %v250 = vld [vmem:[%s1 + $0x39c] sm:$0xf]
    %v251 = vld [vmem:[%s1 + $0x3a0] sm:$0xf]
    %v252 = vld [vmem:[%s1 + $0x3a4] sm:$0xf]
    %v253 = vld [vmem:[%s1 + $0x3a8] sm:$0xf]
    %v254 = vld [vmem:[%s1 + $0x3ac] sm:$0xf]
    %v255 = vld [vmem:[%s1 + $0x3b0] sm:$0xf]
    %v256 = vld [vmem:[%s1 + $0x3b4] sm:$0xf]
    %v257 = vld [vmem:[%s1 + $0x3b8] sm:$0xf]
    %v258 = vld [vmem:[%s1 + $0x3bc] sm:$0xf]
    %v259 = vld [vmem:[%s1 + $0x3c0] sm:$0xf]
    %v260 = vld [vmem:[%s1 + $0x3c4] sm:$0xf]
    %v261 = vld [vmem:[%s1 + $0x3c8] sm:$0xf]
    %v262 = vld [vmem:[%s1 + $0x3cc] sm:$0xf]
    %v263 = vld [vmem:[%s1 + $0x3d0] sm:$0xf]
    %v264 = vld [vmem:[%s1 + $0x3d4] sm:$0xf]
    %v265 = vld [vmem:[%s1 + $0x3d8] sm:$0xf]
    %v266 = vld [vmem:[%s1 + $0x3dc] sm:$0xf]
    %v267 = vld [vmem:[%s1 + $0x3e0] sm:$0xf]
    %v268 = vld [vmem:[%s1 + $0x3e4] sm:$0xf]
    %v269 = vld [vmem:[%s1 + $0x3e8] sm:$0xf]
    %v270 = vld [vmem:[%s1 + $0x3ec] sm:$0xf]
    %v271 = vld [vmem:[%s1 + $0x3f0] sm:$0xf]
    %v272 = vld [vmem:[%s1 + $0x3f4] sm:$0xf]
    %v273 = vld [vmem:[%s1 + $0x3f8] sm:$0xf]
    %v274 = vld [vmem:[%s1 + $0x3fc] sm:$0xf]
    %v275 = vld [vmem:[%s1 + $0x400] sm:$0xf]
    %v276 = vld [vmem:[%s1 + $0x404] sm:$0xf]
    %v277 = vld [vmem:[%s1 + $0x408] sm:$0xf]
    %v278 = vld [vmem:[%s1 + $0x40c] sm:$0xf]
    %v279 = vld [vmem:[%s1 + $0x410] sm:$0xf]
    %v280 = vld [vmem:[%s1 + $0x414] sm:$0xf]
    %v281 = vld [vmem:[%s1 + $0x418] sm:$0xf]
    %v282 = vld [vmem:[%s1 + $0x41c] sm:$0xf]
    %v283 = vld [vmem:[%s1 + $0x420] sm:$0xf]
    %v284 = vld [vmem:[%s1 + $0x424] sm:$0xf]
    %v285 = vld [vmem:[%s1 + $0x428] sm:$0xf]
    %v286 = vld [vmem:[%s1 + $0x42c] sm:$0xf]
    %v287 = vld [vmem:[%s1 + $0x430] sm:$0xf]
    %v288 = vld [vmem:[%s1 + $0x434] sm:$0xf]
    %v289 = vld [vmem:[%s1 + $0x438] sm:$0xf]
    %v290 = vld [vmem:[%s1 + $0x43c] sm:$0xf]
    %v291 = vld [vmem:[%s1 + $0x440] sm:$0xf]
    %v292 = vld [vmem:[%s1 + $0x444] sm:$0xf]
    %v293 = vld [vmem:[%s1 + $0x448] sm:$0xf]
    %v294 = vld [vmem:[%s2] sm:$0x1]
    %v296 = vperm.slane %v294, 0
    %299 = vst [vmem:[#allocation1] ss:$9 sm:$0xff] %v16
    %v300 = vld [vmem:[#allocation1] sm:$0xff]
    %v301 = vld [vmem:[#allocation1 + $0x9] sm:$0xff]
    %v302 = vld [vmem:[#allocation1 + $0x12] sm:$0xff]
    %v303 = vld [vmem:[#allocation1 + $0x1b] sm:$0xff]
    %v304 = vld [vmem:[#allocation1 + $0x24] sm:$0xff]
    %v305 = vld [vmem:[#allocation1 + $0x2d] sm:$0xff]
    %v306 = vld [vmem:[#allocation1 + $0x36] sm:$0xff]
    %v307 = vld [vmem:[#allocation1 + $0x3f] sm:$0xff]
    %309 = vst [vmem:[#allocation1] ss:$9 sm:$0xff] %v17
    %v310 = vld [vmem:[#allocation1] sm:$0xff]
    %v311 = vld [vmem:[#allocation1 + $0x9] sm:$0xff]
    %v312 = vld [vmem:[#allocation1 + $0x12] sm:$0xff]
    %v313 = vld [vmem:[#allocation1 + $0x1b] sm:$0xff]
    %v314 = vld [vmem:[#allocation1 + $0x24] sm:$0xff]
    %v315 = vld [vmem:[#allocation1 + $0x2d] sm:$0xff]
    %v316 = vld [vmem:[#allocation1 + $0x36] sm:$0xff]
    %v317 = vld [vmem:[#allocation1 + $0x3f] sm:$0xff]
    %319 = vst [vmem:[#allocation1] ss:$9 sm:$0xff] %v18
    %v320 = vld [vmem:[#allocation1] sm:$0xff]
    %v321 = vld [vmem:[#allocation1 + $0x9] sm:$0xff]
    %v614 = vunpack.c.l.b16 %v19
    %v615 = vunpack.c.l.b16 %v20
    %v616 = vunpack.c.l.b16 %v21
    %v617 = vunpack.c.l.b16 %v22
    %v618 = vunpack.c.l.b16 %v23
    %v619 = vunpack.c.l.b16 %v24
    %v620 = vunpack.c.l.b16 %v25
    %v621 = vunpack.c.l.b16 %v26
    %v622 = vunpack.c.l.b16 %v27
    %v623 = vunpack.c.l.b16 %v28
    %v624 = vunpack.c.l.b16 %v29
    %v625 = vunpack.c.l.b16 %v30
    %v626 = vunpack.c.l.b16 %v31
    %v627 = vunpack.c.l.b16 %v32
    %v628 = vunpack.c.l.b16 %v33
    %v629 = vunpack.c.l.b16 %v34
    %v630 = vunpack.c.l.b16 %v35
    %v631 = vunpack.c.l.b16 %v36
    %v632 = vunpack.c.l.b16 %v37
    %v633 = vunpack.c.l.b16 %v38
    %v634 = vunpack.c.l.b16 %v39
    %v635 = vunpack.c.l.b16 %v40
    %v636 = vunpack.c.l.b16 %v41
    %v637 = vunpack.c.l.b16 %v42
    %v638 = vunpack.c.l.b16 %v43
    %v639 = vunpack.c.l.b16 %v44
    %v640 = vunpack.c.l.b16 %v45
    %v641 = vunpack.c.l.b16 %v46
    %v642 = vunpack.c.l.b16 %v47
    %v643 = vunpack.c.l.b16 %v48
    %v644 = vunpack.c.l.b16 %v49
    %v645 = vunpack.c.l.b16 %v50
    %v646 = vunpack.c.l.b16 %v51
    %v647 = vunpack.c.l.b16 %v52
    %v648 = vunpack.c.l.b16 %v53
    %v649 = vunpack.c.l.b16 %v54
    %v650 = vunpack.c.l.b16 %v55
    %v651 = vunpack.c.l.b16 %v56
    %v652 = vunpack.c.l.b16 %v57
    %v653 = vunpack.c.l.b16 %v58
    %v654 = vunpack.c.l.b16 %v59
    %v655 = vunpack.c.l.b16 %v60
    %v656 = vunpack.c.l.b16 %v61
    %v657 = vunpack.c.l.b16 %v62
    %v658 = vunpack.c.l.b16 %v63
    %v659 = vunpack.c.l.b16 %v64
    %v660 = vunpack.c.l.b16 %v65
    %v661 = vunpack.c.l.b16 %v66
    %v662 = vunpack.c.l.b16 %v67
    %v663 = vunpack.c.l.b16 %v68
    %v664 = vunpack.c.l.b16 %v69
    %v665 = vunpack.c.l.b16 %v70
    %v666 = vunpack.c.l.b16 %v71
    %v667 = vunpack.c.l.b16 %v72
    %v668 = vunpack.c.l.b16 %v73
    %v669 = vunpack.c.l.b16 %v74
    %v670 = vunpack.c.l.b16 %v75
    %v671 = vunpack.c.l.b16 %v76
    %v672 = vunpack.c.l.b16 %v77
    %v673 = vunpack.c.l.b16 %v78
    %v674 = vunpack.c.l.b16 %v79
    %v675 = vunpack.c.l.b16 %v80
    %v676 = vunpack.c.l.b16 %v81
    %v677 = vunpack.c.l.b16 %v82
    %v678 = vunpack.c.l.b16 %v83
    %v679 = vunpack.c.l.b16 %v84
    %v680 = vunpack.c.l.b16 %v85
    %v681 = vunpack.c.l.b16 %v86
    %v682 = vunpack.c.l.b16 %v87
    %v683 = vunpack.c.l.b16 %v88
    %v684 = vunpack.c.l.b16 %v89
    %v685 = vunpack.c.l.b16 %v90
    %v686 = vunpack.c.l.b16 %v91
    %v687 = vunpack.c.l.b16 %v92
    %v688 = vunpack.c.l.b16 %v93
    %v689 = vunpack.c.l.b16 %v94
    %v690 = vunpack.c.l.b16 %v95
    %v691 = vunpack.c.l.b16 %v96
    %v692 = vunpack.c.l.b16 %v97
    %v693 = vunpack.c.l.b16 %v98
    %v694 = vunpack.c.l.b16 %v99
    %v695 = vunpack.c.l.b16 %v100
    %v696 = vunpack.c.l.b16 %v101
    %v697 = vunpack.c.l.b16 %v102
    %v698 = vunpack.c.l.b16 %v103
    %v699 = vunpack.c.l.b16 %v104
    %v700 = vunpack.c.l.b16 %v105
    %v701 = vunpack.c.l.b16 %v106
    %v702 = vunpack.c.l.b16 %v107
    %v703 = vunpack.c.l.b16 %v108
    %v704 = vunpack.c.l.b16 %v109
    %v705 = vunpack.c.l.b16 %v110
    %v706 = vunpack.c.l.b16 %v111
    %v707 = vunpack.c.l.b16 %v112
    %v708 = vunpack.c.l.b16 %v113
    %v709 = vunpack.c.l.b16 %v114
    %v710 = vunpack.c.l.b16 %v115
    %v711 = vunpack.c.l.b16 %v116
    %v712 = vunpack.c.l.b16 %v117
    %v713 = vunpack.c.l.b16 %v118
    %v714 = vunpack.c.l.b16 %v119
    %v715 = vunpack.c.l.b16 %v120
    %v716 = vunpack.c.l.b16 %v121
    %v717 = vunpack.c.l.b16 %v122
    %v718 = vunpack.c.l.b16 %v123
    %v719 = vunpack.c.l.b16 %v124
    %v720 = vunpack.c.l.b16 %v125
    %v721 = vunpack.c.l.b16 %v126
    %v722 = vunpack.c.l.b16 %v127
    %v723 = vunpack.c.l.b16 %v128
    %v724 = vunpack.c.l.b16 %v129
    %v725 = vunpack.c.l.b16 %v130
    %v726 = vunpack.c.l.b16 %v131
    %v727 = vunpack.c.l.b16 %v132
    %v728 = vunpack.c.l.b16 %v133
    %v729 = vunpack.c.l.b16 %v134
    %v730 = vunpack.c.l.b16 %v135
    %v731 = vunpack.c.l.b16 %v136
    %v732 = vunpack.c.l.b16 %v137
    %v733 = vunpack.c.l.b16 %v138
    %v734 = vunpack.c.l.b16 %v139
    %v735 = vunpack.c.l.b16 %v140
    %v736 = vunpack.c.l.b16 %v141
    %v737 = vunpack.c.l.b16 %v142
    %v738 = vunpack.c.l.b16 %v143
    %v739 = vunpack.c.l.b16 %v144
    %v740 = vunpack.c.l.b16 %v145
    %v741 = vunpack.c.l.b16 %v146
    %v742 = vunpack.c.l.b16 %v147
    %v743 = vunpack.c.l.b16 %v148
    %v744 = vunpack.c.l.b16 %v149
    %v745 = vunpack.c.l.b16 %v150
    %v746 = vunpack.c.l.b16 %v151
    %v747 = vunpack.c.l.b16 %v152
    %v748 = vunpack.c.l.b16 %v153
    %v749 = vunpack.c.l.b16 %v154
    %v750 = vunpack.c.l.b16 %v155
    %v751 = vunpack.c.l.b16 %v156
    %v752 = vunpack.c.l.b16 %v157
    %v753 = vunpack.c.l.b16 %v158
    %v754 = vunpack.c.l.b16 %v159
    %v755 = vunpack.c.l.b16 %v160
    %v756 = vunpack.c.l.b16 %v161
    %v757 = vunpack.c.l.b16 %v162
    %v758 = vunpack.c.l.b16 %v163
    %v759 = vunpack.c.l.b16 %v164
    %v760 = vunpack.c.l.b16 %v165
    %v761 = vunpack.c.l.b16 %v166
    %v762 = vunpack.c.l.b16 %v167
    %v763 = vunpack.c.l.b16 %v168
    %v764 = vunpack.c.l.b16 %v169
    %v765 = vunpack.c.l.b16 %v170
    %v766 = vunpack.c.l.b16 %v171
    %v767 = vunpack.c.l.b16 %v172
    %v768 = vunpack.c.l.b16 %v173
    %v769 = vunpack.c.l.b16 %v174
    %v770 = vunpack.c.l.b16 %v175
    %v771 = vunpack.c.l.b16 %v176
    %v772 = vunpack.c.l.b16 %v177
    %v773 = vunpack.c.l.b16 %v178
    %v774 = vunpack.c.l.b16 %v179
    %v775 = vunpack.c.l.b16 %v180
    %v776 = vunpack.c.l.b16 %v181
    %v777 = vunpack.c.l.b16 %v182
    %v778 = vunpack.c.l.b16 %v183
    %v779 = vunpack.c.l.b16 %v184
    %v780 = vunpack.c.l.b16 %v185
    %v781 = vunpack.c.l.b16 %v186
    %v782 = vunpack.c.l.b16 %v187
    %v783 = vunpack.c.l.b16 %v188
    %v784 = vunpack.c.l.b16 %v189
    %v785 = vunpack.c.l.b16 %v190
    %v786 = vunpack.c.l.b16 %v191
    %v787 = vunpack.c.l.b16 %v192
    %v788 = vunpack.c.l.b16 %v193
    %v789 = vunpack.c.l.b16 %v194
    %v790 = vunpack.c.l.b16 %v195
    %v791 = vunpack.c.l.b16 %v196
    %v792 = vunpack.c.l.b16 %v197
    %v793 = vunpack.c.l.b16 %v198
    %v794 = vunpack.c.l.b16 %v199
    %v795 = vunpack.c.l.b16 %v200
    %v796 = vunpack.c.l.b16 %v201
    %v797 = vunpack.c.l.b16 %v202
    %v798 = vunpack.c.l.b16 %v203
    %v799 = vunpack.c.l.b16 %v204
    %v800 = vunpack.c.l.b16 %v205
    %v801 = vunpack.c.l.b16 %v206
    %v802 = vunpack.c.l.b16 %v207
    %v803 = vunpack.c.l.b16 %v208
    %v804 = vunpack.c.l.b16 %v209
    %v805 = vunpack.c.l.b16 %v210
    %v806 = vunpack.c.l.b16 %v211
    %v807 = vunpack.c.l.b16 %v212
    %v808 = vunpack.c.l.b16 %v213
    %v809 = vunpack.c.l.b16 %v214
    %v810 = vunpack.c.l.b16 %v215
    %v811 = vunpack.c.l.b16 %v216
    %v812 = vunpack.c.l.b16 %v217
    %v813 = vunpack.c.l.b16 %v218
    %v814 = vunpack.c.l.b16 %v219
    %v815 = vunpack.c.l.b16 %v220
    %v816 = vunpack.c.l.b16 %v221
    %v817 = vunpack.c.l.b16 %v222
    %v818 = vunpack.c.l.b16 %v223
    %v819 = vunpack.c.l.b16 %v224
    %v820 = vunpack.c.l.b16 %v225
    %v821 = vunpack.c.l.b16 %v226
    %v822 = vunpack.c.l.b16 %v227
    %v823 = vunpack.c.l.b16 %v228
    %v824 = vunpack.c.l.b16 %v229
    %v825 = vunpack.c.l.b16 %v230
    %v826 = vunpack.c.l.b16 %v231
    %v827 = vunpack.c.l.b16 %v232
    %v828 = vunpack.c.l.b16 %v233
    %v829 = vunpack.c.l.b16 %v234
    %v830 = vunpack.c.l.b16 %v235
    %v831 = vunpack.c.l.b16 %v236
    %v832 = vunpack.c.l.b16 %v237
    %v833 = vunpack.c.l.b16 %v238
    %v834 = vunpack.c.l.b16 %v239
    %v835 = vunpack.c.l.b16 %v240
    %v836 = vunpack.c.l.b16 %v241
    %v837 = vunpack.c.l.b16 %v242
    %v838 = vunpack.c.l.b16 %v243
    %v839 = vunpack.c.l.b16 %v244
    %v840 = vunpack.c.l.b16 %v245
    %v841 = vunpack.c.l.b16 %v246
    %v842 = vunpack.c.l.b16 %v247
    %v843 = vunpack.c.l.b16 %v248
    %v844 = vunpack.c.l.b16 %v249
    %v845 = vunpack.c.l.b16 %v250
    %v846 = vunpack.c.l.b16 %v251
    %v847 = vunpack.c.l.b16 %v252
    %v848 = vunpack.c.l.b16 %v253
    %v849 = vunpack.c.l.b16 %v254
    %v850 = vunpack.c.l.b16 %v255
    %v851 = vunpack.c.l.b16 %v256
    %v852 = vunpack.c.l.b16 %v257
    %v853 = vunpack.c.l.b16 %v258
    %v854 = vunpack.c.l.b16 %v259
    %v855 = vunpack.c.l.b16 %v260
    %v856 = vunpack.c.l.b16 %v261
    %v857 = vunpack.c.l.b16 %v262
    %v858 = vunpack.c.l.b16 %v263
    %v859 = vunpack.c.l.b16 %v264
    %v860 = vunpack.c.l.b16 %v265
    %v861 = vunpack.c.l.b16 %v266
    %v862 = vunpack.c.l.b16 %v267
    %v863 = vunpack.c.l.b16 %v268
    %v864 = vunpack.c.l.b16 %v269
    %v865 = vunpack.c.l.b16 %v270
    %v866 = vunpack.c.l.b16 %v271
    %v867 = vunpack.c.l.b16 %v272
    %v868 = vunpack.c.l.b16 %v273
    %v869 = vunpack.c.l.b16 %v274
    %v870 = vunpack.c.l.b16 %v275
    %v871 = vunpack.c.l.b16 %v276
    %v872 = vunpack.c.l.b16 %v277
    %v873 = vunpack.c.l.b16 %v278
    %v874 = vunpack.c.l.b16 %v279
    %v875 = vunpack.c.l.b16 %v280
    %v876 = vunpack.c.l.b16 %v281
    %v877 = vunpack.c.l.b16 %v282
    %v878 = vunpack.c.l.b16 %v283
    %v879 = vunpack.c.l.b16 %v284
    %v880 = vunpack.c.l.b16 %v285
    %v881 = vunpack.c.l.b16 %v286
    %v882 = vunpack.c.l.b16 %v287
    %v883 = vunpack.c.l.b16 %v288
    %v884 = vunpack.c.l.b16 %v289
    %v885 = vunpack.c.l.b16 %v290
    %v886 = vunpack.c.l.b16 %v291
    %v887 = vunpack.c.l.b16 %v292
    %v888 = vunpack.c.l.b16 %v293
    %v889 = vpack.c.b16 %v615, %v614
    %v890 = vpack.c.b16 %v617, %v616
    %v891 = vpack.c.b16 %v619, %v618
    %v892 = vpack.c.b16 %v621, %v620
    %v893 = vpack.c.b16 %v623, %v622
    %v894 = vpack.c.b16 %v625, %v624
    %v895 = vpack.c.b16 %v627, %v626
    %v896 = vpack.c.b16 %v629, %v628
    %v897 = vpack.c.b16 %v631, %v630
    %v898 = vpack.c.b16 %v633, %v632
    %v899 = vpack.c.b16 %v635, %v634
    %v900 = vpack.c.b16 %v637, %v636
    %v901 = vpack.c.b16 %v639, %v638
    %v902 = vpack.c.b16 %v641, %v640
    %v903 = vpack.c.b16 %v643, %v642
    %v904 = vpack.c.b16 %v645, %v644
    %v905 = vpack.c.b16 %v647, %v646
    %v906 = vpack.c.b16 %v649, %v648
    %v907 = vpack.c.b16 %v651, %v650
    %v908 = vpack.c.b16 %v653, %v652
    %v909 = vpack.c.b16 %v655, %v654
    %v910 = vpack.c.b16 %v657, %v656
    %v911 = vpack.c.b16 %v659, %v658
    %v912 = vpack.c.b16 %v661, %v660
    %v913 = vpack.c.b16 %v663, %v662
    %v914 = vpack.c.b16 %v665, %v664
    %v915 = vpack.c.b16 %v667, %v666
    %v916 = vpack.c.b16 %v669, %v668
    %v917 = vpack.c.b16 %v671, %v670
    %v918 = vpack.c.b16 %v673, %v672
    %v919 = vpack.c.b16 %v675, %v674
    %v920 = vpack.c.b16 %v677, %v676
    %v921 = vpack.c.b16 %v679, %v678
    %v922 = vpack.c.b16 %v681, %v680
    %v923 = vpack.c.b16 %v683, %v682
    %v924 = vpack.c.b16 %v685, %v684
    %v925 = vpack.c.b16 %v687, %v686
    %v926 = vpack.c.b16 %v689, %v688
    %v927 = vpack.c.b16 %v691, %v690
    %v928 = vpack.c.b16 %v693, %v692
    %v929 = vpack.c.b16 %v695, %v694
    %v930 = vpack.c.b16 %v697, %v696
    %v931 = vpack.c.b16 %v699, %v698
    %v932 = vpack.c.b16 %v701, %v700
    %v933 = vpack.c.b16 %v703, %v702
    %v934 = vpack.c.b16 %v705, %v704
    %v935 = vpack.c.b16 %v707, %v706
    %v936 = vpack.c.b16 %v709, %v708
    %v937 = vpack.c.b16 %v711, %v710
    %v938 = vpack.c.b16 %v713, %v712
    %v939 = vpack.c.b16 %v715, %v714
    %v940 = vpack.c.b16 %v717, %v716
    %v941 = vpack.c.b16 %v719, %v718
    %v942 = vpack.c.b16 %v721, %v720
    %v943 = vpack.c.b16 %v723, %v722
    %v944 = vpack.c.b16 %v725, %v724
    %v945 = vpack.c.b16 %v727, %v726
    %v946 = vpack.c.b16 %v729, %v728
    %v947 = vpack.c.b16 %v731, %v730
    %v948 = vpack.c.b16 %v733, %v732
    %v949 = vpack.c.b16 %v735, %v734
    %v950 = vpack.c.b16 %v737, %v736
    %v951 = vpack.c.b16 %v739, %v738
    %v952 = vpack.c.b16 %v741, %v740
    %v953 = vpack.c.b16 %v743, %v742
    %v954 = vpack.c.b16 %v745, %v744
    %v955 = vpack.c.b16 %v747, %v746
    %v956 = vpack.c.b16 %v749, %v748
    %v957 = vpack.c.b16 %v751, %v750
    %v958 = vpack.c.b16 %v753, %v752
    %v959 = vpack.c.b16 %v755, %v754
    %v960 = vpack.c.b16 %v757, %v756
    %v961 = vpack.c.b16 %v759, %v758
    %v962 = vpack.c.b16 %v761, %v760
    %v963 = vpack.c.b16 %v763, %v762
    %v964 = vpack.c.b16 %v765, %v764
    %v965 = vpack.c.b16 %v767, %v766
    %v966 = vpack.c.b16 %v769, %v768
    %v967 = vpack.c.b16 %v771, %v770
    %v968 = vpack.c.b16 %v773, %v772
    %v969 = vpack.c.b16 %v775, %v774
    %v970 = vpack.c.b16 %v777, %v776
    %v971 = vpack.c.b16 %v779, %v778
    %v972 = vpack.c.b16 %v781, %v780
    %v973 = vpack.c.b16 %v783, %v782
    %v974 = vpack.c.b16 %v785, %v784
    %v975 = vpack.c.b16 %v787, %v786
    %v976 = vpack.c.b16 %v789, %v788
    %v977 = vpack.c.b16 %v791, %v790
    %v978 = vpack.c.b16 %v793, %v792
    %v979 = vpack.c.b16 %v795, %v794
    %v980 = vpack.c.b16 %v797, %v796
    %v981 = vpack.c.b16 %v799, %v798
    %v982 = vpack.c.b16 %v801, %v800
    %v983 = vpack.c.b16 %v803, %v802
    %v984 = vpack.c.b16 %v805, %v804
    %v985 = vpack.c.b16 %v807, %v806
    %v986 = vpack.c.b16 %v809, %v808
    %v987 = vpack.c.b16 %v811, %v810
    %v988 = vpack.c.b16 %v813, %v812
    %v989 = vpack.c.b16 %v815, %v814
    %v990 = vpack.c.b16 %v817, %v816
    %v991 = vpack.c.b16 %v819, %v818
    %v992 = vpack.c.b16 %v821, %v820
    %v993 = vpack.c.b16 %v823, %v822
    %v994 = vpack.c.b16 %v825, %v824
    %v995 = vpack.c.b16 %v827, %v826
    %v996 = vpack.c.b16 %v829, %v828
    %v997 = vpack.c.b16 %v831, %v830
    %v998 = vpack.c.b16 %v833, %v832
    %v999 = vpack.c.b16 %v835, %v834
    %v1000 = vpack.c.b16 %v837, %v836
    %v1001 = vpack.c.b16 %v839, %v838
    %v1002 = vpack.c.b16 %v841, %v840
    %v1003 = vpack.c.b16 %v843, %v842
    %v1004 = vpack.c.b16 %v845, %v844
    %v1005 = vpack.c.b16 %v847, %v846
    %v1006 = vpack.c.b16 %v849, %v848
    %v1007 = vpack.c.b16 %v851, %v850
    %v1008 = vpack.c.b16 %v853, %v852
    %v1009 = vpack.c.b16 %v855, %v854
    %v1010 = vpack.c.b16 %v857, %v856
    %v1011 = vpack.c.b16 %v859, %v858
    %v1012 = vpack.c.b16 %v861, %v860
    %v1013 = vpack.c.b16 %v863, %v862
    %v1014 = vpack.c.b16 %v865, %v864
    %v1015 = vpack.c.b16 %v867, %v866
    %v1016 = vpack.c.b16 %v869, %v868
    %v1017 = vpack.c.b16 %v871, %v870
    %v1018 = vpack.c.b16 %v873, %v872
    %v1019 = vpack.c.b16 %v875, %v874
    %v1020 = vpack.c.b16 %v877, %v876
    %v1021 = vpack.c.b16 %v879, %v878
    %v1022 = vpack.c.b16 %v881, %v880
    %v1023 = vpack.c.b16 %v883, %v882
    %v1024 = vpack.c.b16 %v885, %v884
    %v1025 = vpack.c.b16 %v887, %v886
    %v1026 = vpack.c.b16 %v888, %v888
    %vm1164 = vcmask 195584
    %v1165 = vsel %vm1164, %v321, 0
    %vm1167 = vcmask 1043456
    %v1169 = vsel %vm1167, %v1026, 0
    %1171 = vmatpush.bf16.msra.mxu0 %v896
    %1172 = vmatpush.bf16.msra.mxu0 %v895
    %1173 = vmatpush.bf16.msra.mxu0 %v894
    %1174 = vmatpush.bf16.msra.mxu0 %v893
    %1175 = vmatpush.bf16.msra.mxu0 %v892
    %1176 = vmatpush.bf16.msra.mxu0 %v891
    %1177 = vmatpush.bf16.msra.mxu0 %v890
    %1178 = vmatpush.bf16.msra.mxu0 %v889
    %1179 = vmatmul.bf16.gmra.mxu0 %v300
    %v1180 = vpop.f32.mrf.mxu0
    %v1181 = vadd.f32 %v296, %v1180
    %v1182 = vpop.f32.mrf.mxu0
    %1183 = vdwg.mxu0
    %1184 = vmatpush.bf16.msra.mxu0 %v904
    %1185 = vmatpush.bf16.msra.mxu0 %v903
    %1186 = vmatpush.bf16.msra.mxu0 %v902
    %1187 = vmatpush.bf16.msra.mxu0 %v901
    %1188 = vmatpush.bf16.msra.mxu0 %v900
    %1189 = vmatpush.bf16.msra.mxu0 %v899
    %1190 = vmatpush.bf16.msra.mxu0 %v898
    %1191 = vmatpush.bf16.msra.mxu0 %v897
    %1192 = vmatmul.bf16.gmra.mxu0 %v301
    %v1193 = vpop.f32.mrf.mxu0
    %v1194 = vadd.f32 %v1181, %v1193
    %v1195 = vpop.f32.mrf.mxu0
    %1196 = vdwg.mxu0
    %1197 = vmatpush.bf16.msra.mxu0 %v912
    %1198 = vmatpush.bf16.msra.mxu0 %v911
    %1199 = vmatpush.bf16.msra.mxu0 %v910
    %1200 = vmatpush.bf16.msra.mxu0 %v909
    %1201 = vmatpush.bf16.msra.mxu0 %v908
    %1202 = vmatpush.bf16.msra.mxu0 %v907
    %1203 = vmatpush.bf16.msra.mxu0 %v906
    %1204 = vmatpush.bf16.msra.mxu0 %v905
    %1205 = vmatmul.bf16.gmra.mxu0 %v302
    %v1206 = vpop.f32.mrf.mxu0
    %v1207 = vadd.f32 %v1194, %v1206
    %v1208 = vpop.f32.mrf.mxu0
    %1209 = vdwg.mxu0
    %1210 = vmatpush.bf16.msra.mxu0 %v920
    %1211 = vmatpush.bf16.msra.mxu0 %v919
    %1212 = vmatpush.bf16.msra.mxu0 %v918
    %1213 = vmatpush.bf16.msra.mxu0 %v917
    %1214 = vmatpush.bf16.msra.mxu0 %v916
    %1215 = vmatpush.bf16.msra.mxu0 %v915
    %1216 = vmatpush.bf16.msra.mxu0 %v914
    %1217 = vmatpush.bf16.msra.mxu0 %v913
    %1218 = vmatmul.bf16.gmra.mxu0 %v303
    %v1219 = vpop.f32.mrf.mxu0
    %v1220 = vadd.f32 %v1207, %v1219
    %v1221 = vpop.f32.mrf.mxu0
    %1222 = vdwg.mxu0
    %1223 = vmatpush.bf16.msra.mxu0 %v928
    %1224 = vmatpush.bf16.msra.mxu0 %v927
    %1225 = vmatpush.bf16.msra.mxu0 %v926
    %1226 = vmatpush.bf16.msra.mxu0 %v925
    %1227 = vmatpush.bf16.msra.mxu0 %v924
    %1228 = vmatpush.bf16.msra.mxu0 %v923
    %1229 = vmatpush.bf16.msra.mxu0 %v922
    %1230 = vmatpush.bf16.msra.mxu0 %v921
    %1231 = vmatmul.bf16.gmra.mxu0 %v304
    %v1232 = vpop.f32.mrf.mxu0
    %v1233 = vadd.f32 %v1220, %v1232
    %v1234 = vpop.f32.mrf.mxu0
    %1235 = vdwg.mxu0
    %1236 = vmatpush.bf16.msra.mxu0 %v936
    %1237 = vmatpush.bf16.msra.mxu0 %v935
    %1238 = vmatpush.bf16.msra.mxu0 %v934
    %1239 = vmatpush.bf16.msra.mxu0 %v933
    %1240 = vmatpush.bf16.msra.mxu0 %v932
    %1241 = vmatpush.bf16.msra.mxu0 %v931
    %1242 = vmatpush.bf16.msra.mxu0 %v930
    %1243 = vmatpush.bf16.msra.mxu0 %v929
    %1244 = vmatmul.bf16.gmra.mxu0 %v305
    %v1245 = vpop.f32.mrf.mxu0
    %v1246 = vadd.f32 %v1233, %v1245
    %v1247 = vpop.f32.mrf.mxu0
    %1248 = vdwg.mxu0
    %1249 = vmatpush.bf16.msra.mxu0 %v944
    %1250 = vmatpush.bf16.msra.mxu0 %v943
    %1251 = vmatpush.bf16.msra.mxu0 %v942
    %1252 = vmatpush.bf16.msra.mxu0 %v941
    %1253 = vmatpush.bf16.msra.mxu0 %v940
    %1254 = vmatpush.bf16.msra.mxu0 %v939
    %1255 = vmatpush.bf16.msra.mxu0 %v938
    %1256 = vmatpush.bf16.msra.mxu0 %v937
    %1257 = vmatmul.bf16.gmra.mxu0 %v306
    %v1258 = vpop.f32.mrf.mxu0
    %v1259 = vadd.f32 %v1246, %v1258
    %v1260 = vpop.f32.mrf.mxu0
    %1261 = vdwg.mxu0
    %1262 = vmatpush.bf16.msra.mxu0 %v952
    %1263 = vmatpush.bf16.msra.mxu0 %v951
    %1264 = vmatpush.bf16.msra.mxu0 %v950
    %1265 = vmatpush.bf16.msra.mxu0 %v949
    %1266 = vmatpush.bf16.msra.mxu0 %v948
    %1267 = vmatpush.bf16.msra.mxu0 %v947
    %1268 = vmatpush.bf16.msra.mxu0 %v946
    %1269 = vmatpush.bf16.msra.mxu0 %v945
    %1270 = vmatmul.bf16.gmra.mxu0 %v307
    %v1271 = vpop.f32.mrf.mxu0
    %v1272 = vadd.f32 %v1259, %v1271
    %v1273 = vpop.f32.mrf.mxu0
    %1274 = vdwg.mxu0
    %1275 = vmatpush.bf16.msra.mxu0 %v960
    %1276 = vmatpush.bf16.msra.mxu0 %v959
    %1277 = vmatpush.bf16.msra.mxu0 %v958
    %1278 = vmatpush.bf16.msra.mxu0 %v957
    %1279 = vmatpush.bf16.msra.mxu0 %v956
    %1280 = vmatpush.bf16.msra.mxu0 %v955
    %1281 = vmatpush.bf16.msra.mxu0 %v954
    %1282 = vmatpush.bf16.msra.mxu0 %v953
    %1283 = vmatmul.bf16.gmra.mxu0 %v310
    %v1284 = vpop.f32.mrf.mxu0
    %v1285 = vadd.f32 %v1272, %v1284
    %v1286 = vpop.f32.mrf.mxu0
    %1287 = vdwg.mxu0
    %1288 = vmatpush.bf16.msra.mxu0 %v968
    %1289 = vmatpush.bf16.msra.mxu0 %v967
    %1290 = vmatpush.bf16.msra.mxu0 %v966
    %1291 = vmatpush.bf16.msra.mxu0 %v965
    %1292 = vmatpush.bf16.msra.mxu0 %v964
    %1293 = vmatpush.bf16.msra.mxu0 %v963
    %1294 = vmatpush.bf16.msra.mxu0 %v962
    %1295 = vmatpush.bf16.msra.mxu0 %v961
    %1296 = vmatmul.bf16.gmra.mxu0 %v311
    %v1297 = vpop.f32.mrf.mxu0
    %v1298 = vadd.f32 %v1285, %v1297
    %v1299 = vpop.f32.mrf.mxu0
    %1300 = vdwg.mxu0
    %1301 = vmatpush.bf16.msra.mxu0 %v976
    %1302 = vmatpush.bf16.msra.mxu0 %v975
    %1303 = vmatpush.bf16.msra.mxu0 %v974
    %1304 = vmatpush.bf16.msra.mxu0 %v973
    %1305 = vmatpush.bf16.msra.mxu0 %v972
    %1306 = vmatpush.bf16.msra.mxu0 %v971
    %1307 = vmatpush.bf16.msra.mxu0 %v970
    %1308 = vmatpush.bf16.msra.mxu0 %v969
    %1309 = vmatmul.bf16.gmra.mxu0 %v312
    %v1310 = vpop.f32.mrf.mxu0
    %v1311 = vadd.f32 %v1298, %v1310
    %v1312 = vpop.f32.mrf.mxu0
    %1313 = vdwg.mxu0
    %1314 = vmatpush.bf16.msra.mxu0 %v984
    %1315 = vmatpush.bf16.msra.mxu0 %v983
    %1316 = vmatpush.bf16.msra.mxu0 %v982
    %1317 = vmatpush.bf16.msra.mxu0 %v981
    %1318 = vmatpush.bf16.msra.mxu0 %v980
    %1319 = vmatpush.bf16.msra.mxu0 %v979
    %1320 = vmatpush.bf16.msra.mxu0 %v978
    %1321 = vmatpush.bf16.msra.mxu0 %v977
    %1322 = vmatmul.bf16.gmra.mxu0 %v313
    %v1323 = vpop.f32.mrf.mxu0
    %v1324 = vadd.f32 %v1311, %v1323
    %v1325 = vpop.f32.mrf.mxu0
    %1326 = vdwg.mxu0
    %1327 = vmatpush.bf16.msra.mxu0 %v992
    %1328 = vmatpush.bf16.msra.mxu0 %v991
    %1329 = vmatpush.bf16.msra.mxu0 %v990
    %1330 = vmatpush.bf16.msra.mxu0 %v989
    %1331 = vmatpush.bf16.msra.mxu0 %v988
    %1332 = vmatpush.bf16.msra.mxu0 %v987
    %1333 = vmatpush.bf16.msra.mxu0 %v986
    %1334 = vmatpush.bf16.msra.mxu0 %v985
    %1335 = vmatmul.bf16.gmra.mxu0 %v314
    %v1336 = vpop.f32.mrf.mxu0
    %v1337 = vadd.f32 %v1324, %v1336
    %v1338 = vpop.f32.mrf.mxu0
    %1339 = vdwg.mxu0
    %1340 = vmatpush.bf16.msra.mxu0 %v1000
    %1341 = vmatpush.bf16.msra.mxu0 %v999
    %1342 = vmatpush.bf16.msra.mxu0 %v998
    %1343 = vmatpush.bf16.msra.mxu0 %v997
    %1344 = vmatpush.bf16.msra.mxu0 %v996
    %1345 = vmatpush.bf16.msra.mxu0 %v995
    %1346 = vmatpush.bf16.msra.mxu0 %v994
    %1347 = vmatpush.bf16.msra.mxu0 %v993
    %1348 = vmatmul.bf16.gmra.mxu0 %v315
    %v1349 = vpop.f32.mrf.mxu0
    %v1350 = vadd.f32 %v1337, %v1349
    %v1351 = vpop.f32.mrf.mxu0
    %1352 = vdwg.mxu0
    %1353 = vmatpush.bf16.msra.mxu0 %v1008
    %1354 = vmatpush.bf16.msra.mxu0 %v1007
    %1355 = vmatpush.bf16.msra.mxu0 %v1006
    %1356 = vmatpush.bf16.msra.mxu0 %v1005
    %1357 = vmatpush.bf16.msra.mxu0 %v1004
    %1358 = vmatpush.bf16.msra.mxu0 %v1003
    %1359 = vmatpush.bf16.msra.mxu0 %v1002
    %1360 = vmatpush.bf16.msra.mxu0 %v1001
    %1361 = vmatmul.bf16.gmra.mxu0 %v316
    %v1362 = vpop.f32.mrf.mxu0
    %v1363 = vadd.f32 %v1350, %v1362
    %v1364 = vpop.f32.mrf.mxu0
    %1365 = vdwg.mxu0
    %1366 = vmatpush.bf16.msra.mxu0 %v1016
    %1367 = vmatpush.bf16.msra.mxu0 %v1015
    %1368 = vmatpush.bf16.msra.mxu0 %v1014
    %1369 = vmatpush.bf16.msra.mxu0 %v1013
    %1370 = vmatpush.bf16.msra.mxu0 %v1012
    %1371 = vmatpush.bf16.msra.mxu0 %v1011
    %1372 = vmatpush.bf16.msra.mxu0 %v1010
    %1373 = vmatpush.bf16.msra.mxu0 %v1009
    %1374 = vmatmul.bf16.gmra.mxu0 %v317
    %v1375 = vpop.f32.mrf.mxu0
    %v1376 = vadd.f32 %v1363, %v1375
    %v1377 = vpop.f32.mrf.mxu0
    %1378 = vdwg.mxu0
    %1379 = vmatpush.bf16.msra.mxu0 %v1024
    %1380 = vmatpush.bf16.msra.mxu0 %v1023
    %1381 = vmatpush.bf16.msra.mxu0 %v1022
    %1382 = vmatpush.bf16.msra.mxu0 %v1021
    %1383 = vmatpush.bf16.msra.mxu0 %v1020
    %1384 = vmatpush.bf16.msra.mxu0 %v1019
    %1385 = vmatpush.bf16.msra.mxu0 %v1018
    %1386 = vmatpush.bf16.msra.mxu0 %v1017
    %1387 = vmatmul.bf16.gmra.mxu0 %v320
    %v1388 = vpop.f32.mrf.mxu0
    %v1389 = vadd.f32 %v1376, %v1388
    %v1390 = vpop.f32.mrf.mxu0
    %1391 = vdwg.mxu0
    %1392 = vmatpush.bf16.msra.mxu0 0
    %1393 = vmatpush.bf16.msra.mxu0 0
    %1394 = vmatpush.bf16.msra.mxu0 0
    %1395 = vmatpush.bf16.msra.mxu0 0
    %1396 = vmatpush.bf16.msra.mxu0 0
    %1397 = vmatpush.bf16.msra.mxu0 0
    %1398 = vmatpush.bf16.msra.mxu0 %v1169
    %1399 = vmatpush.bf16.msra.mxu0 %v1025
    %1400 = vmatmul.bf16.gmra.mxu0 %v1165
    %v1401 = vpop.f32.mrf.mxu0
    %v1402 = vadd.f32 %v1389, %v1401
    %v1403 = vpop.f32.mrf.mxu0
    %1404 = vdwg.mxu0
    %vm1405 = vcmask 74752
    %1406 = vst.msk [vmem:[#allocation2] sm:$0x3] %vm1405, %v1402
    // Predicated region
    $region14: #{net_forward.25} parent=1 // pred_check
      _
    $region15: #{net_forward.25} parent=1 // pred_check_branch
      %1408 = sbr.rel (0) target = $region17
    $region16: #{net_forward.25} parent=1 // pred_region
      %1410 = vsyncadd [#allocation3], 0
      %s1412 = sshll.u32 [#allocation2], 4
      %s1413 = int_to_ptr.vmem [resolvable:$true] %s1412
      %s1414 = sshll.u32 %s3, 4
      %s1415 = int_to_ptr.hbm [resolvable:$true] %s1414
      %1417 = dma.vmem_to_hbm [thread:$0]  %s1413, 32, %s1415, [#allocation3]
    $region17: #{net_forward.25} parent=1 // pred_fallthru
      _
    // Predicated region
    $region18: #{net_forward.25} parent=1 // pred_check
      _
    $region19: #{net_forward.25} parent=1 // pred_check_branch
      %1419 = sbr.rel (0) target = $region21
    $region20: #{net_forward.25} parent=1 // pred_region
      %1421 = dma.done [#allocation3], 32
    $region21: #{net_forward.25} parent=1 // pred_fallthru
      _
    %1422 = vsyncpa [#allocation3], 1

</llo_original>
